<compile_context>
chip_gen: v6e
topology: v6e:2x2x1
jax: 0.10.0
libtpu: 0.0.40
codegen_flags: <defaults>
</compile_context>

<pallas_src>
import functools

import jax
import jax.numpy as jnp
from jax.experimental import pallas as pl
from jax.experimental.pallas import tpu as pltpu

BN_EPS = 1e-5
_LANE = 128
_VMEM_LIMIT = 64 * 1024 * 1024


def _round_up(x, m):
    return (x + m - 1) // m * m


def _pick_tile_rows(h, w, cin, coutp):
    """Output rows per grid step: multiple of 8, ~512-2048 matmul rows, <~24 MiB VMEM."""
    cin_lanes = _round_up(max(cin, 1), _LANE)
    # per image row: bf16 input row (lane padded) + f32 conv-output row
    row_bytes = (w + 2) * cin_lanes * 2 + w * coutp * 4
    vmem_cap = max(8, (12 * 1024 * 1024) // row_bytes)   # x2 double-buffering -> ~24 MiB
    mxu_cap = max(8, 2048 // max(w, 1))                  # keep matmul M in the 512-2048 class
    th = min(vmem_cap, mxu_cap, _round_up(h, 8))
    return max(8, (th // 8) * 8)


def _conv_stats_kernel(x_ref, halo_ref, w_ref, y_ref, psum_ref, pssq_ref,
                       *, tile_rows, out_w, valid_h):
    """3x3 conv (pad=1) on one row-tile + per-channel BN partial sums.

    x_ref:    (1, TH,  W+2, Cin)   bf16  padded rows [r*TH, r*TH+TH)
    halo_ref: (1, 2,   W+2, Cin)   bf16  padded rows [r*TH+TH, r*TH+TH+2)
    w_ref:    (9, Cin, Coutp)      bf16  (ky*3+kx, cin, cout), resident across grid
    y_ref:    (1, TH,  W, Coutp)   f32   conv output tile
    psum_ref: (1, 1, 8, Coutp)     f32   per-tile channel sum (rows replicated)
    pssq_ref: (1, 1, 8, Coutp)     f32   per-tile channel sum of squares
    """
    cin = x_ref.shape[-1]
    coutp = w_ref.shape[-1]

    # In-kernel im2col: (TH+2)-row window = row-tile + 2-row halo.
    win = jnp.concatenate([x_ref[0], halo_ref[0]], axis=0).astype(jnp.float32)

    acc = jnp.zeros((tile_rows * out_w, coutp), jnp.float32)
    for ky in range(3):
        for kx in range(3):
            slab = win[ky:ky + tile_rows, kx:kx + out_w, :]
            slab = slab.reshape(tile_rows * out_w, cin).astype(jnp.bfloat16)
            acc = acc + jnp.dot(slab, w_ref[ky * 3 + kx],
                                preferred_element_type=jnp.float32)

    y = acc.reshape(tile_rows, out_w, coutp)
    y_ref[0] = y

    # BN partial statistics (f32); mask rows past the true image height (such
    # rows only exist when H % TH != 0).
    r = pl.program_id(1)
    row_id = r * tile_rows + jax.lax.broadcasted_iota(
        jnp.int32, (tile_rows, out_w, 1), 0)
    ym = y * (row_id < valid_h).astype(jnp.float32)
    s = jnp.sum(ym, axis=(0, 1), keepdims=True)        # (1, 1, Coutp)
    ss = jnp.sum(ym * ym, axis=(0, 1), keepdims=True)  # (1, 1, Coutp)
    psum_ref[0, 0] = jnp.broadcast_to(s[0], (8, coutp))
    pssq_ref[0, 0] = jnp.broadcast_to(ss[0], (8, coutp))


def _bn_relu_kernel(y_ref, scale_ref, shift_ref, o_ref):
    """Fused BatchNorm (folded to scale/shift) + ReLU on one conv-output tile."""
    z = y_ref[0] * scale_ref[...] + shift_ref[...]
    o_ref[0] = jnp.maximum(z, 0.0).astype(o_ref.dtype)


def _conv_bn_relu_stage(x_nhwc, w_torch, gamma, beta, out_dtype):
    """One (conv => BN => ReLU) stage.  x_nhwc: (N, H, W, Cin) -> (N, H, W, Cout)."""
    n, h, w, cin = x_nhwc.shape
    cout = w_torch.shape[0]
    coutp = _round_up(cout, _LANE)            # lane-dense output channels

    th = _pick_tile_rows(h, w, cin, coutp)
    n_r = -(-h // th)
    hp = n_r * th + 2                         # padded height (>= H + 2)
    wp = w + 2
    hb = th // 2                              # halo block index scale (blocks of 2 rows)

    # Spatial zero-pad + bf16 cast (plain layout glue, ~1x the input size).
    xp = jnp.pad(x_nhwc.astype(jnp.bfloat16),
                 ((0, 0), (1, hp - h - 1), (1, 1), (0, 0)))

    # (Cout, Cin, 3, 3) -> (ky*3+kx, Cin, Coutp), bf16, zero-padded channels.
    wk = jnp.transpose(w_torch, (2, 3, 1, 0)).reshape(9, cin, cout)
    wk = jnp.pad(wk, ((0, 0), (0, 0), (0, coutp - cout))).astype(jnp.bfloat16)

    kernel = functools.partial(_conv_stats_kernel,
                               tile_rows=th, out_w=w, valid_h=h)

    # Pass 1: conv + per-tile BN partial sums (input passed twice: tile + halo).
    y, psum, pssq = pl.pallas_call(
        kernel,
        grid_spec=pltpu.PrefetchScalarGridSpec(
            num_scalar_prefetch=0,
            grid=(n, n_r),
            in_specs=[
                pl.BlockSpec((1, th, wp, cin), lambda i, r: (i, r, 0, 0)),
                pl.BlockSpec((1, 2, wp, cin),
                             lambda i, r: (i, (r + 1) * hb, 0, 0)),
                pl.BlockSpec((9, cin, coutp), lambda i, r: (0, 0, 0)),
            ],
            out_specs=[
                pl.BlockSpec((1, th, w, coutp), lambda i, r: (i, r, 0, 0)),
                pl.BlockSpec((1, 1, 8, coutp), lambda i, r: (i, r, 0, 0)),
                pl.BlockSpec((1, 1, 8, coutp), lambda i, r: (i, r, 0, 0)),
            ]),
        out_shape=(
            jax.ShapeDtypeStruct((n, n_r * th, w, coutp), jnp.float32),
            jax.ShapeDtypeStruct((n, n_r, 8, coutp), jnp.float32),
            jax.ShapeDtypeStruct((n, n_r, 8, coutp), jnp.float32),
        ),
        compiler_params=pltpu.CompilerParams(
            dimension_semantics=("parallel", "parallel"),
            vmem_limit_bytes=_VMEM_LIMIT),
    )(xp, xp, wk)

    # Tiny cross-tile reduction + BN scale/shift folding in the wrapper (O(Cout)).
    # f32 sum / sum-of-squares; clamp var at 0 against cancellation.
    cnt = float(n * h * w)
    s = jnp.sum(psum[:, :, 0, :cout], axis=(0, 1))
    ss = jnp.sum(pssq[:, :, 0, :cout], axis=(0, 1))
    mean = s / cnt
    var = jnp.maximum(ss / cnt - mean * mean, 0.0)     # biased var (train-mode BN)
    scale = gamma * jax.lax.rsqrt(var + BN_EPS)
    shift = beta - mean * scale
    scale_p = jnp.pad(scale, (0, coutp - cout)).reshape(1, coutp)
    shift_p = jnp.pad(shift, (0, coutp - cout)).reshape(1, coutp)

    # Pass 2: normalize + affine + ReLU over the stored conv output.
    out = pl.pallas_call(
        _bn_relu_kernel,
        grid_spec=pltpu.PrefetchScalarGridSpec(
            num_scalar_prefetch=0,
            grid=(n, n_r),
            in_specs=[
                pl.BlockSpec((1, th, w, coutp), lambda i, r: (i, r, 0, 0)),
                pl.BlockSpec((1, coutp), lambda i, r: (0, 0)),
                pl.BlockSpec((1, coutp), lambda i, r: (0, 0)),
            ],
            out_specs=pl.BlockSpec((1, th, w, coutp),
                                   lambda i, r: (i, r, 0, 0))),
        out_shape=jax.ShapeDtypeStruct((n, n_r * th, w, coutp), out_dtype),
        compiler_params=pltpu.CompilerParams(
            dimension_semantics=("parallel", "parallel"),
            vmem_limit_bytes=_VMEM_LIMIT),
    )(y, scale_p, shift_p)

    return out[:, :h, :, :cout]


@jax.jit
def double_conv(x_nchw, params):
    """DoubleConv forward: (N, Cin, H, W) f32 -> (N, Cout, H, W) f32."""
    x = jnp.transpose(x_nchw, (0, 2, 3, 1))                       # NCHW -> NHWC
    # Conv biases are omitted from the compute: train-mode BN's mean subtraction
    # cancels a per-channel constant bias exactly.
    x = _conv_bn_relu_stage(x, params["w1"], params["g1"], params["beta1"],
                            jnp.bfloat16)                          # mid activation in bf16
    x = _conv_bn_relu_stage(x, params["w2"], params["g2"], params["beta2"],
                            jnp.float32)
    return jnp.transpose(x, (0, 3, 1, 2))                          # NHWC -> NCHW


def init_params(key, in_channels, out_channels, mid_channels=None):
    if not mid_channels:
        mid_channels = out_channels
    k1, k2, k3, k4, k5, k6 = jax.random.split(key, 6)

    def conv_init(kw, kb, cout, cin):
        fan_in = cin * 9
        bound = 1.0 / jnp.sqrt(fan_in)
        w = jax.random.uniform(kw, (cout, cin, 3, 3), jnp.float32, -bound, bound)
        b = jax.random.uniform(kb, (cout,), jnp.float32, -bound, bound)
        return w, b

    w1, b1 = conv_init(k1, k2, mid_channels, in_channels)
    w2, b2 = conv_init(k3, k4, out_channels, mid_channels)
    g1 = jnp.ones((mid_channels,), jnp.float32) + 0.01 * jax.random.normal(k5, (mid_channels,))
    beta1 = jnp.zeros((mid_channels,), jnp.float32)
    g2 = jnp.ones((out_channels,), jnp.float32) + 0.01 * jax.random.normal(k6, (out_channels,))
    beta2 = jnp.zeros((out_channels,), jnp.float32)
    return {
        "w1": w1, "b1": b1, "g1": g1, "beta1": beta1,
        "w2": w2, "b2": b2, "g2": g2, "beta2": beta2,
    }


def _reference_double_conv(x_nchw, params):
    """Pure-XLA f32 reference (conv bias included; it cancels under train-mode BN)."""
    def stage(x, wt, b, g, bet):
        y = jax.lax.conv_general_dilated(
            x, wt, window_strides=(1, 1), padding=((1, 1), (1, 1)),
            dimension_numbers=("NCHW", "OIHW", "NCHW"))
        y = y + b.reshape(1, -1, 1, 1)
        mean = jnp.mean(y, axis=(0, 2, 3), keepdims=True)
        var = jnp.mean((y - mean) ** 2, axis=(0, 2, 3), keepdims=True)
        yh = (y - mean) * jax.lax.rsqrt(var + BN_EPS)
        return jnp.maximum(yh * g.reshape(1, -1, 1, 1) + bet.reshape(1, -1, 1, 1), 0.0)

    x = stage(x_nchw, params["w1"], params["b1"], params["g1"], params["beta1"])
    return stage(x, params["w2"], params["b2"], params["g2"], params["beta2"])


if __name__ == "__main__":
    key = jax.random.PRNGKey(0)
    k_x, k_p = jax.random.split(key)

    N, C_IN, C_OUT, H, W = 2, 4, 8, 16, 16
    x = jax.random.normal(k_x, (N, C_IN, H, W), jnp.float32)
    params = init_params(k_p, C_IN, C_OUT)

    y = jax.block_until_ready(double_conv(x, params))

    assert y.shape == (N, C_OUT, H, W), y.shape
    assert y.dtype == jnp.float32
    assert bool(jnp.all(jnp.isfinite(y)))
    assert bool(jnp.all(y >= 0.0))  # final ReLU

    # Numerical cross-check vs pure-XLA reference (tolerance covers bf16 MXU path).
    y_ref = _reference_double_conv(x, params)
    max_err = float(jnp.max(jnp.abs(y - y_ref)))
    assert max_err < 0.15, f"mismatch vs reference: max abs err = {max_err}"

    # TODO(synk): BatchNorm running-mean/var buffer updates (training-state side
    # effect only) are not materialized; they do not affect this forward output.
    print("KERNEL_OK")
</pallas_src>

<mosaic_0001>
module attributes {stable_mosaic.version = 11 : i64} {
  func.func @_conv_stats_kernel(%arg0: i32, %arg1: i32, %arg2: memref<1x16x18x4xbf16, #tpu.memory_space<vmem>>, %arg3: memref<1x2x18x4xbf16, #tpu.memory_space<vmem>>, %arg4: memref<9x4x128xbf16, #tpu.memory_space<vmem>>, %arg5: memref<1x16x16x128xf32, #tpu.memory_space<vmem>>, %arg6: memref<1x1x8x128xf32, #tpu.memory_space<vmem>>, %arg7: memref<1x1x8x128xf32, #tpu.memory_space<vmem>>) attributes {dimension_semantics = [#tpu.dimension_semantics<parallel>, #tpu.dimension_semantics<parallel>], iteration_bounds = array<i64: 2, 1>, scalar_prefetch = 0 : i64, scratch_operands = 0 : i64, tpu.core_type = #tpu.core_type<tc>, window_params = [{transform_indices = @transform_0, window_bounds = array<i64: 1, 16, 18, 4>}, {transform_indices = @transform_1, window_bounds = array<i64: 1, 2, 18, 4>}, {pipeline_mode = #tpu.pipeline_mode<synchronous>, transform_indices = @transform_2, window_bounds = array<i64: 9, 4, 128>}, {transform_indices = @transform_3, window_bounds = array<i64: 1, 16, 16, 128>}, {transform_indices = @transform_4, window_bounds = array<i64: 1, 1, 8, 128>}, {transform_indices = @transform_5, window_bounds = array<i64: 1, 1, 8, 128>}]} {
    %c0 = arith.constant 0 : index
    %c0_0 = arith.constant 0 : index
    %c0_1 = arith.constant 0 : index
    %c0_2 = arith.constant 0 : index
    %0 = vector.load %arg2[%c0, %c0_0, %c0_1, %c0_2] : memref<1x16x18x4xbf16, #tpu.memory_space<vmem>>, vector<1x16x18x4xbf16>
    %1 = vector.shape_cast %0 : vector<1x16x18x4xbf16> to vector<16x18x4xbf16>
    %c0_3 = arith.constant 0 : index
    %c0_4 = arith.constant 0 : index
    %c0_5 = arith.constant 0 : index
    %c0_6 = arith.constant 0 : index
    %2 = vector.load %arg3[%c0_3, %c0_4, %c0_5, %c0_6] : memref<1x2x18x4xbf16, #tpu.memory_space<vmem>>, vector<1x2x18x4xbf16>
    %3 = vector.shape_cast %2 : vector<1x2x18x4xbf16> to vector<2x18x4xbf16>
    %4 = tpu.concatenate %1, %3 in 0 : vector<16x18x4xbf16>, vector<2x18x4xbf16> -> vector<18x18x4xbf16>
    %5 = arith.extf %4 : vector<18x18x4xbf16> to vector<18x18x4xf32>
    %cst = arith.constant 0.000000e+00 : f32
    %6 = vector.broadcast %cst : f32 to vector<256x128xf32>
    %7 = vector.extract_strided_slice %5 {offsets = [0, 0, 0], sizes = [16, 16, 4], strides = [1, 1, 1]} : vector<18x18x4xf32> to vector<16x16x4xf32>
    %8 = vector.shape_cast %7 : vector<16x16x4xf32> to vector<256x4xf32>
    %9 = arith.truncf %8 : vector<256x4xf32> to vector<256x4xbf16>
    %c0_7 = arith.constant 0 : index
    %c0_8 = arith.constant 0 : index
    %c0_9 = arith.constant 0 : index
    %10 = vector.load %arg4[%c0_7, %c0_8, %c0_9] : memref<9x4x128xbf16, #tpu.memory_space<vmem>>, vector<1x4x128xbf16>
    %11 = vector.shape_cast %10 : vector<1x4x128xbf16> to vector<4x128xbf16>
    %cst_10 = arith.constant dense<0.000000e+00> : vector<256x128xf32>
    %12 = tpu.matmul %9, %11, %cst_10 {dimension_numbers = #tpu.dot_dimension_numbers<[1], [0], [0], [1], [0, 0, 1, 1], [], []>} : vector<256x4xbf16>, vector<4x128xbf16>, vector<256x128xf32> -> vector<256x128xf32>
    %13 = arith.addf %6, %12 : vector<256x128xf32>
    %14 = vector.extract_strided_slice %5 {offsets = [0, 1, 0], sizes = [16, 16, 4], strides = [1, 1, 1]} : vector<18x18x4xf32> to vector<16x16x4xf32>
    %15 = vector.shape_cast %14 : vector<16x16x4xf32> to vector<256x4xf32>
    %16 = arith.truncf %15 : vector<256x4xf32> to vector<256x4xbf16>
    %c1 = arith.constant 1 : index
    %c0_11 = arith.constant 0 : index
    %c0_12 = arith.constant 0 : index
    %17 = vector.load %arg4[%c1, %c0_11, %c0_12] : memref<9x4x128xbf16, #tpu.memory_space<vmem>>, vector<1x4x128xbf16>
    %18 = vector.shape_cast %17 : vector<1x4x128xbf16> to vector<4x128xbf16>
    %cst_13 = arith.constant dense<0.000000e+00> : vector<256x128xf32>
    %19 = tpu.matmul %16, %18, %cst_13 {dimension_numbers = #tpu.dot_dimension_numbers<[1], [0], [0], [1], [0, 0, 1, 1], [], []>} : vector<256x4xbf16>, vector<4x128xbf16>, vector<256x128xf32> -> vector<256x128xf32>
    %20 = arith.addf %13, %19 : vector<256x128xf32>
    %21 = vector.extract_strided_slice %5 {offsets = [0, 2, 0], sizes = [16, 16, 4], strides = [1, 1, 1]} : vector<18x18x4xf32> to vector<16x16x4xf32>
    %22 = vector.shape_cast %21 : vector<16x16x4xf32> to vector<256x4xf32>
    %23 = arith.truncf %22 : vector<256x4xf32> to vector<256x4xbf16>
    %c2 = arith.constant 2 : index
    %c0_14 = arith.constant 0 : index
    %c0_15 = arith.constant 0 : index
    %24 = vector.load %arg4[%c2, %c0_14, %c0_15] : memref<9x4x128xbf16, #tpu.memory_space<vmem>>, vector<1x4x128xbf16>
    %25 = vector.shape_cast %24 : vector<1x4x128xbf16> to vector<4x128xbf16>
    %cst_16 = arith.constant dense<0.000000e+00> : vector<256x128xf32>
    %26 = tpu.matmul %23, %25, %cst_16 {dimension_numbers = #tpu.dot_dimension_numbers<[1], [0], [0], [1], [0, 0, 1, 1], [], []>} : vector<256x4xbf16>, vector<4x128xbf16>, vector<256x128xf32> -> vector<256x128xf32>
    %27 = arith.addf %20, %26 : vector<256x128xf32>
    %28 = vector.extract_strided_slice %5 {offsets = [1, 0, 0], sizes = [16, 16, 4], strides = [1, 1, 1]} : vector<18x18x4xf32> to vector<16x16x4xf32>
    %29 = vector.shape_cast %28 : vector<16x16x4xf32> to vector<256x4xf32>
    %30 = arith.truncf %29 : vector<256x4xf32> to vector<256x4xbf16>
    %c3 = arith.constant 3 : index
    %c0_17 = arith.constant 0 : index
    %c0_18 = arith.constant 0 : index
    %31 = vector.load %arg4[%c3, %c0_17, %c0_18] : memref<9x4x128xbf16, #tpu.memory_space<vmem>>, vector<1x4x128xbf16>
    %32 = vector.shape_cast %31 : vector<1x4x128xbf16> to vector<4x128xbf16>
    %cst_19 = arith.constant dense<0.000000e+00> : vector<256x128xf32>
    %33 = tpu.matmul %30, %32, %cst_19 {dimension_numbers = #tpu.dot_dimension_numbers<[1], [0], [0], [1], [0, 0, 1, 1], [], []>} : vector<256x4xbf16>, vector<4x128xbf16>, vector<256x128xf32> -> vector<256x128xf32>
    %34 = arith.addf %27, %33 : vector<256x128xf32>
    %35 = vector.extract_strided_slice %5 {offsets = [1, 1, 0], sizes = [16, 16, 4], strides = [1, 1, 1]} : vector<18x18x4xf32> to vector<16x16x4xf32>
    %36 = vector.shape_cast %35 : vector<16x16x4xf32> to vector<256x4xf32>
    %37 = arith.truncf %36 : vector<256x4xf32> to vector<256x4xbf16>
    %c4 = arith.constant 4 : index
    %c0_20 = arith.constant 0 : index
    %c0_21 = arith.constant 0 : index
    %38 = vector.load %arg4[%c4, %c0_20, %c0_21] : memref<9x4x128xbf16, #tpu.memory_space<vmem>>, vector<1x4x128xbf16>
    %39 = vector.shape_cast %38 : vector<1x4x128xbf16> to vector<4x128xbf16>
    %cst_22 = arith.constant dense<0.000000e+00> : vector<256x128xf32>
    %40 = tpu.matmul %37, %39, %cst_22 {dimension_numbers = #tpu.dot_dimension_numbers<[1], [0], [0], [1], [0, 0, 1, 1], [], []>} : vector<256x4xbf16>, vector<4x128xbf16>, vector<256x128xf32> -> vector<256x128xf32>
    %41 = arith.addf %34, %40 : vector<256x128xf32>
    %42 = vector.extract_strided_slice %5 {offsets = [1, 2, 0], sizes = [16, 16, 4], strides = [1, 1, 1]} : vector<18x18x4xf32> to vector<16x16x4xf32>
    %43 = vector.shape_cast %42 : vector<16x16x4xf32> to vector<256x4xf32>
    %44 = arith.truncf %43 : vector<256x4xf32> to vector<256x4xbf16>
    %c5 = arith.constant 5 : index
    %c0_23 = arith.constant 0 : index
    %c0_24 = arith.constant 0 : index
    %45 = vector.load %arg4[%c5, %c0_23, %c0_24] : memref<9x4x128xbf16, #tpu.memory_space<vmem>>, vector<1x4x128xbf16>
    %46 = vector.shape_cast %45 : vector<1x4x128xbf16> to vector<4x128xbf16>
    %cst_25 = arith.constant dense<0.000000e+00> : vector<256x128xf32>
    %47 = tpu.matmul %44, %46, %cst_25 {dimension_numbers = #tpu.dot_dimension_numbers<[1], [0], [0], [1], [0, 0, 1, 1], [], []>} : vector<256x4xbf16>, vector<4x128xbf16>, vector<256x128xf32> -> vector<256x128xf32>
    %48 = arith.addf %41, %47 : vector<256x128xf32>
    %49 = vector.extract_strided_slice %5 {offsets = [2, 0, 0], sizes = [16, 16, 4], strides = [1, 1, 1]} : vector<18x18x4xf32> to vector<16x16x4xf32>
    %50 = vector.shape_cast %49 : vector<16x16x4xf32> to vector<256x4xf32>
    %51 = arith.truncf %50 : vector<256x4xf32> to vector<256x4xbf16>
    %c6 = arith.constant 6 : index
    %c0_26 = arith.constant 0 : index
    %c0_27 = arith.constant 0 : index
    %52 = vector.load %arg4[%c6, %c0_26, %c0_27] : memref<9x4x128xbf16, #tpu.memory_space<vmem>>, vector<1x4x128xbf16>
    %53 = vector.shape_cast %52 : vector<1x4x128xbf16> to vector<4x128xbf16>
    %cst_28 = arith.constant dense<0.000000e+00> : vector<256x128xf32>
    %54 = tpu.matmul %51, %53, %cst_28 {dimension_numbers = #tpu.dot_dimension_numbers<[1], [0], [0], [1], [0, 0, 1, 1], [], []>} : vector<256x4xbf16>, vector<4x128xbf16>, vector<256x128xf32> -> vector<256x128xf32>
    %55 = arith.addf %48, %54 : vector<256x128xf32>
    %56 = vector.extract_strided_slice %5 {offsets = [2, 1, 0], sizes = [16, 16, 4], strides = [1, 1, 1]} : vector<18x18x4xf32> to vector<16x16x4xf32>
    %57 = vector.shape_cast %56 : vector<16x16x4xf32> to vector<256x4xf32>
    %58 = arith.truncf %57 : vector<256x4xf32> to vector<256x4xbf16>
    %c7 = arith.constant 7 : index
    %c0_29 = arith.constant 0 : index
    %c0_30 = arith.constant 0 : index
    %59 = vector.load %arg4[%c7, %c0_29, %c0_30] : memref<9x4x128xbf16, #tpu.memory_space<vmem>>, vector<1x4x128xbf16>
    %60 = vector.shape_cast %59 : vector<1x4x128xbf16> to vector<4x128xbf16>
    %cst_31 = arith.constant dense<0.000000e+00> : vector<256x128xf32>
    %61 = tpu.matmul %58, %60, %cst_31 {dimension_numbers = #tpu.dot_dimension_numbers<[1], [0], [0], [1], [0, 0, 1, 1], [], []>} : vector<256x4xbf16>, vector<4x128xbf16>, vector<256x128xf32> -> vector<256x128xf32>
    %62 = arith.addf %55, %61 : vector<256x128xf32>
    %63 = vector.extract_strided_slice %5 {offsets = [2, 2, 0], sizes = [16, 16, 4], strides = [1, 1, 1]} : vector<18x18x4xf32> to vector<16x16x4xf32>
    %64 = vector.shape_cast %63 : vector<16x16x4xf32> to vector<256x4xf32>
    %65 = arith.truncf %64 : vector<256x4xf32> to vector<256x4xbf16>
    %c8 = arith.constant 8 : index
    %c0_32 = arith.constant 0 : index
    %c0_33 = arith.constant 0 : index
    %66 = vector.load %arg4[%c8, %c0_32, %c0_33] : memref<9x4x128xbf16, #tpu.memory_space<vmem>>, vector<1x4x128xbf16>
    %67 = vector.shape_cast %66 : vector<1x4x128xbf16> to vector<4x128xbf16>
    %cst_34 = arith.constant dense<0.000000e+00> : vector<256x128xf32>
    %68 = tpu.matmul %65, %67, %cst_34 {dimension_numbers = #tpu.dot_dimension_numbers<[1], [0], [0], [1], [0, 0, 1, 1], [], []>} : vector<256x4xbf16>, vector<4x128xbf16>, vector<256x128xf32> -> vector<256x128xf32>
    %69 = arith.addf %62, %68 : vector<256x128xf32>
    %70 = vector.shape_cast %69 : vector<256x128xf32> to vector<16x16x128xf32>
    %c0_35 = arith.constant 0 : index
    %c0_36 = arith.constant 0 : index
    %c0_37 = arith.constant 0 : index
    %c0_38 = arith.constant 0 : index
    %71 = vector.load %arg5[%c0_35, %c0_36, %c0_37, %c0_38] : memref<1x16x16x128xf32, #tpu.memory_space<vmem>>, vector<1x16x16x128xf32>
    %72 = vector.shape_cast %71 : vector<1x16x16x128xf32> to vector<16x16x128xf32>
    %73 = vector.shape_cast %70 : vector<16x16x128xf32> to vector<1x16x16x128xf32>
    tpu.vector_store %arg5[%c0_35, %c0_36, %c0_37, %c0_38], %73 {strides = array<i32>} : memref<1x16x16x128xf32, #tpu.memory_space<vmem>>, vector<1x16x16x128xf32>,
    %c16_i32 = arith.constant 16 : i32
    %74 = arith.muli %arg1, %c16_i32 : i32
    %75 = tpu.iota {dimensions = array<i32: 0>} : vector<16x16x1xi32>
    %76 = vector.broadcast %74 : i32 to vector<16x16x1xi32>
    %77 = arith.addi %76, %75 : vector<16x16x1xi32>
    %c16_i32_39 = arith.constant 16 : i32
    %78 = vector.broadcast %c16_i32_39 : i32 to vector<16x16x1xi32>
    %79 = arith.cmpi slt, %77, %78 : vector<16x16x1xi32>
    %80 = arith.extui %79 : vector<16x16x1xi1> to vector<16x16x1xi32>
    %81 = arith.sitofp %80 : vector<16x16x1xi32> to vector<16x16x1xf32>
    %82 = vector.broadcast %81 : vector<16x16x1xf32> to vector<16x16x128xf32>
    %83 = arith.mulf %70, %82 : vector<16x16x128xf32>
    %cst_40 = arith.constant dense<0.000000e+00> : vector<128xf32>
    %84 = vector.multi_reduction <add>, %83, %cst_40 [0, 1] : vector<16x16x128xf32> to vector<128xf32>
    %85 = vector.shape_cast %84 : vector<128xf32> to vector<1x1x128xf32>
    %86 = arith.mulf %83, %83 : vector<16x16x128xf32>
    %cst_41 = arith.constant dense<0.000000e+00> : vector<128xf32>
    %87 = vector.multi_reduction <add>, %86, %cst_41 [0, 1] : vector<16x16x128xf32> to vector<128xf32>
    %88 = vector.shape_cast %87 : vector<128xf32> to vector<1x1x128xf32>
    %89 = vector.shape_cast %85 : vector<1x1x128xf32> to vector<1x128xf32>
    %90 = vector.shape_cast %89 : vector<1x128xf32> to vector<1x128xf32>
    %91 = vector.broadcast %90 : vector<1x128xf32> to vector<8x128xf32>
    %c0_42 = arith.constant 0 : index
    %c0_43 = arith.constant 0 : index
    %c0_44 = arith.constant 0 : index
    %c0_45 = arith.constant 0 : index
    %92 = vector.load %arg6[%c0_42, %c0_43, %c0_44, %c0_45] : memref<1x1x8x128xf32, #tpu.memory_space<vmem>>, vector<1x1x8x128xf32>
    %93 = vector.shape_cast %92 : vector<1x1x8x128xf32> to vector<8x128xf32>
    %94 = vector.shape_cast %91 : vector<8x128xf32> to vector<1x1x8x128xf32>
    tpu.vector_store %arg6[%c0_42, %c0_43, %c0_44, %c0_45], %94 {strides = array<i32>} : memref<1x1x8x128xf32, #tpu.memory_space<vmem>>, vector<1x1x8x128xf32>,
    %95 = vector.shape_cast %88 : vector<1x1x128xf32> to vector<1x128xf32>
    %96 = vector.shape_cast %95 : vector<1x128xf32> to vector<1x128xf32>
    %97 = vector.broadcast %96 : vector<1x128xf32> to vector<8x128xf32>
    %c0_46 = arith.constant 0 : index
    %c0_47 = arith.constant 0 : index
    %c0_48 = arith.constant 0 : index
    %c0_49 = arith.constant 0 : index
    %98 = vector.load %arg7[%c0_46, %c0_47, %c0_48, %c0_49] : memref<1x1x8x128xf32, #tpu.memory_space<vmem>>, vector<1x1x8x128xf32>
    %99 = vector.shape_cast %98 : vector<1x1x8x128xf32> to vector<8x128xf32>
    %100 = vector.shape_cast %97 : vector<8x128xf32> to vector<1x1x8x128xf32>
    tpu.vector_store %arg7[%c0_46, %c0_47, %c0_48, %c0_49], %100 {strides = array<i32>} : memref<1x1x8x128xf32, #tpu.memory_space<vmem>>, vector<1x1x8x128xf32>,
    return
  }
  func.func @transform_0(%arg0: i32, %arg1: i32) -> (i32, i32, i32, i32) {
    %c0_i32 = arith.constant 0 : i32
    %c0_i32_0 = arith.constant 0 : i32
    %c0_i32_1 = arith.constant 0 : i32
    return %arg0, %arg1, %c0_i32, %c0_i32_0 : i32, i32, i32, i32
  }
  func.func @transform_1(%arg0: i32, %arg1: i32) -> (i32, i32, i32, i32) {
    %c1_i32 = arith.constant 1 : i32
    %0 = arith.addi %arg1, %c1_i32 : i32
    %c8_i32 = arith.constant 8 : i32
    %1 = arith.muli %0, %c8_i32 : i32
    %c0_i32 = arith.constant 0 : i32
    %c0_i32_0 = arith.constant 0 : i32
    %c0_i32_1 = arith.constant 0 : i32
    return %arg0, %1, %c0_i32, %c0_i32_0 : i32, i32, i32, i32
  }
  func.func @transform_2(%arg0: i32, %arg1: i32) -> (i32, i32, i32) {
    %c0_i32 = arith.constant 0 : i32
    %c0_i32_0 = arith.constant 0 : i32
    %c0_i32_1 = arith.constant 0 : i32
    %c0_i32_2 = arith.constant 0 : i32
    return %c0_i32, %c0_i32_0, %c0_i32_1 : i32, i32, i32
  }
  func.func @transform_3(%arg0: i32, %arg1: i32) -> (i32, i32, i32, i32) {
    %c0_i32 = arith.constant 0 : i32
    %c0_i32_0 = arith.constant 0 : i32
    %c0_i32_1 = arith.constant 0 : i32
    return %arg0, %arg1, %c0_i32, %c0_i32_0 : i32, i32, i32, i32
  }
  func.func @transform_4(%arg0: i32, %arg1: i32) -> (i32, i32, i32, i32) {
    %c0_i32 = arith.constant 0 : i32
    %c0_i32_0 = arith.constant 0 : i32
    %c0_i32_1 = arith.constant 0 : i32
    return %arg0, %arg1, %c0_i32, %c0_i32_0 : i32, i32, i32, i32
  }
  func.func @transform_5(%arg0: i32, %arg1: i32) -> (i32, i32, i32, i32) {
    %c0_i32 = arith.constant 0 : i32
    %c0_i32_0 = arith.constant 0 : i32
    %c0_i32_1 = arith.constant 0 : i32
    return %arg0, %arg1, %c0_i32, %c0_i32_0 : i32, i32, i32, i32
  }
}

module attributes {stable_mosaic.version = 11 : i64} {
  func.func @_bn_relu_kernel(%arg0: i32, %arg1: i32, %arg2: memref<1x16x16x128xf32, #tpu.memory_space<vmem>>, %arg3: memref<1x128xf32, #tpu.memory_space<vmem>>, %arg4: memref<1x128xf32, #tpu.memory_space<vmem>>, %arg5: memref<1x16x16x128xbf16, #tpu.memory_space<vmem>>) attributes {dimension_semantics = [#tpu.dimension_semantics<parallel>, #tpu.dimension_semantics<parallel>], iteration_bounds = array<i64: 2, 1>, scalar_prefetch = 0 : i64, scratch_operands = 0 : i64, tpu.core_type = #tpu.core_type<tc>, window_params = [{transform_indices = @transform_0, window_bounds = array<i64: 1, 16, 16, 128>}, {pipeline_mode = #tpu.pipeline_mode<synchronous>, transform_indices = @transform_1, window_bounds = array<i64: 1, 128>}, {pipeline_mode = #tpu.pipeline_mode<synchronous>, transform_indices = @transform_2, window_bounds = array<i64: 1, 128>}, {transform_indices = @transform_3, window_bounds = array<i64: 1, 16, 16, 128>}]} {
    %c0 = arith.constant 0 : index
    %c0_0 = arith.constant 0 : index
    %c0_1 = arith.constant 0 : index
    %c0_2 = arith.constant 0 : index
    %0 = vector.load %arg2[%c0, %c0_0, %c0_1, %c0_2] : memref<1x16x16x128xf32, #tpu.memory_space<vmem>>, vector<1x16x16x128xf32>
    %1 = vector.shape_cast %0 : vector<1x16x16x128xf32> to vector<16x16x128xf32>
    %c0_3 = arith.constant 0 : index
    %c0_4 = arith.constant 0 : index
    %2 = vector.load %arg3[%c0_3, %c0_4] : memref<1x128xf32, #tpu.memory_space<vmem>>, vector<1x128xf32>
    %3 = vector.shape_cast %2 : vector<1x128xf32> to vector<1x1x128xf32>
    %4 = vector.broadcast %3 : vector<1x1x128xf32> to vector<16x16x128xf32>
    %5 = arith.mulf %1, %4 : vector<16x16x128xf32>
    %c0_5 = arith.constant 0 : index
    %c0_6 = arith.constant 0 : index
    %6 = vector.load %arg4[%c0_5, %c0_6] : memref<1x128xf32, #tpu.memory_space<vmem>>, vector<1x128xf32>
    %7 = vector.shape_cast %6 : vector<1x128xf32> to vector<1x1x128xf32>
    %8 = vector.broadcast %7 : vector<1x1x128xf32> to vector<16x16x128xf32>
    %9 = arith.addf %5, %8 : vector<16x16x128xf32>
    %cst = arith.constant 0.000000e+00 : f32
    %10 = vector.broadcast %cst : f32 to vector<16x16x128xf32>
    %11 = arith.maximumf %9, %10 : vector<16x16x128xf32>
    %12 = arith.truncf %11 : vector<16x16x128xf32> to vector<16x16x128xbf16>
    %c0_7 = arith.constant 0 : index
    %c0_8 = arith.constant 0 : index
    %c0_9 = arith.constant 0 : index
    %c0_10 = arith.constant 0 : index
    %13 = vector.load %arg5[%c0_7, %c0_8, %c0_9, %c0_10] : memref<1x16x16x128xbf16, #tpu.memory_space<vmem>>, vector<1x16x16x128xbf16>
    %14 = vector.shape_cast %13 : vector<1x16x16x128xbf16> to vector<16x16x128xbf16>
    %15 = vector.shape_cast %12 : vector<16x16x128xbf16> to vector<1x16x16x128xbf16>
    tpu.vector_store %arg5[%c0_7, %c0_8, %c0_9, %c0_10], %15 {strides = array<i32>} : memref<1x16x16x128xbf16, #tpu.memory_space<vmem>>, vector<1x16x16x128xbf16>,
    return
  }
  func.func @transform_0(%arg0: i32, %arg1: i32) -> (i32, i32, i32, i32) {
    %c0_i32 = arith.constant 0 : i32
    %c0_i32_0 = arith.constant 0 : i32
    %c0_i32_1 = arith.constant 0 : i32
    return %arg0, %arg1, %c0_i32, %c0_i32_0 : i32, i32, i32, i32
  }
  func.func @transform_1(%arg0: i32, %arg1: i32) -> (i32, i32) {
    %c0_i32 = arith.constant 0 : i32
    %c0_i32_0 = arith.constant 0 : i32
    %c0_i32_1 = arith.constant 0 : i32
    return %c0_i32, %c0_i32_0 : i32, i32
  }
  func.func @transform_2(%arg0: i32, %arg1: i32) -> (i32, i32) {
    %c0_i32 = arith.constant 0 : i32
    %c0_i32_0 = arith.constant 0 : i32
    %c0_i32_1 = arith.constant 0 : i32
    return %c0_i32, %c0_i32_0 : i32, i32
  }
  func.func @transform_3(%arg0: i32, %arg1: i32) -> (i32, i32, i32, i32) {
    %c0_i32 = arith.constant 0 : i32
    %c0_i32_0 = arith.constant 0 : i32
    %c0_i32_1 = arith.constant 0 : i32
    return %arg0, %arg1, %c0_i32, %c0_i32_0 : i32, i32, i32, i32
  }
}

module attributes {stable_mosaic.version = 11 : i64} {
  func.func @_bn_relu_kernel(%arg0: i32, %arg1: i32, %arg2: memref<1x16x16x128xf32, #tpu.memory_space<vmem>>, %arg3: memref<1x128xf32, #tpu.memory_space<vmem>>, %arg4: memref<1x128xf32, #tpu.memory_space<vmem>>, %arg5: memref<1x16x16x128xf32, #tpu.memory_space<vmem>>) attributes {dimension_semantics = [#tpu.dimension_semantics<parallel>, #tpu.dimension_semantics<parallel>], iteration_bounds = array<i64: 2, 1>, scalar_prefetch = 0 : i64, scratch_operands = 0 : i64, tpu.core_type = #tpu.core_type<tc>, window_params = [{transform_indices = @transform_0, window_bounds = array<i64: 1, 16, 16, 128>}, {pipeline_mode = #tpu.pipeline_mode<synchronous>, transform_indices = @transform_1, window_bounds = array<i64: 1, 128>}, {pipeline_mode = #tpu.pipeline_mode<synchronous>, transform_indices = @transform_2, window_bounds = array<i64: 1, 128>}, {transform_indices = @transform_3, window_bounds = array<i64: 1, 16, 16, 128>}]} {
    %c0 = arith.constant 0 : index
    %c0_0 = arith.constant 0 : index
    %c0_1 = arith.constant 0 : index
    %c0_2 = arith.constant 0 : index
    %0 = vector.load %arg2[%c0, %c0_0, %c0_1, %c0_2] : memref<1x16x16x128xf32, #tpu.memory_space<vmem>>, vector<1x16x16x128xf32>
    %1 = vector.shape_cast %0 : vector<1x16x16x128xf32> to vector<16x16x128xf32>
    %c0_3 = arith.constant 0 : index
    %c0_4 = arith.constant 0 : index
    %2 = vector.load %arg3[%c0_3, %c0_4] : memref<1x128xf32, #tpu.memory_space<vmem>>, vector<1x128xf32>
    %3 = vector.shape_cast %2 : vector<1x128xf32> to vector<1x1x128xf32>
    %4 = vector.broadcast %3 : vector<1x1x128xf32> to vector<16x16x128xf32>
    %5 = arith.mulf %1, %4 : vector<16x16x128xf32>
    %c0_5 = arith.constant 0 : index
    %c0_6 = arith.constant 0 : index
    %6 = vector.load %arg4[%c0_5, %c0_6] : memref<1x128xf32, #tpu.memory_space<vmem>>, vector<1x128xf32>
    %7 = vector.shape_cast %6 : vector<1x128xf32> to vector<1x1x128xf32>
    %8 = vector.broadcast %7 : vector<1x1x128xf32> to vector<16x16x128xf32>
    %9 = arith.addf %5, %8 : vector<16x16x128xf32>
    %cst = arith.constant 0.000000e+00 : f32
    %10 = vector.broadcast %cst : f32 to vector<16x16x128xf32>
    %11 = arith.maximumf %9, %10 : vector<16x16x128xf32>
    %c0_7 = arith.constant 0 : index
    %c0_8 = arith.constant 0 : index
    %c0_9 = arith.constant 0 : index
    %c0_10 = arith.constant 0 : index
    %12 = vector.load %arg5[%c0_7, %c0_8, %c0_9, %c0_10] : memref<1x16x16x128xf32, #tpu.memory_space<vmem>>, vector<1x16x16x128xf32>
    %13 = vector.shape_cast %12 : vector<1x16x16x128xf32> to vector<16x16x128xf32>
    %14 = vector.shape_cast %11 : vector<16x16x128xf32> to vector<1x16x16x128xf32>
    tpu.vector_store %arg5[%c0_7, %c0_8, %c0_9, %c0_10], %14 {strides = array<i32>} : memref<1x16x16x128xf32, #tpu.memory_space<vmem>>, vector<1x16x16x128xf32>,
    return
  }
  func.func @transform_0(%arg0: i32, %arg1: i32) -> (i32, i32, i32, i32) {
    %c0_i32 = arith.constant 0 : i32
    %c0_i32_0 = arith.constant 0 : i32
    %c0_i32_1 = arith.constant 0 : i32
    return %arg0, %arg1, %c0_i32, %c0_i32_0 : i32, i32, i32, i32
  }
  func.func @transform_1(%arg0: i32, %arg1: i32) -> (i32, i32) {
    %c0_i32 = arith.constant 0 : i32
    %c0_i32_0 = arith.constant 0 : i32
    %c0_i32_1 = arith.constant 0 : i32
    return %c0_i32, %c0_i32_0 : i32, i32
  }
  func.func @transform_2(%arg0: i32, %arg1: i32) -> (i32, i32) {
    %c0_i32 = arith.constant 0 : i32
    %c0_i32_0 = arith.constant 0 : i32
    %c0_i32_1 = arith.constant 0 : i32
    return %c0_i32, %c0_i32_0 : i32, i32
  }
  func.func @transform_3(%arg0: i32, %arg1: i32) -> (i32, i32, i32, i32) {
    %c0_i32 = arith.constant 0 : i32
    %c0_i32_0 = arith.constant 0 : i32
    %c0_i32_1 = arith.constant 0 : i32
    return %arg0, %arg1, %c0_i32, %c0_i32_0 : i32, i32, i32, i32
  }
}

module attributes {stable_mosaic.version = 11 : i64} {
  func.func @_conv_stats_kernel(%arg0: i32, %arg1: i32, %arg2: memref<1x16x18x8xbf16, #tpu.memory_space<vmem>>, %arg3: memref<1x2x18x8xbf16, #tpu.memory_space<vmem>>, %arg4: memref<9x8x128xbf16, #tpu.memory_space<vmem>>, %arg5: memref<1x16x16x128xf32, #tpu.memory_space<vmem>>, %arg6: memref<1x1x8x128xf32, #tpu.memory_space<vmem>>, %arg7: memref<1x1x8x128xf32, #tpu.memory_space<vmem>>) attributes {dimension_semantics = [#tpu.dimension_semantics<parallel>, #tpu.dimension_semantics<parallel>], iteration_bounds = array<i64: 2, 1>, scalar_prefetch = 0 : i64, scratch_operands = 0 : i64, tpu.core_type = #tpu.core_type<tc>, window_params = [{transform_indices = @transform_0, window_bounds = array<i64: 1, 16, 18, 8>}, {transform_indices = @transform_1, window_bounds = array<i64: 1, 2, 18, 8>}, {pipeline_mode = #tpu.pipeline_mode<synchronous>, transform_indices = @transform_2, window_bounds = array<i64: 9, 8, 128>}, {transform_indices = @transform_3, window_bounds = array<i64: 1, 16, 16, 128>}, {transform_indices = @transform_4, window_bounds = array<i64: 1, 1, 8, 128>}, {transform_indices = @transform_5, window_bounds = array<i64: 1, 1, 8, 128>}]} {
    %c0 = arith.constant 0 : index
    %c0_0 = arith.constant 0 : index
    %c0_1 = arith.constant 0 : index
    %c0_2 = arith.constant 0 : index
    %0 = vector.load %arg2[%c0, %c0_0, %c0_1, %c0_2] : memref<1x16x18x8xbf16, #tpu.memory_space<vmem>>, vector<1x16x18x8xbf16>
    %1 = vector.shape_cast %0 : vector<1x16x18x8xbf16> to vector<16x18x8xbf16>
    %c0_3 = arith.constant 0 : index
    %c0_4 = arith.constant 0 : index
    %c0_5 = arith.constant 0 : index
    %c0_6 = arith.constant 0 : index
    %2 = vector.load %arg3[%c0_3, %c0_4, %c0_5, %c0_6] : memref<1x2x18x8xbf16, #tpu.memory_space<vmem>>, vector<1x2x18x8xbf16>
    %3 = vector.shape_cast %2 : vector<1x2x18x8xbf16> to vector<2x18x8xbf16>
    %4 = tpu.concatenate %1, %3 in 0 : vector<16x18x8xbf16>, vector<2x18x8xbf16> -> vector<18x18x8xbf16>
    %5 = arith.extf %4 : vector<18x18x8xbf16> to vector<18x18x8xf32>
    %cst = arith.constant 0.000000e+00 : f32
    %6 = vector.broadcast %cst : f32 to vector<256x128xf32>
    %7 = vector.extract_strided_slice %5 {offsets = [0, 0, 0], sizes = [16, 16, 8], strides = [1, 1, 1]} : vector<18x18x8xf32> to vector<16x16x8xf32>
    %8 = vector.shape_cast %7 : vector<16x16x8xf32> to vector<256x8xf32>
    %9 = arith.truncf %8 : vector<256x8xf32> to vector<256x8xbf16>
    %c0_7 = arith.constant 0 : index
    %c0_8 = arith.constant 0 : index
    %c0_9 = arith.constant 0 : index
    %10 = vector.load %arg4[%c0_7, %c0_8, %c0_9] : memref<9x8x128xbf16, #tpu.memory_space<vmem>>, vector<1x8x128xbf16>
    %11 = vector.shape_cast %10 : vector<1x8x128xbf16> to vector<8x128xbf16>
    %cst_10 = arith.constant dense<0.000000e+00> : vector<256x128xf32>
    %12 = tpu.matmul %9, %11, %cst_10 {dimension_numbers = #tpu.dot_dimension_numbers<[1], [0], [0], [1], [0, 0, 1, 1], [], []>} : vector<256x8xbf16>, vector<8x128xbf16>, vector<256x128xf32> -> vector<256x128xf32>
    %13 = arith.addf %6, %12 : vector<256x128xf32>
    %14 = vector.extract_strided_slice %5 {offsets = [0, 1, 0], sizes = [16, 16, 8], strides = [1, 1, 1]} : vector<18x18x8xf32> to vector<16x16x8xf32>
    %15 = vector.shape_cast %14 : vector<16x16x8xf32> to vector<256x8xf32>
    %16 = arith.truncf %15 : vector<256x8xf32> to vector<256x8xbf16>
    %c1 = arith.constant 1 : index
    %c0_11 = arith.constant 0 : index
    %c0_12 = arith.constant 0 : index
    %17 = vector.load %arg4[%c1, %c0_11, %c0_12] : memref<9x8x128xbf16, #tpu.memory_space<vmem>>, vector<1x8x128xbf16>
    %18 = vector.shape_cast %17 : vector<1x8x128xbf16> to vector<8x128xbf16>
    %cst_13 = arith.constant dense<0.000000e+00> : vector<256x128xf32>
    %19 = tpu.matmul %16, %18, %cst_13 {dimension_numbers = #tpu.dot_dimension_numbers<[1], [0], [0], [1], [0, 0, 1, 1], [], []>} : vector<256x8xbf16>, vector<8x128xbf16>, vector<256x128xf32> -> vector<256x128xf32>
    %20 = arith.addf %13, %19 : vector<256x128xf32>
    %21 = vector.extract_strided_slice %5 {offsets = [0, 2, 0], sizes = [16, 16, 8], strides = [1, 1, 1]} : vector<18x18x8xf32> to vector<16x16x8xf32>
    %22 = vector.shape_cast %21 : vector<16x16x8xf32> to vector<256x8xf32>
    %23 = arith.truncf %22 : vector<256x8xf32> to vector<256x8xbf16>
    %c2 = arith.constant 2 : index
    %c0_14 = arith.constant 0 : index
    %c0_15 = arith.constant 0 : index
    %24 = vector.load %arg4[%c2, %c0_14, %c0_15] : memref<9x8x128xbf16, #tpu.memory_space<vmem>>, vector<1x8x128xbf16>
    %25 = vector.shape_cast %24 : vector<1x8x128xbf16> to vector<8x128xbf16>
    %cst_16 = arith.constant dense<0.000000e+00> : vector<256x128xf32>
    %26 = tpu.matmul %23, %25, %cst_16 {dimension_numbers = #tpu.dot_dimension_numbers<[1], [0], [0], [1], [0, 0, 1, 1], [], []>} : vector<256x8xbf16>, vector<8x128xbf16>, vector<256x128xf32> -> vector<256x128xf32>
    %27 = arith.addf %20, %26 : vector<256x128xf32>
    %28 = vector.extract_strided_slice %5 {offsets = [1, 0, 0], sizes = [16, 16, 8], strides = [1, 1, 1]} : vector<18x18x8xf32> to vector<16x16x8xf32>
    %29 = vector.shape_cast %28 : vector<16x16x8xf32> to vector<256x8xf32>
    %30 = arith.truncf %29 : vector<256x8xf32> to vector<256x8xbf16>
    %c3 = arith.constant 3 : index
    %c0_17 = arith.constant 0 : index
    %c0_18 = arith.constant 0 : index
    %31 = vector.load %arg4[%c3, %c0_17, %c0_18] : memref<9x8x128xbf16, #tpu.memory_space<vmem>>, vector<1x8x128xbf16>
    %32 = vector.shape_cast %31 : vector<1x8x128xbf16> to vector<8x128xbf16>
    %cst_19 = arith.constant dense<0.000000e+00> : vector<256x128xf32>
    %33 = tpu.matmul %30, %32, %cst_19 {dimension_numbers = #tpu.dot_dimension_numbers<[1], [0], [0], [1], [0, 0, 1, 1], [], []>} : vector<256x8xbf16>, vector<8x128xbf16>, vector<256x128xf32> -> vector<256x128xf32>
    %34 = arith.addf %27, %33 : vector<256x128xf32>
    %35 = vector.extract_strided_slice %5 {offsets = [1, 1, 0], sizes = [16, 16, 8], strides = [1, 1, 1]} : vector<18x18x8xf32> to vector<16x16x8xf32>
    %36 = vector.shape_cast %35 : vector<16x16x8xf32> to vector<256x8xf32>
    %37 = arith.truncf %36 : vector<256x8xf32> to vector<256x8xbf16>
    %c4 = arith.constant 4 : index
    %c0_20 = arith.constant 0 : index
    %c0_21 = arith.constant 0 : index
    %38 = vector.load %arg4[%c4, %c0_20, %c0_21] : memref<9x8x128xbf16, #tpu.memory_space<vmem>>, vector<1x8x128xbf16>
    %39 = vector.shape_cast %38 : vector<1x8x128xbf16> to vector<8x128xbf16>
    %cst_22 = arith.constant dense<0.000000e+00> : vector<256x128xf32>
    %40 = tpu.matmul %37, %39, %cst_22 {dimension_numbers = #tpu.dot_dimension_numbers<[1], [0], [0], [1], [0, 0, 1, 1], [], []>} : vector<256x8xbf16>, vector<8x128xbf16>, vector<256x128xf32> -> vector<256x128xf32>
    %41 = arith.addf %34, %40 : vector<256x128xf32>
    %42 = vector.extract_strided_slice %5 {offsets = [1, 2, 0], sizes = [16, 16, 8], strides = [1, 1, 1]} : vector<18x18x8xf32> to vector<16x16x8xf32>
    %43 = vector.shape_cast %42 : vector<16x16x8xf32> to vector<256x8xf32>
    %44 = arith.truncf %43 : vector<256x8xf32> to vector<256x8xbf16>
    %c5 = arith.constant 5 : index
    %c0_23 = arith.constant 0 : index
    %c0_24 = arith.constant 0 : index
    %45 = vector.load %arg4[%c5, %c0_23, %c0_24] : memref<9x8x128xbf16, #tpu.memory_space<vmem>>, vector<1x8x128xbf16>
    %46 = vector.shape_cast %45 : vector<1x8x128xbf16> to vector<8x128xbf16>
    %cst_25 = arith.constant dense<0.000000e+00> : vector<256x128xf32>
    %47 = tpu.matmul %44, %46, %cst_25 {dimension_numbers = #tpu.dot_dimension_numbers<[1], [0], [0], [1], [0, 0, 1, 1], [], []>} : vector<256x8xbf16>, vector<8x128xbf16>, vector<256x128xf32> -> vector<256x128xf32>
    %48 = arith.addf %41, %47 : vector<256x128xf32>
    %49 = vector.extract_strided_slice %5 {offsets = [2, 0, 0], sizes = [16, 16, 8], strides = [1, 1, 1]} : vector<18x18x8xf32> to vector<16x16x8xf32>
    %50 = vector.shape_cast %49 : vector<16x16x8xf32> to vector<256x8xf32>
    %51 = arith.truncf %50 : vector<256x8xf32> to vector<256x8xbf16>
    %c6 = arith.constant 6 : index
    %c0_26 = arith.constant 0 : index
    %c0_27 = arith.constant 0 : index
    %52 = vector.load %arg4[%c6, %c0_26, %c0_27] : memref<9x8x128xbf16, #tpu.memory_space<vmem>>, vector<1x8x128xbf16>
    %53 = vector.shape_cast %52 : vector<1x8x128xbf16> to vector<8x128xbf16>
    %cst_28 = arith.constant dense<0.000000e+00> : vector<256x128xf32>
    %54 = tpu.matmul %51, %53, %cst_28 {dimension_numbers = #tpu.dot_dimension_numbers<[1], [0], [0], [1], [0, 0, 1, 1], [], []>} : vector<256x8xbf16>, vector<8x128xbf16>, vector<256x128xf32> -> vector<256x128xf32>
    %55 = arith.addf %48, %54 : vector<256x128xf32>
    %56 = vector.extract_strided_slice %5 {offsets = [2, 1, 0], sizes = [16, 16, 8], strides = [1, 1, 1]} : vector<18x18x8xf32> to vector<16x16x8xf32>
    %57 = vector.shape_cast %56 : vector<16x16x8xf32> to vector<256x8xf32>
    %58 = arith.truncf %57 : vector<256x8xf32> to vector<256x8xbf16>
    %c7 = arith.constant 7 : index
    %c0_29 = arith.constant 0 : index
    %c0_30 = arith.constant 0 : index
    %59 = vector.load %arg4[%c7, %c0_29, %c0_30] : memref<9x8x128xbf16, #tpu.memory_space<vmem>>, vector<1x8x128xbf16>
    %60 = vector.shape_cast %59 : vector<1x8x128xbf16> to vector<8x128xbf16>
    %cst_31 = arith.constant dense<0.000000e+00> : vector<256x128xf32>
    %61 = tpu.matmul %58, %60, %cst_31 {dimension_numbers = #tpu.dot_dimension_numbers<[1], [0], [0], [1], [0, 0, 1, 1], [], []>} : vector<256x8xbf16>, vector<8x128xbf16>, vector<256x128xf32> -> vector<256x128xf32>
    %62 = arith.addf %55, %61 : vector<256x128xf32>
    %63 = vector.extract_strided_slice %5 {offsets = [2, 2, 0], sizes = [16, 16, 8], strides = [1, 1, 1]} : vector<18x18x8xf32> to vector<16x16x8xf32>
    %64 = vector.shape_cast %63 : vector<16x16x8xf32> to vector<256x8xf32>
    %65 = arith.truncf %64 : vector<256x8xf32> to vector<256x8xbf16>
    %c8 = arith.constant 8 : index
    %c0_32 = arith.constant 0 : index
    %c0_33 = arith.constant 0 : index
    %66 = vector.load %arg4[%c8, %c0_32, %c0_33] : memref<9x8x128xbf16, #tpu.memory_space<vmem>>, vector<1x8x128xbf16>
    %67 = vector.shape_cast %66 : vector<1x8x128xbf16> to vector<8x128xbf16>
    %cst_34 = arith.constant dense<0.000000e+00> : vector<256x128xf32>
    %68 = tpu.matmul %65, %67, %cst_34 {dimension_numbers = #tpu.dot_dimension_numbers<[1], [0], [0], [1], [0, 0, 1, 1], [], []>} : vector<256x8xbf16>, vector<8x128xbf16>, vector<256x128xf32> -> vector<256x128xf32>
    %69 = arith.addf %62, %68 : vector<256x128xf32>
    %70 = vector.shape_cast %69 : vector<256x128xf32> to vector<16x16x128xf32>
    %c0_35 = arith.constant 0 : index
    %c0_36 = arith.constant 0 : index
    %c0_37 = arith.constant 0 : index
    %c0_38 = arith.constant 0 : index
    %71 = vector.load %arg5[%c0_35, %c0_36, %c0_37, %c0_38] : memref<1x16x16x128xf32, #tpu.memory_space<vmem>>, vector<1x16x16x128xf32>
    %72 = vector.shape_cast %71 : vector<1x16x16x128xf32> to vector<16x16x128xf32>
    %73 = vector.shape_cast %70 : vector<16x16x128xf32> to vector<1x16x16x128xf32>
    tpu.vector_store %arg5[%c0_35, %c0_36, %c0_37, %c0_38], %73 {strides = array<i32>} : memref<1x16x16x128xf32, #tpu.memory_space<vmem>>, vector<1x16x16x128xf32>,
    %c16_i32 = arith.constant 16 : i32
    %74 = arith.muli %arg1, %c16_i32 : i32
    %75 = tpu.iota {dimensions = array<i32: 0>} : vector<16x16x1xi32>
    %76 = vector.broadcast %74 : i32 to vector<16x16x1xi32>
    %77 = arith.addi %76, %75 : vector<16x16x1xi32>
    %c16_i32_39 = arith.constant 16 : i32
    %78 = vector.broadcast %c16_i32_39 : i32 to vector<16x16x1xi32>
    %79 = arith.cmpi slt, %77, %78 : vector<16x16x1xi32>
    %80 = arith.extui %79 : vector<16x16x1xi1> to vector<16x16x1xi32>
    %81 = arith.sitofp %80 : vector<16x16x1xi32> to vector<16x16x1xf32>
    %82 = vector.broadcast %81 : vector<16x16x1xf32> to vector<16x16x128xf32>
    %83 = arith.mulf %70, %82 : vector<16x16x128xf32>
    %cst_40 = arith.constant dense<0.000000e+00> : vector<128xf32>
    %84 = vector.multi_reduction <add>, %83, %cst_40 [0, 1] : vector<16x16x128xf32> to vector<128xf32>
    %85 = vector.shape_cast %84 : vector<128xf32> to vector<1x1x128xf32>
    %86 = arith.mulf %83, %83 : vector<16x16x128xf32>
    %cst_41 = arith.constant dense<0.000000e+00> : vector<128xf32>
    %87 = vector.multi_reduction <add>, %86, %cst_41 [0, 1] : vector<16x16x128xf32> to vector<128xf32>
    %88 = vector.shape_cast %87 : vector<128xf32> to vector<1x1x128xf32>
    %89 = vector.shape_cast %85 : vector<1x1x128xf32> to vector<1x128xf32>
    %90 = vector.shape_cast %89 : vector<1x128xf32> to vector<1x128xf32>
    %91 = vector.broadcast %90 : vector<1x128xf32> to vector<8x128xf32>
    %c0_42 = arith.constant 0 : index
    %c0_43 = arith.constant 0 : index
    %c0_44 = arith.constant 0 : index
    %c0_45 = arith.constant 0 : index
    %92 = vector.load %arg6[%c0_42, %c0_43, %c0_44, %c0_45] : memref<1x1x8x128xf32, #tpu.memory_space<vmem>>, vector<1x1x8x128xf32>
    %93 = vector.shape_cast %92 : vector<1x1x8x128xf32> to vector<8x128xf32>
    %94 = vector.shape_cast %91 : vector<8x128xf32> to vector<1x1x8x128xf32>
    tpu.vector_store %arg6[%c0_42, %c0_43, %c0_44, %c0_45], %94 {strides = array<i32>} : memref<1x1x8x128xf32, #tpu.memory_space<vmem>>, vector<1x1x8x128xf32>,
    %95 = vector.shape_cast %88 : vector<1x1x128xf32> to vector<1x128xf32>
    %96 = vector.shape_cast %95 : vector<1x128xf32> to vector<1x128xf32>
    %97 = vector.broadcast %96 : vector<1x128xf32> to vector<8x128xf32>
    %c0_46 = arith.constant 0 : index
    %c0_47 = arith.constant 0 : index
    %c0_48 = arith.constant 0 : index
    %c0_49 = arith.constant 0 : index
    %98 = vector.load %arg7[%c0_46, %c0_47, %c0_48, %c0_49] : memref<1x1x8x128xf32, #tpu.memory_space<vmem>>, vector<1x1x8x128xf32>
    %99 = vector.shape_cast %98 : vector<1x1x8x128xf32> to vector<8x128xf32>
    %100 = vector.shape_cast %97 : vector<8x128xf32> to vector<1x1x8x128xf32>
    tpu.vector_store %arg7[%c0_46, %c0_47, %c0_48, %c0_49], %100 {strides = array<i32>} : memref<1x1x8x128xf32, #tpu.memory_space<vmem>>, vector<1x1x8x128xf32>,
    return
  }
  func.func @transform_0(%arg0: i32, %arg1: i32) -> (i32, i32, i32, i32) {
    %c0_i32 = arith.constant 0 : i32
    %c0_i32_0 = arith.constant 0 : i32
    %c0_i32_1 = arith.constant 0 : i32
    return %arg0, %arg1, %c0_i32, %c0_i32_0 : i32, i32, i32, i32
  }
  func.func @transform_1(%arg0: i32, %arg1: i32) -> (i32, i32, i32, i32) {
    %c1_i32 = arith.constant 1 : i32
    %0 = arith.addi %arg1, %c1_i32 : i32
    %c8_i32 = arith.constant 8 : i32
    %1 = arith.muli %0, %c8_i32 : i32
    %c0_i32 = arith.constant 0 : i32
    %c0_i32_0 = arith.constant 0 : i32
    %c0_i32_1 = arith.constant 0 : i32
    return %arg0, %1, %c0_i32, %c0_i32_0 : i32, i32, i32, i32
  }
  func.func @transform_2(%arg0: i32, %arg1: i32) -> (i32, i32, i32) {
    %c0_i32 = arith.constant 0 : i32
    %c0_i32_0 = arith.constant 0 : i32
    %c0_i32_1 = arith.constant 0 : i32
    %c0_i32_2 = arith.constant 0 : i32
    return %c0_i32, %c0_i32_0, %c0_i32_1 : i32, i32, i32
  }
  func.func @transform_3(%arg0: i32, %arg1: i32) -> (i32, i32, i32, i32) {
    %c0_i32 = arith.constant 0 : i32
    %c0_i32_0 = arith.constant 0 : i32
    %c0_i32_1 = arith.constant 0 : i32
    return %arg0, %arg1, %c0_i32, %c0_i32_0 : i32, i32, i32, i32
  }
  func.func @transform_4(%arg0: i32, %arg1: i32) -> (i32, i32, i32, i32) {
    %c0_i32 = arith.constant 0 : i32
    %c0_i32_0 = arith.constant 0 : i32
    %c0_i32_1 = arith.constant 0 : i32
    return %arg0, %arg1, %c0_i32, %c0_i32_0 : i32, i32, i32, i32
  }
  func.func @transform_5(%arg0: i32, %arg1: i32) -> (i32, i32, i32, i32) {
    %c0_i32 = arith.constant 0 : i32
    %c0_i32_0 = arith.constant 0 : i32
    %c0_i32_1 = arith.constant 0 : i32
    return %arg0, %arg1, %c0_i32, %c0_i32_0 : i32, i32, i32, i32
  }
}

</mosaic_0001>

<llo_original>
// kernel: double_conv.5
$region0: #{double_conv.5}
  #allocation0 [shape = 'u32[]', space=smem, size = 0x4, offset = 0x4, fixed_abs, tag = 'smem constant byte address 0x4 - core index']
  #allocation1 [shape = 'u32[144,128]{1,0:T(1,128)}', space=vmem, size = 0x12000, scoped, tag = 'internal scratch']
  %s0 = inlined_call_operand.vmem [shape: f32[2,16,16,128], index: 0, kind: input, shape index: {}]
  %s1 = inlined_call_operand.vmem [shape: f32[1,128], index: 1, kind: input, shape index: {}]
  %s2 = inlined_call_operand.vmem [shape: f32[1,128], index: 2, kind: input, shape index: {}]
  %s3 = inlined_call_operand.vmem [shape: bf16[2,16,16,128], index: 3, kind: output, shape index: {}]
  %s4 = sld [smem:[#allocation0]]
  $region45: #{double_conv.5} parent=0
    _
  %s6 = ssub.s32 1, %s4
  %s7 = scalar_select 0, %s6, %s4
  loop: start=0, step=1, limit=4
  $region2: #{double_conv.5} parent=0 // loop_pre_header
    _
  $region3: #{double_conv.5} parent=0 // loop_header
    %s9 = sphi 0, %s13
    %p10 = scmp.ge.s32.totalorder %s9, 4
    %s16 = sphi 0, %s28
    %s17 = sphi 0, %s24
    %s18 = sphi 0, %s16
    %s19 = sphi 0, %s17
    %s20 = sphi 0, %s18
    %s21 = sphi 0, %s19
    %s33 = sphi 0, %s35
    %s36 = sphi 0, %s33
    %s37 = sphi 0, %s36
    %s53 = sphi 0, %s37
    %s57 = sphi 0, %s57
    %s59 = sphi 0, %s57
    %s60 = sphi 0, %s59
    %s74 = sphi 0, %s60
    %s78 = sphi 0, %s78
    %s80 = sphi 0, %s78
    %s81 = sphi 0, %s80
    %s95 = sphi 0, %s81
    %s103 = sphi 0, %s105
    %s106 = sphi 0, %s103
    %s107 = sphi 0, %s106
    %s123 = sphi 0, %s107
  $region4: #{double_conv.5} parent=0 // loop_header_branch
    %12 = sbr.rel (%p10) target = $region8
  $region5: #{double_conv.5} parent=0 // loop_body
    %s14 = ssub.s32 %s9, 1
    %s15 = ssub.s32 %s9, 2
    %s22 = sadd.s32 1, %s17
    %p23 = scmp.ge.s32.totalorder %s22, 1
    %s24 = scalar_select %p23, 0, %s22
    %s25 = sadd.s32 1, %s16
    %s26 = scalar_select %p23, %s25, %s16
    %p27 = scmp.ge.s32.totalorder %s26, 2
    %s28 = scalar_select %p27, 0, %s26
    %s29 = ssub.s32 %s16, %s28
    %s30 = ssub.s32 %s17, %s24
    %s31 = sor.u32 %s29, %s30
    %p32 = scmp.eq.s32.totalorder %s31, 0
    %s34 = sadd.s32 %s33, 1
    %s35 = scalar_select %p32, %s33, %s34
    %p38 = pneg %p32
    %p39 = scmp.eq.s32.totalorder %s9, 1
    %p40 = por %p38, %p39
    %p41 = scmp.ne.s32.totalorder %s33, %s36
    %p42 = scmp.eq.s32.totalorder %s9, 0
    %p43 = por %p41, %p42
    %p44 = scmp.ne.s32.totalorder %s33, %s36
    %p45 = scmp.eq.s32.totalorder %s14, 1
    %p46 = por %p44, %p45
    %p47 = scmp.ne.s32.totalorder %s36, %s37
    %p48 = scmp.eq.s32.totalorder %s14, 0
    %p49 = por %p47, %p48
    %p50 = scmp.ne.s32.totalorder %s36, %s37
    %p51 = scmp.eq.s32.totalorder %s15, 1
    %p52 = por %p50, %p51
    %p54 = scmp.ne.s32.totalorder %s37, %s53
    %p55 = scmp.eq.s32.totalorder %s15, 0
    %p56 = por %p54, %p55
    %s58 = sadd.s32 %s57, 1
    %p61 = scmp.eq.s32.totalorder %s9, 1
    %p62 = scmp.ne.s32.totalorder %s57, %s59
    %p63 = scmp.eq.s32.totalorder %s9, 0
    %p64 = por %p62, %p63
    %p65 = scmp.ne.s32.totalorder %s57, %s59
    %p66 = scmp.eq.s32.totalorder %s14, 1
    %p67 = por %p65, %p66
    %p68 = scmp.ne.s32.totalorder %s59, %s60
    %p69 = scmp.eq.s32.totalorder %s14, 0
    %p70 = por %p68, %p69
    %p71 = scmp.ne.s32.totalorder %s59, %s60
    %p72 = scmp.eq.s32.totalorder %s15, 1
    %p73 = por %p71, %p72
    %p75 = scmp.ne.s32.totalorder %s60, %s74
    %p76 = scmp.eq.s32.totalorder %s15, 0
    %p77 = por %p75, %p76
    %s79 = sadd.s32 %s78, 1
    %p82 = scmp.eq.s32.totalorder %s9, 1
    %p83 = scmp.ne.s32.totalorder %s78, %s80
    %p84 = scmp.eq.s32.totalorder %s9, 0
    %p85 = por %p83, %p84
    %p86 = scmp.ne.s32.totalorder %s78, %s80
    %p87 = scmp.eq.s32.totalorder %s14, 1
    %p88 = por %p86, %p87
    %p89 = scmp.ne.s32.totalorder %s80, %s81
    %p90 = scmp.eq.s32.totalorder %s14, 0
    %p91 = por %p89, %p90
    %p92 = scmp.ne.s32.totalorder %s80, %s81
    %p93 = scmp.eq.s32.totalorder %s15, 1
    %p94 = por %p92, %p93
    %p96 = scmp.ne.s32.totalorder %s81, %s95
    %p97 = scmp.eq.s32.totalorder %s15, 0
    %p98 = por %p96, %p97
    %s99 = ssub.s32 %s16, %s28
    %s100 = ssub.s32 %s17, %s24
    %s101 = sor.u32 %s99, %s100
    %p102 = scmp.eq.s32.totalorder %s101, 0
    %s104 = sadd.s32 %s103, 1
    %s105 = scalar_select %p102, %s103, %s104
    %p108 = pneg %p102
    %p109 = scmp.eq.s32.totalorder %s9, 1
    %p110 = por %p108, %p109
    %p111 = scmp.ne.s32.totalorder %s103, %s106
    %p112 = scmp.eq.s32.totalorder %s9, 0
    %p113 = por %p111, %p112
    %p114 = scmp.ne.s32.totalorder %s103, %s106
    %p115 = scmp.eq.s32.totalorder %s14, 1
    %p116 = por %p114, %p115
    %p117 = scmp.ne.s32.totalorder %s106, %s107
    %p118 = scmp.eq.s32.totalorder %s14, 0
    %p119 = por %p117, %p118
    %p120 = scmp.ne.s32.totalorder %s106, %s107
    %p121 = scmp.eq.s32.totalorder %s15, 1
    %p122 = por %p120, %p121
    %p124 = scmp.ne.s32.totalorder %s107, %s123
    %p125 = scmp.eq.s32.totalorder %s15, 0
    %p126 = por %p124, %p125
    %p127 = scmp.le.s32.totalorder 1, %s9
    %p128 = scmp.lt.s32.totalorder %s9, 3
    %p129 = pnand %p127, %p128
    %p130 = pneg %p129
    // Predicated region
    $region9: #{double_conv.5} parent=5 // pred_check
      _
    $region10: #{double_conv.5} parent=5 // pred_check_branch
      %132 = sbr.rel (%p129) target = $region12
    $region11: #{double_conv.5} parent=5 // pred_region
      %s133 = ssub.s32 %s9, 1
      // Predicated region
      $region13: #{double_conv.5} parent=11 // pred_check
        %p134 = pneg %p70
      $region14: #{double_conv.5} parent=11 // pred_check_branch
        %136 = sbr.rel (%p134) target = $region16
      $region15: #{double_conv.5} parent=11 // pred_region
        _
      $region16: #{double_conv.5} parent=11 // pred_fallthru
        _
      // Predicated region
      $region17: #{double_conv.5} parent=11 // pred_check
        %p137 = pneg %p91
      $region18: #{double_conv.5} parent=11 // pred_check_branch
        %139 = sbr.rel (%p137) target = $region20
      $region19: #{double_conv.5} parent=11 // pred_region
        _
      $region20: #{double_conv.5} parent=11 // pred_fallthru
        _
    $region12: #{double_conv.5} parent=5 // pred_fallthru
      _
    %p140 = scmp.lt.s32.totalorder %s9, 2
    // Predicated region
    $region21: #{double_conv.5} parent=5 // pred_check
      %p141 = pneg %p140
    $region22: #{double_conv.5} parent=5 // pred_check_branch
      %143 = sbr.rel (%p141) target = $region24
    $region23: #{double_conv.5} parent=5 // pred_region
      // Predicated region
      $region25: #{double_conv.5} parent=23 // pred_check
        %p144 = pneg %p43
      $region26: #{double_conv.5} parent=23 // pred_check_branch
        %146 = sbr.rel (%p144) target = $region28
      $region27: #{double_conv.5} parent=23 // pred_region
        %s147 = smul.u32 16, %s17
        %p148 = scmp.lt.s32.totalorder %s16, 1
        %s149 = scalar_select %p148, %s16, 1
        %p150 = scmp.lt.s32.totalorder %s147, 15
        %s151 = scalar_select %p150, %s147, 15
        %s152 = smul.addr %s151, 2
        %s153 = smul.addr %s149, 32
        %s154 = sadd.s32 %s152, %s153
        %s155 = smul.addr %s154, 8
        %s156 = scalar_lea.vmem %s0, %s155
        %s157 = smul.u32 16, %s17
      $region28: #{double_conv.5} parent=23 // pred_fallthru
        _
    $region24: #{double_conv.5} parent=5 // pred_fallthru
      _
    %p158 = scmp.le.s32.totalorder 1, %s9
    %p159 = scmp.lt.s32.totalorder %s9, 3
    %p160 = pnand %p158, %p159
    %p161 = pneg %p160
    // Predicated region
    $region29: #{double_conv.5} parent=5 // pred_check
      _
    $region30: #{double_conv.5} parent=5 // pred_check_branch
      %163 = sbr.rel (%p160) target = $region32
    $region31: #{double_conv.5} parent=5 // pred_region
      %s164 = ssub.s32 %s9, 1
      %s165 = smul.u32 16, %s19
      %p166 = scmp.lt.s32.totalorder %s18, 1
      %s167 = scalar_select %p166, %s18, 1
      %p168 = scmp.lt.s32.totalorder %s165, 15
      %s169 = scalar_select %p168, %s165, 15
      %s170 = smul.addr %s169, 2
      %s171 = smul.addr %s167, 32
      %s172 = sadd.s32 %s170, %s171
      %s173 = smul.addr %s172, 8
      %s174 = scalar_lea.vmem %s0, %s173
      %p175 = pneg %p49
      %p176 = pneg %p46
      %p177 = pneg %p70
      %p178 = pneg %p67
      %p179 = pneg %p91
      %p180 = pneg %p88
      %p181 = pneg %p119
      %p182 = pneg %p116
      %s183 = smul.u32 16, %s19
      %p184 = scmp.lt.s32.totalorder %s18, 1
      %s185 = scalar_select %p184, %s18, 1
      %p186 = scmp.lt.s32.totalorder %s183, 15
      %s187 = scalar_select %p186, %s183, 15
      %s188 = smul.addr %s187, 2
      %s189 = smul.addr %s185, 32
      %s190 = sadd.s32 %s188, %s189
      %s191 = smul.addr %s190, 4
      %s192 = scalar_lea.vmem %s3, %s191
      %s193 = smul.u32 16, %s19
      %p194 = scmp.lt.s32.totalorder %s18, 1
      %s195 = scalar_select %p194, %s18, 1
      %p196 = scmp.lt.s32.totalorder %s193, 15
      %s197 = scalar_select %p196, %s193, 15
      %s198 = smul.addr %s197, 2
      %s199 = smul.addr %s195, 32
      %s200 = sadd.s32 %s198, %s199
      %s201 = smul.addr %s200, 8
      %s202 = scalar_lea.vmem %s0, %s201
      %s203 = smul.u32 16, %s19
      %s204 = smul.u32 16, %s19
      %p205 = scmp.lt.s32.totalorder %s18, 1
      %s206 = scalar_select %p205, %s18, 1
      %p207 = scmp.lt.s32.totalorder %s204, 15
      %s208 = scalar_select %p207, %s204, 15
      %s209 = smul.addr %s208, 2
      %s210 = smul.addr %s206, 32
      %s211 = sadd.s32 %s209, %s210
      %s212 = smul.addr %s211, 4
      %s213 = scalar_lea.vmem %s3, %s212
      %s214 = smul.u32 16, %s19
      %v215 = vld [vmem:[%s202] sm:$0xff]
      %v216 = vld [vmem:[%s202 + $0x8] sm:$0xff]
      %v217 = vld [vmem:[%s202 + $0x10] sm:$0xff]
      %v218 = vld [vmem:[%s202 + $0x18] sm:$0xff]
      %v219 = vld [vmem:[%s202 + $0x20] sm:$0xff]
      %v220 = vld [vmem:[%s202 + $0x28] sm:$0xff]
      %v221 = vld [vmem:[%s202 + $0x30] sm:$0xff]
      %v222 = vld [vmem:[%s202 + $0x38] sm:$0xff]
      %v223 = vld [vmem:[%s202 + $0x40] sm:$0xff]
      %v224 = vld [vmem:[%s202 + $0x48] sm:$0xff]
      %v225 = vld [vmem:[%s202 + $0x50] sm:$0xff]
      %v226 = vld [vmem:[%s202 + $0x58] sm:$0xff]
      %v227 = vld [vmem:[%s202 + $0x60] sm:$0xff]
      %v228 = vld [vmem:[%s202 + $0x68] sm:$0xff]
      %v229 = vld [vmem:[%s202 + $0x70] sm:$0xff]
      %v230 = vld [vmem:[%s202 + $0x78] sm:$0xff]
      %v231 = vld [vmem:[%s202 + $0x80] sm:$0xff]
      %v232 = vld [vmem:[%s202 + $0x88] sm:$0xff]
      %v233 = vld [vmem:[%s202 + $0x90] sm:$0xff]
      %v234 = vld [vmem:[%s202 + $0x98] sm:$0xff]
      %v235 = vld [vmem:[%s202 + $0xa0] sm:$0xff]
      %v236 = vld [vmem:[%s202 + $0xa8] sm:$0xff]
      %v237 = vld [vmem:[%s202 + $0xb0] sm:$0xff]
      %v238 = vld [vmem:[%s202 + $0xb8] sm:$0xff]
      %v239 = vld [vmem:[%s202 + $0xc0] sm:$0xff]
      %v240 = vld [vmem:[%s202 + $0xc8] sm:$0xff]
      %v241 = vld [vmem:[%s202 + $0xd0] sm:$0xff]
      %v242 = vld [vmem:[%s202 + $0xd8] sm:$0xff]
      %v243 = vld [vmem:[%s202 + $0xe0] sm:$0xff]
      %v244 = vld [vmem:[%s202 + $0xe8] sm:$0xff]
      %v245 = vld [vmem:[%s202 + $0xf0] sm:$0xff]
      %v246 = vld [vmem:[%s202 + $0xf8] sm:$0xff]
      %v247 = vld [vmem:[%s1] sm:$0x1]
      %v249 = vlaneseq
      %v250 = vshrl.u32 %v249, 7
      %v251 = vsub.s32 0, %v250
      %v252 = vrot.slane %v247, %v251
      %v254 = vmul.f32 %v215, %v252
      %v255 = vmul.f32 %v216, %v252
      %v256 = vmul.f32 %v217, %v252
      %v257 = vmul.f32 %v218, %v252
      %v258 = vmul.f32 %v219, %v252
      %v259 = vmul.f32 %v220, %v252
      %v260 = vmul.f32 %v221, %v252
      %v261 = vmul.f32 %v222, %v252
      %v262 = vmul.f32 %v223, %v252
      %v263 = vmul.f32 %v224, %v252
      %v264 = vmul.f32 %v225, %v252
      %v265 = vmul.f32 %v226, %v252
      %v266 = vmul.f32 %v227, %v252
      %v267 = vmul.f32 %v228, %v252
      %v268 = vmul.f32 %v229, %v252
      %v269 = vmul.f32 %v230, %v252
      %v270 = vmul.f32 %v231, %v252
      %v271 = vmul.f32 %v232, %v252
      %v272 = vmul.f32 %v233, %v252
      %v273 = vmul.f32 %v234, %v252
      %v274 = vmul.f32 %v235, %v252
      %v275 = vmul.f32 %v236, %v252
      %v276 = vmul.f32 %v237, %v252
      %v277 = vmul.f32 %v238, %v252
      %v278 = vmul.f32 %v239, %v252
      %v279 = vmul.f32 %v240, %v252
      %v280 = vmul.f32 %v241, %v252
      %v281 = vmul.f32 %v242, %v252
      %v282 = vmul.f32 %v243, %v252
      %v283 = vmul.f32 %v244, %v252
      %v284 = vmul.f32 %v245, %v252
      %v285 = vmul.f32 %v246, %v252
      %v286 = vld [vmem:[%s2] sm:$0x1]
      %v288 = vlaneseq
      %v289 = vshrl.u32 %v288, 7
      %v290 = vsub.s32 0, %v289
      %v291 = vrot.slane %v286, %v290
      %v293 = vadd.f32 %v254, %v291
      %v294 = vadd.f32 %v255, %v291
      %v295 = vadd.f32 %v256, %v291
      %v296 = vadd.f32 %v257, %v291
      %v297 = vadd.f32 %v258, %v291
      %v298 = vadd.f32 %v259, %v291
      %v299 = vadd.f32 %v260, %v291
      %v300 = vadd.f32 %v261, %v291
      %v301 = vadd.f32 %v262, %v291
      %v302 = vadd.f32 %v263, %v291
      %v303 = vadd.f32 %v264, %v291
      %v304 = vadd.f32 %v265, %v291
      %v305 = vadd.f32 %v266, %v291
      %v306 = vadd.f32 %v267, %v291
      %v307 = vadd.f32 %v268, %v291
      %v308 = vadd.f32 %v269, %v291
      %v309 = vadd.f32 %v270, %v291
      %v310 = vadd.f32 %v271, %v291
      %v311 = vadd.f32 %v272, %v291
      %v312 = vadd.f32 %v273, %v291
      %v313 = vadd.f32 %v274, %v291
      %v314 = vadd.f32 %v275, %v291
      %v315 = vadd.f32 %v276, %v291
      %v316 = vadd.f32 %v277, %v291
      %v317 = vadd.f32 %v278, %v291
      %v318 = vadd.f32 %v279, %v291
      %v319 = vadd.f32 %v280, %v291
      %v320 = vadd.f32 %v281, %v291
      %v321 = vadd.f32 %v282, %v291
      %v322 = vadd.f32 %v283, %v291
      %v323 = vadd.f32 %v284, %v291
      %v324 = vadd.f32 %v285, %v291
      %v325 = vmax.f32 %v293, 0.0
      %v326 = vmax.f32 %v294, 0.0
      %v327 = vmax.f32 %v295, 0.0
      %v328 = vmax.f32 %v296, 0.0
      %v329 = vmax.f32 %v297, 0.0
      %v330 = vmax.f32 %v298, 0.0
      %v331 = vmax.f32 %v299, 0.0
      %v332 = vmax.f32 %v300, 0.0
      %v333 = vmax.f32 %v301, 0.0
      %v334 = vmax.f32 %v302, 0.0
      %v335 = vmax.f32 %v303, 0.0
      %v336 = vmax.f32 %v304, 0.0
      %v337 = vmax.f32 %v305, 0.0
      %v338 = vmax.f32 %v306, 0.0
      %v339 = vmax.f32 %v307, 0.0
      %v340 = vmax.f32 %v308, 0.0
      %v341 = vmax.f32 %v309, 0.0
      %v342 = vmax.f32 %v310, 0.0
      %v343 = vmax.f32 %v311, 0.0
      %v344 = vmax.f32 %v312, 0.0
      %v345 = vmax.f32 %v313, 0.0
      %v346 = vmax.f32 %v314, 0.0
      %v347 = vmax.f32 %v315, 0.0
      %v348 = vmax.f32 %v316, 0.0
      %v349 = vmax.f32 %v317, 0.0
      %v350 = vmax.f32 %v318, 0.0
      %v351 = vmax.f32 %v319, 0.0
      %v352 = vmax.f32 %v320, 0.0
      %v353 = vmax.f32 %v321, 0.0
      %v354 = vmax.f32 %v322, 0.0
      %v355 = vmax.f32 %v323, 0.0
      %v356 = vmax.f32 %v324, 0.0
      %v357 = vpack.c.bf16 %v326, %v325
      %v358 = vpack.c.bf16 %v328, %v327
      %v359 = vpack.c.bf16 %v330, %v329
      %v360 = vpack.c.bf16 %v332, %v331
      %v361 = vpack.c.bf16 %v334, %v333
      %v362 = vpack.c.bf16 %v336, %v335
      %v363 = vpack.c.bf16 %v338, %v337
      %v364 = vpack.c.bf16 %v340, %v339
      %v365 = vpack.c.bf16 %v342, %v341
      %v366 = vpack.c.bf16 %v344, %v343
      %v367 = vpack.c.bf16 %v346, %v345
      %v368 = vpack.c.bf16 %v348, %v347
      %v369 = vpack.c.bf16 %v350, %v349
      %v370 = vpack.c.bf16 %v352, %v351
      %v371 = vpack.c.bf16 %v354, %v353
      %v372 = vpack.c.bf16 %v356, %v355
      %v389 = vunpack.c.l.b16 %v357
      %v390 = vunpack.c.h.b16 %v357
      %v391 = vunpack.c.l.b16 %v358
      %v392 = vunpack.c.h.b16 %v358
      %v393 = vunpack.c.l.b16 %v359
      %v394 = vunpack.c.h.b16 %v359
      %v395 = vunpack.c.l.b16 %v360
      %v396 = vunpack.c.h.b16 %v360
      %v397 = vunpack.c.l.b16 %v361
      %v398 = vunpack.c.h.b16 %v361
      %v399 = vunpack.c.l.b16 %v362
      %v400 = vunpack.c.h.b16 %v362
      %v401 = vunpack.c.l.b16 %v363
      %v402 = vunpack.c.h.b16 %v363
      %v403 = vunpack.c.l.b16 %v364
      %v404 = vunpack.c.h.b16 %v364
      %v405 = vunpack.c.l.b16 %v365
      %v406 = vunpack.c.h.b16 %v365
      %v407 = vunpack.c.l.b16 %v366
      %v408 = vunpack.c.h.b16 %v366
      %v409 = vunpack.c.l.b16 %v367
      %v410 = vunpack.c.h.b16 %v367
      %v411 = vunpack.c.l.b16 %v368
      %v412 = vunpack.c.h.b16 %v368
      %v413 = vunpack.c.l.b16 %v369
      %v414 = vunpack.c.h.b16 %v369
      %v415 = vunpack.c.l.b16 %v370
      %v416 = vunpack.c.h.b16 %v370
      %v417 = vunpack.c.l.b16 %v371
      %v418 = vunpack.c.h.b16 %v371
      %v419 = vunpack.c.l.b16 %v372
      %v420 = vunpack.c.h.b16 %v372
      %v421 = vpack.c.b16 %v389, %v389
      %v422 = vpack.c.b16 %v390, %v390
      %v423 = vpack.c.b16 %v391, %v391
      %v424 = vpack.c.b16 %v392, %v392
      %v425 = vpack.c.b16 %v393, %v393
      %v426 = vpack.c.b16 %v394, %v394
      %v427 = vpack.c.b16 %v395, %v395
      %v428 = vpack.c.b16 %v396, %v396
      %v429 = vpack.c.b16 %v397, %v397
      %v430 = vpack.c.b16 %v398, %v398
      %v431 = vpack.c.b16 %v399, %v399
      %v432 = vpack.c.b16 %v400, %v400
      %v433 = vpack.c.b16 %v401, %v401
      %v434 = vpack.c.b16 %v402, %v402
      %v435 = vpack.c.b16 %v403, %v403
      %v436 = vpack.c.b16 %v404, %v404
      %v437 = vpack.c.b16 %v405, %v405
      %v438 = vpack.c.b16 %v406, %v406
      %v439 = vpack.c.b16 %v407, %v407
      %v440 = vpack.c.b16 %v408, %v408
      %v441 = vpack.c.b16 %v409, %v409
      %v442 = vpack.c.b16 %v410, %v410
      %v443 = vpack.c.b16 %v411, %v411
      %v444 = vpack.c.b16 %v412, %v412
      %v445 = vpack.c.b16 %v413, %v413
      %v446 = vpack.c.b16 %v414, %v414
      %v447 = vpack.c.b16 %v415, %v415
      %v448 = vpack.c.b16 %v416, %v416
      %v449 = vpack.c.b16 %v417, %v417
      %v450 = vpack.c.b16 %v418, %v418
      %v451 = vpack.c.b16 %v419, %v419
      %v452 = vpack.c.b16 %v420, %v420
      %485 = vst [vmem:[%s213] sm:$0xf] %v421
      %486 = vst [vmem:[%s213 + $0x4] sm:$0xf] %v422
      %487 = vst [vmem:[%s213 + $0x8] sm:$0xf] %v423
      %488 = vst [vmem:[%s213 + $0xc] sm:$0xf] %v424
      %489 = vst [vmem:[%s213 + $0x10] sm:$0xf] %v425
      %490 = vst [vmem:[%s213 + $0x14] sm:$0xf] %v426
      %491 = vst [vmem:[%s213 + $0x18] sm:$0xf] %v427
      %492 = vst [vmem:[%s213 + $0x1c] sm:$0xf] %v428
      %493 = vst [vmem:[%s213 + $0x20] sm:$0xf] %v429
      %494 = vst [vmem:[%s213 + $0x24] sm:$0xf] %v430
      %495 = vst [vmem:[%s213 + $0x28] sm:$0xf] %v431
      %496 = vst [vmem:[%s213 + $0x2c] sm:$0xf] %v432
      %497 = vst [vmem:[%s213 + $0x30] sm:$0xf] %v433
      %498 = vst [vmem:[%s213 + $0x34] sm:$0xf] %v434
      %499 = vst [vmem:[%s213 + $0x38] sm:$0xf] %v435
      %500 = vst [vmem:[%s213 + $0x3c] sm:$0xf] %v436
      %501 = vst [vmem:[%s213 + $0x40] sm:$0xf] %v437
      %502 = vst [vmem:[%s213 + $0x44] sm:$0xf] %v438
      %503 = vst [vmem:[%s213 + $0x48] sm:$0xf] %v439
      %504 = vst [vmem:[%s213 + $0x4c] sm:$0xf] %v440
      %505 = vst [vmem:[%s213 + $0x50] sm:$0xf] %v441
      %506 = vst [vmem:[%s213 + $0x54] sm:$0xf] %v442
      %507 = vst [vmem:[%s213 + $0x58] sm:$0xf] %v443
      %508 = vst [vmem:[%s213 + $0x5c] sm:$0xf] %v444
      %509 = vst [vmem:[%s213 + $0x60] sm:$0xf] %v445
      %510 = vst [vmem:[%s213 + $0x64] sm:$0xf] %v446
      %511 = vst [vmem:[%s213 + $0x68] sm:$0xf] %v447
      %512 = vst [vmem:[%s213 + $0x6c] sm:$0xf] %v448
      %513 = vst [vmem:[%s213 + $0x70] sm:$0xf] %v449
      %514 = vst [vmem:[%s213 + $0x74] sm:$0xf] %v450
      %515 = vst [vmem:[%s213 + $0x78] sm:$0xf] %v451
      %516 = vst [vmem:[%s213 + $0x7c] sm:$0xf] %v452
      %s517 = smul.u32 16, %s19
      %p518 = scmp.lt.s32.totalorder %s18, 1
      %s519 = scalar_select %p518, %s18, 1
      %p520 = scmp.lt.s32.totalorder %s517, 15
      %s521 = scalar_select %p520, %s517, 15
      %s522 = smul.addr %s521, 2
      %s523 = smul.addr %s519, 32
      %s524 = sadd.s32 %s522, %s523
      %s525 = smul.addr %s524, 4
      %s526 = scalar_lea.vmem %s3, %s525
      // Predicated region
      $region33: #{double_conv.5} parent=31 // pred_check
        %p527 = pneg %p116
      $region34: #{double_conv.5} parent=31 // pred_check_branch
        %529 = sbr.rel (%p527) target = $region36
      $region35: #{double_conv.5} parent=31 // pred_region
        %s530 = smul.u32 16, %s19
      $region36: #{double_conv.5} parent=31 // pred_fallthru
        _
    $region32: #{double_conv.5} parent=5 // pred_fallthru
      _
    %p531 = scmp.le.s32.totalorder 2, %s9
    // Predicated region
    $region37: #{double_conv.5} parent=5 // pred_check
      %p532 = pneg %p531
    $region38: #{double_conv.5} parent=5 // pred_check_branch
      %534 = sbr.rel (%p532) target = $region40
    $region39: #{double_conv.5} parent=5 // pred_region
      %s535 = ssub.s32 %s9, 2
      // Predicated region
      $region41: #{double_conv.5} parent=39 // pred_check
        %p536 = pneg %p122
      $region42: #{double_conv.5} parent=39 // pred_check_branch
        %538 = sbr.rel (%p536) target = $region44
      $region43: #{double_conv.5} parent=39 // pred_region
        %s539 = smul.u32 16, %s21
        %p540 = scmp.lt.s32.totalorder %s20, 1
        %s541 = scalar_select %p540, %s20, 1
        %p542 = scmp.lt.s32.totalorder %s539, 15
        %s543 = scalar_select %p542, %s539, 15
        %s544 = smul.addr %s543, 2
        %s545 = smul.addr %s541, 32
        %s546 = sadd.s32 %s544, %s545
        %s547 = smul.addr %s546, 4
        %s548 = scalar_lea.vmem %s3, %s547
      $region44: #{double_conv.5} parent=39 // pred_fallthru
        _
    $region40: #{double_conv.5} parent=5 // pred_fallthru
      _
  $region6: #{double_conv.5} parent=0 // loop_footer
    %s13 = sadd.s32 1, %s9
  $region7: #{double_conv.5} parent=0 // loop_footer_branch
    %8 = sbr.rel target = $region3
  $region8: #{double_conv.5} parent=0 // loop_exit
    _

// kernel: double_conv.7
$region0: #{double_conv.7}
  #allocation0 [shape = 'u32[]', space=smem, size = 0x4, offset = 0x4, fixed_abs, tag = 'smem constant byte address 0x4 - core index']
  #allocation1 [shape = 'u32[144,128]{1,0:T(1,128)}', space=vmem, size = 0x12000, scoped, tag = 'internal scratch']
  %s0 = inlined_call_operand.vmem [shape: f32[2,16,16,128], index: 0, kind: input, shape index: {}]
  %s1 = inlined_call_operand.vmem [shape: f32[1,128], index: 1, kind: input, shape index: {}]
  %s2 = inlined_call_operand.vmem [shape: f32[1,128], index: 2, kind: input, shape index: {}]
  %s3 = inlined_call_operand.vmem [shape: f32[2,16,16,128], index: 3, kind: output, shape index: {}]
  %s4 = sld [smem:[#allocation0]]
  $region45: #{double_conv.7} parent=0
    _
  %s6 = ssub.s32 1, %s4
  %s7 = scalar_select 0, %s6, %s4
  loop: start=0, step=1, limit=4
  $region2: #{double_conv.7} parent=0 // loop_pre_header
    _
  $region3: #{double_conv.7} parent=0 // loop_header
    %s9 = sphi 0, %s13
    %p10 = scmp.ge.s32.totalorder %s9, 4
    %s16 = sphi 0, %s28
    %s17 = sphi 0, %s24
    %s18 = sphi 0, %s16
    %s19 = sphi 0, %s17
    %s20 = sphi 0, %s18
    %s21 = sphi 0, %s19
    %s33 = sphi 0, %s35
    %s36 = sphi 0, %s33
    %s37 = sphi 0, %s36
    %s53 = sphi 0, %s37
    %s57 = sphi 0, %s57
    %s59 = sphi 0, %s57
    %s60 = sphi 0, %s59
    %s74 = sphi 0, %s60
    %s78 = sphi 0, %s78
    %s80 = sphi 0, %s78
    %s81 = sphi 0, %s80
    %s95 = sphi 0, %s81
    %s103 = sphi 0, %s105
    %s106 = sphi 0, %s103
    %s107 = sphi 0, %s106
    %s123 = sphi 0, %s107
  $region4: #{double_conv.7} parent=0 // loop_header_branch
    %12 = sbr.rel (%p10) target = $region8
  $region5: #{double_conv.7} parent=0 // loop_body
    %s14 = ssub.s32 %s9, 1
    %s15 = ssub.s32 %s9, 2
    %s22 = sadd.s32 1, %s17
    %p23 = scmp.ge.s32.totalorder %s22, 1
    %s24 = scalar_select %p23, 0, %s22
    %s25 = sadd.s32 1, %s16
    %s26 = scalar_select %p23, %s25, %s16
    %p27 = scmp.ge.s32.totalorder %s26, 2
    %s28 = scalar_select %p27, 0, %s26
    %s29 = ssub.s32 %s16, %s28
    %s30 = ssub.s32 %s17, %s24
    %s31 = sor.u32 %s29, %s30
    %p32 = scmp.eq.s32.totalorder %s31, 0
    %s34 = sadd.s32 %s33, 1
    %s35 = scalar_select %p32, %s33, %s34
    %p38 = pneg %p32
    %p39 = scmp.eq.s32.totalorder %s9, 1
    %p40 = por %p38, %p39
    %p41 = scmp.ne.s32.totalorder %s33, %s36
    %p42 = scmp.eq.s32.totalorder %s9, 0
    %p43 = por %p41, %p42
    %p44 = scmp.ne.s32.totalorder %s33, %s36
    %p45 = scmp.eq.s32.totalorder %s14, 1
    %p46 = por %p44, %p45
    %p47 = scmp.ne.s32.totalorder %s36, %s37
    %p48 = scmp.eq.s32.totalorder %s14, 0
    %p49 = por %p47, %p48
    %p50 = scmp.ne.s32.totalorder %s36, %s37
    %p51 = scmp.eq.s32.totalorder %s15, 1
    %p52 = por %p50, %p51
    %p54 = scmp.ne.s32.totalorder %s37, %s53
    %p55 = scmp.eq.s32.totalorder %s15, 0
    %p56 = por %p54, %p55
    %s58 = sadd.s32 %s57, 1
    %p61 = scmp.eq.s32.totalorder %s9, 1
    %p62 = scmp.ne.s32.totalorder %s57, %s59
    %p63 = scmp.eq.s32.totalorder %s9, 0
    %p64 = por %p62, %p63
    %p65 = scmp.ne.s32.totalorder %s57, %s59
    %p66 = scmp.eq.s32.totalorder %s14, 1
    %p67 = por %p65, %p66
    %p68 = scmp.ne.s32.totalorder %s59, %s60
    %p69 = scmp.eq.s32.totalorder %s14, 0
    %p70 = por %p68, %p69
    %p71 = scmp.ne.s32.totalorder %s59, %s60
    %p72 = scmp.eq.s32.totalorder %s15, 1
    %p73 = por %p71, %p72
    %p75 = scmp.ne.s32.totalorder %s60, %s74
    %p76 = scmp.eq.s32.totalorder %s15, 0
    %p77 = por %p75, %p76
    %s79 = sadd.s32 %s78, 1
    %p82 = scmp.eq.s32.totalorder %s9, 1
    %p83 = scmp.ne.s32.totalorder %s78, %s80
    %p84 = scmp.eq.s32.totalorder %s9, 0
    %p85 = por %p83, %p84
    %p86 = scmp.ne.s32.totalorder %s78, %s80
    %p87 = scmp.eq.s32.totalorder %s14, 1
    %p88 = por %p86, %p87
    %p89 = scmp.ne.s32.totalorder %s80, %s81
    %p90 = scmp.eq.s32.totalorder %s14, 0
    %p91 = por %p89, %p90
    %p92 = scmp.ne.s32.totalorder %s80, %s81
    %p93 = scmp.eq.s32.totalorder %s15, 1
    %p94 = por %p92, %p93
    %p96 = scmp.ne.s32.totalorder %s81, %s95
    %p97 = scmp.eq.s32.totalorder %s15, 0
    %p98 = por %p96, %p97
    %s99 = ssub.s32 %s16, %s28
    %s100 = ssub.s32 %s17, %s24
    %s101 = sor.u32 %s99, %s100
    %p102 = scmp.eq.s32.totalorder %s101, 0
    %s104 = sadd.s32 %s103, 1
    %s105 = scalar_select %p102, %s103, %s104
    %p108 = pneg %p102
    %p109 = scmp.eq.s32.totalorder %s9, 1
    %p110 = por %p108, %p109
    %p111 = scmp.ne.s32.totalorder %s103, %s106
    %p112 = scmp.eq.s32.totalorder %s9, 0
    %p113 = por %p111, %p112
    %p114 = scmp.ne.s32.totalorder %s103, %s106
    %p115 = scmp.eq.s32.totalorder %s14, 1
    %p116 = por %p114, %p115
    %p117 = scmp.ne.s32.totalorder %s106, %s107
    %p118 = scmp.eq.s32.totalorder %s14, 0
    %p119 = por %p117, %p118
    %p120 = scmp.ne.s32.totalorder %s106, %s107
    %p121 = scmp.eq.s32.totalorder %s15, 1
    %p122 = por %p120, %p121
    %p124 = scmp.ne.s32.totalorder %s107, %s123
    %p125 = scmp.eq.s32.totalorder %s15, 0
    %p126 = por %p124, %p125
    %p127 = scmp.le.s32.totalorder 1, %s9
    %p128 = scmp.lt.s32.totalorder %s9, 3
    %p129 = pnand %p127, %p128
    %p130 = pneg %p129
    // Predicated region
    $region9: #{double_conv.7} parent=5 // pred_check
      _
    $region10: #{double_conv.7} parent=5 // pred_check_branch
      %132 = sbr.rel (%p129) target = $region12
    $region11: #{double_conv.7} parent=5 // pred_region
      %s133 = ssub.s32 %s9, 1
      // Predicated region
      $region13: #{double_conv.7} parent=11 // pred_check
        %p134 = pneg %p70
      $region14: #{double_conv.7} parent=11 // pred_check_branch
        %136 = sbr.rel (%p134) target = $region16
      $region15: #{double_conv.7} parent=11 // pred_region
        _
      $region16: #{double_conv.7} parent=11 // pred_fallthru
        _
      // Predicated region
      $region17: #{double_conv.7} parent=11 // pred_check
        %p137 = pneg %p91
      $region18: #{double_conv.7} parent=11 // pred_check_branch
        %139 = sbr.rel (%p137) target = $region20
      $region19: #{double_conv.7} parent=11 // pred_region
        _
      $region20: #{double_conv.7} parent=11 // pred_fallthru
        _
    $region12: #{double_conv.7} parent=5 // pred_fallthru
      _
    %p140 = scmp.lt.s32.totalorder %s9, 2
    // Predicated region
    $region21: #{double_conv.7} parent=5 // pred_check
      %p141 = pneg %p140
    $region22: #{double_conv.7} parent=5 // pred_check_branch
      %143 = sbr.rel (%p141) target = $region24
    $region23: #{double_conv.7} parent=5 // pred_region
      // Predicated region
      $region25: #{double_conv.7} parent=23 // pred_check
        %p144 = pneg %p43
      $region26: #{double_conv.7} parent=23 // pred_check_branch
        %146 = sbr.rel (%p144) target = $region28
      $region27: #{double_conv.7} parent=23 // pred_region
        %s147 = smul.u32 16, %s17
        %p148 = scmp.lt.s32.totalorder %s16, 1
        %s149 = scalar_select %p148, %s16, 1
        %p150 = scmp.lt.s32.totalorder %s147, 15
        %s151 = scalar_select %p150, %s147, 15
        %s152 = smul.addr %s151, 2
        %s153 = smul.addr %s149, 32
        %s154 = sadd.s32 %s152, %s153
        %s155 = smul.addr %s154, 8
        %s156 = scalar_lea.vmem %s0, %s155
        %s157 = smul.u32 16, %s17
      $region28: #{double_conv.7} parent=23 // pred_fallthru
        _
    $region24: #{double_conv.7} parent=5 // pred_fallthru
      _
    %p158 = scmp.le.s32.totalorder 1, %s9
    %p159 = scmp.lt.s32.totalorder %s9, 3
    %p160 = pnand %p158, %p159
    %p161 = pneg %p160
    // Predicated region
    $region29: #{double_conv.7} parent=5 // pred_check
      _
    $region30: #{double_conv.7} parent=5 // pred_check_branch
      %163 = sbr.rel (%p160) target = $region32
    $region31: #{double_conv.7} parent=5 // pred_region
      %s164 = ssub.s32 %s9, 1
      %s165 = smul.u32 16, %s19
      %p166 = scmp.lt.s32.totalorder %s18, 1
      %s167 = scalar_select %p166, %s18, 1
      %p168 = scmp.lt.s32.totalorder %s165, 15
      %s169 = scalar_select %p168, %s165, 15
      %s170 = smul.addr %s169, 2
      %s171 = smul.addr %s167, 32
      %s172 = sadd.s32 %s170, %s171
      %s173 = smul.addr %s172, 8
      %s174 = scalar_lea.vmem %s0, %s173
      %p175 = pneg %p49
      %p176 = pneg %p46
      %p177 = pneg %p70
      %p178 = pneg %p67
      %p179 = pneg %p91
      %p180 = pneg %p88
      %p181 = pneg %p119
      %p182 = pneg %p116
      %s183 = smul.u32 16, %s19
      %p184 = scmp.lt.s32.totalorder %s18, 1
      %s185 = scalar_select %p184, %s18, 1
      %p186 = scmp.lt.s32.totalorder %s183, 15
      %s187 = scalar_select %p186, %s183, 15
      %s188 = smul.addr %s187, 2
      %s189 = smul.addr %s185, 32
      %s190 = sadd.s32 %s188, %s189
      %s191 = smul.addr %s190, 8
      %s192 = scalar_lea.vmem %s3, %s191
      %s193 = smul.u32 16, %s19
      %p194 = scmp.lt.s32.totalorder %s18, 1
      %s195 = scalar_select %p194, %s18, 1
      %p196 = scmp.lt.s32.totalorder %s193, 15
      %s197 = scalar_select %p196, %s193, 15
      %s198 = smul.addr %s197, 2
      %s199 = smul.addr %s195, 32
      %s200 = sadd.s32 %s198, %s199
      %s201 = smul.addr %s200, 8
      %s202 = scalar_lea.vmem %s0, %s201
      %s203 = smul.u32 16, %s19
      %s204 = smul.u32 16, %s19
      %p205 = scmp.lt.s32.totalorder %s18, 1
      %s206 = scalar_select %p205, %s18, 1
      %p207 = scmp.lt.s32.totalorder %s204, 15
      %s208 = scalar_select %p207, %s204, 15
      %s209 = smul.addr %s208, 2
      %s210 = smul.addr %s206, 32
      %s211 = sadd.s32 %s209, %s210
      %s212 = smul.addr %s211, 8
      %s213 = scalar_lea.vmem %s3, %s212
      %s214 = smul.u32 16, %s19
      %v215 = vld [vmem:[%s202] sm:$0xff]
      %v216 = vld [vmem:[%s202 + $0x8] sm:$0xff]
      %v217 = vld [vmem:[%s202 + $0x10] sm:$0xff]
      %v218 = vld [vmem:[%s202 + $0x18] sm:$0xff]
      %v219 = vld [vmem:[%s202 + $0x20] sm:$0xff]
      %v220 = vld [vmem:[%s202 + $0x28] sm:$0xff]
      %v221 = vld [vmem:[%s202 + $0x30] sm:$0xff]
      %v222 = vld [vmem:[%s202 + $0x38] sm:$0xff]
      %v223 = vld [vmem:[%s202 + $0x40] sm:$0xff]
      %v224 = vld [vmem:[%s202 + $0x48] sm:$0xff]
      %v225 = vld [vmem:[%s202 + $0x50] sm:$0xff]
      %v226 = vld [vmem:[%s202 + $0x58] sm:$0xff]
      %v227 = vld [vmem:[%s202 + $0x60] sm:$0xff]
      %v228 = vld [vmem:[%s202 + $0x68] sm:$0xff]
      %v229 = vld [vmem:[%s202 + $0x70] sm:$0xff]
      %v230 = vld [vmem:[%s202 + $0x78] sm:$0xff]
      %v231 = vld [vmem:[%s202 + $0x80] sm:$0xff]
      %v232 = vld [vmem:[%s202 + $0x88] sm:$0xff]
      %v233 = vld [vmem:[%s202 + $0x90] sm:$0xff]
      %v234 = vld [vmem:[%s202 + $0x98] sm:$0xff]
      %v235 = vld [vmem:[%s202 + $0xa0] sm:$0xff]
      %v236 = vld [vmem:[%s202 + $0xa8] sm:$0xff]
      %v237 = vld [vmem:[%s202 + $0xb0] sm:$0xff]
      %v238 = vld [vmem:[%s202 + $0xb8] sm:$0xff]
      %v239 = vld [vmem:[%s202 + $0xc0] sm:$0xff]
      %v240 = vld [vmem:[%s202 + $0xc8] sm:$0xff]
      %v241 = vld [vmem:[%s202 + $0xd0] sm:$0xff]
      %v242 = vld [vmem:[%s202 + $0xd8] sm:$0xff]
      %v243 = vld [vmem:[%s202 + $0xe0] sm:$0xff]
      %v244 = vld [vmem:[%s202 + $0xe8] sm:$0xff]
      %v245 = vld [vmem:[%s202 + $0xf0] sm:$0xff]
      %v246 = vld [vmem:[%s202 + $0xf8] sm:$0xff]
      %v247 = vld [vmem:[%s1] sm:$0x1]
      %v249 = vlaneseq
      %v250 = vshrl.u32 %v249, 7
      %v251 = vsub.s32 0, %v250
      %v252 = vrot.slane %v247, %v251
      %v254 = vmul.f32 %v215, %v252
      %v255 = vmul.f32 %v216, %v252
      %v256 = vmul.f32 %v217, %v252
      %v257 = vmul.f32 %v218, %v252
      %v258 = vmul.f32 %v219, %v252
      %v259 = vmul.f32 %v220, %v252
      %v260 = vmul.f32 %v221, %v252
      %v261 = vmul.f32 %v222, %v252
      %v262 = vmul.f32 %v223, %v252
      %v263 = vmul.f32 %v224, %v252
      %v264 = vmul.f32 %v225, %v252
      %v265 = vmul.f32 %v226, %v252
      %v266 = vmul.f32 %v227, %v252
      %v267 = vmul.f32 %v228, %v252
      %v268 = vmul.f32 %v229, %v252
      %v269 = vmul.f32 %v230, %v252
      %v270 = vmul.f32 %v231, %v252
      %v271 = vmul.f32 %v232, %v252
      %v272 = vmul.f32 %v233, %v252
      %v273 = vmul.f32 %v234, %v252
      %v274 = vmul.f32 %v235, %v252
      %v275 = vmul.f32 %v236, %v252
      %v276 = vmul.f32 %v237, %v252
      %v277 = vmul.f32 %v238, %v252
      %v278 = vmul.f32 %v239, %v252
      %v279 = vmul.f32 %v240, %v252
      %v280 = vmul.f32 %v241, %v252
      %v281 = vmul.f32 %v242, %v252
      %v282 = vmul.f32 %v243, %v252
      %v283 = vmul.f32 %v244, %v252
      %v284 = vmul.f32 %v245, %v252
      %v285 = vmul.f32 %v246, %v252
      %v286 = vld [vmem:[%s2] sm:$0x1]
      %v288 = vlaneseq
      %v289 = vshrl.u32 %v288, 7
      %v290 = vsub.s32 0, %v289
      %v291 = vrot.slane %v286, %v290
      %v293 = vadd.f32 %v254, %v291
      %v294 = vadd.f32 %v255, %v291
      %v295 = vadd.f32 %v256, %v291
      %v296 = vadd.f32 %v257, %v291
      %v297 = vadd.f32 %v258, %v291
      %v298 = vadd.f32 %v259, %v291
      %v299 = vadd.f32 %v260, %v291
      %v300 = vadd.f32 %v261, %v291
      %v301 = vadd.f32 %v262, %v291
      %v302 = vadd.f32 %v263, %v291
      %v303 = vadd.f32 %v264, %v291
      %v304 = vadd.f32 %v265, %v291
      %v305 = vadd.f32 %v266, %v291
      %v306 = vadd.f32 %v267, %v291
      %v307 = vadd.f32 %v268, %v291
      %v308 = vadd.f32 %v269, %v291
      %v309 = vadd.f32 %v270, %v291
      %v310 = vadd.f32 %v271, %v291
      %v311 = vadd.f32 %v272, %v291
      %v312 = vadd.f32 %v273, %v291
      %v313 = vadd.f32 %v274, %v291
      %v314 = vadd.f32 %v275, %v291
      %v315 = vadd.f32 %v276, %v291
      %v316 = vadd.f32 %v277, %v291
      %v317 = vadd.f32 %v278, %v291
      %v318 = vadd.f32 %v279, %v291
      %v319 = vadd.f32 %v280, %v291
      %v320 = vadd.f32 %v281, %v291
      %v321 = vadd.f32 %v282, %v291
      %v322 = vadd.f32 %v283, %v291
      %v323 = vadd.f32 %v284, %v291
      %v324 = vadd.f32 %v285, %v291
      %v325 = vmax.f32 %v293, 0.0
      %v326 = vmax.f32 %v294, 0.0
      %v327 = vmax.f32 %v295, 0.0
      %v328 = vmax.f32 %v296, 0.0
      %v329 = vmax.f32 %v297, 0.0
      %v330 = vmax.f32 %v298, 0.0
      %v331 = vmax.f32 %v299, 0.0
      %v332 = vmax.f32 %v300, 0.0
      %v333 = vmax.f32 %v301, 0.0
      %v334 = vmax.f32 %v302, 0.0
      %v335 = vmax.f32 %v303, 0.0
      %v336 = vmax.f32 %v304, 0.0
      %v337 = vmax.f32 %v305, 0.0
      %v338 = vmax.f32 %v306, 0.0
      %v339 = vmax.f32 %v307, 0.0
      %v340 = vmax.f32 %v308, 0.0
      %v341 = vmax.f32 %v309, 0.0
      %v342 = vmax.f32 %v310, 0.0
      %v343 = vmax.f32 %v311, 0.0
      %v344 = vmax.f32 %v312, 0.0
      %v345 = vmax.f32 %v313, 0.0
      %v346 = vmax.f32 %v314, 0.0
      %v347 = vmax.f32 %v315, 0.0
      %v348 = vmax.f32 %v316, 0.0
      %v349 = vmax.f32 %v317, 0.0
      %v350 = vmax.f32 %v318, 0.0
      %v351 = vmax.f32 %v319, 0.0
      %v352 = vmax.f32 %v320, 0.0
      %v353 = vmax.f32 %v321, 0.0
      %v354 = vmax.f32 %v322, 0.0
      %v355 = vmax.f32 %v323, 0.0
      %v356 = vmax.f32 %v324, 0.0
      %357 = vst [vmem:[%s213] sm:$0xff] %v325
      %358 = vst [vmem:[%s213 + $0x8] sm:$0xff] %v326
      %359 = vst [vmem:[%s213 + $0x10] sm:$0xff] %v327
      %360 = vst [vmem:[%s213 + $0x18] sm:$0xff] %v328
      %361 = vst [vmem:[%s213 + $0x20] sm:$0xff] %v329
      %362 = vst [vmem:[%s213 + $0x28] sm:$0xff] %v330
      %363 = vst [vmem:[%s213 + $0x30] sm:$0xff] %v331
      %364 = vst [vmem:[%s213 + $0x38] sm:$0xff] %v332
      %365 = vst [vmem:[%s213 + $0x40] sm:$0xff] %v333
      %366 = vst [vmem:[%s213 + $0x48] sm:$0xff] %v334
      %367 = vst [vmem:[%s213 + $0x50] sm:$0xff] %v335
      %368 = vst [vmem:[%s213 + $0x58] sm:$0xff] %v336
      %369 = vst [vmem:[%s213 + $0x60] sm:$0xff] %v337
      %370 = vst [vmem:[%s213 + $0x68] sm:$0xff] %v338
      %371 = vst [vmem:[%s213 + $0x70] sm:$0xff] %v339
      %372 = vst [vmem:[%s213 + $0x78] sm:$0xff] %v340
      %373 = vst [vmem:[%s213 + $0x80] sm:$0xff] %v341
      %374 = vst [vmem:[%s213 + $0x88] sm:$0xff] %v342
      %375 = vst [vmem:[%s213 + $0x90] sm:$0xff] %v343
      %376 = vst [vmem:[%s213 + $0x98] sm:$0xff] %v344
      %377 = vst [vmem:[%s213 + $0xa0] sm:$0xff] %v345
      %378 = vst [vmem:[%s213 + $0xa8] sm:$0xff] %v346
      %379 = vst [vmem:[%s213 + $0xb0] sm:$0xff] %v347
      %380 = vst [vmem:[%s213 + $0xb8] sm:$0xff] %v348
      %381 = vst [vmem:[%s213 + $0xc0] sm:$0xff] %v349
      %382 = vst [vmem:[%s213 + $0xc8] sm:$0xff] %v350
      %383 = vst [vmem:[%s213 + $0xd0] sm:$0xff] %v351
      %384 = vst [vmem:[%s213 + $0xd8] sm:$0xff] %v352
      %385 = vst [vmem:[%s213 + $0xe0] sm:$0xff] %v353
      %386 = vst [vmem:[%s213 + $0xe8] sm:$0xff] %v354
      %387 = vst [vmem:[%s213 + $0xf0] sm:$0xff] %v355
      %388 = vst [vmem:[%s213 + $0xf8] sm:$0xff] %v356
      %s389 = smul.u32 16, %s19
      %p390 = scmp.lt.s32.totalorder %s18, 1
      %s391 = scalar_select %p390, %s18, 1
      %p392 = scmp.lt.s32.totalorder %s389, 15
      %s393 = scalar_select %p392, %s389, 15
      %s394 = smul.addr %s393, 2
      %s395 = smul.addr %s391, 32
      %s396 = sadd.s32 %s394, %s395
      %s397 = smul.addr %s396, 8
      %s398 = scalar_lea.vmem %s3, %s397
      // Predicated region
      $region33: #{double_conv.7} parent=31 // pred_check
        %p399 = pneg %p116
      $region34: #{double_conv.7} parent=31 // pred_check_branch
        %401 = sbr.rel (%p399) target = $region36
      $region35: #{double_conv.7} parent=31 // pred_region
        %s402 = smul.u32 16, %s19
      $region36: #{double_conv.7} parent=31 // pred_fallthru
        _
    $region32: #{double_conv.7} parent=5 // pred_fallthru
      _
    %p403 = scmp.le.s32.totalorder 2, %s9
    // Predicated region
    $region37: #{double_conv.7} parent=5 // pred_check
      %p404 = pneg %p403
    $region38: #{double_conv.7} parent=5 // pred_check_branch
      %406 = sbr.rel (%p404) target = $region40
    $region39: #{double_conv.7} parent=5 // pred_region
      %s407 = ssub.s32 %s9, 2
      // Predicated region
      $region41: #{double_conv.7} parent=39 // pred_check
        %p408 = pneg %p122
      $region42: #{double_conv.7} parent=39 // pred_check_branch
        %410 = sbr.rel (%p408) target = $region44
      $region43: #{double_conv.7} parent=39 // pred_region
        %s411 = smul.u32 16, %s21
        %p412 = scmp.lt.s32.totalorder %s20, 1
        %s413 = scalar_select %p412, %s20, 1
        %p414 = scmp.lt.s32.totalorder %s411, 15
        %s415 = scalar_select %p414, %s411, 15
        %s416 = smul.addr %s415, 2
        %s417 = smul.addr %s413, 32
        %s418 = sadd.s32 %s416, %s417
        %s419 = smul.addr %s418, 8
        %s420 = scalar_lea.vmem %s3, %s419
      $region44: #{double_conv.7} parent=39 // pred_fallthru
        _
    $region40: #{double_conv.7} parent=5 // pred_fallthru
      _
  $region6: #{double_conv.7} parent=0 // loop_footer
    %s13 = sadd.s32 1, %s9
  $region7: #{double_conv.7} parent=0 // loop_footer_branch
    %8 = sbr.rel target = $region3
  $region8: #{double_conv.7} parent=0 // loop_exit
    _

// kernel: double_conv.4
$region0: #{double_conv.4}
  #allocation0 [shape = 'u32[]', space=smem, size = 0x4, offset = 0x4, fixed_abs, tag = 'smem constant byte address 0x4 - core index']
  #allocation1 [shape = 'u32[144,128]{1,0:T(1,128)}', space=vmem, size = 0x12000, scoped, tag = 'internal scratch']
  %s0 = inlined_call_operand.vmem [shape: bf16[2,18,18,4], index: 0, kind: input, shape index: {}, may-alias: {0,1}]
  %s1 = inlined_call_operand.vmem [shape: bf16[2,18,18,4], index: 1, kind: input, shape index: {}, may-alias: {0,1}]
  %s2 = inlined_call_operand.vmem [shape: bf16[9,4,128], index: 2, kind: input, shape index: {}]
  %s3 = inlined_call_operand.vmem [shape: f32[2,16,16,128], index: 3, kind: output, shape index: {0}]
  %s4 = inlined_call_operand.vmem [shape: f32[2,1,8,128], index: 4, kind: output, shape index: {1}]
  %s5 = inlined_call_operand.vmem [shape: f32[2,1,8,128], index: 5, kind: output, shape index: {2}]
  %6 = xla_tuple %s3, %s4, %s5
  %s7 = sld [smem:[#allocation0]]
  $region61: #{double_conv.4} parent=0
    _
  %s9 = ssub.s32 1, %s7
  %s10 = scalar_select 0, %s9, %s7
  loop: start=0, step=1, limit=4
  $region2: #{double_conv.4} parent=0 // loop_pre_header
    _
  $region3: #{double_conv.4} parent=0 // loop_header
    %s12 = sphi 0, %s16
    %p13 = scmp.ge.s32.totalorder %s12, 4
    %s19 = sphi 0, %s31
    %s20 = sphi 0, %s27
    %s21 = sphi 0, %s19
    %s22 = sphi 0, %s20
    %s23 = sphi 0, %s21
    %s24 = sphi 0, %s22
    %s36 = sphi 0, %s38
    %s39 = sphi 0, %s36
    %s40 = sphi 0, %s39
    %s56 = sphi 0, %s40
    %s68 = sphi 0, %s70
    %s71 = sphi 0, %s68
    %s72 = sphi 0, %s71
    %s88 = sphi 0, %s72
    %s92 = sphi 0, %s92
    %s94 = sphi 0, %s92
    %s95 = sphi 0, %s94
    %s109 = sphi 0, %s95
    %s117 = sphi 0, %s119
    %s120 = sphi 0, %s117
    %s121 = sphi 0, %s120
    %s137 = sphi 0, %s121
    %s145 = sphi 0, %s147
    %s148 = sphi 0, %s145
    %s149 = sphi 0, %s148
    %s165 = sphi 0, %s149
    %s173 = sphi 0, %s175
    %s176 = sphi 0, %s173
    %s177 = sphi 0, %s176
    %s193 = sphi 0, %s177
  $region4: #{double_conv.4} parent=0 // loop_header_branch
    %15 = sbr.rel (%p13) target = $region8
  $region5: #{double_conv.4} parent=0 // loop_body
    %s17 = ssub.s32 %s12, 1
    %s18 = ssub.s32 %s12, 2
    %s25 = sadd.s32 1, %s20
    %p26 = scmp.ge.s32.totalorder %s25, 1
    %s27 = scalar_select %p26, 0, %s25
    %s28 = sadd.s32 1, %s19
    %s29 = scalar_select %p26, %s28, %s19
    %p30 = scmp.ge.s32.totalorder %s29, 2
    %s31 = scalar_select %p30, 0, %s29
    %s32 = ssub.s32 %s19, %s31
    %s33 = ssub.s32 %s20, %s27
    %s34 = sor.u32 %s32, %s33
    %p35 = scmp.eq.s32.totalorder %s34, 0
    %s37 = sadd.s32 %s36, 1
    %s38 = scalar_select %p35, %s36, %s37
    %p41 = pneg %p35
    %p42 = scmp.eq.s32.totalorder %s12, 1
    %p43 = por %p41, %p42
    %p44 = scmp.ne.s32.totalorder %s36, %s39
    %p45 = scmp.eq.s32.totalorder %s12, 0
    %p46 = por %p44, %p45
    %p47 = scmp.ne.s32.totalorder %s36, %s39
    %p48 = scmp.eq.s32.totalorder %s17, 1
    %p49 = por %p47, %p48
    %p50 = scmp.ne.s32.totalorder %s39, %s40
    %p51 = scmp.eq.s32.totalorder %s17, 0
    %p52 = por %p50, %p51
    %p53 = scmp.ne.s32.totalorder %s39, %s40
    %p54 = scmp.eq.s32.totalorder %s18, 1
    %p55 = por %p53, %p54
    %p57 = scmp.ne.s32.totalorder %s40, %s56
    %p58 = scmp.eq.s32.totalorder %s18, 0
    %p59 = por %p57, %p58
    %s60 = sadd.s32 %s20, 1
    %s61 = smul.u32 %s60, 8
    %s62 = sadd.s32 %s27, 1
    %s63 = smul.u32 %s62, 8
    %s64 = ssub.s32 %s19, %s31
    %s65 = ssub.s32 %s61, %s63
    %s66 = sor.u32 %s64, %s65
    %p67 = scmp.eq.s32.totalorder %s66, 0
    %s69 = sadd.s32 %s68, 1
    %s70 = scalar_select %p67, %s68, %s69
    %p73 = pneg %p67
    %p74 = scmp.eq.s32.totalorder %s12, 1
    %p75 = por %p73, %p74
    %p76 = scmp.ne.s32.totalorder %s68, %s71
    %p77 = scmp.eq.s32.totalorder %s12, 0
    %p78 = por %p76, %p77
    %p79 = scmp.ne.s32.totalorder %s68, %s71
    %p80 = scmp.eq.s32.totalorder %s17, 1
    %p81 = por %p79, %p80
    %p82 = scmp.ne.s32.totalorder %s71, %s72
    %p83 = scmp.eq.s32.totalorder %s17, 0
    %p84 = por %p82, %p83
    %p85 = scmp.ne.s32.totalorder %s71, %s72
    %p86 = scmp.eq.s32.totalorder %s18, 1
    %p87 = por %p85, %p86
    %p89 = scmp.ne.s32.totalorder %s72, %s88
    %p90 = scmp.eq.s32.totalorder %s18, 0
    %p91 = por %p89, %p90
    %s93 = sadd.s32 %s92, 1
    %p96 = scmp.eq.s32.totalorder %s12, 1
    %p97 = scmp.ne.s32.totalorder %s92, %s94
    %p98 = scmp.eq.s32.totalorder %s12, 0
    %p99 = por %p97, %p98
    %p100 = scmp.ne.s32.totalorder %s92, %s94
    %p101 = scmp.eq.s32.totalorder %s17, 1
    %p102 = por %p100, %p101
    %p103 = scmp.ne.s32.totalorder %s94, %s95
    %p104 = scmp.eq.s32.totalorder %s17, 0
    %p105 = por %p103, %p104
    %p106 = scmp.ne.s32.totalorder %s94, %s95
    %p107 = scmp.eq.s32.totalorder %s18, 1
    %p108 = por %p106, %p107
    %p110 = scmp.ne.s32.totalorder %s95, %s109
    %p111 = scmp.eq.s32.totalorder %s18, 0
    %p112 = por %p110, %p111
    %s113 = ssub.s32 %s19, %s31
    %s114 = ssub.s32 %s20, %s27
    %s115 = sor.u32 %s113, %s114
    %p116 = scmp.eq.s32.totalorder %s115, 0
    %s118 = sadd.s32 %s117, 1
    %s119 = scalar_select %p116, %s117, %s118
    %p122 = pneg %p116
    %p123 = scmp.eq.s32.totalorder %s12, 1
    %p124 = por %p122, %p123
    %p125 = scmp.ne.s32.totalorder %s117, %s120
    %p126 = scmp.eq.s32.totalorder %s12, 0
    %p127 = por %p125, %p126
    %p128 = scmp.ne.s32.totalorder %s117, %s120
    %p129 = scmp.eq.s32.totalorder %s17, 1
    %p130 = por %p128, %p129
    %p131 = scmp.ne.s32.totalorder %s120, %s121
    %p132 = scmp.eq.s32.totalorder %s17, 0
    %p133 = por %p131, %p132
    %p134 = scmp.ne.s32.totalorder %s120, %s121
    %p135 = scmp.eq.s32.totalorder %s18, 1
    %p136 = por %p134, %p135
    %p138 = scmp.ne.s32.totalorder %s121, %s137
    %p139 = scmp.eq.s32.totalorder %s18, 0
    %p140 = por %p138, %p139
    %s141 = ssub.s32 %s19, %s31
    %s142 = ssub.s32 %s20, %s27
    %s143 = sor.u32 %s141, %s142
    %p144 = scmp.eq.s32.totalorder %s143, 0
    %s146 = sadd.s32 %s145, 1
    %s147 = scalar_select %p144, %s145, %s146
    %p150 = pneg %p144
    %p151 = scmp.eq.s32.totalorder %s12, 1
    %p152 = por %p150, %p151
    %p153 = scmp.ne.s32.totalorder %s145, %s148
    %p154 = scmp.eq.s32.totalorder %s12, 0
    %p155 = por %p153, %p154
    %p156 = scmp.ne.s32.totalorder %s145, %s148
    %p157 = scmp.eq.s32.totalorder %s17, 1
    %p158 = por %p156, %p157
    %p159 = scmp.ne.s32.totalorder %s148, %s149
    %p160 = scmp.eq.s32.totalorder %s17, 0
    %p161 = por %p159, %p160
    %p162 = scmp.ne.s32.totalorder %s148, %s149
    %p163 = scmp.eq.s32.totalorder %s18, 1
    %p164 = por %p162, %p163
    %p166 = scmp.ne.s32.totalorder %s149, %s165
    %p167 = scmp.eq.s32.totalorder %s18, 0
    %p168 = por %p166, %p167
    %s169 = ssub.s32 %s19, %s31
    %s170 = ssub.s32 %s20, %s27
    %s171 = sor.u32 %s169, %s170
    %p172 = scmp.eq.s32.totalorder %s171, 0
    %s174 = sadd.s32 %s173, 1
    %s175 = scalar_select %p172, %s173, %s174
    %p178 = pneg %p172
    %p179 = scmp.eq.s32.totalorder %s12, 1
    %p180 = por %p178, %p179
    %p181 = scmp.ne.s32.totalorder %s173, %s176
    %p182 = scmp.eq.s32.totalorder %s12, 0
    %p183 = por %p181, %p182
    %p184 = scmp.ne.s32.totalorder %s173, %s176
    %p185 = scmp.eq.s32.totalorder %s17, 1
    %p186 = por %p184, %p185
    %p187 = scmp.ne.s32.totalorder %s176, %s177
    %p188 = scmp.eq.s32.totalorder %s17, 0
    %p189 = por %p187, %p188
    %p190 = scmp.ne.s32.totalorder %s176, %s177
    %p191 = scmp.eq.s32.totalorder %s18, 1
    %p192 = por %p190, %p191
    %p194 = scmp.ne.s32.totalorder %s177, %s193
    %p195 = scmp.eq.s32.totalorder %s18, 0
    %p196 = por %p194, %p195
    %p197 = scmp.le.s32.totalorder 1, %s12
    %p198 = scmp.lt.s32.totalorder %s12, 3
    %p199 = pnand %p197, %p198
    %p200 = pneg %p199
    // Predicated region
    $region9: #{double_conv.4} parent=5 // pred_check
      _
    $region10: #{double_conv.4} parent=5 // pred_check_branch
      %202 = sbr.rel (%p199) target = $region12
    $region11: #{double_conv.4} parent=5 // pred_region
      %s203 = ssub.s32 %s12, 1
      // Predicated region
      $region13: #{double_conv.4} parent=11 // pred_check
        %p204 = pneg %p105
      $region14: #{double_conv.4} parent=11 // pred_check_branch
        %206 = sbr.rel (%p204) target = $region16
      $region15: #{double_conv.4} parent=11 // pred_region
        _
      $region16: #{double_conv.4} parent=11 // pred_fallthru
        _
    $region12: #{double_conv.4} parent=5 // pred_fallthru
      _
    %p207 = scmp.lt.s32.totalorder %s12, 2
    // Predicated region
    $region17: #{double_conv.4} parent=5 // pred_check
      %p208 = pneg %p207
    $region18: #{double_conv.4} parent=5 // pred_check_branch
      %210 = sbr.rel (%p208) target = $region20
    $region19: #{double_conv.4} parent=5 // pred_region
      // Predicated region
      $region21: #{double_conv.4} parent=19 // pred_check
        %p211 = pneg %p46
      $region22: #{double_conv.4} parent=19 // pred_check_branch
        %213 = sbr.rel (%p211) target = $region24
      $region23: #{double_conv.4} parent=19 // pred_region
        %s214 = smul.u32 16, %s20
        %s215 = ssub.s32 18, %s214
        %p216 = scmp.lt.s32.totalorder %s215, 16
        %s217 = scalar_select %p216, %s215, 16
        %s218 = smul.u32 64, %s217
        %s219 = smul.u32 %s218, 3
        %p220 = scmp.lt.s32.totalorder %s19, 1
        %s221 = scalar_select %p220, %s19, 1
        %p222 = scmp.lt.s32.totalorder %s214, 17
        %s223 = scalar_select %p222, %s214, 17
        %s224 = smul.addr %s223, 3
        %s225 = smul.addr %s221, 54
        %s226 = sadd.s32 %s224, %s225
        %s227 = smul.addr %s226, 4
        %s228 = scalar_lea.vmem %s0, %s227
        %s229 = smul.u32 16, %s20
        %s230 = ssub.s32 18, %s229
        %p231 = scmp.lt.s32.totalorder %s230, 16
        %s232 = scalar_select %p231, %s230, 16
        %s233 = smul.u32 64, %s232
        %s234 = smul.u32 %s233, 3
      $region24: #{double_conv.4} parent=19 // pred_fallthru
        _
      // Predicated region
      $region25: #{double_conv.4} parent=19 // pred_check
        %p235 = pneg %p78
      $region26: #{double_conv.4} parent=19 // pred_check_branch
        %237 = sbr.rel (%p235) target = $region28
      $region27: #{double_conv.4} parent=19 // pred_region
        %s238 = sadd.s32 %s20, 1
        %s239 = smul.u32 %s238, 8
        %s240 = smul.u32 2, %s239
        %p241 = scmp.lt.s32.totalorder %s19, 1
        %s242 = scalar_select %p241, %s19, 1
        %p243 = scmp.lt.s32.totalorder %s240, 17
        %s244 = scalar_select %p243, %s240, 17
        %s245 = smul.addr %s244, 3
        %s246 = smul.addr %s242, 54
        %s247 = sadd.s32 %s245, %s246
        %s248 = smul.addr %s247, 4
        %s249 = scalar_lea.vmem %s1, %s248
        %s250 = sadd.s32 %s20, 1
        %s251 = smul.u32 %s250, 8
        %s252 = smul.u32 2, %s251
      $region28: #{double_conv.4} parent=19 // pred_fallthru
        _
    $region20: #{double_conv.4} parent=5 // pred_fallthru
      _
    %p253 = scmp.le.s32.totalorder 1, %s12
    %p254 = scmp.lt.s32.totalorder %s12, 3
    %p255 = pnand %p253, %p254
    %p256 = pneg %p255
    // Predicated region
    $region29: #{double_conv.4} parent=5 // pred_check
      _
    $region30: #{double_conv.4} parent=5 // pred_check_branch
      %258 = sbr.rel (%p255) target = $region32
    $region31: #{double_conv.4} parent=5 // pred_region
      %s259 = ssub.s32 %s12, 1
      %s260 = smul.u32 16, %s22
      %s261 = ssub.s32 18, %s260
      %p262 = scmp.lt.s32.totalorder %s261, 16
      %s263 = scalar_select %p262, %s261, 16
      %s264 = smul.u32 64, %s263
      %s265 = smul.u32 %s264, 3
      %p266 = scmp.lt.s32.totalorder %s21, 1
      %s267 = scalar_select %p266, %s21, 1
      %p268 = scmp.lt.s32.totalorder %s260, 17
      %s269 = scalar_select %p268, %s260, 17
      %s270 = smul.addr %s269, 3
      %s271 = smul.addr %s267, 54
      %s272 = sadd.s32 %s270, %s271
      %s273 = smul.addr %s272, 4
      %s274 = scalar_lea.vmem %s0, %s273
      %p275 = pneg %p52
      %p276 = pneg %p49
      %s277 = sadd.s32 %s22, 1
      %s278 = smul.u32 %s277, 8
      %s279 = smul.u32 2, %s278
      %p280 = scmp.lt.s32.totalorder %s21, 1
      %s281 = scalar_select %p280, %s21, 1
      %p282 = scmp.lt.s32.totalorder %s279, 17
      %s283 = scalar_select %p282, %s279, 17
      %s284 = smul.addr %s283, 3
      %s285 = smul.addr %s281, 54
      %s286 = sadd.s32 %s284, %s285
      %s287 = smul.addr %s286, 4
      %s288 = scalar_lea.vmem %s1, %s287
      %p289 = pneg %p84
      %p290 = pneg %p81
      %p291 = pneg %p105
      %p292 = pneg %p102
      %p293 = pneg %p133
      %p294 = pneg %p130
      %s295 = smul.u32 16, %s22
      %p296 = scmp.lt.s32.totalorder %s21, 1
      %s297 = scalar_select %p296, %s21, 1
      %p298 = scmp.lt.s32.totalorder %s295, 15
      %s299 = scalar_select %p298, %s295, 15
      %s300 = smul.addr %s299, 2
      %s301 = smul.addr %s297, 32
      %s302 = sadd.s32 %s300, %s301
      %s303 = smul.addr %s302, 8
      %s304 = scalar_lea.vmem %s3, %s303
      %p305 = pneg %p161
      %p306 = pneg %p158
      %p307 = scmp.lt.s32.totalorder %s21, 1
      %s308 = scalar_select %p307, %s21, 1
      %p309 = scmp.lt.s32.totalorder %s22, 0
      %s310 = scalar_select %p309, %s22, 0
      %s311 = sadd.s32 %s310, %s308
      %s312 = smul.addr %s311, 8
      %s313 = scalar_lea.vmem %s4, %s312
      %p314 = pneg %p189
      %p315 = pneg %p186
      %p316 = scmp.lt.s32.totalorder %s21, 1
      %s317 = scalar_select %p316, %s21, 1
      %p318 = scmp.lt.s32.totalorder %s22, 0
      %s319 = scalar_select %p318, %s22, 0
      %s320 = sadd.s32 %s319, %s317
      %s321 = smul.addr %s320, 8
      %s322 = scalar_lea.vmem %s5, %s321
      %s323 = smul.u32 16, %s22
      %s324 = ssub.s32 18, %s323
      %p325 = scmp.lt.s32.totalorder %s324, 16
      %s326 = scalar_select %p325, %s324, 16
      %s327 = smul.u32 64, %s326
      %s328 = smul.u32 %s327, 3
      %p329 = scmp.lt.s32.totalorder %s21, 1
      %s330 = scalar_select %p329, %s21, 1
      %p331 = scmp.lt.s32.totalorder %s323, 17
      %s332 = scalar_select %p331, %s323, 17
      %s333 = smul.addr %s332, 3
      %s334 = smul.addr %s330, 54
      %s335 = sadd.s32 %s333, %s334
      %s336 = smul.addr %s335, 4
      %s337 = scalar_lea.vmem %s0, %s336
      %s338 = smul.u32 16, %s22
      %s339 = ssub.s32 18, %s338
      %p340 = scmp.lt.s32.totalorder %s339, 16
      %s341 = scalar_select %p340, %s339, 16
      %s342 = smul.u32 64, %s341
      %s343 = smul.u32 %s342, 3
      %s344 = sadd.s32 %s22, 1
      %s345 = smul.u32 %s344, 8
      %s346 = smul.u32 2, %s345
      %p347 = scmp.lt.s32.totalorder %s21, 1
      %s348 = scalar_select %p347, %s21, 1
      %p349 = scmp.lt.s32.totalorder %s346, 17
      %s350 = scalar_select %p349, %s346, 17
      %s351 = smul.addr %s350, 3
      %s352 = smul.addr %s348, 54
      %s353 = sadd.s32 %s351, %s352
      %s354 = smul.addr %s353, 4
      %s355 = scalar_lea.vmem %s1, %s354
      %s356 = sadd.s32 %s22, 1
      %s357 = smul.u32 %s356, 8
      %s358 = smul.u32 2, %s357
      %s359 = smul.u32 16, %s22
      %p360 = scmp.lt.s32.totalorder %s21, 1
      %s361 = scalar_select %p360, %s21, 1
      %p362 = scmp.lt.s32.totalorder %s359, 15
      %s363 = scalar_select %p362, %s359, 15
      %s364 = smul.addr %s363, 2
      %s365 = smul.addr %s361, 32
      %s366 = sadd.s32 %s364, %s365
      %s367 = smul.addr %s366, 8
      %s368 = scalar_lea.vmem %s3, %s367
      %s369 = smul.u32 16, %s22
      %p370 = scmp.lt.s32.totalorder %s21, 1
      %s371 = scalar_select %p370, %s21, 1
      %p372 = scmp.lt.s32.totalorder %s22, 0
      %s373 = scalar_select %p372, %s22, 0
      %s374 = sadd.s32 %s373, %s371
      %s375 = smul.addr %s374, 8
      %s376 = scalar_lea.vmem %s4, %s375
      %p377 = scmp.lt.s32.totalorder %s21, 1
      %s378 = scalar_select %p377, %s21, 1
      %p379 = scmp.lt.s32.totalorder %s22, 0
      %s380 = scalar_select %p379, %s22, 0
      %s381 = sadd.s32 %s380, %s378
      %s382 = smul.addr %s381, 8
      %s383 = scalar_lea.vmem %s5, %s382
      %v385 = vld [vmem:[%s337] sm:$0xf]
      %v386 = vld [vmem:[%s337 + $0x4] sm:$0xf]
      %v387 = vld [vmem:[%s337 + $0x8] sm:$0x1]
      %v388 = vld [vmem:[%s337 + $0xc] sm:$0xf]
      %v389 = vld [vmem:[%s337 + $0x10] sm:$0xf]
      %v390 = vld [vmem:[%s337 + $0x14] sm:$0x1]
      %v391 = vld [vmem:[%s337 + $0x18] sm:$0xf]
      %v392 = vld [vmem:[%s337 + $0x1c] sm:$0xf]
      %v393 = vld [vmem:[%s337 + $0x20] sm:$0x1]
      %v394 = vld [vmem:[%s337 + $0x24] sm:$0xf]
      %v395 = vld [vmem:[%s337 + $0x28] sm:$0xf]
      %v396 = vld [vmem:[%s337 + $0x2c] sm:$0x1]
      %v397 = vld [vmem:[%s337 + $0x30] sm:$0xf]
      %v398 = vld [vmem:[%s337 + $0x34] sm:$0xf]
      %v399 = vld [vmem:[%s337 + $0x38] sm:$0x1]
      %v400 = vld [vmem:[%s337 + $0x3c] sm:$0xf]
      %v401 = vld [vmem:[%s337 + $0x40] sm:$0xf]
      %v402 = vld [vmem:[%s337 + $0x44] sm:$0x1]
      %v403 = vld [vmem:[%s337 + $0x48] sm:$0xf]
      %v404 = vld [vmem:[%s337 + $0x4c] sm:$0xf]
      %v405 = vld [vmem:[%s337 + $0x50] sm:$0x1]
      %v406 = vld [vmem:[%s337 + $0x54] sm:$0xf]
      %v407 = vld [vmem:[%s337 + $0x58] sm:$0xf]
      %v408 = vld [vmem:[%s337 + $0x5c] sm:$0x1]
      %v409 = vld [vmem:[%s337 + $0x60] sm:$0xf]
      %v410 = vld [vmem:[%s337 + $0x64] sm:$0xf]
      %v411 = vld [vmem:[%s337 + $0x68] sm:$0x1]
      %v412 = vld [vmem:[%s337 + $0x6c] sm:$0xf]
      %v413 = vld [vmem:[%s337 + $0x70] sm:$0xf]
      %v414 = vld [vmem:[%s337 + $0x74] sm:$0x1]
      %v415 = vld [vmem:[%s337 + $0x78] sm:$0xf]
      %v416 = vld [vmem:[%s337 + $0x7c] sm:$0xf]
      %v417 = vld [vmem:[%s337 + $0x80] sm:$0x1]
      %v418 = vld [vmem:[%s337 + $0x84] sm:$0xf]
      %v419 = vld [vmem:[%s337 + $0x88] sm:$0xf]
      %v420 = vld [vmem:[%s337 + $0x8c] sm:$0x1]
      %v421 = vld [vmem:[%s337 + $0x90] sm:$0xf]
      %v422 = vld [vmem:[%s337 + $0x94] sm:$0xf]
      %v423 = vld [vmem:[%s337 + $0x98] sm:$0x1]
      %v424 = vld [vmem:[%s337 + $0x9c] sm:$0xf]
      %v425 = vld [vmem:[%s337 + $0xa0] sm:$0xf]
      %v426 = vld [vmem:[%s337 + $0xa4] sm:$0x1]
      %v427 = vld [vmem:[%s337 + $0xa8] sm:$0xf]
      %v428 = vld [vmem:[%s337 + $0xac] sm:$0xf]
      %v429 = vld [vmem:[%s337 + $0xb0] sm:$0x1]
      %v430 = vld [vmem:[%s337 + $0xb4] sm:$0xf]
      %v431 = vld [vmem:[%s337 + $0xb8] sm:$0xf]
      %v432 = vld [vmem:[%s337 + $0xbc] sm:$0x1]
      %v433 = vld [vmem:[%s355] sm:$0xf]
      %v434 = vld [vmem:[%s355 + $0x4] sm:$0xf]
      %v435 = vld [vmem:[%s355 + $0x8] sm:$0x1]
      %v436 = vld [vmem:[%s355 + $0xc] sm:$0xf]
      %v437 = vld [vmem:[%s355 + $0x10] sm:$0xf]
      %v438 = vld [vmem:[%s355 + $0x14] sm:$0x1]
      %v439 = vunpack.c.l.bf16 %v385
      %v440 = vunpack.c.l.bf16 %v386
      %v441 = vunpack.c.l.bf16 %v387
      %v442 = vunpack.c.l.bf16 %v388
      %v443 = vunpack.c.l.bf16 %v389
      %v444 = vunpack.c.l.bf16 %v390
      %v445 = vunpack.c.l.bf16 %v391
      %v446 = vunpack.c.l.bf16 %v392
      %v447 = vunpack.c.l.bf16 %v393
      %v448 = vunpack.c.l.bf16 %v394
      %v449 = vunpack.c.l.bf16 %v395
      %v450 = vunpack.c.l.bf16 %v396
      %v451 = vunpack.c.l.bf16 %v397
      %v452 = vunpack.c.l.bf16 %v398
      %v453 = vunpack.c.l.bf16 %v399
      %v454 = vunpack.c.l.bf16 %v400
      %v455 = vunpack.c.l.bf16 %v401
      %v456 = vunpack.c.l.bf16 %v402
      %v457 = vunpack.c.l.bf16 %v403
      %v458 = vunpack.c.l.bf16 %v404
      %v459 = vunpack.c.l.bf16 %v405
      %v460 = vunpack.c.l.bf16 %v406
      %v461 = vunpack.c.l.bf16 %v407
      %v462 = vunpack.c.l.bf16 %v408
      %v463 = vunpack.c.l.bf16 %v409
      %v464 = vunpack.c.l.bf16 %v410
      %v465 = vunpack.c.l.bf16 %v411
      %v466 = vunpack.c.l.bf16 %v412
      %v467 = vunpack.c.l.bf16 %v413
      %v468 = vunpack.c.l.bf16 %v414
      %v469 = vunpack.c.l.bf16 %v415
      %v470 = vunpack.c.l.bf16 %v416
      %v471 = vunpack.c.l.bf16 %v417
      %v472 = vunpack.c.l.bf16 %v418
      %v473 = vunpack.c.l.bf16 %v419
      %v474 = vunpack.c.l.bf16 %v420
      %v475 = vunpack.c.l.bf16 %v421
      %v476 = vunpack.c.l.bf16 %v422
      %v477 = vunpack.c.l.bf16 %v423
      %v478 = vunpack.c.l.bf16 %v424
      %v479 = vunpack.c.l.bf16 %v425
      %v480 = vunpack.c.l.bf16 %v426
      %v481 = vunpack.c.l.bf16 %v427
      %v482 = vunpack.c.l.bf16 %v428
      %v483 = vunpack.c.l.bf16 %v429
      %v484 = vunpack.c.l.bf16 %v430
      %v485 = vunpack.c.l.bf16 %v431
      %v486 = vunpack.c.l.bf16 %v432
      %v487 = vunpack.c.l.bf16 %v433
      %v488 = vunpack.c.l.bf16 %v434
      %v489 = vunpack.c.l.bf16 %v435
      %v490 = vunpack.c.l.bf16 %v436
      %v491 = vunpack.c.l.bf16 %v437
      %v492 = vunpack.c.l.bf16 %v438
      %v493 = vpack.c.bf16 %v440, %v439
      %v494 = vpack.c.bf16 %v443, %v442
      %v495 = vpack.c.bf16 %v446, %v445
      %v496 = vpack.c.bf16 %v449, %v448
      %v497 = vpack.c.bf16 %v452, %v451
      %v498 = vpack.c.bf16 %v455, %v454
      %v499 = vpack.c.bf16 %v458, %v457
      %v500 = vpack.c.bf16 %v461, %v460
      %v501 = vpack.c.bf16 %v464, %v463
      %v502 = vpack.c.bf16 %v467, %v466
      %v503 = vpack.c.bf16 %v470, %v469
      %v504 = vpack.c.bf16 %v473, %v472
      %v505 = vpack.c.bf16 %v476, %v475
      %v506 = vpack.c.bf16 %v479, %v478
      %v507 = vpack.c.bf16 %v482, %v481
      %v508 = vpack.c.bf16 %v485, %v484
      %v509 = vld [vmem:[%s2] sm:$0x3]
      %vm558 = vcmask 1046528
      %v559 = vrot.slane %v439, 1
      %v560 = vrot.slane %v440, 1
      %v561 = vsel %vm558, %v559, %v560
      %v562 = vrot.slane %v441, 1
      %v563 = vsel %vm558, %v560, %v562
      %v564 = vrot.slane %v442, 1
      %v565 = vrot.slane %v443, 1
      %v566 = vsel %vm558, %v564, %v565
      %v567 = vrot.slane %v444, 1
      %v568 = vsel %vm558, %v565, %v567
      %v569 = vrot.slane %v445, 1
      %v570 = vrot.slane %v446, 1
      %v571 = vsel %vm558, %v569, %v570
      %v572 = vrot.slane %v447, 1
      %v573 = vsel %vm558, %v570, %v572
      %v574 = vrot.slane %v448, 1
      %v575 = vrot.slane %v449, 1
      %v576 = vsel %vm558, %v574, %v575
      %v577 = vrot.slane %v450, 1
      %v578 = vsel %vm558, %v575, %v577
      %v579 = vrot.slane %v451, 1
      %v580 = vrot.slane %v452, 1
      %v581 = vsel %vm558, %v579, %v580
      %v582 = vrot.slane %v453, 1
      %v583 = vsel %vm558, %v580, %v582
      %v584 = vrot.slane %v454, 1
      %v585 = vrot.slane %v455, 1
      %v586 = vsel %vm558, %v584, %v585
      %v587 = vrot.slane %v456, 1
      %v588 = vsel %vm558, %v585, %v587
      %v589 = vrot.slane %v457, 1
      %v590 = vrot.slane %v458, 1
      %v591 = vsel %vm558, %v589, %v590
      %v592 = vrot.slane %v459, 1
      %v593 = vsel %vm558, %v590, %v592
      %v594 = vrot.slane %v460, 1
      %v595 = vrot.slane %v461, 1
      %v596 = vsel %vm558, %v594, %v595
      %v597 = vrot.slane %v462, 1
      %v598 = vsel %vm558, %v595, %v597
      %v599 = vrot.slane %v463, 1
      %v600 = vrot.slane %v464, 1
      %v601 = vsel %vm558, %v599, %v600
      %v602 = vrot.slane %v465, 1
      %v603 = vsel %vm558, %v600, %v602
      %v604 = vrot.slane %v466, 1
      %v605 = vrot.slane %v467, 1
      %v606 = vsel %vm558, %v604, %v605
      %v607 = vrot.slane %v468, 1
      %v608 = vsel %vm558, %v605, %v607
      %v609 = vrot.slane %v469, 1
      %v610 = vrot.slane %v470, 1
      %v611 = vsel %vm558, %v609, %v610
      %v612 = vrot.slane %v471, 1
      %v613 = vsel %vm558, %v610, %v612
      %v614 = vrot.slane %v472, 1
      %v615 = vrot.slane %v473, 1
      %v616 = vsel %vm558, %v614, %v615
      %v617 = vrot.slane %v474, 1
      %v618 = vsel %vm558, %v615, %v617
      %v619 = vrot.slane %v475, 1
      %v620 = vrot.slane %v476, 1
      %v621 = vsel %vm558, %v619, %v620
      %v622 = vrot.slane %v477, 1
      %v623 = vsel %vm558, %v620, %v622
      %v624 = vrot.slane %v478, 1
      %v625 = vrot.slane %v479, 1
      %v626 = vsel %vm558, %v624, %v625
      %v627 = vrot.slane %v480, 1
      %v628 = vsel %vm558, %v625, %v627
      %v629 = vrot.slane %v481, 1
      %v630 = vrot.slane %v482, 1
      %v631 = vsel %vm558, %v629, %v630
      %v632 = vrot.slane %v483, 1
      %v633 = vsel %vm558, %v630, %v632
      %v634 = vrot.slane %v484, 1
      %v635 = vrot.slane %v485, 1
      %v636 = vsel %vm558, %v634, %v635
      %v637 = vrot.slane %v486, 1
      %v638 = vsel %vm558, %v635, %v637
      %v671 = vpack.c.bf16 %v563, %v561
      %v672 = vpack.c.bf16 %v568, %v566
      %v673 = vpack.c.bf16 %v573, %v571
      %v674 = vpack.c.bf16 %v578, %v576
      %v675 = vpack.c.bf16 %v583, %v581
      %v676 = vpack.c.bf16 %v588, %v586
      %v677 = vpack.c.bf16 %v593, %v591
      %v678 = vpack.c.bf16 %v598, %v596
      %v679 = vpack.c.bf16 %v603, %v601
      %v680 = vpack.c.bf16 %v608, %v606
      %v681 = vpack.c.bf16 %v613, %v611
      %v682 = vpack.c.bf16 %v618, %v616
      %v683 = vpack.c.bf16 %v623, %v621
      %v684 = vpack.c.bf16 %v628, %v626
      %v685 = vpack.c.bf16 %v633, %v631
      %v686 = vpack.c.bf16 %v638, %v636
      %s687 = scalar_lea.vmem %s2, 2
      %v688 = vld [vmem:[%s687] sm:$0x3]
      %vm689 = vcmask 31744
      %v691 = vsel %vm689, %v671, 0
      %v694 = vsel %vm689, %v672, 0
      %v697 = vsel %vm689, %v673, 0
      %v700 = vsel %vm689, %v674, 0
      %v703 = vsel %vm689, %v675, 0
      %v706 = vsel %vm689, %v676, 0
      %v709 = vsel %vm689, %v677, 0
      %v712 = vsel %vm689, %v678, 0
      %v715 = vsel %vm689, %v679, 0
      %v718 = vsel %vm689, %v680, 0
      %v721 = vsel %vm689, %v681, 0
      %v724 = vsel %vm689, %v682, 0
      %v727 = vsel %vm689, %v683, 0
      %v730 = vsel %vm689, %v684, 0
      %v733 = vsel %vm689, %v685, 0
      %v736 = vsel %vm689, %v686, 0
      %vm738 = vcmask 1041408
      %v740 = vsel %vm738, %v688, 0
      %742 = vmatprep.subr.bf16.mxu0 0
      %743 = vmatpush1.bf16.msra.mxu0 0
      %744 = vmatprep.subr.bf16.mxu0 0
      %745 = vmatpush1.bf16.msra.mxu0 0
      %746 = vmatprep.subr.bf16.mxu0 0
      %747 = vmatpush1.bf16.msra.mxu0 0
      %748 = vmatprep.subr.bf16.mxu0 0
      %749 = vmatpush1.bf16.msra.mxu0 0
      %750 = vmatprep.subr.bf16.mxu0 0
      %751 = vmatpush1.bf16.msra.mxu0 0
      %752 = vmatprep.subr.bf16.mxu0 0
      %753 = vmatpush1.bf16.msra.mxu0 0
      %754 = vmatprep.subr.bf16.mxu0 0
      %755 = vmatpush1.bf16.msra.mxu0 0
      %756 = vmatprep.subr.bf16.mxu0 0
      %757 = vmatpush1.bf16.msra.mxu0 %v740
      %758 = vmatprep.subr.bf16.mxu0 0
      %759 = vmatpush2.bf16.msra.mxu0 0
      %760 = vmatprep.subr.bf16.mxu0 0
      %761 = vmatpush2.bf16.msra.mxu0 0
      %762 = vmatprep.subr.bf16.mxu0 0
      %763 = vmatpush2.bf16.msra.mxu0 0
      %764 = vmatprep.subr.bf16.mxu0 0
      %765 = vmatpush2.bf16.msra.mxu0 0
      %766 = vmatprep.subr.bf16.mxu0 0
      %767 = vmatpush2.bf16.msra.mxu0 0
      %768 = vmatprep.subr.bf16.mxu0 0
      %769 = vmatpush2.bf16.msra.mxu0 0
      %770 = vmatprep.subr.bf16.mxu0 0
      %771 = vmatpush2.bf16.msra.mxu0 0
      %772 = vmatprep.subr.bf16.mxu0 0
      %773 = vmatpush2.bf16.msra.mxu0 0
      %774 = vmatprep.mubr.bf16.mxu0 0
      %775 = vmatmul.mubr.bf16.gmra.mxu0 %v691
      %v776 = vpop.f32.mrf.mxu0
      %v777 = vadd.f32 0.0, %v776
      %v778 = vpop.f32.mrf.mxu0
      %v779 = vpop.f32.mrf.mxu0
      %v780 = vadd.f32 0.0, %v779
      %v781 = vpop.f32.mrf.mxu0
      %782 = vmatprep.mubr.bf16.mxu0 0
      %783 = vmatmul.mubr.bf16.gmra.mxu0 %v694
      %v784 = vpop.f32.mrf.mxu0
      %v785 = vadd.f32 0.0, %v784
      %v786 = vpop.f32.mrf.mxu0
      %v787 = vpop.f32.mrf.mxu0
      %v788 = vadd.f32 0.0, %v787
      %v789 = vpop.f32.mrf.mxu0
      %790 = vmatprep.mubr.bf16.mxu0 0
      %791 = vmatmul.mubr.bf16.gmra.mxu0 %v697
      %v792 = vpop.f32.mrf.mxu0
      %v793 = vadd.f32 0.0, %v792
      %v794 = vpop.f32.mrf.mxu0
      %v795 = vpop.f32.mrf.mxu0
      %v796 = vadd.f32 0.0, %v795
      %v797 = vpop.f32.mrf.mxu0
      %798 = vmatprep.mubr.bf16.mxu0 0
      %799 = vmatmul.mubr.bf16.gmra.mxu0 %v700
      %v800 = vpop.f32.mrf.mxu0
      %v801 = vadd.f32 0.0, %v800
      %v802 = vpop.f32.mrf.mxu0
      %v803 = vpop.f32.mrf.mxu0
      %v804 = vadd.f32 0.0, %v803
      %v805 = vpop.f32.mrf.mxu0
      %806 = vmatprep.mubr.bf16.mxu0 0
      %807 = vmatmul.mubr.bf16.gmra.mxu0 %v703
      %v808 = vpop.f32.mrf.mxu0
      %v809 = vadd.f32 0.0, %v808
      %v810 = vpop.f32.mrf.mxu0
      %v811 = vpop.f32.mrf.mxu0
      %v812 = vadd.f32 0.0, %v811
      %v813 = vpop.f32.mrf.mxu0
      %814 = vmatprep.mubr.bf16.mxu0 0
      %815 = vmatmul.mubr.bf16.gmra.mxu0 %v706
      %v816 = vpop.f32.mrf.mxu0
      %v817 = vadd.f32 0.0, %v816
      %v818 = vpop.f32.mrf.mxu0
      %v819 = vpop.f32.mrf.mxu0
      %v820 = vadd.f32 0.0, %v819
      %v821 = vpop.f32.mrf.mxu0
      %822 = vmatprep.mubr.bf16.mxu0 0
      %823 = vmatmul.mubr.bf16.gmra.mxu0 %v709
      %v824 = vpop.f32.mrf.mxu0
      %v825 = vadd.f32 0.0, %v824
      %v826 = vpop.f32.mrf.mxu0
      %v827 = vpop.f32.mrf.mxu0
      %v828 = vadd.f32 0.0, %v827
      %v829 = vpop.f32.mrf.mxu0
      %830 = vmatprep.mubr.bf16.mxu0 0
      %831 = vmatmul.mubr.bf16.gmra.mxu0 %v712
      %v832 = vpop.f32.mrf.mxu0
      %v833 = vadd.f32 0.0, %v832
      %v834 = vpop.f32.mrf.mxu0
      %v835 = vpop.f32.mrf.mxu0
      %v836 = vadd.f32 0.0, %v835
      %v837 = vpop.f32.mrf.mxu0
      %838 = vmatprep.mubr.bf16.mxu0 0
      %839 = vmatmul.mubr.bf16.gmra.mxu0 %v715
      %v840 = vpop.f32.mrf.mxu0
      %v841 = vadd.f32 0.0, %v840
      %v842 = vpop.f32.mrf.mxu0
      %v843 = vpop.f32.mrf.mxu0
      %v844 = vadd.f32 0.0, %v843
      %v845 = vpop.f32.mrf.mxu0
      %846 = vmatprep.mubr.bf16.mxu0 0
      %847 = vmatmul.mubr.bf16.gmra.mxu0 %v718
      %v848 = vpop.f32.mrf.mxu0
      %v849 = vadd.f32 0.0, %v848
      %v850 = vpop.f32.mrf.mxu0
      %v851 = vpop.f32.mrf.mxu0
      %v852 = vadd.f32 0.0, %v851
      %v853 = vpop.f32.mrf.mxu0
      %854 = vmatprep.mubr.bf16.mxu0 0
      %855 = vmatmul.mubr.bf16.gmra.mxu0 %v721
      %v856 = vpop.f32.mrf.mxu0
      %v857 = vadd.f32 0.0, %v856
      %v858 = vpop.f32.mrf.mxu0
      %v859 = vpop.f32.mrf.mxu0
      %v860 = vadd.f32 0.0, %v859
      %v861 = vpop.f32.mrf.mxu0
      %862 = vmatprep.mubr.bf16.mxu0 0
      %863 = vmatmul.mubr.bf16.gmra.mxu0 %v724
      %v864 = vpop.f32.mrf.mxu0
      %v865 = vadd.f32 0.0, %v864
      %v866 = vpop.f32.mrf.mxu0
      %v867 = vpop.f32.mrf.mxu0
      %v868 = vadd.f32 0.0, %v867
      %v869 = vpop.f32.mrf.mxu0
      %870 = vmatprep.mubr.bf16.mxu0 0
      %871 = vmatmul.mubr.bf16.gmra.mxu0 %v727
      %v872 = vpop.f32.mrf.mxu0
      %v873 = vadd.f32 0.0, %v872
      %v874 = vpop.f32.mrf.mxu0
      %v875 = vpop.f32.mrf.mxu0
      %v876 = vadd.f32 0.0, %v875
      %v877 = vpop.f32.mrf.mxu0
      %878 = vmatprep.mubr.bf16.mxu0 0
      %879 = vmatmul.mubr.bf16.gmra.mxu0 %v730
      %v880 = vpop.f32.mrf.mxu0
      %v881 = vadd.f32 0.0, %v880
      %v882 = vpop.f32.mrf.mxu0
      %v883 = vpop.f32.mrf.mxu0
      %v884 = vadd.f32 0.0, %v883
      %v885 = vpop.f32.mrf.mxu0
      %886 = vmatprep.mubr.bf16.mxu0 0
      %887 = vmatmul.mubr.bf16.gmra.mxu0 %v733
      %v888 = vpop.f32.mrf.mxu0
      %v889 = vadd.f32 0.0, %v888
      %v890 = vpop.f32.mrf.mxu0
      %v891 = vpop.f32.mrf.mxu0
      %v892 = vadd.f32 0.0, %v891
      %v893 = vpop.f32.mrf.mxu0
      %894 = vmatprep.mubr.bf16.mxu0 0
      %895 = vmatmul.mubr.bf16.gmra.mxu0 %v736
      %v896 = vpop.f32.mrf.mxu0
      %v897 = vadd.f32 0.0, %v896
      %v898 = vpop.f32.mrf.mxu0
      %v899 = vpop.f32.mrf.mxu0
      %v900 = vadd.f32 0.0, %v899
      %v901 = vpop.f32.mrf.mxu0
      %902 = vdwg.mxu0
      %v904 = vsel %vm689, %v493, 0
      %v907 = vsel %vm689, %v494, 0
      %v910 = vsel %vm689, %v495, 0
      %v913 = vsel %vm689, %v496, 0
      %v916 = vsel %vm689, %v497, 0
      %v919 = vsel %vm689, %v498, 0
      %v922 = vsel %vm689, %v499, 0
      %v925 = vsel %vm689, %v500, 0
      %v928 = vsel %vm689, %v501, 0
      %v931 = vsel %vm689, %v502, 0
      %v934 = vsel %vm689, %v503, 0
      %v937 = vsel %vm689, %v504, 0
      %v940 = vsel %vm689, %v505, 0
      %v943 = vsel %vm689, %v506, 0
      %v946 = vsel %vm689, %v507, 0
      %v949 = vsel %vm689, %v508, 0
      %v952 = vsel %vm738, %v509, 0
      %954 = vmatprep.subr.bf16.mxu0 0
      %955 = vmatpush1.bf16.msra.mxu0 0
      %956 = vmatprep.subr.bf16.mxu0 0
      %957 = vmatpush1.bf16.msra.mxu0 0
      %958 = vmatprep.subr.bf16.mxu0 0
      %959 = vmatpush1.bf16.msra.mxu0 0
      %960 = vmatprep.subr.bf16.mxu0 0
      %961 = vmatpush1.bf16.msra.mxu0 0
      %962 = vmatprep.subr.bf16.mxu0 0
      %963 = vmatpush1.bf16.msra.mxu0 0
      %964 = vmatprep.subr.bf16.mxu0 0
      %965 = vmatpush1.bf16.msra.mxu0 0
      %966 = vmatprep.subr.bf16.mxu0 0
      %967 = vmatpush1.bf16.msra.mxu0 0
      %968 = vmatprep.subr.bf16.mxu0 0
      %969 = vmatpush1.bf16.msra.mxu0 %v952
      %970 = vmatprep.subr.bf16.mxu0 0
      %971 = vmatpush2.bf16.msra.mxu0 0
      %972 = vmatprep.subr.bf16.mxu0 0
      %973 = vmatpush2.bf16.msra.mxu0 0
      %974 = vmatprep.subr.bf16.mxu0 0
      %975 = vmatpush2.bf16.msra.mxu0 0
      %976 = vmatprep.subr.bf16.mxu0 0
      %977 = vmatpush2.bf16.msra.mxu0 0
      %978 = vmatprep.subr.bf16.mxu0 0
      %979 = vmatpush2.bf16.msra.mxu0 0
      %980 = vmatprep.subr.bf16.mxu0 0
      %981 = vmatpush2.bf16.msra.mxu0 0
      %982 = vmatprep.subr.bf16.mxu0 0
      %983 = vmatpush2.bf16.msra.mxu0 0
      %984 = vmatprep.subr.bf16.mxu0 0
      %985 = vmatpush2.bf16.msra.mxu0 0
      %986 = vmatprep.mubr.bf16.mxu0 0
      %987 = vmatmul.mubr.bf16.gmra.mxu0 %v904
      %v988 = vpop.f32.mrf.mxu0
      %v989 = vadd.f32 %v777, %v988
      %v990 = vpop.f32.mrf.mxu0
      %v991 = vpop.f32.mrf.mxu0
      %v992 = vadd.f32 %v780, %v991
      %v993 = vpop.f32.mrf.mxu0
      %994 = vmatprep.mubr.bf16.mxu0 0
      %995 = vmatmul.mubr.bf16.gmra.mxu0 %v907
      %v996 = vpop.f32.mrf.mxu0
      %v997 = vadd.f32 %v785, %v996
      %v998 = vpop.f32.mrf.mxu0
      %v999 = vpop.f32.mrf.mxu0
      %v1000 = vadd.f32 %v788, %v999
      %v1001 = vpop.f32.mrf.mxu0
      %1002 = vmatprep.mubr.bf16.mxu0 0
      %1003 = vmatmul.mubr.bf16.gmra.mxu0 %v910
      %v1004 = vpop.f32.mrf.mxu0
      %v1005 = vadd.f32 %v793, %v1004
      %v1006 = vpop.f32.mrf.mxu0
      %v1007 = vpop.f32.mrf.mxu0
      %v1008 = vadd.f32 %v796, %v1007
      %v1009 = vpop.f32.mrf.mxu0
      %1010 = vmatprep.mubr.bf16.mxu0 0
      %1011 = vmatmul.mubr.bf16.gmra.mxu0 %v913
      %v1012 = vpop.f32.mrf.mxu0
      %v1013 = vadd.f32 %v801, %v1012
      %v1014 = vpop.f32.mrf.mxu0
      %v1015 = vpop.f32.mrf.mxu0
      %v1016 = vadd.f32 %v804, %v1015
      %v1017 = vpop.f32.mrf.mxu0
      %1018 = vmatprep.mubr.bf16.mxu0 0
      %1019 = vmatmul.mubr.bf16.gmra.mxu0 %v916
      %v1020 = vpop.f32.mrf.mxu0
      %v1021 = vadd.f32 %v809, %v1020
      %v1022 = vpop.f32.mrf.mxu0
      %v1023 = vpop.f32.mrf.mxu0
      %v1024 = vadd.f32 %v812, %v1023
      %v1025 = vpop.f32.mrf.mxu0
      %1026 = vmatprep.mubr.bf16.mxu0 0
      %1027 = vmatmul.mubr.bf16.gmra.mxu0 %v919
      %v1028 = vpop.f32.mrf.mxu0
      %v1029 = vadd.f32 %v817, %v1028
      %v1030 = vpop.f32.mrf.mxu0
      %v1031 = vpop.f32.mrf.mxu0
      %v1032 = vadd.f32 %v820, %v1031
      %v1033 = vpop.f32.mrf.mxu0
      %1034 = vmatprep.mubr.bf16.mxu0 0
      %1035 = vmatmul.mubr.bf16.gmra.mxu0 %v922
      %v1036 = vpop.f32.mrf.mxu0
      %v1037 = vadd.f32 %v825, %v1036
      %v1038 = vpop.f32.mrf.mxu0
      %v1039 = vpop.f32.mrf.mxu0
      %v1040 = vadd.f32 %v828, %v1039
      %v1041 = vpop.f32.mrf.mxu0
      %1042 = vmatprep.mubr.bf16.mxu0 0
      %1043 = vmatmul.mubr.bf16.gmra.mxu0 %v925
      %v1044 = vpop.f32.mrf.mxu0
      %v1045 = vadd.f32 %v833, %v1044
      %v1046 = vpop.f32.mrf.mxu0
      %v1047 = vpop.f32.mrf.mxu0
      %v1048 = vadd.f32 %v836, %v1047
      %v1049 = vpop.f32.mrf.mxu0
      %1050 = vmatprep.mubr.bf16.mxu0 0
      %1051 = vmatmul.mubr.bf16.gmra.mxu0 %v928
      %v1052 = vpop.f32.mrf.mxu0
      %v1053 = vadd.f32 %v841, %v1052
      %v1054 = vpop.f32.mrf.mxu0
      %v1055 = vpop.f32.mrf.mxu0
      %v1056 = vadd.f32 %v844, %v1055
      %v1057 = vpop.f32.mrf.mxu0
      %1058 = vmatprep.mubr.bf16.mxu0 0
      %1059 = vmatmul.mubr.bf16.gmra.mxu0 %v931
      %v1060 = vpop.f32.mrf.mxu0
      %v1061 = vadd.f32 %v849, %v1060
      %v1062 = vpop.f32.mrf.mxu0
      %v1063 = vpop.f32.mrf.mxu0
      %v1064 = vadd.f32 %v852, %v1063
      %v1065 = vpop.f32.mrf.mxu0
      %1066 = vmatprep.mubr.bf16.mxu0 0
      %1067 = vmatmul.mubr.bf16.gmra.mxu0 %v934
      %v1068 = vpop.f32.mrf.mxu0
      %v1069 = vadd.f32 %v857, %v1068
      %v1070 = vpop.f32.mrf.mxu0
      %v1071 = vpop.f32.mrf.mxu0
      %v1072 = vadd.f32 %v860, %v1071
      %v1073 = vpop.f32.mrf.mxu0
      %1074 = vmatprep.mubr.bf16.mxu0 0
      %1075 = vmatmul.mubr.bf16.gmra.mxu0 %v937
      %v1076 = vpop.f32.mrf.mxu0
      %v1077 = vadd.f32 %v865, %v1076
      %v1078 = vpop.f32.mrf.mxu0
      %v1079 = vpop.f32.mrf.mxu0
      %v1080 = vadd.f32 %v868, %v1079
      %v1081 = vpop.f32.mrf.mxu0
      %1082 = vmatprep.mubr.bf16.mxu0 0
      %1083 = vmatmul.mubr.bf16.gmra.mxu0 %v940
      %v1084 = vpop.f32.mrf.mxu0
      %v1085 = vadd.f32 %v873, %v1084
      %v1086 = vpop.f32.mrf.mxu0
      %v1087 = vpop.f32.mrf.mxu0
      %v1088 = vadd.f32 %v876, %v1087
      %v1089 = vpop.f32.mrf.mxu0
      %1090 = vmatprep.mubr.bf16.mxu0 0
      %1091 = vmatmul.mubr.bf16.gmra.mxu0 %v943
      %v1092 = vpop.f32.mrf.mxu0
      %v1093 = vadd.f32 %v881, %v1092
      %v1094 = vpop.f32.mrf.mxu0
      %v1095 = vpop.f32.mrf.mxu0
      %v1096 = vadd.f32 %v884, %v1095
      %v1097 = vpop.f32.mrf.mxu0
      %1098 = vmatprep.mubr.bf16.mxu0 0
      %1099 = vmatmul.mubr.bf16.gmra.mxu0 %v946
      %v1100 = vpop.f32.mrf.mxu0
      %v1101 = vadd.f32 %v889, %v1100
      %v1102 = vpop.f32.mrf.mxu0
      %v1103 = vpop.f32.mrf.mxu0
      %v1104 = vadd.f32 %v892, %v1103
      %v1105 = vpop.f32.mrf.mxu0
      %1106 = vmatprep.mubr.bf16.mxu0 0
      %1107 = vmatmul.mubr.bf16.gmra.mxu0 %v949
      %v1108 = vpop.f32.mrf.mxu0
      %v1109 = vadd.f32 %v897, %v1108
      %v1110 = vpop.f32.mrf.mxu0
      %v1111 = vpop.f32.mrf.mxu0
      %v1112 = vadd.f32 %v900, %v1111
      %v1113 = vpop.f32.mrf.mxu0
      %1114 = vdwg.mxu0
      %vm1115 = vcmask 1045504
      %v1116 = vrot.slane %v439, 2
      %v1117 = vrot.slane %v440, 2
      %v1118 = vsel %vm1115, %v1116, %v1117
      %v1119 = vrot.slane %v441, 2
      %v1120 = vsel %vm1115, %v1117, %v1119
      %v1121 = vrot.slane %v442, 2
      %v1122 = vrot.slane %v443, 2
      %v1123 = vsel %vm1115, %v1121, %v1122
      %v1124 = vrot.slane %v444, 2
      %v1125 = vsel %vm1115, %v1122, %v1124
      %v1126 = vrot.slane %v445, 2
      %v1127 = vrot.slane %v446, 2
      %v1128 = vsel %vm1115, %v1126, %v1127
      %v1129 = vrot.slane %v447, 2
      %v1130 = vsel %vm1115, %v1127, %v1129
      %v1131 = vrot.slane %v448, 2
      %v1132 = vrot.slane %v449, 2
      %v1133 = vsel %vm1115, %v1131, %v1132
      %v1134 = vrot.slane %v450, 2
      %v1135 = vsel %vm1115, %v1132, %v1134
      %v1136 = vrot.slane %v451, 2
      %v1137 = vrot.slane %v452, 2
      %v1138 = vsel %vm1115, %v1136, %v1137
      %v1139 = vrot.slane %v453, 2
      %v1140 = vsel %vm1115, %v1137, %v1139
      %v1141 = vrot.slane %v454, 2
      %v1142 = vrot.slane %v455, 2
      %v1143 = vsel %vm1115, %v1141, %v1142
      %v1144 = vrot.slane %v456, 2
      %v1145 = vsel %vm1115, %v1142, %v1144
      %v1146 = vrot.slane %v457, 2
      %v1147 = vrot.slane %v458, 2
      %v1148 = vsel %vm1115, %v1146, %v1147
      %v1149 = vrot.slane %v459, 2
      %v1150 = vsel %vm1115, %v1147, %v1149
      %v1151 = vrot.slane %v460, 2
      %v1152 = vrot.slane %v461, 2
      %v1153 = vsel %vm1115, %v1151, %v1152
      %v1154 = vrot.slane %v462, 2
      %v1155 = vsel %vm1115, %v1152, %v1154
      %v1156 = vrot.slane %v463, 2
      %v1157 = vrot.slane %v464, 2
      %v1158 = vsel %vm1115, %v1156, %v1157
      %v1159 = vrot.slane %v465, 2
      %v1160 = vsel %vm1115, %v1157, %v1159
      %v1161 = vrot.slane %v466, 2
      %v1162 = vrot.slane %v467, 2
      %v1163 = vsel %vm1115, %v1161, %v1162
      %v1164 = vrot.slane %v468, 2
      %v1165 = vsel %vm1115, %v1162, %v1164
      %v1166 = vrot.slane %v469, 2
      %v1167 = vrot.slane %v470, 2
      %v1168 = vsel %vm1115, %v1166, %v1167
      %v1169 = vrot.slane %v471, 2
      %v1170 = vsel %vm1115, %v1167, %v1169
      %v1171 = vrot.slane %v472, 2
      %v1172 = vrot.slane %v473, 2
      %v1173 = vsel %vm1115, %v1171, %v1172
      %v1174 = vrot.slane %v474, 2
      %v1175 = vsel %vm1115, %v1172, %v1174
      %v1176 = vrot.slane %v475, 2
      %v1177 = vrot.slane %v476, 2
      %v1178 = vsel %vm1115, %v1176, %v1177
      %v1179 = vrot.slane %v477, 2
      %v1180 = vsel %vm1115, %v1177, %v1179
      %v1181 = vrot.slane %v478, 2
      %v1182 = vrot.slane %v479, 2
      %v1183 = vsel %vm1115, %v1181, %v1182
      %v1184 = vrot.slane %v480, 2
      %v1185 = vsel %vm1115, %v1182, %v1184
      %v1186 = vrot.slane %v481, 2
      %v1187 = vrot.slane %v482, 2
      %v1188 = vsel %vm1115, %v1186, %v1187
      %v1189 = vrot.slane %v483, 2
      %v1190 = vsel %vm1115, %v1187, %v1189
      %v1191 = vrot.slane %v484, 2
      %v1192 = vrot.slane %v485, 2
      %v1193 = vsel %vm1115, %v1191, %v1192
      %v1194 = vrot.slane %v486, 2
      %v1195 = vsel %vm1115, %v1192, %v1194
      %v1228 = vpack.c.bf16 %v1120, %v1118
      %v1229 = vpack.c.bf16 %v1125, %v1123
      %v1230 = vpack.c.bf16 %v1130, %v1128
      %v1231 = vpack.c.bf16 %v1135, %v1133
      %v1232 = vpack.c.bf16 %v1140, %v1138
      %v1233 = vpack.c.bf16 %v1145, %v1143
      %v1234 = vpack.c.bf16 %v1150, %v1148
      %v1235 = vpack.c.bf16 %v1155, %v1153
      %v1236 = vpack.c.bf16 %v1160, %v1158
      %v1237 = vpack.c.bf16 %v1165, %v1163
      %v1238 = vpack.c.bf16 %v1170, %v1168
      %v1239 = vpack.c.bf16 %v1175, %v1173
      %v1240 = vpack.c.bf16 %v1180, %v1178
      %v1241 = vpack.c.bf16 %v1185, %v1183
      %v1242 = vpack.c.bf16 %v1190, %v1188
      %v1243 = vpack.c.bf16 %v1195, %v1193
      %s1244 = scalar_lea.vmem %s2, 4
      %v1245 = vld [vmem:[%s1244] sm:$0x3]
      %v1247 = vsel %vm689, %v1228, 0
      %v1250 = vsel %vm689, %v1229, 0
      %v1253 = vsel %vm689, %v1230, 0
      %v1256 = vsel %vm689, %v1231, 0
      %v1259 = vsel %vm689, %v1232, 0
      %v1262 = vsel %vm689, %v1233, 0
      %v1265 = vsel %vm689, %v1234, 0
      %v1268 = vsel %vm689, %v1235, 0
      %v1271 = vsel %vm689, %v1236, 0
      %v1274 = vsel %vm689, %v1237, 0
      %v1277 = vsel %vm689, %v1238, 0
      %v1280 = vsel %vm689, %v1239, 0
      %v1283 = vsel %vm689, %v1240, 0
      %v1286 = vsel %vm689, %v1241, 0
      %v1289 = vsel %vm689, %v1242, 0
      %v1292 = vsel %vm689, %v1243, 0
      %v1295 = vsel %vm738, %v1245, 0
      %1297 = vmatprep.subr.bf16.mxu0 0
      %1298 = vmatpush1.bf16.msra.mxu0 0
      %1299 = vmatprep.subr.bf16.mxu0 0
      %1300 = vmatpush1.bf16.msra.mxu0 0
      %1301 = vmatprep.subr.bf16.mxu0 0
      %1302 = vmatpush1.bf16.msra.mxu0 0
      %1303 = vmatprep.subr.bf16.mxu0 0
      %1304 = vmatpush1.bf16.msra.mxu0 0
      %1305 = vmatprep.subr.bf16.mxu0 0
      %1306 = vmatpush1.bf16.msra.mxu0 0
      %1307 = vmatprep.subr.bf16.mxu0 0
      %1308 = vmatpush1.bf16.msra.mxu0 0
      %1309 = vmatprep.subr.bf16.mxu0 0
      %1310 = vmatpush1.bf16.msra.mxu0 0
      %1311 = vmatprep.subr.bf16.mxu0 0
      %1312 = vmatpush1.bf16.msra.mxu0 %v1295
      %1313 = vmatprep.subr.bf16.mxu0 0
      %1314 = vmatpush2.bf16.msra.mxu0 0
      %1315 = vmatprep.subr.bf16.mxu0 0
      %1316 = vmatpush2.bf16.msra.mxu0 0
      %1317 = vmatprep.subr.bf16.mxu0 0
      %1318 = vmatpush2.bf16.msra.mxu0 0
      %1319 = vmatprep.subr.bf16.mxu0 0
      %1320 = vmatpush2.bf16.msra.mxu0 0
      %1321 = vmatprep.subr.bf16.mxu0 0
      %1322 = vmatpush2.bf16.msra.mxu0 0
      %1323 = vmatprep.subr.bf16.mxu0 0
      %1324 = vmatpush2.bf16.msra.mxu0 0
      %1325 = vmatprep.subr.bf16.mxu0 0
      %1326 = vmatpush2.bf16.msra.mxu0 0
      %1327 = vmatprep.subr.bf16.mxu0 0
      %1328 = vmatpush2.bf16.msra.mxu0 0
      %1329 = vmatprep.mubr.bf16.mxu0 0
      %1330 = vmatmul.mubr.bf16.gmra.mxu0 %v1247
      %v1331 = vpop.f32.mrf.mxu0
      %v1332 = vadd.f32 0.0, %v1331
      %v1333 = vpop.f32.mrf.mxu0
      %v1334 = vpop.f32.mrf.mxu0
      %v1335 = vadd.f32 0.0, %v1334
      %v1336 = vpop.f32.mrf.mxu0
      %1337 = vmatprep.mubr.bf16.mxu0 0
      %1338 = vmatmul.mubr.bf16.gmra.mxu0 %v1250
      %v1339 = vpop.f32.mrf.mxu0
      %v1340 = vadd.f32 0.0, %v1339
      %v1341 = vpop.f32.mrf.mxu0
      %v1342 = vpop.f32.mrf.mxu0
      %v1343 = vadd.f32 0.0, %v1342
      %v1344 = vpop.f32.mrf.mxu0
      %1345 = vmatprep.mubr.bf16.mxu0 0
      %1346 = vmatmul.mubr.bf16.gmra.mxu0 %v1253
      %v1347 = vpop.f32.mrf.mxu0
      %v1348 = vadd.f32 0.0, %v1347
      %v1349 = vpop.f32.mrf.mxu0
      %v1350 = vpop.f32.mrf.mxu0
      %v1351 = vadd.f32 0.0, %v1350
      %v1352 = vpop.f32.mrf.mxu0
      %1353 = vmatprep.mubr.bf16.mxu0 0
      %1354 = vmatmul.mubr.bf16.gmra.mxu0 %v1256
      %v1355 = vpop.f32.mrf.mxu0
      %v1356 = vadd.f32 0.0, %v1355
      %v1357 = vpop.f32.mrf.mxu0
      %v1358 = vpop.f32.mrf.mxu0
      %v1359 = vadd.f32 0.0, %v1358
      %v1360 = vpop.f32.mrf.mxu0
      %1361 = vmatprep.mubr.bf16.mxu0 0
      %1362 = vmatmul.mubr.bf16.gmra.mxu0 %v1259
      %v1363 = vpop.f32.mrf.mxu0
      %v1364 = vadd.f32 0.0, %v1363
      %v1365 = vpop.f32.mrf.mxu0
      %v1366 = vpop.f32.mrf.mxu0
      %v1367 = vadd.f32 0.0, %v1366
      %v1368 = vpop.f32.mrf.mxu0
      %1369 = vmatprep.mubr.bf16.mxu0 0
      %1370 = vmatmul.mubr.bf16.gmra.mxu0 %v1262
      %v1371 = vpop.f32.mrf.mxu0
      %v1372 = vadd.f32 0.0, %v1371
      %v1373 = vpop.f32.mrf.mxu0
      %v1374 = vpop.f32.mrf.mxu0
      %v1375 = vadd.f32 0.0, %v1374
      %v1376 = vpop.f32.mrf.mxu0
      %1377 = vmatprep.mubr.bf16.mxu0 0
      %1378 = vmatmul.mubr.bf16.gmra.mxu0 %v1265
      %v1379 = vpop.f32.mrf.mxu0
      %v1380 = vadd.f32 0.0, %v1379
      %v1381 = vpop.f32.mrf.mxu0
      %v1382 = vpop.f32.mrf.mxu0
      %v1383 = vadd.f32 0.0, %v1382
      %v1384 = vpop.f32.mrf.mxu0
      %1385 = vmatprep.mubr.bf16.mxu0 0
      %1386 = vmatmul.mubr.bf16.gmra.mxu0 %v1268
      %v1387 = vpop.f32.mrf.mxu0
      %v1388 = vadd.f32 0.0, %v1387
      %v1389 = vpop.f32.mrf.mxu0
      %v1390 = vpop.f32.mrf.mxu0
      %v1391 = vadd.f32 0.0, %v1390
      %v1392 = vpop.f32.mrf.mxu0
      %1393 = vmatprep.mubr.bf16.mxu0 0
      %1394 = vmatmul.mubr.bf16.gmra.mxu0 %v1271
      %v1395 = vpop.f32.mrf.mxu0
      %v1396 = vadd.f32 0.0, %v1395
      %v1397 = vpop.f32.mrf.mxu0
      %v1398 = vpop.f32.mrf.mxu0
      %v1399 = vadd.f32 0.0, %v1398
      %v1400 = vpop.f32.mrf.mxu0
      %1401 = vmatprep.mubr.bf16.mxu0 0
      %1402 = vmatmul.mubr.bf16.gmra.mxu0 %v1274
      %v1403 = vpop.f32.mrf.mxu0
      %v1404 = vadd.f32 0.0, %v1403
      %v1405 = vpop.f32.mrf.mxu0
      %v1406 = vpop.f32.mrf.mxu0
      %v1407 = vadd.f32 0.0, %v1406
      %v1408 = vpop.f32.mrf.mxu0
      %1409 = vmatprep.mubr.bf16.mxu0 0
      %1410 = vmatmul.mubr.bf16.gmra.mxu0 %v1277
      %v1411 = vpop.f32.mrf.mxu0
      %v1412 = vadd.f32 0.0, %v1411
      %v1413 = vpop.f32.mrf.mxu0
      %v1414 = vpop.f32.mrf.mxu0
      %v1415 = vadd.f32 0.0, %v1414
      %v1416 = vpop.f32.mrf.mxu0
      %1417 = vmatprep.mubr.bf16.mxu0 0
      %1418 = vmatmul.mubr.bf16.gmra.mxu0 %v1280
      %v1419 = vpop.f32.mrf.mxu0
      %v1420 = vadd.f32 0.0, %v1419
      %v1421 = vpop.f32.mrf.mxu0
      %v1422 = vpop.f32.mrf.mxu0
      %v1423 = vadd.f32 0.0, %v1422
      %v1424 = vpop.f32.mrf.mxu0
      %1425 = vmatprep.mubr.bf16.mxu0 0
      %1426 = vmatmul.mubr.bf16.gmra.mxu0 %v1283
      %v1427 = vpop.f32.mrf.mxu0
      %v1428 = vadd.f32 0.0, %v1427
      %v1429 = vpop.f32.mrf.mxu0
      %v1430 = vpop.f32.mrf.mxu0
      %v1431 = vadd.f32 0.0, %v1430
      %v1432 = vpop.f32.mrf.mxu0
      %1433 = vmatprep.mubr.bf16.mxu0 0
      %1434 = vmatmul.mubr.bf16.gmra.mxu0 %v1286
      %v1435 = vpop.f32.mrf.mxu0
      %v1436 = vadd.f32 0.0, %v1435
      %v1437 = vpop.f32.mrf.mxu0
      %v1438 = vpop.f32.mrf.mxu0
      %v1439 = vadd.f32 0.0, %v1438
      %v1440 = vpop.f32.mrf.mxu0
      %1441 = vmatprep.mubr.bf16.mxu0 0
      %1442 = vmatmul.mubr.bf16.gmra.mxu0 %v1289
      %v1443 = vpop.f32.mrf.mxu0
      %v1444 = vadd.f32 0.0, %v1443
      %v1445 = vpop.f32.mrf.mxu0
      %v1446 = vpop.f32.mrf.mxu0
      %v1447 = vadd.f32 0.0, %v1446
      %v1448 = vpop.f32.mrf.mxu0
      %1449 = vmatprep.mubr.bf16.mxu0 0
      %1450 = vmatmul.mubr.bf16.gmra.mxu0 %v1292
      %v1451 = vpop.f32.mrf.mxu0
      %v1452 = vadd.f32 0.0, %v1451
      %v1453 = vpop.f32.mrf.mxu0
      %v1454 = vpop.f32.mrf.mxu0
      %v1455 = vadd.f32 0.0, %v1454
      %v1456 = vpop.f32.mrf.mxu0
      %1457 = vdwg.mxu0
      %v1458 = vadd.f32 %v989, %v1332
      %v1459 = vadd.f32 %v992, %v1335
      %v1460 = vadd.f32 %v997, %v1340
      %v1461 = vadd.f32 %v1000, %v1343
      %v1462 = vadd.f32 %v1005, %v1348
      %v1463 = vadd.f32 %v1008, %v1351
      %v1464 = vadd.f32 %v1013, %v1356
      %v1465 = vadd.f32 %v1016, %v1359
      %v1466 = vadd.f32 %v1021, %v1364
      %v1467 = vadd.f32 %v1024, %v1367
      %v1468 = vadd.f32 %v1029, %v1372
      %v1469 = vadd.f32 %v1032, %v1375
      %v1470 = vadd.f32 %v1037, %v1380
      %v1471 = vadd.f32 %v1040, %v1383
      %v1472 = vadd.f32 %v1045, %v1388
      %v1473 = vadd.f32 %v1048, %v1391
      %v1474 = vadd.f32 %v1053, %v1396
      %v1475 = vadd.f32 %v1056, %v1399
      %v1476 = vadd.f32 %v1061, %v1404
      %v1477 = vadd.f32 %v1064, %v1407
      %v1478 = vadd.f32 %v1069, %v1412
      %v1479 = vadd.f32 %v1072, %v1415
      %v1480 = vadd.f32 %v1077, %v1420
      %v1481 = vadd.f32 %v1080, %v1423
      %v1482 = vadd.f32 %v1085, %v1428
      %v1483 = vadd.f32 %v1088, %v1431
      %v1484 = vadd.f32 %v1093, %v1436
      %v1485 = vadd.f32 %v1096, %v1439
      %v1486 = vadd.f32 %v1101, %v1444
      %v1487 = vadd.f32 %v1104, %v1447
      %v1488 = vadd.f32 %v1109, %v1452
      %v1489 = vadd.f32 %v1112, %v1455
      %v1490 = vpack.c.bf16 %v488, %v487
      %s1491 = scalar_lea.vmem %s2, 6
      %v1492 = vld [vmem:[%s1491] sm:$0x3]
      %v1494 = vsel %vm689, %v1490, 0
      %v1497 = vsel %vm738, %v1492, 0
      %1499 = vmatprep.subr.bf16.mxu0 0
      %1500 = vmatpush1.bf16.msra.mxu0 0
      %1501 = vmatprep.subr.bf16.mxu0 0
      %1502 = vmatpush1.bf16.msra.mxu0 0
      %1503 = vmatprep.subr.bf16.mxu0 0
      %1504 = vmatpush1.bf16.msra.mxu0 0
      %1505 = vmatprep.subr.bf16.mxu0 0
      %1506 = vmatpush1.bf16.msra.mxu0 0
      %1507 = vmatprep.subr.bf16.mxu0 0
      %1508 = vmatpush1.bf16.msra.mxu0 0
      %1509 = vmatprep.subr.bf16.mxu0 0
      %1510 = vmatpush1.bf16.msra.mxu0 0
      %1511 = vmatprep.subr.bf16.mxu0 0
      %1512 = vmatpush1.bf16.msra.mxu0 0
      %1513 = vmatprep.subr.bf16.mxu0 0
      %1514 = vmatpush1.bf16.msra.mxu0 %v1497
      %1515 = vmatprep.subr.bf16.mxu0 0
      %1516 = vmatpush2.bf16.msra.mxu0 0
      %1517 = vmatprep.subr.bf16.mxu0 0
      %1518 = vmatpush2.bf16.msra.mxu0 0
      %1519 = vmatprep.subr.bf16.mxu0 0
      %1520 = vmatpush2.bf16.msra.mxu0 0
      %1521 = vmatprep.subr.bf16.mxu0 0
      %1522 = vmatpush2.bf16.msra.mxu0 0
      %1523 = vmatprep.subr.bf16.mxu0 0
      %1524 = vmatpush2.bf16.msra.mxu0 0
      %1525 = vmatprep.subr.bf16.mxu0 0
      %1526 = vmatpush2.bf16.msra.mxu0 0
      %1527 = vmatprep.subr.bf16.mxu0 0
      %1528 = vmatpush2.bf16.msra.mxu0 0
      %1529 = vmatprep.subr.bf16.mxu0 0
      %1530 = vmatpush2.bf16.msra.mxu0 0
      %1531 = vmatprep.mubr.bf16.mxu0 0
      %1532 = vmatmul.mubr.bf16.gmra.mxu0 %v907
      %v1533 = vpop.f32.mrf.mxu0
      %v1534 = vadd.f32 0.0, %v1533
      %v1535 = vpop.f32.mrf.mxu0
      %v1536 = vpop.f32.mrf.mxu0
      %v1537 = vadd.f32 0.0, %v1536
      %v1538 = vpop.f32.mrf.mxu0
      %1539 = vmatprep.mubr.bf16.mxu0 0
      %1540 = vmatmul.mubr.bf16.gmra.mxu0 %v910
      %v1541 = vpop.f32.mrf.mxu0
      %v1542 = vadd.f32 0.0, %v1541
      %v1543 = vpop.f32.mrf.mxu0
      %v1544 = vpop.f32.mrf.mxu0
      %v1545 = vadd.f32 0.0, %v1544
      %v1546 = vpop.f32.mrf.mxu0
      %1547 = vmatprep.mubr.bf16.mxu0 0
      %1548 = vmatmul.mubr.bf16.gmra.mxu0 %v913
      %v1549 = vpop.f32.mrf.mxu0
      %v1550 = vadd.f32 0.0, %v1549
      %v1551 = vpop.f32.mrf.mxu0
      %v1552 = vpop.f32.mrf.mxu0
      %v1553 = vadd.f32 0.0, %v1552
      %v1554 = vpop.f32.mrf.mxu0
      %1555 = vmatprep.mubr.bf16.mxu0 0
      %1556 = vmatmul.mubr.bf16.gmra.mxu0 %v916
      %v1557 = vpop.f32.mrf.mxu0
      %v1558 = vadd.f32 0.0, %v1557
      %v1559 = vpop.f32.mrf.mxu0
      %v1560 = vpop.f32.mrf.mxu0
      %v1561 = vadd.f32 0.0, %v1560
      %v1562 = vpop.f32.mrf.mxu0
      %1563 = vmatprep.mubr.bf16.mxu0 0
      %1564 = vmatmul.mubr.bf16.gmra.mxu0 %v919
      %v1565 = vpop.f32.mrf.mxu0
      %v1566 = vadd.f32 0.0, %v1565
      %v1567 = vpop.f32.mrf.mxu0
      %v1568 = vpop.f32.mrf.mxu0
      %v1569 = vadd.f32 0.0, %v1568
      %v1570 = vpop.f32.mrf.mxu0
      %1571 = vmatprep.mubr.bf16.mxu0 0
      %1572 = vmatmul.mubr.bf16.gmra.mxu0 %v922
      %v1573 = vpop.f32.mrf.mxu0
      %v1574 = vadd.f32 0.0, %v1573
      %v1575 = vpop.f32.mrf.mxu0
      %v1576 = vpop.f32.mrf.mxu0
      %v1577 = vadd.f32 0.0, %v1576
      %v1578 = vpop.f32.mrf.mxu0
      %1579 = vmatprep.mubr.bf16.mxu0 0
      %1580 = vmatmul.mubr.bf16.gmra.mxu0 %v925
      %v1581 = vpop.f32.mrf.mxu0
      %v1582 = vadd.f32 0.0, %v1581
      %v1583 = vpop.f32.mrf.mxu0
      %v1584 = vpop.f32.mrf.mxu0
      %v1585 = vadd.f32 0.0, %v1584
      %v1586 = vpop.f32.mrf.mxu0
      %1587 = vmatprep.mubr.bf16.mxu0 0
      %1588 = vmatmul.mubr.bf16.gmra.mxu0 %v928
      %v1589 = vpop.f32.mrf.mxu0
      %v1590 = vadd.f32 0.0, %v1589
      %v1591 = vpop.f32.mrf.mxu0
      %v1592 = vpop.f32.mrf.mxu0
      %v1593 = vadd.f32 0.0, %v1592
      %v1594 = vpop.f32.mrf.mxu0
      %1595 = vmatprep.mubr.bf16.mxu0 0
      %1596 = vmatmul.mubr.bf16.gmra.mxu0 %v931
      %v1597 = vpop.f32.mrf.mxu0
      %v1598 = vadd.f32 0.0, %v1597
      %v1599 = vpop.f32.mrf.mxu0
      %v1600 = vpop.f32.mrf.mxu0
      %v1601 = vadd.f32 0.0, %v1600
      %v1602 = vpop.f32.mrf.mxu0
      %1603 = vmatprep.mubr.bf16.mxu0 0
      %1604 = vmatmul.mubr.bf16.gmra.mxu0 %v934
      %v1605 = vpop.f32.mrf.mxu0
      %v1606 = vadd.f32 0.0, %v1605
      %v1607 = vpop.f32.mrf.mxu0
      %v1608 = vpop.f32.mrf.mxu0
      %v1609 = vadd.f32 0.0, %v1608
      %v1610 = vpop.f32.mrf.mxu0
      %1611 = vmatprep.mubr.bf16.mxu0 0
      %1612 = vmatmul.mubr.bf16.gmra.mxu0 %v937
      %v1613 = vpop.f32.mrf.mxu0
      %v1614 = vadd.f32 0.0, %v1613
      %v1615 = vpop.f32.mrf.mxu0
      %v1616 = vpop.f32.mrf.mxu0
      %v1617 = vadd.f32 0.0, %v1616
      %v1618 = vpop.f32.mrf.mxu0
      %1619 = vmatprep.mubr.bf16.mxu0 0
      %1620 = vmatmul.mubr.bf16.gmra.mxu0 %v940
      %v1621 = vpop.f32.mrf.mxu0
      %v1622 = vadd.f32 0.0, %v1621
      %v1623 = vpop.f32.mrf.mxu0
      %v1624 = vpop.f32.mrf.mxu0
      %v1625 = vadd.f32 0.0, %v1624
      %v1626 = vpop.f32.mrf.mxu0
      %1627 = vmatprep.mubr.bf16.mxu0 0
      %1628 = vmatmul.mubr.bf16.gmra.mxu0 %v943
      %v1629 = vpop.f32.mrf.mxu0
      %v1630 = vadd.f32 0.0, %v1629
      %v1631 = vpop.f32.mrf.mxu0
      %v1632 = vpop.f32.mrf.mxu0
      %v1633 = vadd.f32 0.0, %v1632
      %v1634 = vpop.f32.mrf.mxu0
      %1635 = vmatprep.mubr.bf16.mxu0 0
      %1636 = vmatmul.mubr.bf16.gmra.mxu0 %v946
      %v1637 = vpop.f32.mrf.mxu0
      %v1638 = vadd.f32 0.0, %v1637
      %v1639 = vpop.f32.mrf.mxu0
      %v1640 = vpop.f32.mrf.mxu0
      %v1641 = vadd.f32 0.0, %v1640
      %v1642 = vpop.f32.mrf.mxu0
      %1643 = vmatprep.mubr.bf16.mxu0 0
      %1644 = vmatmul.mubr.bf16.gmra.mxu0 %v949
      %v1645 = vpop.f32.mrf.mxu0
      %v1646 = vadd.f32 0.0, %v1645
      %v1647 = vpop.f32.mrf.mxu0
      %v1648 = vpop.f32.mrf.mxu0
      %v1649 = vadd.f32 0.0, %v1648
      %v1650 = vpop.f32.mrf.mxu0
      %1651 = vmatprep.mubr.bf16.mxu0 0
      %1652 = vmatmul.mubr.bf16.gmra.mxu0 %v1494
      %v1653 = vpop.f32.mrf.mxu0
      %v1654 = vadd.f32 0.0, %v1653
      %v1655 = vpop.f32.mrf.mxu0
      %v1656 = vpop.f32.mrf.mxu0
      %v1657 = vadd.f32 0.0, %v1656
      %v1658 = vpop.f32.mrf.mxu0
      %1659 = vdwg.mxu0
      %v1660 = vadd.f32 %v1458, %v1534
      %v1661 = vadd.f32 %v1459, %v1537
      %v1662 = vadd.f32 %v1460, %v1542
      %v1663 = vadd.f32 %v1461, %v1545
      %v1664 = vadd.f32 %v1462, %v1550
      %v1665 = vadd.f32 %v1463, %v1553
      %v1666 = vadd.f32 %v1464, %v1558
      %v1667 = vadd.f32 %v1465, %v1561
      %v1668 = vadd.f32 %v1466, %v1566
      %v1669 = vadd.f32 %v1467, %v1569
      %v1670 = vadd.f32 %v1468, %v1574
      %v1671 = vadd.f32 %v1469, %v1577
      %v1672 = vadd.f32 %v1470, %v1582
      %v1673 = vadd.f32 %v1471, %v1585
      %v1674 = vadd.f32 %v1472, %v1590
      %v1675 = vadd.f32 %v1473, %v1593
      %v1676 = vadd.f32 %v1474, %v1598
      %v1677 = vadd.f32 %v1475, %v1601
      %v1678 = vadd.f32 %v1476, %v1606
      %v1679 = vadd.f32 %v1477, %v1609
      %v1680 = vadd.f32 %v1478, %v1614
      %v1681 = vadd.f32 %v1479, %v1617
      %v1682 = vadd.f32 %v1480, %v1622
      %v1683 = vadd.f32 %v1481, %v1625
      %v1684 = vadd.f32 %v1482, %v1630
      %v1685 = vadd.f32 %v1483, %v1633
      %v1686 = vadd.f32 %v1484, %v1638
      %v1687 = vadd.f32 %v1485, %v1641
      %v1688 = vadd.f32 %v1486, %v1646
      %v1689 = vadd.f32 %v1487, %v1649
      %v1690 = vadd.f32 %v1488, %v1654
      %v1691 = vadd.f32 %v1489, %v1657
      %v1695 = vrot.slane %v487, 1
      %v1696 = vrot.slane %v488, 1
      %v1697 = vsel %vm558, %v1695, %v1696
      %v1698 = vrot.slane %v489, 1
      %v1699 = vsel %vm558, %v1696, %v1698
      %v1702 = vpack.c.bf16 %v1699, %v1697
      %s1703 = scalar_lea.vmem %s2, 8
      %v1704 = vld [vmem:[%s1703] sm:$0x3]
      %v1706 = vsel %vm689, %v1702, 0
      %v1709 = vsel %vm738, %v1704, 0
      %1711 = vmatprep.subr.bf16.mxu0 0
      %1712 = vmatpush1.bf16.msra.mxu0 0
      %1713 = vmatprep.subr.bf16.mxu0 0
      %1714 = vmatpush1.bf16.msra.mxu0 0
      %1715 = vmatprep.subr.bf16.mxu0 0
      %1716 = vmatpush1.bf16.msra.mxu0 0
      %1717 = vmatprep.subr.bf16.mxu0 0
      %1718 = vmatpush1.bf16.msra.mxu0 0
      %1719 = vmatprep.subr.bf16.mxu0 0
      %1720 = vmatpush1.bf16.msra.mxu0 0
      %1721 = vmatprep.subr.bf16.mxu0 0
      %1722 = vmatpush1.bf16.msra.mxu0 0
      %1723 = vmatprep.subr.bf16.mxu0 0
      %1724 = vmatpush1.bf16.msra.mxu0 0
      %1725 = vmatprep.subr.bf16.mxu0 0
      %1726 = vmatpush1.bf16.msra.mxu0 %v1709
      %1727 = vmatprep.subr.bf16.mxu0 0
      %1728 = vmatpush2.bf16.msra.mxu0 0
      %1729 = vmatprep.subr.bf16.mxu0 0
      %1730 = vmatpush2.bf16.msra.mxu0 0
      %1731 = vmatprep.subr.bf16.mxu0 0
      %1732 = vmatpush2.bf16.msra.mxu0 0
      %1733 = vmatprep.subr.bf16.mxu0 0
      %1734 = vmatpush2.bf16.msra.mxu0 0
      %1735 = vmatprep.subr.bf16.mxu0 0
      %1736 = vmatpush2.bf16.msra.mxu0 0
      %1737 = vmatprep.subr.bf16.mxu0 0
      %1738 = vmatpush2.bf16.msra.mxu0 0
      %1739 = vmatprep.subr.bf16.mxu0 0
      %1740 = vmatpush2.bf16.msra.mxu0 0
      %1741 = vmatprep.subr.bf16.mxu0 0
      %1742 = vmatpush2.bf16.msra.mxu0 0
      %1743 = vmatprep.mubr.bf16.mxu0 0
      %1744 = vmatmul.mubr.bf16.gmra.mxu0 %v694
      %v1745 = vpop.f32.mrf.mxu0
      %v1746 = vadd.f32 0.0, %v1745
      %v1747 = vpop.f32.mrf.mxu0
      %v1748 = vpop.f32.mrf.mxu0
      %v1749 = vadd.f32 0.0, %v1748
      %v1750 = vpop.f32.mrf.mxu0
      %1751 = vmatprep.mubr.bf16.mxu0 0
      %1752 = vmatmul.mubr.bf16.gmra.mxu0 %v697
      %v1753 = vpop.f32.mrf.mxu0
      %v1754 = vadd.f32 0.0, %v1753
      %v1755 = vpop.f32.mrf.mxu0
      %v1756 = vpop.f32.mrf.mxu0
      %v1757 = vadd.f32 0.0, %v1756
      %v1758 = vpop.f32.mrf.mxu0
      %1759 = vmatprep.mubr.bf16.mxu0 0
      %1760 = vmatmul.mubr.bf16.gmra.mxu0 %v700
      %v1761 = vpop.f32.mrf.mxu0
      %v1762 = vadd.f32 0.0, %v1761
      %v1763 = vpop.f32.mrf.mxu0
      %v1764 = vpop.f32.mrf.mxu0
      %v1765 = vadd.f32 0.0, %v1764
      %v1766 = vpop.f32.mrf.mxu0
      %1767 = vmatprep.mubr.bf16.mxu0 0
      %1768 = vmatmul.mubr.bf16.gmra.mxu0 %v703
      %v1769 = vpop.f32.mrf.mxu0
      %v1770 = vadd.f32 0.0, %v1769
      %v1771 = vpop.f32.mrf.mxu0
      %v1772 = vpop.f32.mrf.mxu0
      %v1773 = vadd.f32 0.0, %v1772
      %v1774 = vpop.f32.mrf.mxu0
      %1775 = vmatprep.mubr.bf16.mxu0 0
      %1776 = vmatmul.mubr.bf16.gmra.mxu0 %v706
      %v1777 = vpop.f32.mrf.mxu0
      %v1778 = vadd.f32 0.0, %v1777
      %v1779 = vpop.f32.mrf.mxu0
      %v1780 = vpop.f32.mrf.mxu0
      %v1781 = vadd.f32 0.0, %v1780
      %v1782 = vpop.f32.mrf.mxu0
      %1783 = vmatprep.mubr.bf16.mxu0 0
      %1784 = vmatmul.mubr.bf16.gmra.mxu0 %v709
      %v1785 = vpop.f32.mrf.mxu0
      %v1786 = vadd.f32 0.0, %v1785
      %v1787 = vpop.f32.mrf.mxu0
      %v1788 = vpop.f32.mrf.mxu0
      %v1789 = vadd.f32 0.0, %v1788
      %v1790 = vpop.f32.mrf.mxu0
      %1791 = vmatprep.mubr.bf16.mxu0 0
      %1792 = vmatmul.mubr.bf16.gmra.mxu0 %v712
      %v1793 = vpop.f32.mrf.mxu0
      %v1794 = vadd.f32 0.0, %v1793
      %v1795 = vpop.f32.mrf.mxu0
      %v1796 = vpop.f32.mrf.mxu0
      %v1797 = vadd.f32 0.0, %v1796
      %v1798 = vpop.f32.mrf.mxu0
      %1799 = vmatprep.mubr.bf16.mxu0 0
      %1800 = vmatmul.mubr.bf16.gmra.mxu0 %v715
      %v1801 = vpop.f32.mrf.mxu0
      %v1802 = vadd.f32 0.0, %v1801
      %v1803 = vpop.f32.mrf.mxu0
      %v1804 = vpop.f32.mrf.mxu0
      %v1805 = vadd.f32 0.0, %v1804
      %v1806 = vpop.f32.mrf.mxu0
      %1807 = vmatprep.mubr.bf16.mxu0 0
      %1808 = vmatmul.mubr.bf16.gmra.mxu0 %v718
      %v1809 = vpop.f32.mrf.mxu0
      %v1810 = vadd.f32 0.0, %v1809
      %v1811 = vpop.f32.mrf.mxu0
      %v1812 = vpop.f32.mrf.mxu0
      %v1813 = vadd.f32 0.0, %v1812
      %v1814 = vpop.f32.mrf.mxu0
      %1815 = vmatprep.mubr.bf16.mxu0 0
      %1816 = vmatmul.mubr.bf16.gmra.mxu0 %v721
      %v1817 = vpop.f32.mrf.mxu0
      %v1818 = vadd.f32 0.0, %v1817
      %v1819 = vpop.f32.mrf.mxu0
      %v1820 = vpop.f32.mrf.mxu0
      %v1821 = vadd.f32 0.0, %v1820
      %v1822 = vpop.f32.mrf.mxu0
      %1823 = vmatprep.mubr.bf16.mxu0 0
      %1824 = vmatmul.mubr.bf16.gmra.mxu0 %v724
      %v1825 = vpop.f32.mrf.mxu0
      %v1826 = vadd.f32 0.0, %v1825
      %v1827 = vpop.f32.mrf.mxu0
      %v1828 = vpop.f32.mrf.mxu0
      %v1829 = vadd.f32 0.0, %v1828
      %v1830 = vpop.f32.mrf.mxu0
      %1831 = vmatprep.mubr.bf16.mxu0 0
      %1832 = vmatmul.mubr.bf16.gmra.mxu0 %v727
      %v1833 = vpop.f32.mrf.mxu0
      %v1834 = vadd.f32 0.0, %v1833
      %v1835 = vpop.f32.mrf.mxu0
      %v1836 = vpop.f32.mrf.mxu0
      %v1837 = vadd.f32 0.0, %v1836
      %v1838 = vpop.f32.mrf.mxu0
      %1839 = vmatprep.mubr.bf16.mxu0 0
      %1840 = vmatmul.mubr.bf16.gmra.mxu0 %v730
      %v1841 = vpop.f32.mrf.mxu0
      %v1842 = vadd.f32 0.0, %v1841
      %v1843 = vpop.f32.mrf.mxu0
      %v1844 = vpop.f32.mrf.mxu0
      %v1845 = vadd.f32 0.0, %v1844
      %v1846 = vpop.f32.mrf.mxu0
      %1847 = vmatprep.mubr.bf16.mxu0 0
      %1848 = vmatmul.mubr.bf16.gmra.mxu0 %v733
      %v1849 = vpop.f32.mrf.mxu0
      %v1850 = vadd.f32 0.0, %v1849
      %v1851 = vpop.f32.mrf.mxu0
      %v1852 = vpop.f32.mrf.mxu0
      %v1853 = vadd.f32 0.0, %v1852
      %v1854 = vpop.f32.mrf.mxu0
      %1855 = vmatprep.mubr.bf16.mxu0 0
      %1856 = vmatmul.mubr.bf16.gmra.mxu0 %v736
      %v1857 = vpop.f32.mrf.mxu0
      %v1858 = vadd.f32 0.0, %v1857
      %v1859 = vpop.f32.mrf.mxu0
      %v1860 = vpop.f32.mrf.mxu0
      %v1861 = vadd.f32 0.0, %v1860
      %v1862 = vpop.f32.mrf.mxu0
      %1863 = vmatprep.mubr.bf16.mxu0 0
      %1864 = vmatmul.mubr.bf16.gmra.mxu0 %v1706
      %v1865 = vpop.f32.mrf.mxu0
      %v1866 = vadd.f32 0.0, %v1865
      %v1867 = vpop.f32.mrf.mxu0
      %v1868 = vpop.f32.mrf.mxu0
      %v1869 = vadd.f32 0.0, %v1868
      %v1870 = vpop.f32.mrf.mxu0
      %1871 = vdwg.mxu0
      %v1872 = vadd.f32 %v1660, %v1746
      %v1873 = vadd.f32 %v1661, %v1749
      %v1874 = vadd.f32 %v1662, %v1754
      %v1875 = vadd.f32 %v1663, %v1757
      %v1876 = vadd.f32 %v1664, %v1762
      %v1877 = vadd.f32 %v1665, %v1765
      %v1878 = vadd.f32 %v1666, %v1770
      %v1879 = vadd.f32 %v1667, %v1773
      %v1880 = vadd.f32 %v1668, %v1778
      %v1881 = vadd.f32 %v1669, %v1781
      %v1882 = vadd.f32 %v1670, %v1786
      %v1883 = vadd.f32 %v1671, %v1789
      %v1884 = vadd.f32 %v1672, %v1794
      %v1885 = vadd.f32 %v1673, %v1797
      %v1886 = vadd.f32 %v1674, %v1802
      %v1887 = vadd.f32 %v1675, %v1805
      %v1888 = vadd.f32 %v1676, %v1810
      %v1889 = vadd.f32 %v1677, %v1813
      %v1890 = vadd.f32 %v1678, %v1818
      %v1891 = vadd.f32 %v1679, %v1821
      %v1892 = vadd.f32 %v1680, %v1826
      %v1893 = vadd.f32 %v1681, %v1829
      %v1894 = vadd.f32 %v1682, %v1834
      %v1895 = vadd.f32 %v1683, %v1837
      %v1896 = vadd.f32 %v1684, %v1842
      %v1897 = vadd.f32 %v1685, %v1845
      %v1898 = vadd.f32 %v1686, %v1850
      %v1899 = vadd.f32 %v1687, %v1853
      %v1900 = vadd.f32 %v1688, %v1858
      %v1901 = vadd.f32 %v1689, %v1861
      %v1902 = vadd.f32 %v1690, %v1866
      %v1903 = vadd.f32 %v1691, %v1869
      %v1904 = vrot.slane %v487, 2
      %v1905 = vrot.slane %v488, 2
      %v1906 = vsel %vm1115, %v1904, %v1905
      %v1907 = vrot.slane %v489, 2
      %v1908 = vsel %vm1115, %v1905, %v1907
      %v1911 = vpack.c.bf16 %v1908, %v1906
      %s1912 = scalar_lea.vmem %s2, 10
      %v1913 = vld [vmem:[%s1912] sm:$0x3]
      %v1915 = vsel %vm689, %v1911, 0
      %v1918 = vsel %vm738, %v1913, 0
      %1920 = vmatprep.subr.bf16.mxu0 0
      %1921 = vmatpush1.bf16.msra.mxu0 0
      %1922 = vmatprep.subr.bf16.mxu0 0
      %1923 = vmatpush1.bf16.msra.mxu0 0
      %1924 = vmatprep.subr.bf16.mxu0 0
      %1925 = vmatpush1.bf16.msra.mxu0 0
      %1926 = vmatprep.subr.bf16.mxu0 0
      %1927 = vmatpush1.bf16.msra.mxu0 0
      %1928 = vmatprep.subr.bf16.mxu0 0
      %1929 = vmatpush1.bf16.msra.mxu0 0
      %1930 = vmatprep.subr.bf16.mxu0 0
      %1931 = vmatpush1.bf16.msra.mxu0 0
      %1932 = vmatprep.subr.bf16.mxu0 0
      %1933 = vmatpush1.bf16.msra.mxu0 0
      %1934 = vmatprep.subr.bf16.mxu0 0
      %1935 = vmatpush1.bf16.msra.mxu0 %v1918
      %1936 = vmatprep.subr.bf16.mxu0 0
      %1937 = vmatpush2.bf16.msra.mxu0 0
      %1938 = vmatprep.subr.bf16.mxu0 0
      %1939 = vmatpush2.bf16.msra.mxu0 0
      %1940 = vmatprep.subr.bf16.mxu0 0
      %1941 = vmatpush2.bf16.msra.mxu0 0
      %1942 = vmatprep.subr.bf16.mxu0 0
      %1943 = vmatpush2.bf16.msra.mxu0 0
      %1944 = vmatprep.subr.bf16.mxu0 0
      %1945 = vmatpush2.bf16.msra.mxu0 0
      %1946 = vmatprep.subr.bf16.mxu0 0
      %1947 = vmatpush2.bf16.msra.mxu0 0
      %1948 = vmatprep.subr.bf16.mxu0 0
      %1949 = vmatpush2.bf16.msra.mxu0 0
      %1950 = vmatprep.subr.bf16.mxu0 0
      %1951 = vmatpush2.bf16.msra.mxu0 0
      %1952 = vmatprep.mubr.bf16.mxu0 0
      %1953 = vmatmul.mubr.bf16.gmra.mxu0 %v1250
      %v1954 = vpop.f32.mrf.mxu0
      %v1955 = vadd.f32 0.0, %v1954
      %v1956 = vpop.f32.mrf.mxu0
      %v1957 = vpop.f32.mrf.mxu0
      %v1958 = vadd.f32 0.0, %v1957
      %v1959 = vpop.f32.mrf.mxu0
      %1960 = vmatprep.mubr.bf16.mxu0 0
      %1961 = vmatmul.mubr.bf16.gmra.mxu0 %v1253
      %v1962 = vpop.f32.mrf.mxu0
      %v1963 = vadd.f32 0.0, %v1962
      %v1964 = vpop.f32.mrf.mxu0
      %v1965 = vpop.f32.mrf.mxu0
      %v1966 = vadd.f32 0.0, %v1965
      %v1967 = vpop.f32.mrf.mxu0
      %1968 = vmatprep.mubr.bf16.mxu0 0
      %1969 = vmatmul.mubr.bf16.gmra.mxu0 %v1256
      %v1970 = vpop.f32.mrf.mxu0
      %v1971 = vadd.f32 0.0, %v1970
      %v1972 = vpop.f32.mrf.mxu0
      %v1973 = vpop.f32.mrf.mxu0
      %v1974 = vadd.f32 0.0, %v1973
      %v1975 = vpop.f32.mrf.mxu0
      %1976 = vmatprep.mubr.bf16.mxu0 0
      %1977 = vmatmul.mubr.bf16.gmra.mxu0 %v1259
      %v1978 = vpop.f32.mrf.mxu0
      %v1979 = vadd.f32 0.0, %v1978
      %v1980 = vpop.f32.mrf.mxu0
      %v1981 = vpop.f32.mrf.mxu0
      %v1982 = vadd.f32 0.0, %v1981
      %v1983 = vpop.f32.mrf.mxu0
      %1984 = vmatprep.mubr.bf16.mxu0 0
      %1985 = vmatmul.mubr.bf16.gmra.mxu0 %v1262
      %v1986 = vpop.f32.mrf.mxu0
      %v1987 = vadd.f32 0.0, %v1986
      %v1988 = vpop.f32.mrf.mxu0
      %v1989 = vpop.f32.mrf.mxu0
      %v1990 = vadd.f32 0.0, %v1989
      %v1991 = vpop.f32.mrf.mxu0
      %1992 = vmatprep.mubr.bf16.mxu0 0
      %1993 = vmatmul.mubr.bf16.gmra.mxu0 %v1265
      %v1994 = vpop.f32.mrf.mxu0
      %v1995 = vadd.f32 0.0, %v1994
      %v1996 = vpop.f32.mrf.mxu0
      %v1997 = vpop.f32.mrf.mxu0
      %v1998 = vadd.f32 0.0, %v1997
      %v1999 = vpop.f32.mrf.mxu0
      %2000 = vmatprep.mubr.bf16.mxu0 0
      %2001 = vmatmul.mubr.bf16.gmra.mxu0 %v1268
      %v2002 = vpop.f32.mrf.mxu0
      %v2003 = vadd.f32 0.0, %v2002
      %v2004 = vpop.f32.mrf.mxu0
      %v2005 = vpop.f32.mrf.mxu0
      %v2006 = vadd.f32 0.0, %v2005
      %v2007 = vpop.f32.mrf.mxu0
      %2008 = vmatprep.mubr.bf16.mxu0 0
      %2009 = vmatmul.mubr.bf16.gmra.mxu0 %v1271
      %v2010 = vpop.f32.mrf.mxu0
      %v2011 = vadd.f32 0.0, %v2010
      %v2012 = vpop.f32.mrf.mxu0
      %v2013 = vpop.f32.mrf.mxu0
      %v2014 = vadd.f32 0.0, %v2013
      %v2015 = vpop.f32.mrf.mxu0
      %2016 = vmatprep.mubr.bf16.mxu0 0
      %2017 = vmatmul.mubr.bf16.gmra.mxu0 %v1274
      %v2018 = vpop.f32.mrf.mxu0
      %v2019 = vadd.f32 0.0, %v2018
      %v2020 = vpop.f32.mrf.mxu0
      %v2021 = vpop.f32.mrf.mxu0
      %v2022 = vadd.f32 0.0, %v2021
      %v2023 = vpop.f32.mrf.mxu0
      %2024 = vmatprep.mubr.bf16.mxu0 0
      %2025 = vmatmul.mubr.bf16.gmra.mxu0 %v1277
      %v2026 = vpop.f32.mrf.mxu0
      %v2027 = vadd.f32 0.0, %v2026
      %v2028 = vpop.f32.mrf.mxu0
      %v2029 = vpop.f32.mrf.mxu0
      %v2030 = vadd.f32 0.0, %v2029
      %v2031 = vpop.f32.mrf.mxu0
      %2032 = vmatprep.mubr.bf16.mxu0 0
      %2033 = vmatmul.mubr.bf16.gmra.mxu0 %v1280
      %v2034 = vpop.f32.mrf.mxu0
      %v2035 = vadd.f32 0.0, %v2034
      %v2036 = vpop.f32.mrf.mxu0
      %v2037 = vpop.f32.mrf.mxu0
      %v2038 = vadd.f32 0.0, %v2037
      %v2039 = vpop.f32.mrf.mxu0
      %2040 = vmatprep.mubr.bf16.mxu0 0
      %2041 = vmatmul.mubr.bf16.gmra.mxu0 %v1283
      %v2042 = vpop.f32.mrf.mxu0
      %v2043 = vadd.f32 0.0, %v2042
      %v2044 = vpop.f32.mrf.mxu0
      %v2045 = vpop.f32.mrf.mxu0
      %v2046 = vadd.f32 0.0, %v2045
      %v2047 = vpop.f32.mrf.mxu0
      %2048 = vmatprep.mubr.bf16.mxu0 0
      %2049 = vmatmul.mubr.bf16.gmra.mxu0 %v1286
      %v2050 = vpop.f32.mrf.mxu0
      %v2051 = vadd.f32 0.0, %v2050
      %v2052 = vpop.f32.mrf.mxu0
      %v2053 = vpop.f32.mrf.mxu0
      %v2054 = vadd.f32 0.0, %v2053
      %v2055 = vpop.f32.mrf.mxu0
      %2056 = vmatprep.mubr.bf16.mxu0 0
      %2057 = vmatmul.mubr.bf16.gmra.mxu0 %v1289
      %v2058 = vpop.f32.mrf.mxu0
      %v2059 = vadd.f32 0.0, %v2058
      %v2060 = vpop.f32.mrf.mxu0
      %v2061 = vpop.f32.mrf.mxu0
      %v2062 = vadd.f32 0.0, %v2061
      %v2063 = vpop.f32.mrf.mxu0
      %2064 = vmatprep.mubr.bf16.mxu0 0
      %2065 = vmatmul.mubr.bf16.gmra.mxu0 %v1292
      %v2066 = vpop.f32.mrf.mxu0
      %v2067 = vadd.f32 0.0, %v2066
      %v2068 = vpop.f32.mrf.mxu0
      %v2069 = vpop.f32.mrf.mxu0
      %v2070 = vadd.f32 0.0, %v2069
      %v2071 = vpop.f32.mrf.mxu0
      %2072 = vmatprep.mubr.bf16.mxu0 0
      %2073 = vmatmul.mubr.bf16.gmra.mxu0 %v1915
      %v2074 = vpop.f32.mrf.mxu0
      %v2075 = vadd.f32 0.0, %v2074
      %v2076 = vpop.f32.mrf.mxu0
      %v2077 = vpop.f32.mrf.mxu0
      %v2078 = vadd.f32 0.0, %v2077
      %v2079 = vpop.f32.mrf.mxu0
      %2080 = vdwg.mxu0
      %v2081 = vadd.f32 %v1872, %v1955
      %v2082 = vadd.f32 %v1873, %v1958
      %v2083 = vadd.f32 %v1874, %v1963
      %v2084 = vadd.f32 %v1875, %v1966
      %v2085 = vadd.f32 %v1876, %v1971
      %v2086 = vadd.f32 %v1877, %v1974
      %v2087 = vadd.f32 %v1878, %v1979
      %v2088 = vadd.f32 %v1879, %v1982
      %v2089 = vadd.f32 %v1880, %v1987
      %v2090 = vadd.f32 %v1881, %v1990
      %v2091 = vadd.f32 %v1882, %v1995
      %v2092 = vadd.f32 %v1883, %v1998
      %v2093 = vadd.f32 %v1884, %v2003
      %v2094 = vadd.f32 %v1885, %v2006
      %v2095 = vadd.f32 %v1886, %v2011
      %v2096 = vadd.f32 %v1887, %v2014
      %v2097 = vadd.f32 %v1888, %v2019
      %v2098 = vadd.f32 %v1889, %v2022
      %v2099 = vadd.f32 %v1890, %v2027
      %v2100 = vadd.f32 %v1891, %v2030
      %v2101 = vadd.f32 %v1892, %v2035
      %v2102 = vadd.f32 %v1893, %v2038
      %v2103 = vadd.f32 %v1894, %v2043
      %v2104 = vadd.f32 %v1895, %v2046
      %v2105 = vadd.f32 %v1896, %v2051
      %v2106 = vadd.f32 %v1897, %v2054
      %v2107 = vadd.f32 %v1898, %v2059
      %v2108 = vadd.f32 %v1899, %v2062
      %v2109 = vadd.f32 %v1900, %v2067
      %v2110 = vadd.f32 %v1901, %v2070
      %v2111 = vadd.f32 %v1902, %v2075
      %v2112 = vadd.f32 %v1903, %v2078
      %v2113 = vpack.c.bf16 %v491, %v490
      %s2114 = scalar_lea.vmem %s2, 12
      %v2115 = vld [vmem:[%s2114] sm:$0x3]
      %v2117 = vsel %vm689, %v2113, 0
      %v2120 = vsel %vm738, %v2115, 0
      %2122 = vmatprep.subr.bf16.mxu0 0
      %2123 = vmatpush1.bf16.msra.mxu0 0
      %2124 = vmatprep.subr.bf16.mxu0 0
      %2125 = vmatpush1.bf16.msra.mxu0 0
      %2126 = vmatprep.subr.bf16.mxu0 0
      %2127 = vmatpush1.bf16.msra.mxu0 0
      %2128 = vmatprep.subr.bf16.mxu0 0
      %2129 = vmatpush1.bf16.msra.mxu0 0
      %2130 = vmatprep.subr.bf16.mxu0 0
      %2131 = vmatpush1.bf16.msra.mxu0 0
      %2132 = vmatprep.subr.bf16.mxu0 0
      %2133 = vmatpush1.bf16.msra.mxu0 0
      %2134 = vmatprep.subr.bf16.mxu0 0
      %2135 = vmatpush1.bf16.msra.mxu0 0
      %2136 = vmatprep.subr.bf16.mxu0 0
      %2137 = vmatpush1.bf16.msra.mxu0 %v2120
      %2138 = vmatprep.subr.bf16.mxu0 0
      %2139 = vmatpush2.bf16.msra.mxu0 0
      %2140 = vmatprep.subr.bf16.mxu0 0
      %2141 = vmatpush2.bf16.msra.mxu0 0
      %2142 = vmatprep.subr.bf16.mxu0 0
      %2143 = vmatpush2.bf16.msra.mxu0 0
      %2144 = vmatprep.subr.bf16.mxu0 0
      %2145 = vmatpush2.bf16.msra.mxu0 0
      %2146 = vmatprep.subr.bf16.mxu0 0
      %2147 = vmatpush2.bf16.msra.mxu0 0
      %2148 = vmatprep.subr.bf16.mxu0 0
      %2149 = vmatpush2.bf16.msra.mxu0 0
      %2150 = vmatprep.subr.bf16.mxu0 0
      %2151 = vmatpush2.bf16.msra.mxu0 0
      %2152 = vmatprep.subr.bf16.mxu0 0
      %2153 = vmatpush2.bf16.msra.mxu0 0
      %2154 = vmatprep.mubr.bf16.mxu0 0
      %2155 = vmatmul.mubr.bf16.gmra.mxu0 %v910
      %v2156 = vpop.f32.mrf.mxu0
      %v2157 = vadd.f32 0.0, %v2156
      %v2158 = vpop.f32.mrf.mxu0
      %v2159 = vpop.f32.mrf.mxu0
      %v2160 = vadd.f32 0.0, %v2159
      %v2161 = vpop.f32.mrf.mxu0
      %2162 = vmatprep.mubr.bf16.mxu0 0
      %2163 = vmatmul.mubr.bf16.gmra.mxu0 %v913
      %v2164 = vpop.f32.mrf.mxu0
      %v2165 = vadd.f32 0.0, %v2164
      %v2166 = vpop.f32.mrf.mxu0
      %v2167 = vpop.f32.mrf.mxu0
      %v2168 = vadd.f32 0.0, %v2167
      %v2169 = vpop.f32.mrf.mxu0
      %2170 = vmatprep.mubr.bf16.mxu0 0
      %2171 = vmatmul.mubr.bf16.gmra.mxu0 %v916
      %v2172 = vpop.f32.mrf.mxu0
      %v2173 = vadd.f32 0.0, %v2172
      %v2174 = vpop.f32.mrf.mxu0
      %v2175 = vpop.f32.mrf.mxu0
      %v2176 = vadd.f32 0.0, %v2175
      %v2177 = vpop.f32.mrf.mxu0
      %2178 = vmatprep.mubr.bf16.mxu0 0
      %2179 = vmatmul.mubr.bf16.gmra.mxu0 %v919
      %v2180 = vpop.f32.mrf.mxu0
      %v2181 = vadd.f32 0.0, %v2180
      %v2182 = vpop.f32.mrf.mxu0
      %v2183 = vpop.f32.mrf.mxu0
      %v2184 = vadd.f32 0.0, %v2183
      %v2185 = vpop.f32.mrf.mxu0
      %2186 = vmatprep.mubr.bf16.mxu0 0
      %2187 = vmatmul.mubr.bf16.gmra.mxu0 %v922
      %v2188 = vpop.f32.mrf.mxu0
      %v2189 = vadd.f32 0.0, %v2188
      %v2190 = vpop.f32.mrf.mxu0
      %v2191 = vpop.f32.mrf.mxu0
      %v2192 = vadd.f32 0.0, %v2191
      %v2193 = vpop.f32.mrf.mxu0
      %2194 = vmatprep.mubr.bf16.mxu0 0
      %2195 = vmatmul.mubr.bf16.gmra.mxu0 %v925
      %v2196 = vpop.f32.mrf.mxu0
      %v2197 = vadd.f32 0.0, %v2196
      %v2198 = vpop.f32.mrf.mxu0
      %v2199 = vpop.f32.mrf.mxu0
      %v2200 = vadd.f32 0.0, %v2199
      %v2201 = vpop.f32.mrf.mxu0
      %2202 = vmatprep.mubr.bf16.mxu0 0
      %2203 = vmatmul.mubr.bf16.gmra.mxu0 %v928
      %v2204 = vpop.f32.mrf.mxu0
      %v2205 = vadd.f32 0.0, %v2204
      %v2206 = vpop.f32.mrf.mxu0
      %v2207 = vpop.f32.mrf.mxu0
      %v2208 = vadd.f32 0.0, %v2207
      %v2209 = vpop.f32.mrf.mxu0
      %2210 = vmatprep.mubr.bf16.mxu0 0
      %2211 = vmatmul.mubr.bf16.gmra.mxu0 %v931
      %v2212 = vpop.f32.mrf.mxu0
      %v2213 = vadd.f32 0.0, %v2212
      %v2214 = vpop.f32.mrf.mxu0
      %v2215 = vpop.f32.mrf.mxu0
      %v2216 = vadd.f32 0.0, %v2215
      %v2217 = vpop.f32.mrf.mxu0
      %2218 = vmatprep.mubr.bf16.mxu0 0
      %2219 = vmatmul.mubr.bf16.gmra.mxu0 %v934
      %v2220 = vpop.f32.mrf.mxu0
      %v2221 = vadd.f32 0.0, %v2220
      %v2222 = vpop.f32.mrf.mxu0
      %v2223 = vpop.f32.mrf.mxu0
      %v2224 = vadd.f32 0.0, %v2223
      %v2225 = vpop.f32.mrf.mxu0
      %2226 = vmatprep.mubr.bf16.mxu0 0
      %2227 = vmatmul.mubr.bf16.gmra.mxu0 %v937
      %v2228 = vpop.f32.mrf.mxu0
      %v2229 = vadd.f32 0.0, %v2228
      %v2230 = vpop.f32.mrf.mxu0
      %v2231 = vpop.f32.mrf.mxu0
      %v2232 = vadd.f32 0.0, %v2231
      %v2233 = vpop.f32.mrf.mxu0
      %2234 = vmatprep.mubr.bf16.mxu0 0
      %2235 = vmatmul.mubr.bf16.gmra.mxu0 %v940
      %v2236 = vpop.f32.mrf.mxu0
      %v2237 = vadd.f32 0.0, %v2236
      %v2238 = vpop.f32.mrf.mxu0
      %v2239 = vpop.f32.mrf.mxu0
      %v2240 = vadd.f32 0.0, %v2239
      %v2241 = vpop.f32.mrf.mxu0
      %2242 = vmatprep.mubr.bf16.mxu0 0
      %2243 = vmatmul.mubr.bf16.gmra.mxu0 %v943
      %v2244 = vpop.f32.mrf.mxu0
      %v2245 = vadd.f32 0.0, %v2244
      %v2246 = vpop.f32.mrf.mxu0
      %v2247 = vpop.f32.mrf.mxu0
      %v2248 = vadd.f32 0.0, %v2247
      %v2249 = vpop.f32.mrf.mxu0
      %2250 = vmatprep.mubr.bf16.mxu0 0
      %2251 = vmatmul.mubr.bf16.gmra.mxu0 %v946
      %v2252 = vpop.f32.mrf.mxu0
      %v2253 = vadd.f32 0.0, %v2252
      %v2254 = vpop.f32.mrf.mxu0
      %v2255 = vpop.f32.mrf.mxu0
      %v2256 = vadd.f32 0.0, %v2255
      %v2257 = vpop.f32.mrf.mxu0
      %2258 = vmatprep.mubr.bf16.mxu0 0
      %2259 = vmatmul.mubr.bf16.gmra.mxu0 %v949
      %v2260 = vpop.f32.mrf.mxu0
      %v2261 = vadd.f32 0.0, %v2260
      %v2262 = vpop.f32.mrf.mxu0
      %v2263 = vpop.f32.mrf.mxu0
      %v2264 = vadd.f32 0.0, %v2263
      %v2265 = vpop.f32.mrf.mxu0
      %2266 = vmatprep.mubr.bf16.mxu0 0
      %2267 = vmatmul.mubr.bf16.gmra.mxu0 %v1494
      %v2268 = vpop.f32.mrf.mxu0
      %v2269 = vadd.f32 0.0, %v2268
      %v2270 = vpop.f32.mrf.mxu0
      %v2271 = vpop.f32.mrf.mxu0
      %v2272 = vadd.f32 0.0, %v2271
      %v2273 = vpop.f32.mrf.mxu0
      %2274 = vmatprep.mubr.bf16.mxu0 0
      %2275 = vmatmul.mubr.bf16.gmra.mxu0 %v2117
      %v2276 = vpop.f32.mrf.mxu0
      %v2277 = vadd.f32 0.0, %v2276
      %v2278 = vpop.f32.mrf.mxu0
      %v2279 = vpop.f32.mrf.mxu0
      %v2280 = vadd.f32 0.0, %v2279
      %v2281 = vpop.f32.mrf.mxu0
      %2282 = vdwg.mxu0
      %v2283 = vadd.f32 %v2081, %v2157
      %v2284 = vadd.f32 %v2082, %v2160
      %v2285 = vadd.f32 %v2083, %v2165
      %v2286 = vadd.f32 %v2084, %v2168
      %v2287 = vadd.f32 %v2085, %v2173
      %v2288 = vadd.f32 %v2086, %v2176
      %v2289 = vadd.f32 %v2087, %v2181
      %v2290 = vadd.f32 %v2088, %v2184
      %v2291 = vadd.f32 %v2089, %v2189
      %v2292 = vadd.f32 %v2090, %v2192
      %v2293 = vadd.f32 %v2091, %v2197
      %v2294 = vadd.f32 %v2092, %v2200
      %v2295 = vadd.f32 %v2093, %v2205
      %v2296 = vadd.f32 %v2094, %v2208
      %v2297 = vadd.f32 %v2095, %v2213
      %v2298 = vadd.f32 %v2096, %v2216
      %v2299 = vadd.f32 %v2097, %v2221
      %v2300 = vadd.f32 %v2098, %v2224
      %v2301 = vadd.f32 %v2099, %v2229
      %v2302 = vadd.f32 %v2100, %v2232
      %v2303 = vadd.f32 %v2101, %v2237
      %v2304 = vadd.f32 %v2102, %v2240
      %v2305 = vadd.f32 %v2103, %v2245
      %v2306 = vadd.f32 %v2104, %v2248
      %v2307 = vadd.f32 %v2105, %v2253
      %v2308 = vadd.f32 %v2106, %v2256
      %v2309 = vadd.f32 %v2107, %v2261
      %v2310 = vadd.f32 %v2108, %v2264
      %v2311 = vadd.f32 %v2109, %v2269
      %v2312 = vadd.f32 %v2110, %v2272
      %v2313 = vadd.f32 %v2111, %v2277
      %v2314 = vadd.f32 %v2112, %v2280
      %v2318 = vrot.slane %v490, 1
      %v2319 = vrot.slane %v491, 1
      %v2320 = vsel %vm558, %v2318, %v2319
      %v2321 = vrot.slane %v492, 1
      %v2322 = vsel %vm558, %v2319, %v2321
      %v2325 = vpack.c.bf16 %v2322, %v2320
      %s2326 = scalar_lea.vmem %s2, 14
      %v2327 = vld [vmem:[%s2326] sm:$0x3]
      %v2329 = vsel %vm689, %v2325, 0
      %v2332 = vsel %vm738, %v2327, 0
      %2334 = vmatprep.subr.bf16.mxu0 0
      %2335 = vmatpush1.bf16.msra.mxu0 0
      %2336 = vmatprep.subr.bf16.mxu0 0
      %2337 = vmatpush1.bf16.msra.mxu0 0
      %2338 = vmatprep.subr.bf16.mxu0 0
      %2339 = vmatpush1.bf16.msra.mxu0 0
      %2340 = vmatprep.subr.bf16.mxu0 0
      %2341 = vmatpush1.bf16.msra.mxu0 0
      %2342 = vmatprep.subr.bf16.mxu0 0
      %2343 = vmatpush1.bf16.msra.mxu0 0
      %2344 = vmatprep.subr.bf16.mxu0 0
      %2345 = vmatpush1.bf16.msra.mxu0 0
      %2346 = vmatprep.subr.bf16.mxu0 0
      %2347 = vmatpush1.bf16.msra.mxu0 0
      %2348 = vmatprep.subr.bf16.mxu0 0
      %2349 = vmatpush1.bf16.msra.mxu0 %v2332
      %2350 = vmatprep.subr.bf16.mxu0 0
      %2351 = vmatpush2.bf16.msra.mxu0 0
      %2352 = vmatprep.subr.bf16.mxu0 0
      %2353 = vmatpush2.bf16.msra.mxu0 0
      %2354 = vmatprep.subr.bf16.mxu0 0
      %2355 = vmatpush2.bf16.msra.mxu0 0
      %2356 = vmatprep.subr.bf16.mxu0 0
      %2357 = vmatpush2.bf16.msra.mxu0 0
      %2358 = vmatprep.subr.bf16.mxu0 0
      %2359 = vmatpush2.bf16.msra.mxu0 0
      %2360 = vmatprep.subr.bf16.mxu0 0
      %2361 = vmatpush2.bf16.msra.mxu0 0
      %2362 = vmatprep.subr.bf16.mxu0 0
      %2363 = vmatpush2.bf16.msra.mxu0 0
      %2364 = vmatprep.subr.bf16.mxu0 0
      %2365 = vmatpush2.bf16.msra.mxu0 0
      %2366 = vmatprep.mubr.bf16.mxu0 0
      %2367 = vmatmul.mubr.bf16.gmra.mxu0 %v697
      %v2368 = vpop.f32.mrf.mxu0
      %v2369 = vadd.f32 0.0, %v2368
      %v2370 = vpop.f32.mrf.mxu0
      %v2371 = vpop.f32.mrf.mxu0
      %v2372 = vadd.f32 0.0, %v2371
      %v2373 = vpop.f32.mrf.mxu0
      %2374 = vmatprep.mubr.bf16.mxu0 0
      %2375 = vmatmul.mubr.bf16.gmra.mxu0 %v700
      %v2376 = vpop.f32.mrf.mxu0
      %v2377 = vadd.f32 0.0, %v2376
      %v2378 = vpop.f32.mrf.mxu0
      %v2379 = vpop.f32.mrf.mxu0
      %v2380 = vadd.f32 0.0, %v2379
      %v2381 = vpop.f32.mrf.mxu0
      %2382 = vmatprep.mubr.bf16.mxu0 0
      %2383 = vmatmul.mubr.bf16.gmra.mxu0 %v703
      %v2384 = vpop.f32.mrf.mxu0
      %v2385 = vadd.f32 0.0, %v2384
      %v2386 = vpop.f32.mrf.mxu0
      %v2387 = vpop.f32.mrf.mxu0
      %v2388 = vadd.f32 0.0, %v2387
      %v2389 = vpop.f32.mrf.mxu0
      %2390 = vmatprep.mubr.bf16.mxu0 0
      %2391 = vmatmul.mubr.bf16.gmra.mxu0 %v706
      %v2392 = vpop.f32.mrf.mxu0
      %v2393 = vadd.f32 0.0, %v2392
      %v2394 = vpop.f32.mrf.mxu0
      %v2395 = vpop.f32.mrf.mxu0
      %v2396 = vadd.f32 0.0, %v2395
      %v2397 = vpop.f32.mrf.mxu0
      %2398 = vmatprep.mubr.bf16.mxu0 0
      %2399 = vmatmul.mubr.bf16.gmra.mxu0 %v709
      %v2400 = vpop.f32.mrf.mxu0
      %v2401 = vadd.f32 0.0, %v2400
      %v2402 = vpop.f32.mrf.mxu0
      %v2403 = vpop.f32.mrf.mxu0
      %v2404 = vadd.f32 0.0, %v2403
      %v2405 = vpop.f32.mrf.mxu0
      %2406 = vmatprep.mubr.bf16.mxu0 0
      %2407 = vmatmul.mubr.bf16.gmra.mxu0 %v712
      %v2408 = vpop.f32.mrf.mxu0
      %v2409 = vadd.f32 0.0, %v2408
      %v2410 = vpop.f32.mrf.mxu0
      %v2411 = vpop.f32.mrf.mxu0
      %v2412 = vadd.f32 0.0, %v2411
      %v2413 = vpop.f32.mrf.mxu0
      %2414 = vmatprep.mubr.bf16.mxu0 0
      %2415 = vmatmul.mubr.bf16.gmra.mxu0 %v715
      %v2416 = vpop.f32.mrf.mxu0
      %v2417 = vadd.f32 0.0, %v2416
      %v2418 = vpop.f32.mrf.mxu0
      %v2419 = vpop.f32.mrf.mxu0
      %v2420 = vadd.f32 0.0, %v2419
      %v2421 = vpop.f32.mrf.mxu0
      %2422 = vmatprep.mubr.bf16.mxu0 0
      %2423 = vmatmul.mubr.bf16.gmra.mxu0 %v718
      %v2424 = vpop.f32.mrf.mxu0
      %v2425 = vadd.f32 0.0, %v2424
      %v2426 = vpop.f32.mrf.mxu0
      %v2427 = vpop.f32.mrf.mxu0
      %v2428 = vadd.f32 0.0, %v2427
      %v2429 = vpop.f32.mrf.mxu0
      %2430 = vmatprep.mubr.bf16.mxu0 0
      %2431 = vmatmul.mubr.bf16.gmra.mxu0 %v721
      %v2432 = vpop.f32.mrf.mxu0
      %v2433 = vadd.f32 0.0, %v2432
      %v2434 = vpop.f32.mrf.mxu0
      %v2435 = vpop.f32.mrf.mxu0
      %v2436 = vadd.f32 0.0, %v2435
      %v2437 = vpop.f32.mrf.mxu0
      %2438 = vmatprep.mubr.bf16.mxu0 0
      %2439 = vmatmul.mubr.bf16.gmra.mxu0 %v724
      %v2440 = vpop.f32.mrf.mxu0
      %v2441 = vadd.f32 0.0, %v2440
      %v2442 = vpop.f32.mrf.mxu0
      %v2443 = vpop.f32.mrf.mxu0
      %v2444 = vadd.f32 0.0, %v2443
      %v2445 = vpop.f32.mrf.mxu0
      %2446 = vmatprep.mubr.bf16.mxu0 0
      %2447 = vmatmul.mubr.bf16.gmra.mxu0 %v727
      %v2448 = vpop.f32.mrf.mxu0
      %v2449 = vadd.f32 0.0, %v2448
      %v2450 = vpop.f32.mrf.mxu0
      %v2451 = vpop.f32.mrf.mxu0
      %v2452 = vadd.f32 0.0, %v2451
      %v2453 = vpop.f32.mrf.mxu0
      %2454 = vmatprep.mubr.bf16.mxu0 0
      %2455 = vmatmul.mubr.bf16.gmra.mxu0 %v730
      %v2456 = vpop.f32.mrf.mxu0
      %v2457 = vadd.f32 0.0, %v2456
      %v2458 = vpop.f32.mrf.mxu0
      %v2459 = vpop.f32.mrf.mxu0
      %v2460 = vadd.f32 0.0, %v2459
      %v2461 = vpop.f32.mrf.mxu0
      %2462 = vmatprep.mubr.bf16.mxu0 0
      %2463 = vmatmul.mubr.bf16.gmra.mxu0 %v733
      %v2464 = vpop.f32.mrf.mxu0
      %v2465 = vadd.f32 0.0, %v2464
      %v2466 = vpop.f32.mrf.mxu0
      %v2467 = vpop.f32.mrf.mxu0
      %v2468 = vadd.f32 0.0, %v2467
      %v2469 = vpop.f32.mrf.mxu0
      %2470 = vmatprep.mubr.bf16.mxu0 0
      %2471 = vmatmul.mubr.bf16.gmra.mxu0 %v736
      %v2472 = vpop.f32.mrf.mxu0
      %v2473 = vadd.f32 0.0, %v2472
      %v2474 = vpop.f32.mrf.mxu0
      %v2475 = vpop.f32.mrf.mxu0
      %v2476 = vadd.f32 0.0, %v2475
      %v2477 = vpop.f32.mrf.mxu0
      %2478 = vmatprep.mubr.bf16.mxu0 0
      %2479 = vmatmul.mubr.bf16.gmra.mxu0 %v1706
      %v2480 = vpop.f32.mrf.mxu0
      %v2481 = vadd.f32 0.0, %v2480
      %v2482 = vpop.f32.mrf.mxu0
      %v2483 = vpop.f32.mrf.mxu0
      %v2484 = vadd.f32 0.0, %v2483
      %v2485 = vpop.f32.mrf.mxu0
      %2486 = vmatprep.mubr.bf16.mxu0 0
      %2487 = vmatmul.mubr.bf16.gmra.mxu0 %v2329
      %v2488 = vpop.f32.mrf.mxu0
      %v2489 = vadd.f32 0.0, %v2488
      %v2490 = vpop.f32.mrf.mxu0
      %v2491 = vpop.f32.mrf.mxu0
      %v2492 = vadd.f32 0.0, %v2491
      %v2493 = vpop.f32.mrf.mxu0
      %2494 = vdwg.mxu0
      %v2495 = vadd.f32 %v2283, %v2369
      %v2496 = vadd.f32 %v2284, %v2372
      %v2497 = vadd.f32 %v2285, %v2377
      %v2498 = vadd.f32 %v2286, %v2380
      %v2499 = vadd.f32 %v2287, %v2385
      %v2500 = vadd.f32 %v2288, %v2388
      %v2501 = vadd.f32 %v2289, %v2393
      %v2502 = vadd.f32 %v2290, %v2396
      %v2503 = vadd.f32 %v2291, %v2401
      %v2504 = vadd.f32 %v2292, %v2404
      %v2505 = vadd.f32 %v2293, %v2409
      %v2506 = vadd.f32 %v2294, %v2412
      %v2507 = vadd.f32 %v2295, %v2417
      %v2508 = vadd.f32 %v2296, %v2420
      %v2509 = vadd.f32 %v2297, %v2425
      %v2510 = vadd.f32 %v2298, %v2428
      %v2511 = vadd.f32 %v2299, %v2433
      %v2512 = vadd.f32 %v2300, %v2436
      %v2513 = vadd.f32 %v2301, %v2441
      %v2514 = vadd.f32 %v2302, %v2444
      %v2515 = vadd.f32 %v2303, %v2449
      %v2516 = vadd.f32 %v2304, %v2452
      %v2517 = vadd.f32 %v2305, %v2457
      %v2518 = vadd.f32 %v2306, %v2460
      %v2519 = vadd.f32 %v2307, %v2465
      %v2520 = vadd.f32 %v2308, %v2468
      %v2521 = vadd.f32 %v2309, %v2473
      %v2522 = vadd.f32 %v2310, %v2476
      %v2523 = vadd.f32 %v2311, %v2481
      %v2524 = vadd.f32 %v2312, %v2484
      %v2525 = vadd.f32 %v2313, %v2489
      %v2526 = vadd.f32 %v2314, %v2492
      %v2527 = vrot.slane %v490, 2
      %v2528 = vrot.slane %v491, 2
      %v2529 = vsel %vm1115, %v2527, %v2528
      %v2530 = vrot.slane %v492, 2
      %v2531 = vsel %vm1115, %v2528, %v2530
      %v2534 = vpack.c.bf16 %v2531, %v2529
      %s2535 = scalar_lea.vmem %s2, 16
      %v2536 = vld [vmem:[%s2535] sm:$0x3]
      %v2538 = vsel %vm689, %v2534, 0
      %v2541 = vsel %vm738, %v2536, 0
      %2543 = vmatprep.subr.bf16.mxu0 0
      %2544 = vmatpush1.bf16.msra.mxu0 0
      %2545 = vmatprep.subr.bf16.mxu0 0
      %2546 = vmatpush1.bf16.msra.mxu0 0
      %2547 = vmatprep.subr.bf16.mxu0 0
      %2548 = vmatpush1.bf16.msra.mxu0 0
      %2549 = vmatprep.subr.bf16.mxu0 0
      %2550 = vmatpush1.bf16.msra.mxu0 0
      %2551 = vmatprep.subr.bf16.mxu0 0
      %2552 = vmatpush1.bf16.msra.mxu0 0
      %2553 = vmatprep.subr.bf16.mxu0 0
      %2554 = vmatpush1.bf16.msra.mxu0 0
      %2555 = vmatprep.subr.bf16.mxu0 0
      %2556 = vmatpush1.bf16.msra.mxu0 0
      %2557 = vmatprep.subr.bf16.mxu0 0
      %2558 = vmatpush1.bf16.msra.mxu0 %v2541
      %2559 = vmatprep.subr.bf16.mxu0 0
      %2560 = vmatpush2.bf16.msra.mxu0 0
      %2561 = vmatprep.subr.bf16.mxu0 0
      %2562 = vmatpush2.bf16.msra.mxu0 0
      %2563 = vmatprep.subr.bf16.mxu0 0
      %2564 = vmatpush2.bf16.msra.mxu0 0
      %2565 = vmatprep.subr.bf16.mxu0 0
      %2566 = vmatpush2.bf16.msra.mxu0 0
      %2567 = vmatprep.subr.bf16.mxu0 0
      %2568 = vmatpush2.bf16.msra.mxu0 0
      %2569 = vmatprep.subr.bf16.mxu0 0
      %2570 = vmatpush2.bf16.msra.mxu0 0
      %2571 = vmatprep.subr.bf16.mxu0 0
      %2572 = vmatpush2.bf16.msra.mxu0 0
      %2573 = vmatprep.subr.bf16.mxu0 0
      %2574 = vmatpush2.bf16.msra.mxu0 0
      %2575 = vmatprep.mubr.bf16.mxu0 0
      %2576 = vmatmul.mubr.bf16.gmra.mxu0 %v1253
      %v2577 = vpop.f32.mrf.mxu0
      %v2578 = vadd.f32 0.0, %v2577
      %v2579 = vpop.f32.mrf.mxu0
      %v2580 = vpop.f32.mrf.mxu0
      %v2581 = vadd.f32 0.0, %v2580
      %v2582 = vpop.f32.mrf.mxu0
      %2583 = vmatprep.mubr.bf16.mxu0 0
      %2584 = vmatmul.mubr.bf16.gmra.mxu0 %v1256
      %v2585 = vpop.f32.mrf.mxu0
      %v2586 = vadd.f32 0.0, %v2585
      %v2587 = vpop.f32.mrf.mxu0
      %v2588 = vpop.f32.mrf.mxu0
      %v2589 = vadd.f32 0.0, %v2588
      %v2590 = vpop.f32.mrf.mxu0
      %2591 = vmatprep.mubr.bf16.mxu0 0
      %2592 = vmatmul.mubr.bf16.gmra.mxu0 %v1259
      %v2593 = vpop.f32.mrf.mxu0
      %v2594 = vadd.f32 0.0, %v2593
      %v2595 = vpop.f32.mrf.mxu0
      %v2596 = vpop.f32.mrf.mxu0
      %v2597 = vadd.f32 0.0, %v2596
      %v2598 = vpop.f32.mrf.mxu0
      %2599 = vmatprep.mubr.bf16.mxu0 0
      %2600 = vmatmul.mubr.bf16.gmra.mxu0 %v1262
      %v2601 = vpop.f32.mrf.mxu0
      %v2602 = vadd.f32 0.0, %v2601
      %v2603 = vpop.f32.mrf.mxu0
      %v2604 = vpop.f32.mrf.mxu0
      %v2605 = vadd.f32 0.0, %v2604
      %v2606 = vpop.f32.mrf.mxu0
      %2607 = vmatprep.mubr.bf16.mxu0 0
      %2608 = vmatmul.mubr.bf16.gmra.mxu0 %v1265
      %v2609 = vpop.f32.mrf.mxu0
      %v2610 = vadd.f32 0.0, %v2609
      %v2611 = vpop.f32.mrf.mxu0
      %v2612 = vpop.f32.mrf.mxu0
      %v2613 = vadd.f32 0.0, %v2612
      %v2614 = vpop.f32.mrf.mxu0
      %2615 = vmatprep.mubr.bf16.mxu0 0
      %2616 = vmatmul.mubr.bf16.gmra.mxu0 %v1268
      %v2617 = vpop.f32.mrf.mxu0
      %v2618 = vadd.f32 0.0, %v2617
      %v2619 = vpop.f32.mrf.mxu0
      %v2620 = vpop.f32.mrf.mxu0
      %v2621 = vadd.f32 0.0, %v2620
      %v2622 = vpop.f32.mrf.mxu0
      %2623 = vmatprep.mubr.bf16.mxu0 0
      %2624 = vmatmul.mubr.bf16.gmra.mxu0 %v1271
      %v2625 = vpop.f32.mrf.mxu0
      %v2626 = vadd.f32 0.0, %v2625
      %v2627 = vpop.f32.mrf.mxu0
      %v2628 = vpop.f32.mrf.mxu0
      %v2629 = vadd.f32 0.0, %v2628
      %v2630 = vpop.f32.mrf.mxu0
      %2631 = vmatprep.mubr.bf16.mxu0 0
      %2632 = vmatmul.mubr.bf16.gmra.mxu0 %v1274
      %v2633 = vpop.f32.mrf.mxu0
      %v2634 = vadd.f32 0.0, %v2633
      %v2635 = vpop.f32.mrf.mxu0
      %v2636 = vpop.f32.mrf.mxu0
      %v2637 = vadd.f32 0.0, %v2636
      %v2638 = vpop.f32.mrf.mxu0
      %2639 = vmatprep.mubr.bf16.mxu0 0
      %2640 = vmatmul.mubr.bf16.gmra.mxu0 %v1277
      %v2641 = vpop.f32.mrf.mxu0
      %v2642 = vadd.f32 0.0, %v2641
      %v2643 = vpop.f32.mrf.mxu0
      %v2644 = vpop.f32.mrf.mxu0
      %v2645 = vadd.f32 0.0, %v2644
      %v2646 = vpop.f32.mrf.mxu0
      %2647 = vmatprep.mubr.bf16.mxu0 0
      %2648 = vmatmul.mubr.bf16.gmra.mxu0 %v1280
      %v2649 = vpop.f32.mrf.mxu0
      %v2650 = vadd.f32 0.0, %v2649
      %v2651 = vpop.f32.mrf.mxu0
      %v2652 = vpop.f32.mrf.mxu0
      %v2653 = vadd.f32 0.0, %v2652
      %v2654 = vpop.f32.mrf.mxu0
      %2655 = vmatprep.mubr.bf16.mxu0 0
      %2656 = vmatmul.mubr.bf16.gmra.mxu0 %v1283
      %v2657 = vpop.f32.mrf.mxu0
      %v2658 = vadd.f32 0.0, %v2657
      %v2659 = vpop.f32.mrf.mxu0
      %v2660 = vpop.f32.mrf.mxu0
      %v2661 = vadd.f32 0.0, %v2660
      %v2662 = vpop.f32.mrf.mxu0
      %2663 = vmatprep.mubr.bf16.mxu0 0
      %2664 = vmatmul.mubr.bf16.gmra.mxu0 %v1286
      %v2665 = vpop.f32.mrf.mxu0
      %v2666 = vadd.f32 0.0, %v2665
      %v2667 = vpop.f32.mrf.mxu0
      %v2668 = vpop.f32.mrf.mxu0
      %v2669 = vadd.f32 0.0, %v2668
      %v2670 = vpop.f32.mrf.mxu0
      %2671 = vmatprep.mubr.bf16.mxu0 0
      %2672 = vmatmul.mubr.bf16.gmra.mxu0 %v1289
      %v2673 = vpop.f32.mrf.mxu0
      %v2674 = vadd.f32 0.0, %v2673
      %v2675 = vpop.f32.mrf.mxu0
      %v2676 = vpop.f32.mrf.mxu0
      %v2677 = vadd.f32 0.0, %v2676
      %v2678 = vpop.f32.mrf.mxu0
      %2679 = vmatprep.mubr.bf16.mxu0 0
      %2680 = vmatmul.mubr.bf16.gmra.mxu0 %v1292
      %v2681 = vpop.f32.mrf.mxu0
      %v2682 = vadd.f32 0.0, %v2681
      %v2683 = vpop.f32.mrf.mxu0
      %v2684 = vpop.f32.mrf.mxu0
      %v2685 = vadd.f32 0.0, %v2684
      %v2686 = vpop.f32.mrf.mxu0
      %2687 = vmatprep.mubr.bf16.mxu0 0
      %2688 = vmatmul.mubr.bf16.gmra.mxu0 %v1915
      %v2689 = vpop.f32.mrf.mxu0
      %v2690 = vadd.f32 0.0, %v2689
      %v2691 = vpop.f32.mrf.mxu0
      %v2692 = vpop.f32.mrf.mxu0
      %v2693 = vadd.f32 0.0, %v2692
      %v2694 = vpop.f32.mrf.mxu0
      %2695 = vmatprep.mubr.bf16.mxu0 0
      %2696 = vmatmul.mubr.bf16.gmra.mxu0 %v2538
      %v2697 = vpop.f32.mrf.mxu0
      %v2698 = vadd.f32 0.0, %v2697
      %v2699 = vpop.f32.mrf.mxu0
      %v2700 = vpop.f32.mrf.mxu0
      %v2701 = vadd.f32 0.0, %v2700
      %v2702 = vpop.f32.mrf.mxu0
      %2703 = vdwg.mxu0
      %v2704 = vadd.f32 %v2495, %v2578
      %v2705 = vadd.f32 %v2496, %v2581
      %v2706 = vadd.f32 %v2497, %v2586
      %v2707 = vadd.f32 %v2498, %v2589
      %v2708 = vadd.f32 %v2499, %v2594
      %v2709 = vadd.f32 %v2500, %v2597
      %v2710 = vadd.f32 %v2501, %v2602
      %v2711 = vadd.f32 %v2502, %v2605
      %v2712 = vadd.f32 %v2503, %v2610
      %v2713 = vadd.f32 %v2504, %v2613
      %v2714 = vadd.f32 %v2505, %v2618
      %v2715 = vadd.f32 %v2506, %v2621
      %v2716 = vadd.f32 %v2507, %v2626
      %v2717 = vadd.f32 %v2508, %v2629
      %v2718 = vadd.f32 %v2509, %v2634
      %v2719 = vadd.f32 %v2510, %v2637
      %v2720 = vadd.f32 %v2511, %v2642
      %v2721 = vadd.f32 %v2512, %v2645
      %v2722 = vadd.f32 %v2513, %v2650
      %v2723 = vadd.f32 %v2514, %v2653
      %v2724 = vadd.f32 %v2515, %v2658
      %v2725 = vadd.f32 %v2516, %v2661
      %v2726 = vadd.f32 %v2517, %v2666
      %v2727 = vadd.f32 %v2518, %v2669
      %v2728 = vadd.f32 %v2519, %v2674
      %v2729 = vadd.f32 %v2520, %v2677
      %v2730 = vadd.f32 %v2521, %v2682
      %v2731 = vadd.f32 %v2522, %v2685
      %v2732 = vadd.f32 %v2523, %v2690
      %v2733 = vadd.f32 %v2524, %v2693
      %v2734 = vadd.f32 %v2525, %v2698
      %v2735 = vadd.f32 %v2526, %v2701
      %2736 = vst [vmem:[%s368] sm:$0xff] %v2704
      %2737 = vst [vmem:[%s368 + $0x8] sm:$0xff] %v2705
      %2738 = vst [vmem:[%s368 + $0x10] sm:$0xff] %v2706
      %2739 = vst [vmem:[%s368 + $0x18] sm:$0xff] %v2707
      %2740 = vst [vmem:[%s368 + $0x20] sm:$0xff] %v2708
      %2741 = vst [vmem:[%s368 + $0x28] sm:$0xff] %v2709
      %2742 = vst [vmem:[%s368 + $0x30] sm:$0xff] %v2710
      %2743 = vst [vmem:[%s368 + $0x38] sm:$0xff] %v2711
      %2744 = vst [vmem:[%s368 + $0x40] sm:$0xff] %v2712
      %2745 = vst [vmem:[%s368 + $0x48] sm:$0xff] %v2713
      %2746 = vst [vmem:[%s368 + $0x50] sm:$0xff] %v2714
      %2747 = vst [vmem:[%s368 + $0x58] sm:$0xff] %v2715
      %2748 = vst [vmem:[%s368 + $0x60] sm:$0xff] %v2716
      %2749 = vst [vmem:[%s368 + $0x68] sm:$0xff] %v2717
      %2750 = vst [vmem:[%s368 + $0x70] sm:$0xff] %v2718
      %2751 = vst [vmem:[%s368 + $0x78] sm:$0xff] %v2719
      %2752 = vst [vmem:[%s368 + $0x80] sm:$0xff] %v2720
      %2753 = vst [vmem:[%s368 + $0x88] sm:$0xff] %v2721
      %2754 = vst [vmem:[%s368 + $0x90] sm:$0xff] %v2722
      %2755 = vst [vmem:[%s368 + $0x98] sm:$0xff] %v2723
      %2756 = vst [vmem:[%s368 + $0xa0] sm:$0xff] %v2724
      %2757 = vst [vmem:[%s368 + $0xa8] sm:$0xff] %v2725
      %2758 = vst [vmem:[%s368 + $0xb0] sm:$0xff] %v2726
      %2759 = vst [vmem:[%s368 + $0xb8] sm:$0xff] %v2727
      %2760 = vst [vmem:[%s368 + $0xc0] sm:$0xff] %v2728
      %2761 = vst [vmem:[%s368 + $0xc8] sm:$0xff] %v2729
      %2762 = vst [vmem:[%s368 + $0xd0] sm:$0xff] %v2730
      %2763 = vst [vmem:[%s368 + $0xd8] sm:$0xff] %v2731
      %2764 = vst [vmem:[%s368 + $0xe0] sm:$0xff] %v2732
      %2765 = vst [vmem:[%s368 + $0xe8] sm:$0xff] %v2733
      %2766 = vst [vmem:[%s368 + $0xf0] sm:$0xff] %v2734
      %2767 = vst [vmem:[%s368 + $0xf8] sm:$0xff] %v2735
      %s2768 = smul.u32 %s22, 16
      %v2769 = vstv %s2768
      %v2770 = vadd.s32 %v2769, 1
      %v2771 = vadd.s32 %v2769, 2
      %v2772 = vadd.s32 %v2769, 3
      %v2773 = vadd.s32 %v2769, 4
      %v2774 = vadd.s32 %v2769, 5
      %v2775 = vadd.s32 %v2769, 6
      %v2776 = vadd.s32 %v2769, 7
      %v2777 = vadd.s32 %v2769, 8
      %v2778 = vadd.s32 %v2769, 9
      %v2779 = vadd.s32 %v2769, 10
      %v2780 = vadd.s32 %v2769, 11
      %v2781 = vadd.s32 %v2769, 12
      %v2782 = vadd.s32 %v2769, 13
      %v2783 = vadd.s32 %v2769, 14
      %v2784 = vadd.s32 %v2769, 15
      %vm2785 = vcmp.lt.s32.totalorder %v2769, 16
      %vm2786 = vcmp.lt.s32.totalorder %v2770, 16
      %vm2787 = vcmp.lt.s32.totalorder %v2771, 16
      %vm2788 = vcmp.lt.s32.totalorder %v2772, 16
      %vm2789 = vcmp.lt.s32.totalorder %v2773, 16
      %vm2790 = vcmp.lt.s32.totalorder %v2774, 16
      %vm2791 = vcmp.lt.s32.totalorder %v2775, 16
      %vm2792 = vcmp.lt.s32.totalorder %v2776, 16
      %vm2793 = vcmp.lt.s32.totalorder %v2777, 16
      %vm2794 = vcmp.lt.s32.totalorder %v2778, 16
      %vm2795 = vcmp.lt.s32.totalorder %v2779, 16
      %vm2796 = vcmp.lt.s32.totalorder %v2780, 16
      %vm2797 = vcmp.lt.s32.totalorder %v2781, 16
      %vm2798 = vcmp.lt.s32.totalorder %v2782, 16
      %vm2799 = vcmp.lt.s32.totalorder %v2783, 16
      %vm2800 = vcmp.lt.s32.totalorder %v2784, 16
      %v2801 = vsel %vm2785, 1, 0
      %v2802 = vsel %vm2786, 1, 0
      %v2803 = vsel %vm2787, 1, 0
      %v2804 = vsel %vm2788, 1, 0
      %v2805 = vsel %vm2789, 1, 0
      %v2806 = vsel %vm2790, 1, 0
      %v2807 = vsel %vm2791, 1, 0
      %v2808 = vsel %vm2792, 1, 0
      %v2809 = vsel %vm2793, 1, 0
      %v2810 = vsel %vm2794, 1, 0
      %v2811 = vsel %vm2795, 1, 0
      %v2812 = vsel %vm2796, 1, 0
      %v2813 = vsel %vm2797, 1, 0
      %v2814 = vsel %vm2798, 1, 0
      %v2815 = vsel %vm2799, 1, 0
      %v2816 = vsel %vm2800, 1, 0
      %v2817 = vcvt.s32.f32 %v2801
      %v2818 = vcvt.s32.f32 %v2802
      %v2819 = vcvt.s32.f32 %v2803
      %v2820 = vcvt.s32.f32 %v2804
      %v2821 = vcvt.s32.f32 %v2805
      %v2822 = vcvt.s32.f32 %v2806
      %v2823 = vcvt.s32.f32 %v2807
      %v2824 = vcvt.s32.f32 %v2808
      %v2825 = vcvt.s32.f32 %v2809
      %v2826 = vcvt.s32.f32 %v2810
      %v2827 = vcvt.s32.f32 %v2811
      %v2828 = vcvt.s32.f32 %v2812
      %v2829 = vcvt.s32.f32 %v2813
      %v2830 = vcvt.s32.f32 %v2814
      %v2831 = vcvt.s32.f32 %v2815
      %v2832 = vcvt.s32.f32 %v2816
      %v2833 = vmul.f32 %v2704, %v2817
      %v2834 = vmul.f32 %v2705, %v2817
      %v2835 = vmul.f32 %v2706, %v2818
      %v2836 = vmul.f32 %v2707, %v2818
      %v2837 = vmul.f32 %v2708, %v2819
      %v2838 = vmul.f32 %v2709, %v2819
      %v2839 = vmul.f32 %v2710, %v2820
      %v2840 = vmul.f32 %v2711, %v2820
      %v2841 = vmul.f32 %v2712, %v2821
      %v2842 = vmul.f32 %v2713, %v2821
      %v2843 = vmul.f32 %v2714, %v2822
      %v2844 = vmul.f32 %v2715, %v2822
      %v2845 = vmul.f32 %v2716, %v2823
      %v2846 = vmul.f32 %v2717, %v2823
      %v2847 = vmul.f32 %v2718, %v2824
      %v2848 = vmul.f32 %v2719, %v2824
      %v2849 = vmul.f32 %v2720, %v2825
      %v2850 = vmul.f32 %v2721, %v2825
      %v2851 = vmul.f32 %v2722, %v2826
      %v2852 = vmul.f32 %v2723, %v2826
      %v2853 = vmul.f32 %v2724, %v2827
      %v2854 = vmul.f32 %v2725, %v2827
      %v2855 = vmul.f32 %v2726, %v2828
      %v2856 = vmul.f32 %v2727, %v2828
      %v2857 = vmul.f32 %v2728, %v2829
      %v2858 = vmul.f32 %v2729, %v2829
      %v2859 = vmul.f32 %v2730, %v2830
      %v2860 = vmul.f32 %v2731, %v2830
      %v2861 = vmul.f32 %v2732, %v2831
      %v2862 = vmul.f32 %v2733, %v2831
      %v2863 = vmul.f32 %v2734, %v2832
      %v2864 = vmul.f32 %v2735, %v2832
      %v2865 = vadd.f32 %v2833, %v2834
      %v2866 = vadd.f32 %v2865, %v2835
      %v2867 = vadd.f32 %v2866, %v2836
      %v2868 = vadd.f32 %v2867, %v2837
      %v2869 = vadd.f32 %v2868, %v2838
      %v2870 = vadd.f32 %v2869, %v2839
      %v2871 = vadd.f32 %v2870, %v2840
      %v2872 = vadd.f32 %v2871, %v2841
      %v2873 = vadd.f32 %v2872, %v2842
      %v2874 = vadd.f32 %v2873, %v2843
      %v2875 = vadd.f32 %v2874, %v2844
      %v2876 = vadd.f32 %v2875, %v2845
      %v2877 = vadd.f32 %v2876, %v2846
      %v2878 = vadd.f32 %v2877, %v2847
      %v2879 = vadd.f32 %v2878, %v2848
      %v2880 = vadd.f32 %v2879, %v2849
      %v2881 = vadd.f32 %v2880, %v2850
      %v2882 = vadd.f32 %v2881, %v2851
      %v2883 = vadd.f32 %v2882, %v2852
      %v2884 = vadd.f32 %v2883, %v2853
      %v2885 = vadd.f32 %v2884, %v2854
      %v2886 = vadd.f32 %v2885, %v2855
      %v2887 = vadd.f32 %v2886, %v2856
      %v2888 = vadd.f32 %v2887, %v2857
      %v2889 = vadd.f32 %v2888, %v2858
      %v2890 = vadd.f32 %v2889, %v2859
      %v2891 = vadd.f32 %v2890, %v2860
      %v2892 = vadd.f32 %v2891, %v2861
      %v2893 = vadd.f32 %v2892, %v2862
      %v2894 = vadd.f32 %v2893, %v2863
      %v2895 = vadd.f32 %v2894, %v2864
      %v2896 = vrot.slane %v2895, 4
      %v2897 = vadd.f32 %v2895, %v2896
      %v2898 = vrot.slane %v2897, 2
      %v2899 = vadd.f32 %v2897, %v2898
      %v2900 = vrot.slane %v2899, 1
      %v2901 = vadd.f32 %v2899, %v2900
      %v2902 = vmul.f32 %v2833, %v2833
      %v2903 = vmul.f32 %v2834, %v2834
      %v2904 = vmul.f32 %v2835, %v2835
      %v2905 = vmul.f32 %v2836, %v2836
      %v2906 = vmul.f32 %v2837, %v2837
      %v2907 = vmul.f32 %v2838, %v2838
      %v2908 = vmul.f32 %v2839, %v2839
      %v2909 = vmul.f32 %v2840, %v2840
      %v2910 = vmul.f32 %v2841, %v2841
      %v2911 = vmul.f32 %v2842, %v2842
      %v2912 = vmul.f32 %v2843, %v2843
      %v2913 = vmul.f32 %v2844, %v2844
      %v2914 = vmul.f32 %v2845, %v2845
      %v2915 = vmul.f32 %v2846, %v2846
      %v2916 = vmul.f32 %v2847, %v2847
      %v2917 = vmul.f32 %v2848, %v2848
      %v2918 = vmul.f32 %v2849, %v2849
      %v2919 = vmul.f32 %v2850, %v2850
      %v2920 = vmul.f32 %v2851, %v2851
      %v2921 = vmul.f32 %v2852, %v2852
      %v2922 = vmul.f32 %v2853, %v2853
      %v2923 = vmul.f32 %v2854, %v2854
      %v2924 = vmul.f32 %v2855, %v2855
      %v2925 = vmul.f32 %v2856, %v2856
      %v2926 = vmul.f32 %v2857, %v2857
      %v2927 = vmul.f32 %v2858, %v2858
      %v2928 = vmul.f32 %v2859, %v2859
      %v2929 = vmul.f32 %v2860, %v2860
      %v2930 = vmul.f32 %v2861, %v2861
      %v2931 = vmul.f32 %v2862, %v2862
      %v2932 = vmul.f32 %v2863, %v2863
      %v2933 = vmul.f32 %v2864, %v2864
      %v2934 = vadd.f32 %v2902, %v2903
      %v2935 = vadd.f32 %v2934, %v2904
      %v2936 = vadd.f32 %v2935, %v2905
      %v2937 = vadd.f32 %v2936, %v2906
      %v2938 = vadd.f32 %v2937, %v2907
      %v2939 = vadd.f32 %v2938, %v2908
      %v2940 = vadd.f32 %v2939, %v2909
      %v2941 = vadd.f32 %v2940, %v2910
      %v2942 = vadd.f32 %v2941, %v2911
      %v2943 = vadd.f32 %v2942, %v2912
      %v2944 = vadd.f32 %v2943, %v2913
      %v2945 = vadd.f32 %v2944, %v2914
      %v2946 = vadd.f32 %v2945, %v2915
      %v2947 = vadd.f32 %v2946, %v2916
      %v2948 = vadd.f32 %v2947, %v2917
      %v2949 = vadd.f32 %v2948, %v2918
      %v2950 = vadd.f32 %v2949, %v2919
      %v2951 = vadd.f32 %v2950, %v2920
      %v2952 = vadd.f32 %v2951, %v2921
      %v2953 = vadd.f32 %v2952, %v2922
      %v2954 = vadd.f32 %v2953, %v2923
      %v2955 = vadd.f32 %v2954, %v2924
      %v2956 = vadd.f32 %v2955, %v2925
      %v2957 = vadd.f32 %v2956, %v2926
      %v2958 = vadd.f32 %v2957, %v2927
      %v2959 = vadd.f32 %v2958, %v2928
      %v2960 = vadd.f32 %v2959, %v2929
      %v2961 = vadd.f32 %v2960, %v2930
      %v2962 = vadd.f32 %v2961, %v2931
      %v2963 = vadd.f32 %v2962, %v2932
      %v2964 = vadd.f32 %v2963, %v2933
      %v2965 = vrot.slane %v2964, 4
      %v2966 = vadd.f32 %v2964, %v2965
      %v2967 = vrot.slane %v2966, 2
      %v2968 = vadd.f32 %v2966, %v2967
      %v2969 = vrot.slane %v2968, 1
      %v2970 = vadd.f32 %v2968, %v2969
      %2971 = vst [vmem:[%s376] sm:$0xff] %v2901
      %2972 = vst [vmem:[%s383] sm:$0xff] %v2970
      %s2973 = smul.u32 16, %s22
      %p2974 = scmp.lt.s32.totalorder %s21, 1
      %s2975 = scalar_select %p2974, %s21, 1
      %p2976 = scmp.lt.s32.totalorder %s2973, 15
      %s2977 = scalar_select %p2976, %s2973, 15
      %s2978 = smul.addr %s2977, 2
      %s2979 = smul.addr %s2975, 32
      %s2980 = sadd.s32 %s2978, %s2979
      %s2981 = smul.addr %s2980, 8
      %s2982 = scalar_lea.vmem %s3, %s2981
      %p2983 = scmp.lt.s32.totalorder %s21, 1
      %s2984 = scalar_select %p2983, %s21, 1
      %p2985 = scmp.lt.s32.totalorder %s22, 0
      %s2986 = scalar_select %p2985, %s22, 0
      %s2987 = sadd.s32 %s2986, %s2984
      %s2988 = smul.addr %s2987, 8
      %s2989 = scalar_lea.vmem %s4, %s2988
      %p2990 = scmp.lt.s32.totalorder %s21, 1
      %s2991 = scalar_select %p2990, %s21, 1
      %p2992 = scmp.lt.s32.totalorder %s22, 0
      %s2993 = scalar_select %p2992, %s22, 0
      %s2994 = sadd.s32 %s2993, %s2991
      %s2995 = smul.addr %s2994, 8
      %s2996 = scalar_lea.vmem %s5, %s2995
      // Predicated region
      $region33: #{double_conv.4} parent=31 // pred_check
        %p2997 = pneg %p130
      $region34: #{double_conv.4} parent=31 // pred_check_branch
        %2999 = sbr.rel (%p2997) target = $region36
      $region35: #{double_conv.4} parent=31 // pred_region
        %s3000 = smul.u32 16, %s22
      $region36: #{double_conv.4} parent=31 // pred_fallthru
        _
      // Predicated region
      $region37: #{double_conv.4} parent=31 // pred_check
        %p3001 = pneg %p158
      $region38: #{double_conv.4} parent=31 // pred_check_branch
        %3003 = sbr.rel (%p3001) target = $region40
      $region39: #{double_conv.4} parent=31 // pred_region
        _
      $region40: #{double_conv.4} parent=31 // pred_fallthru
        _
      // Predicated region
      $region41: #{double_conv.4} parent=31 // pred_check
        %p3004 = pneg %p186
      $region42: #{double_conv.4} parent=31 // pred_check_branch
        %3006 = sbr.rel (%p3004) target = $region44
      $region43: #{double_conv.4} parent=31 // pred_region
        _
      $region44: #{double_conv.4} parent=31 // pred_fallthru
        _
    $region32: #{double_conv.4} parent=5 // pred_fallthru
      _
    %p3007 = scmp.le.s32.totalorder 2, %s12
    // Predicated region
    $region45: #{double_conv.4} parent=5 // pred_check
      %p3008 = pneg %p3007
    $region46: #{double_conv.4} parent=5 // pred_check_branch
      %3010 = sbr.rel (%p3008) target = $region48
    $region47: #{double_conv.4} parent=5 // pred_region
      %s3011 = ssub.s32 %s12, 2
      // Predicated region
      $region49: #{double_conv.4} parent=47 // pred_check
        %p3012 = pneg %p136
      $region50: #{double_conv.4} parent=47 // pred_check_branch
        %3014 = sbr.rel (%p3012) target = $region52
      $region51: #{double_conv.4} parent=47 // pred_region
        %s3015 = smul.u32 16, %s24
        %p3016 = scmp.lt.s32.totalorder %s23, 1
        %s3017 = scalar_select %p3016, %s23, 1
        %p3018 = scmp.lt.s32.totalorder %s3015, 15
        %s3019 = scalar_select %p3018, %s3015, 15
        %s3020 = smul.addr %s3019, 2
        %s3021 = smul.addr %s3017, 32
        %s3022 = sadd.s32 %s3020, %s3021
        %s3023 = smul.addr %s3022, 8
        %s3024 = scalar_lea.vmem %s3, %s3023
      $region52: #{double_conv.4} parent=47 // pred_fallthru
        _
      // Predicated region
      $region53: #{double_conv.4} parent=47 // pred_check
        %p3025 = pneg %p164
      $region54: #{double_conv.4} parent=47 // pred_check_branch
        %3027 = sbr.rel (%p3025) target = $region56
      $region55: #{double_conv.4} parent=47 // pred_region
        %p3028 = scmp.lt.s32.totalorder %s23, 1
        %s3029 = scalar_select %p3028, %s23, 1
        %p3030 = scmp.lt.s32.totalorder %s24, 0
        %s3031 = scalar_select %p3030, %s24, 0
        %s3032 = sadd.s32 %s3031, %s3029
        %s3033 = smul.addr %s3032, 8
        %s3034 = scalar_lea.vmem %s4, %s3033
      $region56: #{double_conv.4} parent=47 // pred_fallthru
        _
      // Predicated region
      $region57: #{double_conv.4} parent=47 // pred_check
        %p3035 = pneg %p192
      $region58: #{double_conv.4} parent=47 // pred_check_branch
        %3037 = sbr.rel (%p3035) target = $region60
      $region59: #{double_conv.4} parent=47 // pred_region
        %p3038 = scmp.lt.s32.totalorder %s23, 1
        %s3039 = scalar_select %p3038, %s23, 1
        %p3040 = scmp.lt.s32.totalorder %s24, 0
        %s3041 = scalar_select %p3040, %s24, 0
        %s3042 = sadd.s32 %s3041, %s3039
        %s3043 = smul.addr %s3042, 8
        %s3044 = scalar_lea.vmem %s5, %s3043
      $region60: #{double_conv.4} parent=47 // pred_fallthru
        _
    $region48: #{double_conv.4} parent=5 // pred_fallthru
      _
  $region6: #{double_conv.4} parent=0 // loop_footer
    %s16 = sadd.s32 1, %s12
  $region7: #{double_conv.4} parent=0 // loop_footer_branch
    %11 = sbr.rel target = $region3
  $region8: #{double_conv.4} parent=0 // loop_exit
    _

// kernel: double_conv.6
$region0: #{double_conv.6}
  #allocation0 [shape = 'u32[]', space=smem, size = 0x4, offset = 0x4, fixed_abs, tag = 'smem constant byte address 0x4 - core index']
  #allocation1 [shape = 'u32[144,128]{1,0:T(1,128)}', space=vmem, size = 0x12000, scoped, tag = 'internal scratch']
  %s0 = inlined_call_operand.vmem [shape: bf16[2,18,18,8], index: 0, kind: input, shape index: {}, may-alias: {0,1}]
  %s1 = inlined_call_operand.vmem [shape: bf16[2,18,18,8], index: 1, kind: input, shape index: {}, may-alias: {0,1}]
  %s2 = inlined_call_operand.vmem [shape: bf16[9,8,128], index: 2, kind: input, shape index: {}]
  %s3 = inlined_call_operand.vmem [shape: f32[2,16,16,128], index: 3, kind: output, shape index: {0}]
  %s4 = inlined_call_operand.vmem [shape: f32[2,1,8,128], index: 4, kind: output, shape index: {1}]
  %s5 = inlined_call_operand.vmem [shape: f32[2,1,8,128], index: 5, kind: output, shape index: {2}]
  %6 = xla_tuple %s3, %s4, %s5
  %s7 = sld [smem:[#allocation0]]
  $region61: #{double_conv.6} parent=0
    _
  %s9 = ssub.s32 1, %s7
  %s10 = scalar_select 0, %s9, %s7
  loop: start=0, step=1, limit=4
  $region2: #{double_conv.6} parent=0 // loop_pre_header
    _
  $region3: #{double_conv.6} parent=0 // loop_header
    %s12 = sphi 0, %s16
    %p13 = scmp.ge.s32.totalorder %s12, 4
    %s19 = sphi 0, %s31
    %s20 = sphi 0, %s27
    %s21 = sphi 0, %s19
    %s22 = sphi 0, %s20
    %s23 = sphi 0, %s21
    %s24 = sphi 0, %s22
    %s36 = sphi 0, %s38
    %s39 = sphi 0, %s36
    %s40 = sphi 0, %s39
    %s56 = sphi 0, %s40
    %s68 = sphi 0, %s70
    %s71 = sphi 0, %s68
    %s72 = sphi 0, %s71
    %s88 = sphi 0, %s72
    %s92 = sphi 0, %s92
    %s94 = sphi 0, %s92
    %s95 = sphi 0, %s94
    %s109 = sphi 0, %s95
    %s117 = sphi 0, %s119
    %s120 = sphi 0, %s117
    %s121 = sphi 0, %s120
    %s137 = sphi 0, %s121
    %s145 = sphi 0, %s147
    %s148 = sphi 0, %s145
    %s149 = sphi 0, %s148
    %s165 = sphi 0, %s149
    %s173 = sphi 0, %s175
    %s176 = sphi 0, %s173
    %s177 = sphi 0, %s176
    %s193 = sphi 0, %s177
  $region4: #{double_conv.6} parent=0 // loop_header_branch
    %15 = sbr.rel (%p13) target = $region8
  $region5: #{double_conv.6} parent=0 // loop_body
    %s17 = ssub.s32 %s12, 1
    %s18 = ssub.s32 %s12, 2
    %s25 = sadd.s32 1, %s20
    %p26 = scmp.ge.s32.totalorder %s25, 1
    %s27 = scalar_select %p26, 0, %s25
    %s28 = sadd.s32 1, %s19
    %s29 = scalar_select %p26, %s28, %s19
    %p30 = scmp.ge.s32.totalorder %s29, 2
    %s31 = scalar_select %p30, 0, %s29
    %s32 = ssub.s32 %s19, %s31
    %s33 = ssub.s32 %s20, %s27
    %s34 = sor.u32 %s32, %s33
    %p35 = scmp.eq.s32.totalorder %s34, 0
    %s37 = sadd.s32 %s36, 1
    %s38 = scalar_select %p35, %s36, %s37
    %p41 = pneg %p35
    %p42 = scmp.eq.s32.totalorder %s12, 1
    %p43 = por %p41, %p42
    %p44 = scmp.ne.s32.totalorder %s36, %s39
    %p45 = scmp.eq.s32.totalorder %s12, 0
    %p46 = por %p44, %p45
    %p47 = scmp.ne.s32.totalorder %s36, %s39
    %p48 = scmp.eq.s32.totalorder %s17, 1
    %p49 = por %p47, %p48
    %p50 = scmp.ne.s32.totalorder %s39, %s40
    %p51 = scmp.eq.s32.totalorder %s17, 0
    %p52 = por %p50, %p51
    %p53 = scmp.ne.s32.totalorder %s39, %s40
    %p54 = scmp.eq.s32.totalorder %s18, 1
    %p55 = por %p53, %p54
    %p57 = scmp.ne.s32.totalorder %s40, %s56
    %p58 = scmp.eq.s32.totalorder %s18, 0
    %p59 = por %p57, %p58
    %s60 = sadd.s32 %s20, 1
    %s61 = smul.u32 %s60, 8
    %s62 = sadd.s32 %s27, 1
    %s63 = smul.u32 %s62, 8
    %s64 = ssub.s32 %s19, %s31
    %s65 = ssub.s32 %s61, %s63
    %s66 = sor.u32 %s64, %s65
    %p67 = scmp.eq.s32.totalorder %s66, 0
    %s69 = sadd.s32 %s68, 1
    %s70 = scalar_select %p67, %s68, %s69
    %p73 = pneg %p67
    %p74 = scmp.eq.s32.totalorder %s12, 1
    %p75 = por %p73, %p74
    %p76 = scmp.ne.s32.totalorder %s68, %s71
    %p77 = scmp.eq.s32.totalorder %s12, 0
    %p78 = por %p76, %p77
    %p79 = scmp.ne.s32.totalorder %s68, %s71
    %p80 = scmp.eq.s32.totalorder %s17, 1
    %p81 = por %p79, %p80
    %p82 = scmp.ne.s32.totalorder %s71, %s72
    %p83 = scmp.eq.s32.totalorder %s17, 0
    %p84 = por %p82, %p83
    %p85 = scmp.ne.s32.totalorder %s71, %s72
    %p86 = scmp.eq.s32.totalorder %s18, 1
    %p87 = por %p85, %p86
    %p89 = scmp.ne.s32.totalorder %s72, %s88
    %p90 = scmp.eq.s32.totalorder %s18, 0
    %p91 = por %p89, %p90
    %s93 = sadd.s32 %s92, 1
    %p96 = scmp.eq.s32.totalorder %s12, 1
    %p97 = scmp.ne.s32.totalorder %s92, %s94
    %p98 = scmp.eq.s32.totalorder %s12, 0
    %p99 = por %p97, %p98
    %p100 = scmp.ne.s32.totalorder %s92, %s94
    %p101 = scmp.eq.s32.totalorder %s17, 1
    %p102 = por %p100, %p101
    %p103 = scmp.ne.s32.totalorder %s94, %s95
    %p104 = scmp.eq.s32.totalorder %s17, 0
    %p105 = por %p103, %p104
    %p106 = scmp.ne.s32.totalorder %s94, %s95
    %p107 = scmp.eq.s32.totalorder %s18, 1
    %p108 = por %p106, %p107
    %p110 = scmp.ne.s32.totalorder %s95, %s109
    %p111 = scmp.eq.s32.totalorder %s18, 0
    %p112 = por %p110, %p111
    %s113 = ssub.s32 %s19, %s31
    %s114 = ssub.s32 %s20, %s27
    %s115 = sor.u32 %s113, %s114
    %p116 = scmp.eq.s32.totalorder %s115, 0
    %s118 = sadd.s32 %s117, 1
    %s119 = scalar_select %p116, %s117, %s118
    %p122 = pneg %p116
    %p123 = scmp.eq.s32.totalorder %s12, 1
    %p124 = por %p122, %p123
    %p125 = scmp.ne.s32.totalorder %s117, %s120
    %p126 = scmp.eq.s32.totalorder %s12, 0
    %p127 = por %p125, %p126
    %p128 = scmp.ne.s32.totalorder %s117, %s120
    %p129 = scmp.eq.s32.totalorder %s17, 1
    %p130 = por %p128, %p129
    %p131 = scmp.ne.s32.totalorder %s120, %s121
    %p132 = scmp.eq.s32.totalorder %s17, 0
    %p133 = por %p131, %p132
    %p134 = scmp.ne.s32.totalorder %s120, %s121
    %p135 = scmp.eq.s32.totalorder %s18, 1
    %p136 = por %p134, %p135
    %p138 = scmp.ne.s32.totalorder %s121, %s137
    %p139 = scmp.eq.s32.totalorder %s18, 0
    %p140 = por %p138, %p139
    %s141 = ssub.s32 %s19, %s31
    %s142 = ssub.s32 %s20, %s27
    %s143 = sor.u32 %s141, %s142
    %p144 = scmp.eq.s32.totalorder %s143, 0
    %s146 = sadd.s32 %s145, 1
    %s147 = scalar_select %p144, %s145, %s146
    %p150 = pneg %p144
    %p151 = scmp.eq.s32.totalorder %s12, 1
    %p152 = por %p150, %p151
    %p153 = scmp.ne.s32.totalorder %s145, %s148
    %p154 = scmp.eq.s32.totalorder %s12, 0
    %p155 = por %p153, %p154
    %p156 = scmp.ne.s32.totalorder %s145, %s148
    %p157 = scmp.eq.s32.totalorder %s17, 1
    %p158 = por %p156, %p157
    %p159 = scmp.ne.s32.totalorder %s148, %s149
    %p160 = scmp.eq.s32.totalorder %s17, 0
    %p161 = por %p159, %p160
    %p162 = scmp.ne.s32.totalorder %s148, %s149
    %p163 = scmp.eq.s32.totalorder %s18, 1
    %p164 = por %p162, %p163
    %p166 = scmp.ne.s32.totalorder %s149, %s165
    %p167 = scmp.eq.s32.totalorder %s18, 0
    %p168 = por %p166, %p167
    %s169 = ssub.s32 %s19, %s31
    %s170 = ssub.s32 %s20, %s27
    %s171 = sor.u32 %s169, %s170
    %p172 = scmp.eq.s32.totalorder %s171, 0
    %s174 = sadd.s32 %s173, 1
    %s175 = scalar_select %p172, %s173, %s174
    %p178 = pneg %p172
    %p179 = scmp.eq.s32.totalorder %s12, 1
    %p180 = por %p178, %p179
    %p181 = scmp.ne.s32.totalorder %s173, %s176
    %p182 = scmp.eq.s32.totalorder %s12, 0
    %p183 = por %p181, %p182
    %p184 = scmp.ne.s32.totalorder %s173, %s176
    %p185 = scmp.eq.s32.totalorder %s17, 1
    %p186 = por %p184, %p185
    %p187 = scmp.ne.s32.totalorder %s176, %s177
    %p188 = scmp.eq.s32.totalorder %s17, 0
    %p189 = por %p187, %p188
    %p190 = scmp.ne.s32.totalorder %s176, %s177
    %p191 = scmp.eq.s32.totalorder %s18, 1
    %p192 = por %p190, %p191
    %p194 = scmp.ne.s32.totalorder %s177, %s193
    %p195 = scmp.eq.s32.totalorder %s18, 0
    %p196 = por %p194, %p195
    %p197 = scmp.le.s32.totalorder 1, %s12
    %p198 = scmp.lt.s32.totalorder %s12, 3
    %p199 = pnand %p197, %p198
    %p200 = pneg %p199
    // Predicated region
    $region9: #{double_conv.6} parent=5 // pred_check
      _
    $region10: #{double_conv.6} parent=5 // pred_check_branch
      %202 = sbr.rel (%p199) target = $region12
    $region11: #{double_conv.6} parent=5 // pred_region
      %s203 = ssub.s32 %s12, 1
      // Predicated region
      $region13: #{double_conv.6} parent=11 // pred_check
        %p204 = pneg %p105
      $region14: #{double_conv.6} parent=11 // pred_check_branch
        %206 = sbr.rel (%p204) target = $region16
      $region15: #{double_conv.6} parent=11 // pred_region
        _
      $region16: #{double_conv.6} parent=11 // pred_fallthru
        _
    $region12: #{double_conv.6} parent=5 // pred_fallthru
      _
    %p207 = scmp.lt.s32.totalorder %s12, 2
    // Predicated region
    $region17: #{double_conv.6} parent=5 // pred_check
      %p208 = pneg %p207
    $region18: #{double_conv.6} parent=5 // pred_check_branch
      %210 = sbr.rel (%p208) target = $region20
    $region19: #{double_conv.6} parent=5 // pred_region
      // Predicated region
      $region21: #{double_conv.6} parent=19 // pred_check
        %p211 = pneg %p46
      $region22: #{double_conv.6} parent=19 // pred_check_branch
        %213 = sbr.rel (%p211) target = $region24
      $region23: #{double_conv.6} parent=19 // pred_region
        %s214 = smul.u32 16, %s20
        %s215 = ssub.s32 18, %s214
        %p216 = scmp.lt.s32.totalorder %s215, 16
        %s217 = scalar_select %p216, %s215, 16
        %s218 = smul.u32 64, %s217
        %s219 = smul.u32 %s218, 3
        %p220 = scmp.lt.s32.totalorder %s19, 1
        %s221 = scalar_select %p220, %s19, 1
        %p222 = scmp.lt.s32.totalorder %s214, 17
        %s223 = scalar_select %p222, %s214, 17
        %s224 = smul.addr %s223, 3
        %s225 = smul.addr %s221, 54
        %s226 = sadd.s32 %s224, %s225
        %s227 = smul.addr %s226, 4
        %s228 = scalar_lea.vmem %s0, %s227
        %s229 = smul.u32 16, %s20
        %s230 = ssub.s32 18, %s229
        %p231 = scmp.lt.s32.totalorder %s230, 16
        %s232 = scalar_select %p231, %s230, 16
        %s233 = smul.u32 64, %s232
        %s234 = smul.u32 %s233, 3
      $region24: #{double_conv.6} parent=19 // pred_fallthru
        _
      // Predicated region
      $region25: #{double_conv.6} parent=19 // pred_check
        %p235 = pneg %p78
      $region26: #{double_conv.6} parent=19 // pred_check_branch
        %237 = sbr.rel (%p235) target = $region28
      $region27: #{double_conv.6} parent=19 // pred_region
        %s238 = sadd.s32 %s20, 1
        %s239 = smul.u32 %s238, 8
        %s240 = smul.u32 2, %s239
        %p241 = scmp.lt.s32.totalorder %s19, 1
        %s242 = scalar_select %p241, %s19, 1
        %p243 = scmp.lt.s32.totalorder %s240, 17
        %s244 = scalar_select %p243, %s240, 17
        %s245 = smul.addr %s244, 3
        %s246 = smul.addr %s242, 54
        %s247 = sadd.s32 %s245, %s246
        %s248 = smul.addr %s247, 4
        %s249 = scalar_lea.vmem %s1, %s248
        %s250 = sadd.s32 %s20, 1
        %s251 = smul.u32 %s250, 8
        %s252 = smul.u32 2, %s251
      $region28: #{double_conv.6} parent=19 // pred_fallthru
        _
    $region20: #{double_conv.6} parent=5 // pred_fallthru
      _
    %p253 = scmp.le.s32.totalorder 1, %s12
    %p254 = scmp.lt.s32.totalorder %s12, 3
    %p255 = pnand %p253, %p254
    %p256 = pneg %p255
    // Predicated region
    $region29: #{double_conv.6} parent=5 // pred_check
      _
    $region30: #{double_conv.6} parent=5 // pred_check_branch
      %258 = sbr.rel (%p255) target = $region32
    $region31: #{double_conv.6} parent=5 // pred_region
      %s259 = ssub.s32 %s12, 1
      %s260 = smul.u32 16, %s22
      %s261 = ssub.s32 18, %s260
      %p262 = scmp.lt.s32.totalorder %s261, 16
      %s263 = scalar_select %p262, %s261, 16
      %s264 = smul.u32 64, %s263
      %s265 = smul.u32 %s264, 3
      %p266 = scmp.lt.s32.totalorder %s21, 1
      %s267 = scalar_select %p266, %s21, 1
      %p268 = scmp.lt.s32.totalorder %s260, 17
      %s269 = scalar_select %p268, %s260, 17
      %s270 = smul.addr %s269, 3
      %s271 = smul.addr %s267, 54
      %s272 = sadd.s32 %s270, %s271
      %s273 = smul.addr %s272, 4
      %s274 = scalar_lea.vmem %s0, %s273
      %p275 = pneg %p52
      %p276 = pneg %p49
      %s277 = sadd.s32 %s22, 1
      %s278 = smul.u32 %s277, 8
      %s279 = smul.u32 2, %s278
      %p280 = scmp.lt.s32.totalorder %s21, 1
      %s281 = scalar_select %p280, %s21, 1
      %p282 = scmp.lt.s32.totalorder %s279, 17
      %s283 = scalar_select %p282, %s279, 17
      %s284 = smul.addr %s283, 3
      %s285 = smul.addr %s281, 54
      %s286 = sadd.s32 %s284, %s285
      %s287 = smul.addr %s286, 4
      %s288 = scalar_lea.vmem %s1, %s287
      %p289 = pneg %p84
      %p290 = pneg %p81
      %p291 = pneg %p105
      %p292 = pneg %p102
      %p293 = pneg %p133
      %p294 = pneg %p130
      %s295 = smul.u32 16, %s22
      %p296 = scmp.lt.s32.totalorder %s21, 1
      %s297 = scalar_select %p296, %s21, 1
      %p298 = scmp.lt.s32.totalorder %s295, 15
      %s299 = scalar_select %p298, %s295, 15
      %s300 = smul.addr %s299, 2
      %s301 = smul.addr %s297, 32
      %s302 = sadd.s32 %s300, %s301
      %s303 = smul.addr %s302, 8
      %s304 = scalar_lea.vmem %s3, %s303
      %p305 = pneg %p161
      %p306 = pneg %p158
      %p307 = scmp.lt.s32.totalorder %s21, 1
      %s308 = scalar_select %p307, %s21, 1
      %p309 = scmp.lt.s32.totalorder %s22, 0
      %s310 = scalar_select %p309, %s22, 0
      %s311 = sadd.s32 %s310, %s308
      %s312 = smul.addr %s311, 8
      %s313 = scalar_lea.vmem %s4, %s312
      %p314 = pneg %p189
      %p315 = pneg %p186
      %p316 = scmp.lt.s32.totalorder %s21, 1
      %s317 = scalar_select %p316, %s21, 1
      %p318 = scmp.lt.s32.totalorder %s22, 0
      %s319 = scalar_select %p318, %s22, 0
      %s320 = sadd.s32 %s319, %s317
      %s321 = smul.addr %s320, 8
      %s322 = scalar_lea.vmem %s5, %s321
      %s323 = smul.u32 16, %s22
      %s324 = ssub.s32 18, %s323
      %p325 = scmp.lt.s32.totalorder %s324, 16
      %s326 = scalar_select %p325, %s324, 16
      %s327 = smul.u32 64, %s326
      %s328 = smul.u32 %s327, 3
      %p329 = scmp.lt.s32.totalorder %s21, 1
      %s330 = scalar_select %p329, %s21, 1
      %p331 = scmp.lt.s32.totalorder %s323, 17
      %s332 = scalar_select %p331, %s323, 17
      %s333 = smul.addr %s332, 3
      %s334 = smul.addr %s330, 54
      %s335 = sadd.s32 %s333, %s334
      %s336 = smul.addr %s335, 4
      %s337 = scalar_lea.vmem %s0, %s336
      %s338 = smul.u32 16, %s22
      %s339 = ssub.s32 18, %s338
      %p340 = scmp.lt.s32.totalorder %s339, 16
      %s341 = scalar_select %p340, %s339, 16
      %s342 = smul.u32 64, %s341
      %s343 = smul.u32 %s342, 3
      %s344 = sadd.s32 %s22, 1
      %s345 = smul.u32 %s344, 8
      %s346 = smul.u32 2, %s345
      %p347 = scmp.lt.s32.totalorder %s21, 1
      %s348 = scalar_select %p347, %s21, 1
      %p349 = scmp.lt.s32.totalorder %s346, 17
      %s350 = scalar_select %p349, %s346, 17
      %s351 = smul.addr %s350, 3
      %s352 = smul.addr %s348, 54
      %s353 = sadd.s32 %s351, %s352
      %s354 = smul.addr %s353, 4
      %s355 = scalar_lea.vmem %s1, %s354
      %s356 = sadd.s32 %s22, 1
      %s357 = smul.u32 %s356, 8
      %s358 = smul.u32 2, %s357
      %s359 = smul.u32 16, %s22
      %p360 = scmp.lt.s32.totalorder %s21, 1
      %s361 = scalar_select %p360, %s21, 1
      %p362 = scmp.lt.s32.totalorder %s359, 15
      %s363 = scalar_select %p362, %s359, 15
      %s364 = smul.addr %s363, 2
      %s365 = smul.addr %s361, 32
      %s366 = sadd.s32 %s364, %s365
      %s367 = smul.addr %s366, 8
      %s368 = scalar_lea.vmem %s3, %s367
      %s369 = smul.u32 16, %s22
      %p370 = scmp.lt.s32.totalorder %s21, 1
      %s371 = scalar_select %p370, %s21, 1
      %p372 = scmp.lt.s32.totalorder %s22, 0
      %s373 = scalar_select %p372, %s22, 0
      %s374 = sadd.s32 %s373, %s371
      %s375 = smul.addr %s374, 8
      %s376 = scalar_lea.vmem %s4, %s375
      %p377 = scmp.lt.s32.totalorder %s21, 1
      %s378 = scalar_select %p377, %s21, 1
      %p379 = scmp.lt.s32.totalorder %s22, 0
      %s380 = scalar_select %p379, %s22, 0
      %s381 = sadd.s32 %s380, %s378
      %s382 = smul.addr %s381, 8
      %s383 = scalar_lea.vmem %s5, %s382
      %v385 = vld [vmem:[%s337] sm:$0xf]
      %v386 = vld [vmem:[%s337 + $0x4] sm:$0xf]
      %v387 = vld [vmem:[%s337 + $0x8] sm:$0x1]
      %v388 = vld [vmem:[%s337 + $0xc] sm:$0xf]
      %v389 = vld [vmem:[%s337 + $0x10] sm:$0xf]
      %v390 = vld [vmem:[%s337 + $0x14] sm:$0x1]
      %v391 = vld [vmem:[%s337 + $0x18] sm:$0xf]
      %v392 = vld [vmem:[%s337 + $0x1c] sm:$0xf]
      %v393 = vld [vmem:[%s337 + $0x20] sm:$0x1]
      %v394 = vld [vmem:[%s337 + $0x24] sm:$0xf]
      %v395 = vld [vmem:[%s337 + $0x28] sm:$0xf]
      %v396 = vld [vmem:[%s337 + $0x2c] sm:$0x1]
      %v397 = vld [vmem:[%s337 + $0x30] sm:$0xf]
      %v398 = vld [vmem:[%s337 + $0x34] sm:$0xf]
      %v399 = vld [vmem:[%s337 + $0x38] sm:$0x1]
      %v400 = vld [vmem:[%s337 + $0x3c] sm:$0xf]
      %v401 = vld [vmem:[%s337 + $0x40] sm:$0xf]
      %v402 = vld [vmem:[%s337 + $0x44] sm:$0x1]
      %v403 = vld [vmem:[%s337 + $0x48] sm:$0xf]
      %v404 = vld [vmem:[%s337 + $0x4c] sm:$0xf]
      %v405 = vld [vmem:[%s337 + $0x50] sm:$0x1]
      %v406 = vld [vmem:[%s337 + $0x54] sm:$0xf]
      %v407 = vld [vmem:[%s337 + $0x58] sm:$0xf]
      %v408 = vld [vmem:[%s337 + $0x5c] sm:$0x1]
      %v409 = vld [vmem:[%s337 + $0x60] sm:$0xf]
      %v410 = vld [vmem:[%s337 + $0x64] sm:$0xf]
      %v411 = vld [vmem:[%s337 + $0x68] sm:$0x1]
      %v412 = vld [vmem:[%s337 + $0x6c] sm:$0xf]
      %v413 = vld [vmem:[%s337 + $0x70] sm:$0xf]
      %v414 = vld [vmem:[%s337 + $0x74] sm:$0x1]
      %v415 = vld [vmem:[%s337 + $0x78] sm:$0xf]
      %v416 = vld [vmem:[%s337 + $0x7c] sm:$0xf]
      %v417 = vld [vmem:[%s337 + $0x80] sm:$0x1]
      %v418 = vld [vmem:[%s337 + $0x84] sm:$0xf]
      %v419 = vld [vmem:[%s337 + $0x88] sm:$0xf]
      %v420 = vld [vmem:[%s337 + $0x8c] sm:$0x1]
      %v421 = vld [vmem:[%s337 + $0x90] sm:$0xf]
      %v422 = vld [vmem:[%s337 + $0x94] sm:$0xf]
      %v423 = vld [vmem:[%s337 + $0x98] sm:$0x1]
      %v424 = vld [vmem:[%s337 + $0x9c] sm:$0xf]
      %v425 = vld [vmem:[%s337 + $0xa0] sm:$0xf]
      %v426 = vld [vmem:[%s337 + $0xa4] sm:$0x1]
      %v427 = vld [vmem:[%s337 + $0xa8] sm:$0xf]
      %v428 = vld [vmem:[%s337 + $0xac] sm:$0xf]
      %v429 = vld [vmem:[%s337 + $0xb0] sm:$0x1]
      %v430 = vld [vmem:[%s337 + $0xb4] sm:$0xf]
      %v431 = vld [vmem:[%s337 + $0xb8] sm:$0xf]
      %v432 = vld [vmem:[%s337 + $0xbc] sm:$0x1]
      %v433 = vld [vmem:[%s355] sm:$0xf]
      %v434 = vld [vmem:[%s355 + $0x4] sm:$0xf]
      %v435 = vld [vmem:[%s355 + $0x8] sm:$0x1]
      %v436 = vld [vmem:[%s355 + $0xc] sm:$0xf]
      %v437 = vld [vmem:[%s355 + $0x10] sm:$0xf]
      %v438 = vld [vmem:[%s355 + $0x14] sm:$0x1]
      %v439 = vunpack.c.l.bf16 %v385
      %v440 = vunpack.c.l.bf16 %v386
      %v441 = vunpack.c.l.bf16 %v387
      %v442 = vunpack.c.l.bf16 %v388
      %v443 = vunpack.c.l.bf16 %v389
      %v444 = vunpack.c.l.bf16 %v390
      %v445 = vunpack.c.l.bf16 %v391
      %v446 = vunpack.c.l.bf16 %v392
      %v447 = vunpack.c.l.bf16 %v393
      %v448 = vunpack.c.l.bf16 %v394
      %v449 = vunpack.c.l.bf16 %v395
      %v450 = vunpack.c.l.bf16 %v396
      %v451 = vunpack.c.l.bf16 %v397
      %v452 = vunpack.c.l.bf16 %v398
      %v453 = vunpack.c.l.bf16 %v399
      %v454 = vunpack.c.l.bf16 %v400
      %v455 = vunpack.c.l.bf16 %v401
      %v456 = vunpack.c.l.bf16 %v402
      %v457 = vunpack.c.l.bf16 %v403
      %v458 = vunpack.c.l.bf16 %v404
      %v459 = vunpack.c.l.bf16 %v405
      %v460 = vunpack.c.l.bf16 %v406
      %v461 = vunpack.c.l.bf16 %v407
      %v462 = vunpack.c.l.bf16 %v408
      %v463 = vunpack.c.l.bf16 %v409
      %v464 = vunpack.c.l.bf16 %v410
      %v465 = vunpack.c.l.bf16 %v411
      %v466 = vunpack.c.l.bf16 %v412
      %v467 = vunpack.c.l.bf16 %v413
      %v468 = vunpack.c.l.bf16 %v414
      %v469 = vunpack.c.l.bf16 %v415
      %v470 = vunpack.c.l.bf16 %v416
      %v471 = vunpack.c.l.bf16 %v417
      %v472 = vunpack.c.l.bf16 %v418
      %v473 = vunpack.c.l.bf16 %v419
      %v474 = vunpack.c.l.bf16 %v420
      %v475 = vunpack.c.l.bf16 %v421
      %v476 = vunpack.c.l.bf16 %v422
      %v477 = vunpack.c.l.bf16 %v423
      %v478 = vunpack.c.l.bf16 %v424
      %v479 = vunpack.c.l.bf16 %v425
      %v480 = vunpack.c.l.bf16 %v426
      %v481 = vunpack.c.l.bf16 %v427
      %v482 = vunpack.c.l.bf16 %v428
      %v483 = vunpack.c.l.bf16 %v429
      %v484 = vunpack.c.l.bf16 %v430
      %v485 = vunpack.c.l.bf16 %v431
      %v486 = vunpack.c.l.bf16 %v432
      %v487 = vunpack.c.l.bf16 %v433
      %v488 = vunpack.c.l.bf16 %v434
      %v489 = vunpack.c.l.bf16 %v435
      %v490 = vunpack.c.l.bf16 %v436
      %v491 = vunpack.c.l.bf16 %v437
      %v492 = vunpack.c.l.bf16 %v438
      %v493 = vpack.c.bf16 %v440, %v439
      %v494 = vpack.c.bf16 %v443, %v442
      %v495 = vpack.c.bf16 %v446, %v445
      %v496 = vpack.c.bf16 %v449, %v448
      %v497 = vpack.c.bf16 %v452, %v451
      %v498 = vpack.c.bf16 %v455, %v454
      %v499 = vpack.c.bf16 %v458, %v457
      %v500 = vpack.c.bf16 %v461, %v460
      %v501 = vpack.c.bf16 %v464, %v463
      %v502 = vpack.c.bf16 %v467, %v466
      %v503 = vpack.c.bf16 %v470, %v469
      %v504 = vpack.c.bf16 %v473, %v472
      %v505 = vpack.c.bf16 %v476, %v475
      %v506 = vpack.c.bf16 %v479, %v478
      %v507 = vpack.c.bf16 %v482, %v481
      %v508 = vpack.c.bf16 %v485, %v484
      %v509 = vld [vmem:[%s2] sm:$0xf]
      %vm558 = vcmask 1046528
      %v559 = vrot.slane %v439, 1
      %v560 = vrot.slane %v440, 1
      %v561 = vsel %vm558, %v559, %v560
      %v562 = vrot.slane %v441, 1
      %v563 = vsel %vm558, %v560, %v562
      %v564 = vrot.slane %v442, 1
      %v565 = vrot.slane %v443, 1
      %v566 = vsel %vm558, %v564, %v565
      %v567 = vrot.slane %v444, 1
      %v568 = vsel %vm558, %v565, %v567
      %v569 = vrot.slane %v445, 1
      %v570 = vrot.slane %v446, 1
      %v571 = vsel %vm558, %v569, %v570
      %v572 = vrot.slane %v447, 1
      %v573 = vsel %vm558, %v570, %v572
      %v574 = vrot.slane %v448, 1
      %v575 = vrot.slane %v449, 1
      %v576 = vsel %vm558, %v574, %v575
      %v577 = vrot.slane %v450, 1
      %v578 = vsel %vm558, %v575, %v577
      %v579 = vrot.slane %v451, 1
      %v580 = vrot.slane %v452, 1
      %v581 = vsel %vm558, %v579, %v580
      %v582 = vrot.slane %v453, 1
      %v583 = vsel %vm558, %v580, %v582
      %v584 = vrot.slane %v454, 1
      %v585 = vrot.slane %v455, 1
      %v586 = vsel %vm558, %v584, %v585
      %v587 = vrot.slane %v456, 1
      %v588 = vsel %vm558, %v585, %v587
      %v589 = vrot.slane %v457, 1
      %v590 = vrot.slane %v458, 1
      %v591 = vsel %vm558, %v589, %v590
      %v592 = vrot.slane %v459, 1
      %v593 = vsel %vm558, %v590, %v592
      %v594 = vrot.slane %v460, 1
      %v595 = vrot.slane %v461, 1
      %v596 = vsel %vm558, %v594, %v595
      %v597 = vrot.slane %v462, 1
      %v598 = vsel %vm558, %v595, %v597
      %v599 = vrot.slane %v463, 1
      %v600 = vrot.slane %v464, 1
      %v601 = vsel %vm558, %v599, %v600
      %v602 = vrot.slane %v465, 1
      %v603 = vsel %vm558, %v600, %v602
      %v604 = vrot.slane %v466, 1
      %v605 = vrot.slane %v467, 1
      %v606 = vsel %vm558, %v604, %v605
      %v607 = vrot.slane %v468, 1
      %v608 = vsel %vm558, %v605, %v607
      %v609 = vrot.slane %v469, 1
      %v610 = vrot.slane %v470, 1
      %v611 = vsel %vm558, %v609, %v610
      %v612 = vrot.slane %v471, 1
      %v613 = vsel %vm558, %v610, %v612
      %v614 = vrot.slane %v472, 1
      %v615 = vrot.slane %v473, 1
      %v616 = vsel %vm558, %v614, %v615
      %v617 = vrot.slane %v474, 1
      %v618 = vsel %vm558, %v615, %v617
      %v619 = vrot.slane %v475, 1
      %v620 = vrot.slane %v476, 1
      %v621 = vsel %vm558, %v619, %v620
      %v622 = vrot.slane %v477, 1
      %v623 = vsel %vm558, %v620, %v622
      %v624 = vrot.slane %v478, 1
      %v625 = vrot.slane %v479, 1
      %v626 = vsel %vm558, %v624, %v625
      %v627 = vrot.slane %v480, 1
      %v628 = vsel %vm558, %v625, %v627
      %v629 = vrot.slane %v481, 1
      %v630 = vrot.slane %v482, 1
      %v631 = vsel %vm558, %v629, %v630
      %v632 = vrot.slane %v483, 1
      %v633 = vsel %vm558, %v630, %v632
      %v634 = vrot.slane %v484, 1
      %v635 = vrot.slane %v485, 1
      %v636 = vsel %vm558, %v634, %v635
      %v637 = vrot.slane %v486, 1
      %v638 = vsel %vm558, %v635, %v637
      %v671 = vpack.c.bf16 %v563, %v561
      %v672 = vpack.c.bf16 %v568, %v566
      %v673 = vpack.c.bf16 %v573, %v571
      %v674 = vpack.c.bf16 %v578, %v576
      %v675 = vpack.c.bf16 %v583, %v581
      %v676 = vpack.c.bf16 %v588, %v586
      %v677 = vpack.c.bf16 %v593, %v591
      %v678 = vpack.c.bf16 %v598, %v596
      %v679 = vpack.c.bf16 %v603, %v601
      %v680 = vpack.c.bf16 %v608, %v606
      %v681 = vpack.c.bf16 %v613, %v611
      %v682 = vpack.c.bf16 %v618, %v616
      %v683 = vpack.c.bf16 %v623, %v621
      %v684 = vpack.c.bf16 %v628, %v626
      %v685 = vpack.c.bf16 %v633, %v631
      %v686 = vpack.c.bf16 %v638, %v636
      %s687 = scalar_lea.vmem %s2, 4
      %v688 = vld [vmem:[%s687] sm:$0xf]
      %vm689 = vcmask 64512
      %v691 = vsel %vm689, %v671, 0
      %v694 = vsel %vm689, %v672, 0
      %v697 = vsel %vm689, %v673, 0
      %v700 = vsel %vm689, %v674, 0
      %v703 = vsel %vm689, %v675, 0
      %v706 = vsel %vm689, %v676, 0
      %v709 = vsel %vm689, %v677, 0
      %v712 = vsel %vm689, %v678, 0
      %v715 = vsel %vm689, %v679, 0
      %v718 = vsel %vm689, %v680, 0
      %v721 = vsel %vm689, %v681, 0
      %v724 = vsel %vm689, %v682, 0
      %v727 = vsel %vm689, %v683, 0
      %v730 = vsel %vm689, %v684, 0
      %v733 = vsel %vm689, %v685, 0
      %v736 = vsel %vm689, %v686, 0
      %vm738 = vcmask 1043456
      %v740 = vsel %vm738, %v688, 0
      %742 = vmatprep.subr.bf16.mxu0 0
      %743 = vmatpush1.bf16.msra.mxu0 0
      %744 = vmatprep.subr.bf16.mxu0 0
      %745 = vmatpush1.bf16.msra.mxu0 0
      %746 = vmatprep.subr.bf16.mxu0 0
      %747 = vmatpush1.bf16.msra.mxu0 0
      %748 = vmatprep.subr.bf16.mxu0 0
      %749 = vmatpush1.bf16.msra.mxu0 0
      %750 = vmatprep.subr.bf16.mxu0 0
      %751 = vmatpush1.bf16.msra.mxu0 0
      %752 = vmatprep.subr.bf16.mxu0 0
      %753 = vmatpush1.bf16.msra.mxu0 0
      %754 = vmatprep.subr.bf16.mxu0 0
      %755 = vmatpush1.bf16.msra.mxu0 0
      %756 = vmatprep.subr.bf16.mxu0 0
      %757 = vmatpush1.bf16.msra.mxu0 %v740
      %758 = vmatprep.subr.bf16.mxu0 0
      %759 = vmatpush2.bf16.msra.mxu0 0
      %760 = vmatprep.subr.bf16.mxu0 0
      %761 = vmatpush2.bf16.msra.mxu0 0
      %762 = vmatprep.subr.bf16.mxu0 0
      %763 = vmatpush2.bf16.msra.mxu0 0
      %764 = vmatprep.subr.bf16.mxu0 0
      %765 = vmatpush2.bf16.msra.mxu0 0
      %766 = vmatprep.subr.bf16.mxu0 0
      %767 = vmatpush2.bf16.msra.mxu0 0
      %768 = vmatprep.subr.bf16.mxu0 0
      %769 = vmatpush2.bf16.msra.mxu0 0
      %770 = vmatprep.subr.bf16.mxu0 0
      %771 = vmatpush2.bf16.msra.mxu0 0
      %772 = vmatprep.subr.bf16.mxu0 0
      %773 = vmatpush2.bf16.msra.mxu0 0
      %774 = vmatprep.mubr.bf16.mxu0 0
      %775 = vmatmul.mubr.bf16.gmra.mxu0 %v691
      %v776 = vpop.f32.mrf.mxu0
      %v777 = vadd.f32 0.0, %v776
      %v778 = vpop.f32.mrf.mxu0
      %v779 = vpop.f32.mrf.mxu0
      %v780 = vadd.f32 0.0, %v779
      %v781 = vpop.f32.mrf.mxu0
      %782 = vmatprep.mubr.bf16.mxu0 0
      %783 = vmatmul.mubr.bf16.gmra.mxu0 %v694
      %v784 = vpop.f32.mrf.mxu0
      %v785 = vadd.f32 0.0, %v784
      %v786 = vpop.f32.mrf.mxu0
      %v787 = vpop.f32.mrf.mxu0
      %v788 = vadd.f32 0.0, %v787
      %v789 = vpop.f32.mrf.mxu0
      %790 = vmatprep.mubr.bf16.mxu0 0
      %791 = vmatmul.mubr.bf16.gmra.mxu0 %v697
      %v792 = vpop.f32.mrf.mxu0
      %v793 = vadd.f32 0.0, %v792
      %v794 = vpop.f32.mrf.mxu0
      %v795 = vpop.f32.mrf.mxu0
      %v796 = vadd.f32 0.0, %v795
      %v797 = vpop.f32.mrf.mxu0
      %798 = vmatprep.mubr.bf16.mxu0 0
      %799 = vmatmul.mubr.bf16.gmra.mxu0 %v700
      %v800 = vpop.f32.mrf.mxu0
      %v801 = vadd.f32 0.0, %v800
      %v802 = vpop.f32.mrf.mxu0
      %v803 = vpop.f32.mrf.mxu0
      %v804 = vadd.f32 0.0, %v803
      %v805 = vpop.f32.mrf.mxu0
      %806 = vmatprep.mubr.bf16.mxu0 0
      %807 = vmatmul.mubr.bf16.gmra.mxu0 %v703
      %v808 = vpop.f32.mrf.mxu0
      %v809 = vadd.f32 0.0, %v808
      %v810 = vpop.f32.mrf.mxu0
      %v811 = vpop.f32.mrf.mxu0
      %v812 = vadd.f32 0.0, %v811
      %v813 = vpop.f32.mrf.mxu0
      %814 = vmatprep.mubr.bf16.mxu0 0
      %815 = vmatmul.mubr.bf16.gmra.mxu0 %v706
      %v816 = vpop.f32.mrf.mxu0
      %v817 = vadd.f32 0.0, %v816
      %v818 = vpop.f32.mrf.mxu0
      %v819 = vpop.f32.mrf.mxu0
      %v820 = vadd.f32 0.0, %v819
      %v821 = vpop.f32.mrf.mxu0
      %822 = vmatprep.mubr.bf16.mxu0 0
      %823 = vmatmul.mubr.bf16.gmra.mxu0 %v709
      %v824 = vpop.f32.mrf.mxu0
      %v825 = vadd.f32 0.0, %v824
      %v826 = vpop.f32.mrf.mxu0
      %v827 = vpop.f32.mrf.mxu0
      %v828 = vadd.f32 0.0, %v827
      %v829 = vpop.f32.mrf.mxu0
      %830 = vmatprep.mubr.bf16.mxu0 0
      %831 = vmatmul.mubr.bf16.gmra.mxu0 %v712
      %v832 = vpop.f32.mrf.mxu0
      %v833 = vadd.f32 0.0, %v832
      %v834 = vpop.f32.mrf.mxu0
      %v835 = vpop.f32.mrf.mxu0
      %v836 = vadd.f32 0.0, %v835
      %v837 = vpop.f32.mrf.mxu0
      %838 = vmatprep.mubr.bf16.mxu0 0
      %839 = vmatmul.mubr.bf16.gmra.mxu0 %v715
      %v840 = vpop.f32.mrf.mxu0
      %v841 = vadd.f32 0.0, %v840
      %v842 = vpop.f32.mrf.mxu0
      %v843 = vpop.f32.mrf.mxu0
      %v844 = vadd.f32 0.0, %v843
      %v845 = vpop.f32.mrf.mxu0
      %846 = vmatprep.mubr.bf16.mxu0 0
      %847 = vmatmul.mubr.bf16.gmra.mxu0 %v718
      %v848 = vpop.f32.mrf.mxu0
      %v849 = vadd.f32 0.0, %v848
      %v850 = vpop.f32.mrf.mxu0
      %v851 = vpop.f32.mrf.mxu0
      %v852 = vadd.f32 0.0, %v851
      %v853 = vpop.f32.mrf.mxu0
      %854 = vmatprep.mubr.bf16.mxu0 0
      %855 = vmatmul.mubr.bf16.gmra.mxu0 %v721
      %v856 = vpop.f32.mrf.mxu0
      %v857 = vadd.f32 0.0, %v856
      %v858 = vpop.f32.mrf.mxu0
      %v859 = vpop.f32.mrf.mxu0
      %v860 = vadd.f32 0.0, %v859
      %v861 = vpop.f32.mrf.mxu0
      %862 = vmatprep.mubr.bf16.mxu0 0
      %863 = vmatmul.mubr.bf16.gmra.mxu0 %v724
      %v864 = vpop.f32.mrf.mxu0
      %v865 = vadd.f32 0.0, %v864
      %v866 = vpop.f32.mrf.mxu0
      %v867 = vpop.f32.mrf.mxu0
      %v868 = vadd.f32 0.0, %v867
      %v869 = vpop.f32.mrf.mxu0
      %870 = vmatprep.mubr.bf16.mxu0 0
      %871 = vmatmul.mubr.bf16.gmra.mxu0 %v727
      %v872 = vpop.f32.mrf.mxu0
      %v873 = vadd.f32 0.0, %v872
      %v874 = vpop.f32.mrf.mxu0
      %v875 = vpop.f32.mrf.mxu0
      %v876 = vadd.f32 0.0, %v875
      %v877 = vpop.f32.mrf.mxu0
      %878 = vmatprep.mubr.bf16.mxu0 0
      %879 = vmatmul.mubr.bf16.gmra.mxu0 %v730
      %v880 = vpop.f32.mrf.mxu0
      %v881 = vadd.f32 0.0, %v880
      %v882 = vpop.f32.mrf.mxu0
      %v883 = vpop.f32.mrf.mxu0
      %v884 = vadd.f32 0.0, %v883
      %v885 = vpop.f32.mrf.mxu0
      %886 = vmatprep.mubr.bf16.mxu0 0
      %887 = vmatmul.mubr.bf16.gmra.mxu0 %v733
      %v888 = vpop.f32.mrf.mxu0
      %v889 = vadd.f32 0.0, %v888
      %v890 = vpop.f32.mrf.mxu0
      %v891 = vpop.f32.mrf.mxu0
      %v892 = vadd.f32 0.0, %v891
      %v893 = vpop.f32.mrf.mxu0
      %894 = vmatprep.mubr.bf16.mxu0 0
      %895 = vmatmul.mubr.bf16.gmra.mxu0 %v736
      %v896 = vpop.f32.mrf.mxu0
      %v897 = vadd.f32 0.0, %v896
      %v898 = vpop.f32.mrf.mxu0
      %v899 = vpop.f32.mrf.mxu0
      %v900 = vadd.f32 0.0, %v899
      %v901 = vpop.f32.mrf.mxu0
      %902 = vdwg.mxu0
      %v904 = vsel %vm689, %v493, 0
      %v907 = vsel %vm689, %v494, 0
      %v910 = vsel %vm689, %v495, 0
      %v913 = vsel %vm689, %v496, 0
      %v916 = vsel %vm689, %v497, 0
      %v919 = vsel %vm689, %v498, 0
      %v922 = vsel %vm689, %v499, 0
      %v925 = vsel %vm689, %v500, 0
      %v928 = vsel %vm689, %v501, 0
      %v931 = vsel %vm689, %v502, 0
      %v934 = vsel %vm689, %v503, 0
      %v937 = vsel %vm689, %v504, 0
      %v940 = vsel %vm689, %v505, 0
      %v943 = vsel %vm689, %v506, 0
      %v946 = vsel %vm689, %v507, 0
      %v949 = vsel %vm689, %v508, 0
      %v952 = vsel %vm738, %v509, 0
      %954 = vmatprep.subr.bf16.mxu0 0
      %955 = vmatpush1.bf16.msra.mxu0 0
      %956 = vmatprep.subr.bf16.mxu0 0
      %957 = vmatpush1.bf16.msra.mxu0 0
      %958 = vmatprep.subr.bf16.mxu0 0
      %959 = vmatpush1.bf16.msra.mxu0 0
      %960 = vmatprep.subr.bf16.mxu0 0
      %961 = vmatpush1.bf16.msra.mxu0 0
      %962 = vmatprep.subr.bf16.mxu0 0
      %963 = vmatpush1.bf16.msra.mxu0 0
      %964 = vmatprep.subr.bf16.mxu0 0
      %965 = vmatpush1.bf16.msra.mxu0 0
      %966 = vmatprep.subr.bf16.mxu0 0
      %967 = vmatpush1.bf16.msra.mxu0 0
      %968 = vmatprep.subr.bf16.mxu0 0
      %969 = vmatpush1.bf16.msra.mxu0 %v952
      %970 = vmatprep.subr.bf16.mxu0 0
      %971 = vmatpush2.bf16.msra.mxu0 0
      %972 = vmatprep.subr.bf16.mxu0 0
      %973 = vmatpush2.bf16.msra.mxu0 0
      %974 = vmatprep.subr.bf16.mxu0 0
      %975 = vmatpush2.bf16.msra.mxu0 0
      %976 = vmatprep.subr.bf16.mxu0 0
      %977 = vmatpush2.bf16.msra.mxu0 0
      %978 = vmatprep.subr.bf16.mxu0 0
      %979 = vmatpush2.bf16.msra.mxu0 0
      %980 = vmatprep.subr.bf16.mxu0 0
      %981 = vmatpush2.bf16.msra.mxu0 0
      %982 = vmatprep.subr.bf16.mxu0 0
      %983 = vmatpush2.bf16.msra.mxu0 0
      %984 = vmatprep.subr.bf16.mxu0 0
      %985 = vmatpush2.bf16.msra.mxu0 0
      %986 = vmatprep.mubr.bf16.mxu0 0
      %987 = vmatmul.mubr.bf16.gmra.mxu0 %v904
      %v988 = vpop.f32.mrf.mxu0
      %v989 = vadd.f32 %v777, %v988
      %v990 = vpop.f32.mrf.mxu0
      %v991 = vpop.f32.mrf.mxu0
      %v992 = vadd.f32 %v780, %v991
      %v993 = vpop.f32.mrf.mxu0
      %994 = vmatprep.mubr.bf16.mxu0 0
      %995 = vmatmul.mubr.bf16.gmra.mxu0 %v907
      %v996 = vpop.f32.mrf.mxu0
      %v997 = vadd.f32 %v785, %v996
      %v998 = vpop.f32.mrf.mxu0
      %v999 = vpop.f32.mrf.mxu0
      %v1000 = vadd.f32 %v788, %v999
      %v1001 = vpop.f32.mrf.mxu0
      %1002 = vmatprep.mubr.bf16.mxu0 0
      %1003 = vmatmul.mubr.bf16.gmra.mxu0 %v910
      %v1004 = vpop.f32.mrf.mxu0
      %v1005 = vadd.f32 %v793, %v1004
      %v1006 = vpop.f32.mrf.mxu0
      %v1007 = vpop.f32.mrf.mxu0
      %v1008 = vadd.f32 %v796, %v1007
      %v1009 = vpop.f32.mrf.mxu0
      %1010 = vmatprep.mubr.bf16.mxu0 0
      %1011 = vmatmul.mubr.bf16.gmra.mxu0 %v913
      %v1012 = vpop.f32.mrf.mxu0
      %v1013 = vadd.f32 %v801, %v1012
      %v1014 = vpop.f32.mrf.mxu0
      %v1015 = vpop.f32.mrf.mxu0
      %v1016 = vadd.f32 %v804, %v1015
      %v1017 = vpop.f32.mrf.mxu0
      %1018 = vmatprep.mubr.bf16.mxu0 0
      %1019 = vmatmul.mubr.bf16.gmra.mxu0 %v916
      %v1020 = vpop.f32.mrf.mxu0
      %v1021 = vadd.f32 %v809, %v1020
      %v1022 = vpop.f32.mrf.mxu0
      %v1023 = vpop.f32.mrf.mxu0
      %v1024 = vadd.f32 %v812, %v1023
      %v1025 = vpop.f32.mrf.mxu0
      %1026 = vmatprep.mubr.bf16.mxu0 0
      %1027 = vmatmul.mubr.bf16.gmra.mxu0 %v919
      %v1028 = vpop.f32.mrf.mxu0
      %v1029 = vadd.f32 %v817, %v1028
      %v1030 = vpop.f32.mrf.mxu0
      %v1031 = vpop.f32.mrf.mxu0
      %v1032 = vadd.f32 %v820, %v1031
      %v1033 = vpop.f32.mrf.mxu0
      %1034 = vmatprep.mubr.bf16.mxu0 0
      %1035 = vmatmul.mubr.bf16.gmra.mxu0 %v922
      %v1036 = vpop.f32.mrf.mxu0
      %v1037 = vadd.f32 %v825, %v1036
      %v1038 = vpop.f32.mrf.mxu0
      %v1039 = vpop.f32.mrf.mxu0
      %v1040 = vadd.f32 %v828, %v1039
      %v1041 = vpop.f32.mrf.mxu0
      %1042 = vmatprep.mubr.bf16.mxu0 0
      %1043 = vmatmul.mubr.bf16.gmra.mxu0 %v925
      %v1044 = vpop.f32.mrf.mxu0
      %v1045 = vadd.f32 %v833, %v1044
      %v1046 = vpop.f32.mrf.mxu0
      %v1047 = vpop.f32.mrf.mxu0
      %v1048 = vadd.f32 %v836, %v1047
      %v1049 = vpop.f32.mrf.mxu0
      %1050 = vmatprep.mubr.bf16.mxu0 0
      %1051 = vmatmul.mubr.bf16.gmra.mxu0 %v928
      %v1052 = vpop.f32.mrf.mxu0
      %v1053 = vadd.f32 %v841, %v1052
      %v1054 = vpop.f32.mrf.mxu0
      %v1055 = vpop.f32.mrf.mxu0
      %v1056 = vadd.f32 %v844, %v1055
      %v1057 = vpop.f32.mrf.mxu0
      %1058 = vmatprep.mubr.bf16.mxu0 0
      %1059 = vmatmul.mubr.bf16.gmra.mxu0 %v931
      %v1060 = vpop.f32.mrf.mxu0
      %v1061 = vadd.f32 %v849, %v1060
      %v1062 = vpop.f32.mrf.mxu0
      %v1063 = vpop.f32.mrf.mxu0
      %v1064 = vadd.f32 %v852, %v1063
      %v1065 = vpop.f32.mrf.mxu0
      %1066 = vmatprep.mubr.bf16.mxu0 0
      %1067 = vmatmul.mubr.bf16.gmra.mxu0 %v934
      %v1068 = vpop.f32.mrf.mxu0
      %v1069 = vadd.f32 %v857, %v1068
      %v1070 = vpop.f32.mrf.mxu0
      %v1071 = vpop.f32.mrf.mxu0
      %v1072 = vadd.f32 %v860, %v1071
      %v1073 = vpop.f32.mrf.mxu0
      %1074 = vmatprep.mubr.bf16.mxu0 0
      %1075 = vmatmul.mubr.bf16.gmra.mxu0 %v937
      %v1076 = vpop.f32.mrf.mxu0
      %v1077 = vadd.f32 %v865, %v1076
      %v1078 = vpop.f32.mrf.mxu0
      %v1079 = vpop.f32.mrf.mxu0
      %v1080 = vadd.f32 %v868, %v1079
      %v1081 = vpop.f32.mrf.mxu0
      %1082 = vmatprep.mubr.bf16.mxu0 0
      %1083 = vmatmul.mubr.bf16.gmra.mxu0 %v940
      %v1084 = vpop.f32.mrf.mxu0
      %v1085 = vadd.f32 %v873, %v1084
      %v1086 = vpop.f32.mrf.mxu0
      %v1087 = vpop.f32.mrf.mxu0
      %v1088 = vadd.f32 %v876, %v1087
      %v1089 = vpop.f32.mrf.mxu0
      %1090 = vmatprep.mubr.bf16.mxu0 0
      %1091 = vmatmul.mubr.bf16.gmra.mxu0 %v943
      %v1092 = vpop.f32.mrf.mxu0
      %v1093 = vadd.f32 %v881, %v1092
      %v1094 = vpop.f32.mrf.mxu0
      %v1095 = vpop.f32.mrf.mxu0
      %v1096 = vadd.f32 %v884, %v1095
      %v1097 = vpop.f32.mrf.mxu0
      %1098 = vmatprep.mubr.bf16.mxu0 0
      %1099 = vmatmul.mubr.bf16.gmra.mxu0 %v946
      %v1100 = vpop.f32.mrf.mxu0
      %v1101 = vadd.f32 %v889, %v1100
      %v1102 = vpop.f32.mrf.mxu0
      %v1103 = vpop.f32.mrf.mxu0
      %v1104 = vadd.f32 %v892, %v1103
      %v1105 = vpop.f32.mrf.mxu0
      %1106 = vmatprep.mubr.bf16.mxu0 0
      %1107 = vmatmul.mubr.bf16.gmra.mxu0 %v949
      %v1108 = vpop.f32.mrf.mxu0
      %v1109 = vadd.f32 %v897, %v1108
      %v1110 = vpop.f32.mrf.mxu0
      %v1111 = vpop.f32.mrf.mxu0
      %v1112 = vadd.f32 %v900, %v1111
      %v1113 = vpop.f32.mrf.mxu0
      %1114 = vdwg.mxu0
      %vm1115 = vcmask 1045504
      %v1116 = vrot.slane %v439, 2
      %v1117 = vrot.slane %v440, 2
      %v1118 = vsel %vm1115, %v1116, %v1117
      %v1119 = vrot.slane %v441, 2
      %v1120 = vsel %vm1115, %v1117, %v1119
      %v1121 = vrot.slane %v442, 2
      %v1122 = vrot.slane %v443, 2
      %v1123 = vsel %vm1115, %v1121, %v1122
      %v1124 = vrot.slane %v444, 2
      %v1125 = vsel %vm1115, %v1122, %v1124
      %v1126 = vrot.slane %v445, 2
      %v1127 = vrot.slane %v446, 2
      %v1128 = vsel %vm1115, %v1126, %v1127
      %v1129 = vrot.slane %v447, 2
      %v1130 = vsel %vm1115, %v1127, %v1129
      %v1131 = vrot.slane %v448, 2
      %v1132 = vrot.slane %v449, 2
      %v1133 = vsel %vm1115, %v1131, %v1132
      %v1134 = vrot.slane %v450, 2
      %v1135 = vsel %vm1115, %v1132, %v1134
      %v1136 = vrot.slane %v451, 2
      %v1137 = vrot.slane %v452, 2
      %v1138 = vsel %vm1115, %v1136, %v1137
      %v1139 = vrot.slane %v453, 2
      %v1140 = vsel %vm1115, %v1137, %v1139
      %v1141 = vrot.slane %v454, 2
      %v1142 = vrot.slane %v455, 2
      %v1143 = vsel %vm1115, %v1141, %v1142
      %v1144 = vrot.slane %v456, 2
      %v1145 = vsel %vm1115, %v1142, %v1144
      %v1146 = vrot.slane %v457, 2
      %v1147 = vrot.slane %v458, 2
      %v1148 = vsel %vm1115, %v1146, %v1147
      %v1149 = vrot.slane %v459, 2
      %v1150 = vsel %vm1115, %v1147, %v1149
      %v1151 = vrot.slane %v460, 2
      %v1152 = vrot.slane %v461, 2
      %v1153 = vsel %vm1115, %v1151, %v1152
      %v1154 = vrot.slane %v462, 2
      %v1155 = vsel %vm1115, %v1152, %v1154
      %v1156 = vrot.slane %v463, 2
      %v1157 = vrot.slane %v464, 2
      %v1158 = vsel %vm1115, %v1156, %v1157
      %v1159 = vrot.slane %v465, 2
      %v1160 = vsel %vm1115, %v1157, %v1159
      %v1161 = vrot.slane %v466, 2
      %v1162 = vrot.slane %v467, 2
      %v1163 = vsel %vm1115, %v1161, %v1162
      %v1164 = vrot.slane %v468, 2
      %v1165 = vsel %vm1115, %v1162, %v1164
      %v1166 = vrot.slane %v469, 2
      %v1167 = vrot.slane %v470, 2
      %v1168 = vsel %vm1115, %v1166, %v1167
      %v1169 = vrot.slane %v471, 2
      %v1170 = vsel %vm1115, %v1167, %v1169
      %v1171 = vrot.slane %v472, 2
      %v1172 = vrot.slane %v473, 2
      %v1173 = vsel %vm1115, %v1171, %v1172
      %v1174 = vrot.slane %v474, 2
      %v1175 = vsel %vm1115, %v1172, %v1174
      %v1176 = vrot.slane %v475, 2
      %v1177 = vrot.slane %v476, 2
      %v1178 = vsel %vm1115, %v1176, %v1177
      %v1179 = vrot.slane %v477, 2
      %v1180 = vsel %vm1115, %v1177, %v1179
      %v1181 = vrot.slane %v478, 2
      %v1182 = vrot.slane %v479, 2
      %v1183 = vsel %vm1115, %v1181, %v1182
      %v1184 = vrot.slane %v480, 2
      %v1185 = vsel %vm1115, %v1182, %v1184
      %v1186 = vrot.slane %v481, 2
      %v1187 = vrot.slane %v482, 2
      %v1188 = vsel %vm1115, %v1186, %v1187
      %v1189 = vrot.slane %v483, 2
      %v1190 = vsel %vm1115, %v1187, %v1189
      %v1191 = vrot.slane %v484, 2
      %v1192 = vrot.slane %v485, 2
      %v1193 = vsel %vm1115, %v1191, %v1192
      %v1194 = vrot.slane %v486, 2
      %v1195 = vsel %vm1115, %v1192, %v1194
      %v1228 = vpack.c.bf16 %v1120, %v1118
      %v1229 = vpack.c.bf16 %v1125, %v1123
      %v1230 = vpack.c.bf16 %v1130, %v1128
      %v1231 = vpack.c.bf16 %v1135, %v1133
      %v1232 = vpack.c.bf16 %v1140, %v1138
      %v1233 = vpack.c.bf16 %v1145, %v1143
      %v1234 = vpack.c.bf16 %v1150, %v1148
      %v1235 = vpack.c.bf16 %v1155, %v1153
      %v1236 = vpack.c.bf16 %v1160, %v1158
      %v1237 = vpack.c.bf16 %v1165, %v1163
      %v1238 = vpack.c.bf16 %v1170, %v1168
      %v1239 = vpack.c.bf16 %v1175, %v1173
      %v1240 = vpack.c.bf16 %v1180, %v1178
      %v1241 = vpack.c.bf16 %v1185, %v1183
      %v1242 = vpack.c.bf16 %v1190, %v1188
      %v1243 = vpack.c.bf16 %v1195, %v1193
      %s1244 = scalar_lea.vmem %s2, 8
      %v1245 = vld [vmem:[%s1244] sm:$0xf]
      %v1247 = vsel %vm689, %v1228, 0
      %v1250 = vsel %vm689, %v1229, 0
      %v1253 = vsel %vm689, %v1230, 0
      %v1256 = vsel %vm689, %v1231, 0
      %v1259 = vsel %vm689, %v1232, 0
      %v1262 = vsel %vm689, %v1233, 0
      %v1265 = vsel %vm689, %v1234, 0
      %v1268 = vsel %vm689, %v1235, 0
      %v1271 = vsel %vm689, %v1236, 0
      %v1274 = vsel %vm689, %v1237, 0
      %v1277 = vsel %vm689, %v1238, 0
      %v1280 = vsel %vm689, %v1239, 0
      %v1283 = vsel %vm689, %v1240, 0
      %v1286 = vsel %vm689, %v1241, 0
      %v1289 = vsel %vm689, %v1242, 0
      %v1292 = vsel %vm689, %v1243, 0
      %v1295 = vsel %vm738, %v1245, 0
      %1297 = vmatprep.subr.bf16.mxu0 0
      %1298 = vmatpush1.bf16.msra.mxu0 0
      %1299 = vmatprep.subr.bf16.mxu0 0
      %1300 = vmatpush1.bf16.msra.mxu0 0
      %1301 = vmatprep.subr.bf16.mxu0 0
      %1302 = vmatpush1.bf16.msra.mxu0 0
      %1303 = vmatprep.subr.bf16.mxu0 0
      %1304 = vmatpush1.bf16.msra.mxu0 0
      %1305 = vmatprep.subr.bf16.mxu0 0
      %1306 = vmatpush1.bf16.msra.mxu0 0
      %1307 = vmatprep.subr.bf16.mxu0 0
      %1308 = vmatpush1.bf16.msra.mxu0 0
      %1309 = vmatprep.subr.bf16.mxu0 0
      %1310 = vmatpush1.bf16.msra.mxu0 0
      %1311 = vmatprep.subr.bf16.mxu0 0
      %1312 = vmatpush1.bf16.msra.mxu0 %v1295
      %1313 = vmatprep.subr.bf16.mxu0 0
      %1314 = vmatpush2.bf16.msra.mxu0 0
      %1315 = vmatprep.subr.bf16.mxu0 0
      %1316 = vmatpush2.bf16.msra.mxu0 0
      %1317 = vmatprep.subr.bf16.mxu0 0
      %1318 = vmatpush2.bf16.msra.mxu0 0
      %1319 = vmatprep.subr.bf16.mxu0 0
      %1320 = vmatpush2.bf16.msra.mxu0 0
      %1321 = vmatprep.subr.bf16.mxu0 0
      %1322 = vmatpush2.bf16.msra.mxu0 0
      %1323 = vmatprep.subr.bf16.mxu0 0
      %1324 = vmatpush2.bf16.msra.mxu0 0
      %1325 = vmatprep.subr.bf16.mxu0 0
      %1326 = vmatpush2.bf16.msra.mxu0 0
      %1327 = vmatprep.subr.bf16.mxu0 0
      %1328 = vmatpush2.bf16.msra.mxu0 0
      %1329 = vmatprep.mubr.bf16.mxu0 0
      %1330 = vmatmul.mubr.bf16.gmra.mxu0 %v1247
      %v1331 = vpop.f32.mrf.mxu0
      %v1332 = vadd.f32 0.0, %v1331
      %v1333 = vpop.f32.mrf.mxu0
      %v1334 = vpop.f32.mrf.mxu0
      %v1335 = vadd.f32 0.0, %v1334
      %v1336 = vpop.f32.mrf.mxu0
      %1337 = vmatprep.mubr.bf16.mxu0 0
      %1338 = vmatmul.mubr.bf16.gmra.mxu0 %v1250
      %v1339 = vpop.f32.mrf.mxu0
      %v1340 = vadd.f32 0.0, %v1339
      %v1341 = vpop.f32.mrf.mxu0
      %v1342 = vpop.f32.mrf.mxu0
      %v1343 = vadd.f32 0.0, %v1342
      %v1344 = vpop.f32.mrf.mxu0
      %1345 = vmatprep.mubr.bf16.mxu0 0
      %1346 = vmatmul.mubr.bf16.gmra.mxu0 %v1253
      %v1347 = vpop.f32.mrf.mxu0
      %v1348 = vadd.f32 0.0, %v1347
      %v1349 = vpop.f32.mrf.mxu0
      %v1350 = vpop.f32.mrf.mxu0
      %v1351 = vadd.f32 0.0, %v1350
      %v1352 = vpop.f32.mrf.mxu0
      %1353 = vmatprep.mubr.bf16.mxu0 0
      %1354 = vmatmul.mubr.bf16.gmra.mxu0 %v1256
      %v1355 = vpop.f32.mrf.mxu0
      %v1356 = vadd.f32 0.0, %v1355
      %v1357 = vpop.f32.mrf.mxu0
      %v1358 = vpop.f32.mrf.mxu0
      %v1359 = vadd.f32 0.0, %v1358
      %v1360 = vpop.f32.mrf.mxu0
      %1361 = vmatprep.mubr.bf16.mxu0 0
      %1362 = vmatmul.mubr.bf16.gmra.mxu0 %v1259
      %v1363 = vpop.f32.mrf.mxu0
      %v1364 = vadd.f32 0.0, %v1363
      %v1365 = vpop.f32.mrf.mxu0
      %v1366 = vpop.f32.mrf.mxu0
      %v1367 = vadd.f32 0.0, %v1366
      %v1368 = vpop.f32.mrf.mxu0
      %1369 = vmatprep.mubr.bf16.mxu0 0
      %1370 = vmatmul.mubr.bf16.gmra.mxu0 %v1262
      %v1371 = vpop.f32.mrf.mxu0
      %v1372 = vadd.f32 0.0, %v1371
      %v1373 = vpop.f32.mrf.mxu0
      %v1374 = vpop.f32.mrf.mxu0
      %v1375 = vadd.f32 0.0, %v1374
      %v1376 = vpop.f32.mrf.mxu0
      %1377 = vmatprep.mubr.bf16.mxu0 0
      %1378 = vmatmul.mubr.bf16.gmra.mxu0 %v1265
      %v1379 = vpop.f32.mrf.mxu0
      %v1380 = vadd.f32 0.0, %v1379
      %v1381 = vpop.f32.mrf.mxu0
      %v1382 = vpop.f32.mrf.mxu0
      %v1383 = vadd.f32 0.0, %v1382
      %v1384 = vpop.f32.mrf.mxu0
      %1385 = vmatprep.mubr.bf16.mxu0 0
      %1386 = vmatmul.mubr.bf16.gmra.mxu0 %v1268
      %v1387 = vpop.f32.mrf.mxu0
      %v1388 = vadd.f32 0.0, %v1387
      %v1389 = vpop.f32.mrf.mxu0
      %v1390 = vpop.f32.mrf.mxu0
      %v1391 = vadd.f32 0.0, %v1390
      %v1392 = vpop.f32.mrf.mxu0
      %1393 = vmatprep.mubr.bf16.mxu0 0
      %1394 = vmatmul.mubr.bf16.gmra.mxu0 %v1271
      %v1395 = vpop.f32.mrf.mxu0
      %v1396 = vadd.f32 0.0, %v1395
      %v1397 = vpop.f32.mrf.mxu0
      %v1398 = vpop.f32.mrf.mxu0
      %v1399 = vadd.f32 0.0, %v1398
      %v1400 = vpop.f32.mrf.mxu0
      %1401 = vmatprep.mubr.bf16.mxu0 0
      %1402 = vmatmul.mubr.bf16.gmra.mxu0 %v1274
      %v1403 = vpop.f32.mrf.mxu0
      %v1404 = vadd.f32 0.0, %v1403
      %v1405 = vpop.f32.mrf.mxu0
      %v1406 = vpop.f32.mrf.mxu0
      %v1407 = vadd.f32 0.0, %v1406
      %v1408 = vpop.f32.mrf.mxu0
      %1409 = vmatprep.mubr.bf16.mxu0 0
      %1410 = vmatmul.mubr.bf16.gmra.mxu0 %v1277
      %v1411 = vpop.f32.mrf.mxu0
      %v1412 = vadd.f32 0.0, %v1411
      %v1413 = vpop.f32.mrf.mxu0
      %v1414 = vpop.f32.mrf.mxu0
      %v1415 = vadd.f32 0.0, %v1414
      %v1416 = vpop.f32.mrf.mxu0
      %1417 = vmatprep.mubr.bf16.mxu0 0
      %1418 = vmatmul.mubr.bf16.gmra.mxu0 %v1280
      %v1419 = vpop.f32.mrf.mxu0
      %v1420 = vadd.f32 0.0, %v1419
      %v1421 = vpop.f32.mrf.mxu0
      %v1422 = vpop.f32.mrf.mxu0
      %v1423 = vadd.f32 0.0, %v1422
      %v1424 = vpop.f32.mrf.mxu0
      %1425 = vmatprep.mubr.bf16.mxu0 0
      %1426 = vmatmul.mubr.bf16.gmra.mxu0 %v1283
      %v1427 = vpop.f32.mrf.mxu0
      %v1428 = vadd.f32 0.0, %v1427
      %v1429 = vpop.f32.mrf.mxu0
      %v1430 = vpop.f32.mrf.mxu0
      %v1431 = vadd.f32 0.0, %v1430
      %v1432 = vpop.f32.mrf.mxu0
      %1433 = vmatprep.mubr.bf16.mxu0 0
      %1434 = vmatmul.mubr.bf16.gmra.mxu0 %v1286
      %v1435 = vpop.f32.mrf.mxu0
      %v1436 = vadd.f32 0.0, %v1435
      %v1437 = vpop.f32.mrf.mxu0
      %v1438 = vpop.f32.mrf.mxu0
      %v1439 = vadd.f32 0.0, %v1438
      %v1440 = vpop.f32.mrf.mxu0
      %1441 = vmatprep.mubr.bf16.mxu0 0
      %1442 = vmatmul.mubr.bf16.gmra.mxu0 %v1289
      %v1443 = vpop.f32.mrf.mxu0
      %v1444 = vadd.f32 0.0, %v1443
      %v1445 = vpop.f32.mrf.mxu0
      %v1446 = vpop.f32.mrf.mxu0
      %v1447 = vadd.f32 0.0, %v1446
      %v1448 = vpop.f32.mrf.mxu0
      %1449 = vmatprep.mubr.bf16.mxu0 0
      %1450 = vmatmul.mubr.bf16.gmra.mxu0 %v1292
      %v1451 = vpop.f32.mrf.mxu0
      %v1452 = vadd.f32 0.0, %v1451
      %v1453 = vpop.f32.mrf.mxu0
      %v1454 = vpop.f32.mrf.mxu0
      %v1455 = vadd.f32 0.0, %v1454
      %v1456 = vpop.f32.mrf.mxu0
      %1457 = vdwg.mxu0
      %v1458 = vadd.f32 %v989, %v1332
      %v1459 = vadd.f32 %v992, %v1335
      %v1460 = vadd.f32 %v997, %v1340
      %v1461 = vadd.f32 %v1000, %v1343
      %v1462 = vadd.f32 %v1005, %v1348
      %v1463 = vadd.f32 %v1008, %v1351
      %v1464 = vadd.f32 %v1013, %v1356
      %v1465 = vadd.f32 %v1016, %v1359
      %v1466 = vadd.f32 %v1021, %v1364
      %v1467 = vadd.f32 %v1024, %v1367
      %v1468 = vadd.f32 %v1029, %v1372
      %v1469 = vadd.f32 %v1032, %v1375
      %v1470 = vadd.f32 %v1037, %v1380
      %v1471 = vadd.f32 %v1040, %v1383
      %v1472 = vadd.f32 %v1045, %v1388
      %v1473 = vadd.f32 %v1048, %v1391
      %v1474 = vadd.f32 %v1053, %v1396
      %v1475 = vadd.f32 %v1056, %v1399
      %v1476 = vadd.f32 %v1061, %v1404
      %v1477 = vadd.f32 %v1064, %v1407
      %v1478 = vadd.f32 %v1069, %v1412
      %v1479 = vadd.f32 %v1072, %v1415
      %v1480 = vadd.f32 %v1077, %v1420
      %v1481 = vadd.f32 %v1080, %v1423
      %v1482 = vadd.f32 %v1085, %v1428
      %v1483 = vadd.f32 %v1088, %v1431
      %v1484 = vadd.f32 %v1093, %v1436
      %v1485 = vadd.f32 %v1096, %v1439
      %v1486 = vadd.f32 %v1101, %v1444
      %v1487 = vadd.f32 %v1104, %v1447
      %v1488 = vadd.f32 %v1109, %v1452
      %v1489 = vadd.f32 %v1112, %v1455
      %v1490 = vpack.c.bf16 %v488, %v487
      %s1491 = scalar_lea.vmem %s2, 12
      %v1492 = vld [vmem:[%s1491] sm:$0xf]
      %v1494 = vsel %vm689, %v1490, 0
      %v1497 = vsel %vm738, %v1492, 0
      %1499 = vmatprep.subr.bf16.mxu0 0
      %1500 = vmatpush1.bf16.msra.mxu0 0
      %1501 = vmatprep.subr.bf16.mxu0 0
      %1502 = vmatpush1.bf16.msra.mxu0 0
      %1503 = vmatprep.subr.bf16.mxu0 0
      %1504 = vmatpush1.bf16.msra.mxu0 0
      %1505 = vmatprep.subr.bf16.mxu0 0
      %1506 = vmatpush1.bf16.msra.mxu0 0
      %1507 = vmatprep.subr.bf16.mxu0 0
      %1508 = vmatpush1.bf16.msra.mxu0 0
      %1509 = vmatprep.subr.bf16.mxu0 0
      %1510 = vmatpush1.bf16.msra.mxu0 0
      %1511 = vmatprep.subr.bf16.mxu0 0
      %1512 = vmatpush1.bf16.msra.mxu0 0
      %1513 = vmatprep.subr.bf16.mxu0 0
      %1514 = vmatpush1.bf16.msra.mxu0 %v1497
      %1515 = vmatprep.subr.bf16.mxu0 0
      %1516 = vmatpush2.bf16.msra.mxu0 0
      %1517 = vmatprep.subr.bf16.mxu0 0
      %1518 = vmatpush2.bf16.msra.mxu0 0
      %1519 = vmatprep.subr.bf16.mxu0 0
      %1520 = vmatpush2.bf16.msra.mxu0 0
      %1521 = vmatprep.subr.bf16.mxu0 0
      %1522 = vmatpush2.bf16.msra.mxu0 0
      %1523 = vmatprep.subr.bf16.mxu0 0
      %1524 = vmatpush2.bf16.msra.mxu0 0
      %1525 = vmatprep.subr.bf16.mxu0 0
      %1526 = vmatpush2.bf16.msra.mxu0 0
      %1527 = vmatprep.subr.bf16.mxu0 0
      %1528 = vmatpush2.bf16.msra.mxu0 0
      %1529 = vmatprep.subr.bf16.mxu0 0
      %1530 = vmatpush2.bf16.msra.mxu0 0
      %1531 = vmatprep.mubr.bf16.mxu0 0
      %1532 = vmatmul.mubr.bf16.gmra.mxu0 %v907
      %v1533 = vpop.f32.mrf.mxu0
      %v1534 = vadd.f32 0.0, %v1533
      %v1535 = vpop.f32.mrf.mxu0
      %v1536 = vpop.f32.mrf.mxu0
      %v1537 = vadd.f32 0.0, %v1536
      %v1538 = vpop.f32.mrf.mxu0
      %1539 = vmatprep.mubr.bf16.mxu0 0
      %1540 = vmatmul.mubr.bf16.gmra.mxu0 %v910
      %v1541 = vpop.f32.mrf.mxu0
      %v1542 = vadd.f32 0.0, %v1541
      %v1543 = vpop.f32.mrf.mxu0
      %v1544 = vpop.f32.mrf.mxu0
      %v1545 = vadd.f32 0.0, %v1544
      %v1546 = vpop.f32.mrf.mxu0
      %1547 = vmatprep.mubr.bf16.mxu0 0
      %1548 = vmatmul.mubr.bf16.gmra.mxu0 %v913
      %v1549 = vpop.f32.mrf.mxu0
      %v1550 = vadd.f32 0.0, %v1549
      %v1551 = vpop.f32.mrf.mxu0
      %v1552 = vpop.f32.mrf.mxu0
      %v1553 = vadd.f32 0.0, %v1552
      %v1554 = vpop.f32.mrf.mxu0
      %1555 = vmatprep.mubr.bf16.mxu0 0
      %1556 = vmatmul.mubr.bf16.gmra.mxu0 %v916
      %v1557 = vpop.f32.mrf.mxu0
      %v1558 = vadd.f32 0.0, %v1557
      %v1559 = vpop.f32.mrf.mxu0
      %v1560 = vpop.f32.mrf.mxu0
      %v1561 = vadd.f32 0.0, %v1560
      %v1562 = vpop.f32.mrf.mxu0
      %1563 = vmatprep.mubr.bf16.mxu0 0
      %1564 = vmatmul.mubr.bf16.gmra.mxu0 %v919
      %v1565 = vpop.f32.mrf.mxu0
      %v1566 = vadd.f32 0.0, %v1565
      %v1567 = vpop.f32.mrf.mxu0
      %v1568 = vpop.f32.mrf.mxu0
      %v1569 = vadd.f32 0.0, %v1568
      %v1570 = vpop.f32.mrf.mxu0
      %1571 = vmatprep.mubr.bf16.mxu0 0
      %1572 = vmatmul.mubr.bf16.gmra.mxu0 %v922
      %v1573 = vpop.f32.mrf.mxu0
      %v1574 = vadd.f32 0.0, %v1573
      %v1575 = vpop.f32.mrf.mxu0
      %v1576 = vpop.f32.mrf.mxu0
      %v1577 = vadd.f32 0.0, %v1576
      %v1578 = vpop.f32.mrf.mxu0
      %1579 = vmatprep.mubr.bf16.mxu0 0
      %1580 = vmatmul.mubr.bf16.gmra.mxu0 %v925
      %v1581 = vpop.f32.mrf.mxu0
      %v1582 = vadd.f32 0.0, %v1581
      %v1583 = vpop.f32.mrf.mxu0
      %v1584 = vpop.f32.mrf.mxu0
      %v1585 = vadd.f32 0.0, %v1584
      %v1586 = vpop.f32.mrf.mxu0
      %1587 = vmatprep.mubr.bf16.mxu0 0
      %1588 = vmatmul.mubr.bf16.gmra.mxu0 %v928
      %v1589 = vpop.f32.mrf.mxu0
      %v1590 = vadd.f32 0.0, %v1589
      %v1591 = vpop.f32.mrf.mxu0
      %v1592 = vpop.f32.mrf.mxu0
      %v1593 = vadd.f32 0.0, %v1592
      %v1594 = vpop.f32.mrf.mxu0
      %1595 = vmatprep.mubr.bf16.mxu0 0
      %1596 = vmatmul.mubr.bf16.gmra.mxu0 %v931
      %v1597 = vpop.f32.mrf.mxu0
      %v1598 = vadd.f32 0.0, %v1597
      %v1599 = vpop.f32.mrf.mxu0
      %v1600 = vpop.f32.mrf.mxu0
      %v1601 = vadd.f32 0.0, %v1600
      %v1602 = vpop.f32.mrf.mxu0
      %1603 = vmatprep.mubr.bf16.mxu0 0
      %1604 = vmatmul.mubr.bf16.gmra.mxu0 %v934
      %v1605 = vpop.f32.mrf.mxu0
      %v1606 = vadd.f32 0.0, %v1605
      %v1607 = vpop.f32.mrf.mxu0
      %v1608 = vpop.f32.mrf.mxu0
      %v1609 = vadd.f32 0.0, %v1608
      %v1610 = vpop.f32.mrf.mxu0
      %1611 = vmatprep.mubr.bf16.mxu0 0
      %1612 = vmatmul.mubr.bf16.gmra.mxu0 %v937
      %v1613 = vpop.f32.mrf.mxu0
      %v1614 = vadd.f32 0.0, %v1613
      %v1615 = vpop.f32.mrf.mxu0
      %v1616 = vpop.f32.mrf.mxu0
      %v1617 = vadd.f32 0.0, %v1616
      %v1618 = vpop.f32.mrf.mxu0
      %1619 = vmatprep.mubr.bf16.mxu0 0
      %1620 = vmatmul.mubr.bf16.gmra.mxu0 %v940
      %v1621 = vpop.f32.mrf.mxu0
      %v1622 = vadd.f32 0.0, %v1621
      %v1623 = vpop.f32.mrf.mxu0
      %v1624 = vpop.f32.mrf.mxu0
      %v1625 = vadd.f32 0.0, %v1624
      %v1626 = vpop.f32.mrf.mxu0
      %1627 = vmatprep.mubr.bf16.mxu0 0
      %1628 = vmatmul.mubr.bf16.gmra.mxu0 %v943
      %v1629 = vpop.f32.mrf.mxu0
      %v1630 = vadd.f32 0.0, %v1629
      %v1631 = vpop.f32.mrf.mxu0
      %v1632 = vpop.f32.mrf.mxu0
      %v1633 = vadd.f32 0.0, %v1632
      %v1634 = vpop.f32.mrf.mxu0
      %1635 = vmatprep.mubr.bf16.mxu0 0
      %1636 = vmatmul.mubr.bf16.gmra.mxu0 %v946
      %v1637 = vpop.f32.mrf.mxu0
      %v1638 = vadd.f32 0.0, %v1637
      %v1639 = vpop.f32.mrf.mxu0
      %v1640 = vpop.f32.mrf.mxu0
      %v1641 = vadd.f32 0.0, %v1640
      %v1642 = vpop.f32.mrf.mxu0
      %1643 = vmatprep.mubr.bf16.mxu0 0
      %1644 = vmatmul.mubr.bf16.gmra.mxu0 %v949
      %v1645 = vpop.f32.mrf.mxu0
      %v1646 = vadd.f32 0.0, %v1645
      %v1647 = vpop.f32.mrf.mxu0
      %v1648 = vpop.f32.mrf.mxu0
      %v1649 = vadd.f32 0.0, %v1648
      %v1650 = vpop.f32.mrf.mxu0
      %1651 = vmatprep.mubr.bf16.mxu0 0
      %1652 = vmatmul.mubr.bf16.gmra.mxu0 %v1494
      %v1653 = vpop.f32.mrf.mxu0
      %v1654 = vadd.f32 0.0, %v1653
      %v1655 = vpop.f32.mrf.mxu0
      %v1656 = vpop.f32.mrf.mxu0
      %v1657 = vadd.f32 0.0, %v1656
      %v1658 = vpop.f32.mrf.mxu0
      %1659 = vdwg.mxu0
      %v1660 = vadd.f32 %v1458, %v1534
      %v1661 = vadd.f32 %v1459, %v1537
      %v1662 = vadd.f32 %v1460, %v1542
      %v1663 = vadd.f32 %v1461, %v1545
      %v1664 = vadd.f32 %v1462, %v1550
      %v1665 = vadd.f32 %v1463, %v1553
      %v1666 = vadd.f32 %v1464, %v1558
      %v1667 = vadd.f32 %v1465, %v1561
      %v1668 = vadd.f32 %v1466, %v1566
      %v1669 = vadd.f32 %v1467, %v1569
      %v1670 = vadd.f32 %v1468, %v1574
      %v1671 = vadd.f32 %v1469, %v1577
      %v1672 = vadd.f32 %v1470, %v1582
      %v1673 = vadd.f32 %v1471, %v1585
      %v1674 = vadd.f32 %v1472, %v1590
      %v1675 = vadd.f32 %v1473, %v1593
      %v1676 = vadd.f32 %v1474, %v1598
      %v1677 = vadd.f32 %v1475, %v1601
      %v1678 = vadd.f32 %v1476, %v1606
      %v1679 = vadd.f32 %v1477, %v1609
      %v1680 = vadd.f32 %v1478, %v1614
      %v1681 = vadd.f32 %v1479, %v1617
      %v1682 = vadd.f32 %v1480, %v1622
      %v1683 = vadd.f32 %v1481, %v1625
      %v1684 = vadd.f32 %v1482, %v1630
      %v1685 = vadd.f32 %v1483, %v1633
      %v1686 = vadd.f32 %v1484, %v1638
      %v1687 = vadd.f32 %v1485, %v1641
      %v1688 = vadd.f32 %v1486, %v1646
      %v1689 = vadd.f32 %v1487, %v1649
      %v1690 = vadd.f32 %v1488, %v1654
      %v1691 = vadd.f32 %v1489, %v1657
      %v1695 = vrot.slane %v487, 1
      %v1696 = vrot.slane %v488, 1
      %v1697 = vsel %vm558, %v1695, %v1696
      %v1698 = vrot.slane %v489, 1
      %v1699 = vsel %vm558, %v1696, %v1698
      %v1702 = vpack.c.bf16 %v1699, %v1697
      %s1703 = scalar_lea.vmem %s2, 16
      %v1704 = vld [vmem:[%s1703] sm:$0xf]
      %v1706 = vsel %vm689, %v1702, 0
      %v1709 = vsel %vm738, %v1704, 0
      %1711 = vmatprep.subr.bf16.mxu0 0
      %1712 = vmatpush1.bf16.msra.mxu0 0
      %1713 = vmatprep.subr.bf16.mxu0 0
      %1714 = vmatpush1.bf16.msra.mxu0 0
      %1715 = vmatprep.subr.bf16.mxu0 0
      %1716 = vmatpush1.bf16.msra.mxu0 0
      %1717 = vmatprep.subr.bf16.mxu0 0
      %1718 = vmatpush1.bf16.msra.mxu0 0
      %1719 = vmatprep.subr.bf16.mxu0 0
      %1720 = vmatpush1.bf16.msra.mxu0 0
      %1721 = vmatprep.subr.bf16.mxu0 0
      %1722 = vmatpush1.bf16.msra.mxu0 0
      %1723 = vmatprep.subr.bf16.mxu0 0
      %1724 = vmatpush1.bf16.msra.mxu0 0
      %1725 = vmatprep.subr.bf16.mxu0 0
      %1726 = vmatpush1.bf16.msra.mxu0 %v1709
      %1727 = vmatprep.subr.bf16.mxu0 0
      %1728 = vmatpush2.bf16.msra.mxu0 0
      %1729 = vmatprep.subr.bf16.mxu0 0
      %1730 = vmatpush2.bf16.msra.mxu0 0
      %1731 = vmatprep.subr.bf16.mxu0 0
      %1732 = vmatpush2.bf16.msra.mxu0 0
      %1733 = vmatprep.subr.bf16.mxu0 0
      %1734 = vmatpush2.bf16.msra.mxu0 0
      %1735 = vmatprep.subr.bf16.mxu0 0
      %1736 = vmatpush2.bf16.msra.mxu0 0
      %1737 = vmatprep.subr.bf16.mxu0 0
      %1738 = vmatpush2.bf16.msra.mxu0 0
      %1739 = vmatprep.subr.bf16.mxu0 0
      %1740 = vmatpush2.bf16.msra.mxu0 0
      %1741 = vmatprep.subr.bf16.mxu0 0
      %1742 = vmatpush2.bf16.msra.mxu0 0
      %1743 = vmatprep.mubr.bf16.mxu0 0
      %1744 = vmatmul.mubr.bf16.gmra.mxu0 %v694
      %v1745 = vpop.f32.mrf.mxu0
      %v1746 = vadd.f32 0.0, %v1745
      %v1747 = vpop.f32.mrf.mxu0
      %v1748 = vpop.f32.mrf.mxu0
      %v1749 = vadd.f32 0.0, %v1748
      %v1750 = vpop.f32.mrf.mxu0
      %1751 = vmatprep.mubr.bf16.mxu0 0
      %1752 = vmatmul.mubr.bf16.gmra.mxu0 %v697
      %v1753 = vpop.f32.mrf.mxu0
      %v1754 = vadd.f32 0.0, %v1753
      %v1755 = vpop.f32.mrf.mxu0
      %v1756 = vpop.f32.mrf.mxu0
      %v1757 = vadd.f32 0.0, %v1756
      %v1758 = vpop.f32.mrf.mxu0
      %1759 = vmatprep.mubr.bf16.mxu0 0
      %1760 = vmatmul.mubr.bf16.gmra.mxu0 %v700
      %v1761 = vpop.f32.mrf.mxu0
      %v1762 = vadd.f32 0.0, %v1761
      %v1763 = vpop.f32.mrf.mxu0
      %v1764 = vpop.f32.mrf.mxu0
      %v1765 = vadd.f32 0.0, %v1764
      %v1766 = vpop.f32.mrf.mxu0
      %1767 = vmatprep.mubr.bf16.mxu0 0
      %1768 = vmatmul.mubr.bf16.gmra.mxu0 %v703
      %v1769 = vpop.f32.mrf.mxu0
      %v1770 = vadd.f32 0.0, %v1769
      %v1771 = vpop.f32.mrf.mxu0
      %v1772 = vpop.f32.mrf.mxu0
      %v1773 = vadd.f32 0.0, %v1772
      %v1774 = vpop.f32.mrf.mxu0
      %1775 = vmatprep.mubr.bf16.mxu0 0
      %1776 = vmatmul.mubr.bf16.gmra.mxu0 %v706
      %v1777 = vpop.f32.mrf.mxu0
      %v1778 = vadd.f32 0.0, %v1777
      %v1779 = vpop.f32.mrf.mxu0
      %v1780 = vpop.f32.mrf.mxu0
      %v1781 = vadd.f32 0.0, %v1780
      %v1782 = vpop.f32.mrf.mxu0
      %1783 = vmatprep.mubr.bf16.mxu0 0
      %1784 = vmatmul.mubr.bf16.gmra.mxu0 %v709
      %v1785 = vpop.f32.mrf.mxu0
      %v1786 = vadd.f32 0.0, %v1785
      %v1787 = vpop.f32.mrf.mxu0
      %v1788 = vpop.f32.mrf.mxu0
      %v1789 = vadd.f32 0.0, %v1788
      %v1790 = vpop.f32.mrf.mxu0
      %1791 = vmatprep.mubr.bf16.mxu0 0
      %1792 = vmatmul.mubr.bf16.gmra.mxu0 %v712
      %v1793 = vpop.f32.mrf.mxu0
      %v1794 = vadd.f32 0.0, %v1793
      %v1795 = vpop.f32.mrf.mxu0
      %v1796 = vpop.f32.mrf.mxu0
      %v1797 = vadd.f32 0.0, %v1796
      %v1798 = vpop.f32.mrf.mxu0
      %1799 = vmatprep.mubr.bf16.mxu0 0
      %1800 = vmatmul.mubr.bf16.gmra.mxu0 %v715
      %v1801 = vpop.f32.mrf.mxu0
      %v1802 = vadd.f32 0.0, %v1801
      %v1803 = vpop.f32.mrf.mxu0
      %v1804 = vpop.f32.mrf.mxu0
      %v1805 = vadd.f32 0.0, %v1804
      %v1806 = vpop.f32.mrf.mxu0
      %1807 = vmatprep.mubr.bf16.mxu0 0
      %1808 = vmatmul.mubr.bf16.gmra.mxu0 %v718
      %v1809 = vpop.f32.mrf.mxu0
      %v1810 = vadd.f32 0.0, %v1809
      %v1811 = vpop.f32.mrf.mxu0
      %v1812 = vpop.f32.mrf.mxu0
      %v1813 = vadd.f32 0.0, %v1812
      %v1814 = vpop.f32.mrf.mxu0
      %1815 = vmatprep.mubr.bf16.mxu0 0
      %1816 = vmatmul.mubr.bf16.gmra.mxu0 %v721
      %v1817 = vpop.f32.mrf.mxu0
      %v1818 = vadd.f32 0.0, %v1817
      %v1819 = vpop.f32.mrf.mxu0
      %v1820 = vpop.f32.mrf.mxu0
      %v1821 = vadd.f32 0.0, %v1820
      %v1822 = vpop.f32.mrf.mxu0
      %1823 = vmatprep.mubr.bf16.mxu0 0
      %1824 = vmatmul.mubr.bf16.gmra.mxu0 %v724
      %v1825 = vpop.f32.mrf.mxu0
      %v1826 = vadd.f32 0.0, %v1825
      %v1827 = vpop.f32.mrf.mxu0
      %v1828 = vpop.f32.mrf.mxu0
      %v1829 = vadd.f32 0.0, %v1828
      %v1830 = vpop.f32.mrf.mxu0
      %1831 = vmatprep.mubr.bf16.mxu0 0
      %1832 = vmatmul.mubr.bf16.gmra.mxu0 %v727
      %v1833 = vpop.f32.mrf.mxu0
      %v1834 = vadd.f32 0.0, %v1833
      %v1835 = vpop.f32.mrf.mxu0
      %v1836 = vpop.f32.mrf.mxu0
      %v1837 = vadd.f32 0.0, %v1836
      %v1838 = vpop.f32.mrf.mxu0
      %1839 = vmatprep.mubr.bf16.mxu0 0
      %1840 = vmatmul.mubr.bf16.gmra.mxu0 %v730
      %v1841 = vpop.f32.mrf.mxu0
      %v1842 = vadd.f32 0.0, %v1841
      %v1843 = vpop.f32.mrf.mxu0
      %v1844 = vpop.f32.mrf.mxu0
      %v1845 = vadd.f32 0.0, %v1844
      %v1846 = vpop.f32.mrf.mxu0
      %1847 = vmatprep.mubr.bf16.mxu0 0
      %1848 = vmatmul.mubr.bf16.gmra.mxu0 %v733
      %v1849 = vpop.f32.mrf.mxu0
      %v1850 = vadd.f32 0.0, %v1849
      %v1851 = vpop.f32.mrf.mxu0
      %v1852 = vpop.f32.mrf.mxu0
      %v1853 = vadd.f32 0.0, %v1852
      %v1854 = vpop.f32.mrf.mxu0
      %1855 = vmatprep.mubr.bf16.mxu0 0
      %1856 = vmatmul.mubr.bf16.gmra.mxu0 %v736
      %v1857 = vpop.f32.mrf.mxu0
      %v1858 = vadd.f32 0.0, %v1857
      %v1859 = vpop.f32.mrf.mxu0
      %v1860 = vpop.f32.mrf.mxu0
      %v1861 = vadd.f32 0.0, %v1860
      %v1862 = vpop.f32.mrf.mxu0
      %1863 = vmatprep.mubr.bf16.mxu0 0
      %1864 = vmatmul.mubr.bf16.gmra.mxu0 %v1706
      %v1865 = vpop.f32.mrf.mxu0
      %v1866 = vadd.f32 0.0, %v1865
      %v1867 = vpop.f32.mrf.mxu0
      %v1868 = vpop.f32.mrf.mxu0
      %v1869 = vadd.f32 0.0, %v1868
      %v1870 = vpop.f32.mrf.mxu0
      %1871 = vdwg.mxu0
      %v1872 = vadd.f32 %v1660, %v1746
      %v1873 = vadd.f32 %v1661, %v1749
      %v1874 = vadd.f32 %v1662, %v1754
      %v1875 = vadd.f32 %v1663, %v1757
      %v1876 = vadd.f32 %v1664, %v1762
      %v1877 = vadd.f32 %v1665, %v1765
      %v1878 = vadd.f32 %v1666, %v1770
      %v1879 = vadd.f32 %v1667, %v1773
      %v1880 = vadd.f32 %v1668, %v1778
      %v1881 = vadd.f32 %v1669, %v1781
      %v1882 = vadd.f32 %v1670, %v1786
      %v1883 = vadd.f32 %v1671, %v1789
      %v1884 = vadd.f32 %v1672, %v1794
      %v1885 = vadd.f32 %v1673, %v1797
      %v1886 = vadd.f32 %v1674, %v1802
      %v1887 = vadd.f32 %v1675, %v1805
      %v1888 = vadd.f32 %v1676, %v1810
      %v1889 = vadd.f32 %v1677, %v1813
      %v1890 = vadd.f32 %v1678, %v1818
      %v1891 = vadd.f32 %v1679, %v1821
      %v1892 = vadd.f32 %v1680, %v1826
      %v1893 = vadd.f32 %v1681, %v1829
      %v1894 = vadd.f32 %v1682, %v1834
      %v1895 = vadd.f32 %v1683, %v1837
      %v1896 = vadd.f32 %v1684, %v1842
      %v1897 = vadd.f32 %v1685, %v1845
      %v1898 = vadd.f32 %v1686, %v1850
      %v1899 = vadd.f32 %v1687, %v1853
      %v1900 = vadd.f32 %v1688, %v1858
      %v1901 = vadd.f32 %v1689, %v1861
      %v1902 = vadd.f32 %v1690, %v1866
      %v1903 = vadd.f32 %v1691, %v1869
      %v1904 = vrot.slane %v487, 2
      %v1905 = vrot.slane %v488, 2
      %v1906 = vsel %vm1115, %v1904, %v1905
      %v1907 = vrot.slane %v489, 2
      %v1908 = vsel %vm1115, %v1905, %v1907
      %v1911 = vpack.c.bf16 %v1908, %v1906
      %s1912 = scalar_lea.vmem %s2, 20
      %v1913 = vld [vmem:[%s1912] sm:$0xf]
      %v1915 = vsel %vm689, %v1911, 0
      %v1918 = vsel %vm738, %v1913, 0
      %1920 = vmatprep.subr.bf16.mxu0 0
      %1921 = vmatpush1.bf16.msra.mxu0 0
      %1922 = vmatprep.subr.bf16.mxu0 0
      %1923 = vmatpush1.bf16.msra.mxu0 0
      %1924 = vmatprep.subr.bf16.mxu0 0
      %1925 = vmatpush1.bf16.msra.mxu0 0
      %1926 = vmatprep.subr.bf16.mxu0 0
      %1927 = vmatpush1.bf16.msra.mxu0 0
      %1928 = vmatprep.subr.bf16.mxu0 0
      %1929 = vmatpush1.bf16.msra.mxu0 0
      %1930 = vmatprep.subr.bf16.mxu0 0
      %1931 = vmatpush1.bf16.msra.mxu0 0
      %1932 = vmatprep.subr.bf16.mxu0 0
      %1933 = vmatpush1.bf16.msra.mxu0 0
      %1934 = vmatprep.subr.bf16.mxu0 0
      %1935 = vmatpush1.bf16.msra.mxu0 %v1918
      %1936 = vmatprep.subr.bf16.mxu0 0
      %1937 = vmatpush2.bf16.msra.mxu0 0
      %1938 = vmatprep.subr.bf16.mxu0 0
      %1939 = vmatpush2.bf16.msra.mxu0 0
      %1940 = vmatprep.subr.bf16.mxu0 0
      %1941 = vmatpush2.bf16.msra.mxu0 0
      %1942 = vmatprep.subr.bf16.mxu0 0
      %1943 = vmatpush2.bf16.msra.mxu0 0
      %1944 = vmatprep.subr.bf16.mxu0 0
      %1945 = vmatpush2.bf16.msra.mxu0 0
      %1946 = vmatprep.subr.bf16.mxu0 0
      %1947 = vmatpush2.bf16.msra.mxu0 0
      %1948 = vmatprep.subr.bf16.mxu0 0
      %1949 = vmatpush2.bf16.msra.mxu0 0
      %1950 = vmatprep.subr.bf16.mxu0 0
      %1951 = vmatpush2.bf16.msra.mxu0 0
      %1952 = vmatprep.mubr.bf16.mxu0 0
      %1953 = vmatmul.mubr.bf16.gmra.mxu0 %v1250
      %v1954 = vpop.f32.mrf.mxu0
      %v1955 = vadd.f32 0.0, %v1954
      %v1956 = vpop.f32.mrf.mxu0
      %v1957 = vpop.f32.mrf.mxu0
      %v1958 = vadd.f32 0.0, %v1957
      %v1959 = vpop.f32.mrf.mxu0
      %1960 = vmatprep.mubr.bf16.mxu0 0
      %1961 = vmatmul.mubr.bf16.gmra.mxu0 %v1253
      %v1962 = vpop.f32.mrf.mxu0
      %v1963 = vadd.f32 0.0, %v1962
      %v1964 = vpop.f32.mrf.mxu0
      %v1965 = vpop.f32.mrf.mxu0
      %v1966 = vadd.f32 0.0, %v1965
      %v1967 = vpop.f32.mrf.mxu0
      %1968 = vmatprep.mubr.bf16.mxu0 0
      %1969 = vmatmul.mubr.bf16.gmra.mxu0 %v1256
      %v1970 = vpop.f32.mrf.mxu0
      %v1971 = vadd.f32 0.0, %v1970
      %v1972 = vpop.f32.mrf.mxu0
      %v1973 = vpop.f32.mrf.mxu0
      %v1974 = vadd.f32 0.0, %v1973
      %v1975 = vpop.f32.mrf.mxu0
      %1976 = vmatprep.mubr.bf16.mxu0 0
      %1977 = vmatmul.mubr.bf16.gmra.mxu0 %v1259
      %v1978 = vpop.f32.mrf.mxu0
      %v1979 = vadd.f32 0.0, %v1978
      %v1980 = vpop.f32.mrf.mxu0
      %v1981 = vpop.f32.mrf.mxu0
      %v1982 = vadd.f32 0.0, %v1981
      %v1983 = vpop.f32.mrf.mxu0
      %1984 = vmatprep.mubr.bf16.mxu0 0
      %1985 = vmatmul.mubr.bf16.gmra.mxu0 %v1262
      %v1986 = vpop.f32.mrf.mxu0
      %v1987 = vadd.f32 0.0, %v1986
      %v1988 = vpop.f32.mrf.mxu0
      %v1989 = vpop.f32.mrf.mxu0
      %v1990 = vadd.f32 0.0, %v1989
      %v1991 = vpop.f32.mrf.mxu0
      %1992 = vmatprep.mubr.bf16.mxu0 0
      %1993 = vmatmul.mubr.bf16.gmra.mxu0 %v1265
      %v1994 = vpop.f32.mrf.mxu0
      %v1995 = vadd.f32 0.0, %v1994
      %v1996 = vpop.f32.mrf.mxu0
      %v1997 = vpop.f32.mrf.mxu0
      %v1998 = vadd.f32 0.0, %v1997
      %v1999 = vpop.f32.mrf.mxu0
      %2000 = vmatprep.mubr.bf16.mxu0 0
      %2001 = vmatmul.mubr.bf16.gmra.mxu0 %v1268
      %v2002 = vpop.f32.mrf.mxu0
      %v2003 = vadd.f32 0.0, %v2002
      %v2004 = vpop.f32.mrf.mxu0
      %v2005 = vpop.f32.mrf.mxu0
      %v2006 = vadd.f32 0.0, %v2005
      %v2007 = vpop.f32.mrf.mxu0
      %2008 = vmatprep.mubr.bf16.mxu0 0
      %2009 = vmatmul.mubr.bf16.gmra.mxu0 %v1271
      %v2010 = vpop.f32.mrf.mxu0
      %v2011 = vadd.f32 0.0, %v2010
      %v2012 = vpop.f32.mrf.mxu0
      %v2013 = vpop.f32.mrf.mxu0
      %v2014 = vadd.f32 0.0, %v2013
      %v2015 = vpop.f32.mrf.mxu0
      %2016 = vmatprep.mubr.bf16.mxu0 0
      %2017 = vmatmul.mubr.bf16.gmra.mxu0 %v1274
      %v2018 = vpop.f32.mrf.mxu0
      %v2019 = vadd.f32 0.0, %v2018
      %v2020 = vpop.f32.mrf.mxu0
      %v2021 = vpop.f32.mrf.mxu0
      %v2022 = vadd.f32 0.0, %v2021
      %v2023 = vpop.f32.mrf.mxu0
      %2024 = vmatprep.mubr.bf16.mxu0 0
      %2025 = vmatmul.mubr.bf16.gmra.mxu0 %v1277
      %v2026 = vpop.f32.mrf.mxu0
      %v2027 = vadd.f32 0.0, %v2026
      %v2028 = vpop.f32.mrf.mxu0
      %v2029 = vpop.f32.mrf.mxu0
      %v2030 = vadd.f32 0.0, %v2029
      %v2031 = vpop.f32.mrf.mxu0
      %2032 = vmatprep.mubr.bf16.mxu0 0
      %2033 = vmatmul.mubr.bf16.gmra.mxu0 %v1280
      %v2034 = vpop.f32.mrf.mxu0
      %v2035 = vadd.f32 0.0, %v2034
      %v2036 = vpop.f32.mrf.mxu0
      %v2037 = vpop.f32.mrf.mxu0
      %v2038 = vadd.f32 0.0, %v2037
      %v2039 = vpop.f32.mrf.mxu0
      %2040 = vmatprep.mubr.bf16.mxu0 0
      %2041 = vmatmul.mubr.bf16.gmra.mxu0 %v1283
      %v2042 = vpop.f32.mrf.mxu0
      %v2043 = vadd.f32 0.0, %v2042
      %v2044 = vpop.f32.mrf.mxu0
      %v2045 = vpop.f32.mrf.mxu0
      %v2046 = vadd.f32 0.0, %v2045
      %v2047 = vpop.f32.mrf.mxu0
      %2048 = vmatprep.mubr.bf16.mxu0 0
      %2049 = vmatmul.mubr.bf16.gmra.mxu0 %v1286
      %v2050 = vpop.f32.mrf.mxu0
      %v2051 = vadd.f32 0.0, %v2050
      %v2052 = vpop.f32.mrf.mxu0
      %v2053 = vpop.f32.mrf.mxu0
      %v2054 = vadd.f32 0.0, %v2053
      %v2055 = vpop.f32.mrf.mxu0
      %2056 = vmatprep.mubr.bf16.mxu0 0
      %2057 = vmatmul.mubr.bf16.gmra.mxu0 %v1289
      %v2058 = vpop.f32.mrf.mxu0
      %v2059 = vadd.f32 0.0, %v2058
      %v2060 = vpop.f32.mrf.mxu0
      %v2061 = vpop.f32.mrf.mxu0
      %v2062 = vadd.f32 0.0, %v2061
      %v2063 = vpop.f32.mrf.mxu0
      %2064 = vmatprep.mubr.bf16.mxu0 0
      %2065 = vmatmul.mubr.bf16.gmra.mxu0 %v1292
      %v2066 = vpop.f32.mrf.mxu0
      %v2067 = vadd.f32 0.0, %v2066
      %v2068 = vpop.f32.mrf.mxu0
      %v2069 = vpop.f32.mrf.mxu0
      %v2070 = vadd.f32 0.0, %v2069
      %v2071 = vpop.f32.mrf.mxu0
      %2072 = vmatprep.mubr.bf16.mxu0 0
      %2073 = vmatmul.mubr.bf16.gmra.mxu0 %v1915
      %v2074 = vpop.f32.mrf.mxu0
      %v2075 = vadd.f32 0.0, %v2074
      %v2076 = vpop.f32.mrf.mxu0
      %v2077 = vpop.f32.mrf.mxu0
      %v2078 = vadd.f32 0.0, %v2077
      %v2079 = vpop.f32.mrf.mxu0
      %2080 = vdwg.mxu0
      %v2081 = vadd.f32 %v1872, %v1955
      %v2082 = vadd.f32 %v1873, %v1958
      %v2083 = vadd.f32 %v1874, %v1963
      %v2084 = vadd.f32 %v1875, %v1966
      %v2085 = vadd.f32 %v1876, %v1971
      %v2086 = vadd.f32 %v1877, %v1974
      %v2087 = vadd.f32 %v1878, %v1979
      %v2088 = vadd.f32 %v1879, %v1982
      %v2089 = vadd.f32 %v1880, %v1987
      %v2090 = vadd.f32 %v1881, %v1990
      %v2091 = vadd.f32 %v1882, %v1995
      %v2092 = vadd.f32 %v1883, %v1998
      %v2093 = vadd.f32 %v1884, %v2003
      %v2094 = vadd.f32 %v1885, %v2006
      %v2095 = vadd.f32 %v1886, %v2011
      %v2096 = vadd.f32 %v1887, %v2014
      %v2097 = vadd.f32 %v1888, %v2019
      %v2098 = vadd.f32 %v1889, %v2022
      %v2099 = vadd.f32 %v1890, %v2027
      %v2100 = vadd.f32 %v1891, %v2030
      %v2101 = vadd.f32 %v1892, %v2035
      %v2102 = vadd.f32 %v1893, %v2038
      %v2103 = vadd.f32 %v1894, %v2043
      %v2104 = vadd.f32 %v1895, %v2046
      %v2105 = vadd.f32 %v1896, %v2051
      %v2106 = vadd.f32 %v1897, %v2054
      %v2107 = vadd.f32 %v1898, %v2059
      %v2108 = vadd.f32 %v1899, %v2062
      %v2109 = vadd.f32 %v1900, %v2067
      %v2110 = vadd.f32 %v1901, %v2070
      %v2111 = vadd.f32 %v1902, %v2075
      %v2112 = vadd.f32 %v1903, %v2078
      %v2113 = vpack.c.bf16 %v491, %v490
      %s2114 = scalar_lea.vmem %s2, 24
      %v2115 = vld [vmem:[%s2114] sm:$0xf]
      %v2117 = vsel %vm689, %v2113, 0
      %v2120 = vsel %vm738, %v2115, 0
      %2122 = vmatprep.subr.bf16.mxu0 0
      %2123 = vmatpush1.bf16.msra.mxu0 0
      %2124 = vmatprep.subr.bf16.mxu0 0
      %2125 = vmatpush1.bf16.msra.mxu0 0
      %2126 = vmatprep.subr.bf16.mxu0 0
      %2127 = vmatpush1.bf16.msra.mxu0 0
      %2128 = vmatprep.subr.bf16.mxu0 0
      %2129 = vmatpush1.bf16.msra.mxu0 0
      %2130 = vmatprep.subr.bf16.mxu0 0
      %2131 = vmatpush1.bf16.msra.mxu0 0
      %2132 = vmatprep.subr.bf16.mxu0 0
      %2133 = vmatpush1.bf16.msra.mxu0 0
      %2134 = vmatprep.subr.bf16.mxu0 0
      %2135 = vmatpush1.bf16.msra.mxu0 0
      %2136 = vmatprep.subr.bf16.mxu0 0
      %2137 = vmatpush1.bf16.msra.mxu0 %v2120
      %2138 = vmatprep.subr.bf16.mxu0 0
      %2139 = vmatpush2.bf16.msra.mxu0 0
      %2140 = vmatprep.subr.bf16.mxu0 0
      %2141 = vmatpush2.bf16.msra.mxu0 0
      %2142 = vmatprep.subr.bf16.mxu0 0
      %2143 = vmatpush2.bf16.msra.mxu0 0
      %2144 = vmatprep.subr.bf16.mxu0 0
      %2145 = vmatpush2.bf16.msra.mxu0 0
      %2146 = vmatprep.subr.bf16.mxu0 0
      %2147 = vmatpush2.bf16.msra.mxu0 0
      %2148 = vmatprep.subr.bf16.mxu0 0
      %2149 = vmatpush2.bf16.msra.mxu0 0
      %2150 = vmatprep.subr.bf16.mxu0 0
      %2151 = vmatpush2.bf16.msra.mxu0 0
      %2152 = vmatprep.subr.bf16.mxu0 0
      %2153 = vmatpush2.bf16.msra.mxu0 0
      %2154 = vmatprep.mubr.bf16.mxu0 0
      %2155 = vmatmul.mubr.bf16.gmra.mxu0 %v910
      %v2156 = vpop.f32.mrf.mxu0
      %v2157 = vadd.f32 0.0, %v2156
      %v2158 = vpop.f32.mrf.mxu0
      %v2159 = vpop.f32.mrf.mxu0
      %v2160 = vadd.f32 0.0, %v2159
      %v2161 = vpop.f32.mrf.mxu0
      %2162 = vmatprep.mubr.bf16.mxu0 0
      %2163 = vmatmul.mubr.bf16.gmra.mxu0 %v913
      %v2164 = vpop.f32.mrf.mxu0
      %v2165 = vadd.f32 0.0, %v2164
      %v2166 = vpop.f32.mrf.mxu0
      %v2167 = vpop.f32.mrf.mxu0
      %v2168 = vadd.f32 0.0, %v2167
      %v2169 = vpop.f32.mrf.mxu0
      %2170 = vmatprep.mubr.bf16.mxu0 0
      %2171 = vmatmul.mubr.bf16.gmra.mxu0 %v916
      %v2172 = vpop.f32.mrf.mxu0
      %v2173 = vadd.f32 0.0, %v2172
      %v2174 = vpop.f32.mrf.mxu0
      %v2175 = vpop.f32.mrf.mxu0
      %v2176 = vadd.f32 0.0, %v2175
      %v2177 = vpop.f32.mrf.mxu0
      %2178 = vmatprep.mubr.bf16.mxu0 0
      %2179 = vmatmul.mubr.bf16.gmra.mxu0 %v919
      %v2180 = vpop.f32.mrf.mxu0
      %v2181 = vadd.f32 0.0, %v2180
      %v2182 = vpop.f32.mrf.mxu0
      %v2183 = vpop.f32.mrf.mxu0
      %v2184 = vadd.f32 0.0, %v2183
      %v2185 = vpop.f32.mrf.mxu0
      %2186 = vmatprep.mubr.bf16.mxu0 0
      %2187 = vmatmul.mubr.bf16.gmra.mxu0 %v922
      %v2188 = vpop.f32.mrf.mxu0
      %v2189 = vadd.f32 0.0, %v2188
      %v2190 = vpop.f32.mrf.mxu0
      %v2191 = vpop.f32.mrf.mxu0
      %v2192 = vadd.f32 0.0, %v2191
      %v2193 = vpop.f32.mrf.mxu0
      %2194 = vmatprep.mubr.bf16.mxu0 0
      %2195 = vmatmul.mubr.bf16.gmra.mxu0 %v925
      %v2196 = vpop.f32.mrf.mxu0
      %v2197 = vadd.f32 0.0, %v2196
      %v2198 = vpop.f32.mrf.mxu0
      %v2199 = vpop.f32.mrf.mxu0
      %v2200 = vadd.f32 0.0, %v2199
      %v2201 = vpop.f32.mrf.mxu0
      %2202 = vmatprep.mubr.bf16.mxu0 0
      %2203 = vmatmul.mubr.bf16.gmra.mxu0 %v928
      %v2204 = vpop.f32.mrf.mxu0
      %v2205 = vadd.f32 0.0, %v2204
      %v2206 = vpop.f32.mrf.mxu0
      %v2207 = vpop.f32.mrf.mxu0
      %v2208 = vadd.f32 0.0, %v2207
      %v2209 = vpop.f32.mrf.mxu0
      %2210 = vmatprep.mubr.bf16.mxu0 0
      %2211 = vmatmul.mubr.bf16.gmra.mxu0 %v931
      %v2212 = vpop.f32.mrf.mxu0
      %v2213 = vadd.f32 0.0, %v2212
      %v2214 = vpop.f32.mrf.mxu0
      %v2215 = vpop.f32.mrf.mxu0
      %v2216 = vadd.f32 0.0, %v2215
      %v2217 = vpop.f32.mrf.mxu0
      %2218 = vmatprep.mubr.bf16.mxu0 0
      %2219 = vmatmul.mubr.bf16.gmra.mxu0 %v934
      %v2220 = vpop.f32.mrf.mxu0
      %v2221 = vadd.f32 0.0, %v2220
      %v2222 = vpop.f32.mrf.mxu0
      %v2223 = vpop.f32.mrf.mxu0
      %v2224 = vadd.f32 0.0, %v2223
      %v2225 = vpop.f32.mrf.mxu0
      %2226 = vmatprep.mubr.bf16.mxu0 0
      %2227 = vmatmul.mubr.bf16.gmra.mxu0 %v937
      %v2228 = vpop.f32.mrf.mxu0
      %v2229 = vadd.f32 0.0, %v2228
      %v2230 = vpop.f32.mrf.mxu0
      %v2231 = vpop.f32.mrf.mxu0
      %v2232 = vadd.f32 0.0, %v2231
      %v2233 = vpop.f32.mrf.mxu0
      %2234 = vmatprep.mubr.bf16.mxu0 0
      %2235 = vmatmul.mubr.bf16.gmra.mxu0 %v940
      %v2236 = vpop.f32.mrf.mxu0
      %v2237 = vadd.f32 0.0, %v2236
      %v2238 = vpop.f32.mrf.mxu0
      %v2239 = vpop.f32.mrf.mxu0
      %v2240 = vadd.f32 0.0, %v2239
      %v2241 = vpop.f32.mrf.mxu0
      %2242 = vmatprep.mubr.bf16.mxu0 0
      %2243 = vmatmul.mubr.bf16.gmra.mxu0 %v943
      %v2244 = vpop.f32.mrf.mxu0
      %v2245 = vadd.f32 0.0, %v2244
      %v2246 = vpop.f32.mrf.mxu0
      %v2247 = vpop.f32.mrf.mxu0
      %v2248 = vadd.f32 0.0, %v2247
      %v2249 = vpop.f32.mrf.mxu0
      %2250 = vmatprep.mubr.bf16.mxu0 0
      %2251 = vmatmul.mubr.bf16.gmra.mxu0 %v946
      %v2252 = vpop.f32.mrf.mxu0
      %v2253 = vadd.f32 0.0, %v2252
      %v2254 = vpop.f32.mrf.mxu0
      %v2255 = vpop.f32.mrf.mxu0
      %v2256 = vadd.f32 0.0, %v2255
      %v2257 = vpop.f32.mrf.mxu0
      %2258 = vmatprep.mubr.bf16.mxu0 0
      %2259 = vmatmul.mubr.bf16.gmra.mxu0 %v949
      %v2260 = vpop.f32.mrf.mxu0
      %v2261 = vadd.f32 0.0, %v2260
      %v2262 = vpop.f32.mrf.mxu0
      %v2263 = vpop.f32.mrf.mxu0
      %v2264 = vadd.f32 0.0, %v2263
      %v2265 = vpop.f32.mrf.mxu0
      %2266 = vmatprep.mubr.bf16.mxu0 0
      %2267 = vmatmul.mubr.bf16.gmra.mxu0 %v1494
      %v2268 = vpop.f32.mrf.mxu0
      %v2269 = vadd.f32 0.0, %v2268
      %v2270 = vpop.f32.mrf.mxu0
      %v2271 = vpop.f32.mrf.mxu0
      %v2272 = vadd.f32 0.0, %v2271
      %v2273 = vpop.f32.mrf.mxu0
      %2274 = vmatprep.mubr.bf16.mxu0 0
      %2275 = vmatmul.mubr.bf16.gmra.mxu0 %v2117
      %v2276 = vpop.f32.mrf.mxu0
      %v2277 = vadd.f32 0.0, %v2276
      %v2278 = vpop.f32.mrf.mxu0
      %v2279 = vpop.f32.mrf.mxu0
      %v2280 = vadd.f32 0.0, %v2279
      %v2281 = vpop.f32.mrf.mxu0
      %2282 = vdwg.mxu0
      %v2283 = vadd.f32 %v2081, %v2157
      %v2284 = vadd.f32 %v2082, %v2160
      %v2285 = vadd.f32 %v2083, %v2165
      %v2286 = vadd.f32 %v2084, %v2168
      %v2287 = vadd.f32 %v2085, %v2173
      %v2288 = vadd.f32 %v2086, %v2176
      %v2289 = vadd.f32 %v2087, %v2181
      %v2290 = vadd.f32 %v2088, %v2184
      %v2291 = vadd.f32 %v2089, %v2189
      %v2292 = vadd.f32 %v2090, %v2192
      %v2293 = vadd.f32 %v2091, %v2197
      %v2294 = vadd.f32 %v2092, %v2200
      %v2295 = vadd.f32 %v2093, %v2205
      %v2296 = vadd.f32 %v2094, %v2208
      %v2297 = vadd.f32 %v2095, %v2213
      %v2298 = vadd.f32 %v2096, %v2216
      %v2299 = vadd.f32 %v2097, %v2221
      %v2300 = vadd.f32 %v2098, %v2224
      %v2301 = vadd.f32 %v2099, %v2229
      %v2302 = vadd.f32 %v2100, %v2232
      %v2303 = vadd.f32 %v2101, %v2237
      %v2304 = vadd.f32 %v2102, %v2240
      %v2305 = vadd.f32 %v2103, %v2245
      %v2306 = vadd.f32 %v2104, %v2248
      %v2307 = vadd.f32 %v2105, %v2253
      %v2308 = vadd.f32 %v2106, %v2256
      %v2309 = vadd.f32 %v2107, %v2261
      %v2310 = vadd.f32 %v2108, %v2264
      %v2311 = vadd.f32 %v2109, %v2269
      %v2312 = vadd.f32 %v2110, %v2272
      %v2313 = vadd.f32 %v2111, %v2277
      %v2314 = vadd.f32 %v2112, %v2280
      %v2318 = vrot.slane %v490, 1
      %v2319 = vrot.slane %v491, 1
      %v2320 = vsel %vm558, %v2318, %v2319
      %v2321 = vrot.slane %v492, 1
      %v2322 = vsel %vm558, %v2319, %v2321
      %v2325 = vpack.c.bf16 %v2322, %v2320
      %s2326 = scalar_lea.vmem %s2, 28
      %v2327 = vld [vmem:[%s2326] sm:$0xf]
      %v2329 = vsel %vm689, %v2325, 0
      %v2332 = vsel %vm738, %v2327, 0
      %2334 = vmatprep.subr.bf16.mxu0 0
      %2335 = vmatpush1.bf16.msra.mxu0 0
      %2336 = vmatprep.subr.bf16.mxu0 0
      %2337 = vmatpush1.bf16.msra.mxu0 0
      %2338 = vmatprep.subr.bf16.mxu0 0
      %2339 = vmatpush1.bf16.msra.mxu0 0
      %2340 = vmatprep.subr.bf16.mxu0 0
      %2341 = vmatpush1.bf16.msra.mxu0 0
      %2342 = vmatprep.subr.bf16.mxu0 0
      %2343 = vmatpush1.bf16.msra.mxu0 0
      %2344 = vmatprep.subr.bf16.mxu0 0
      %2345 = vmatpush1.bf16.msra.mxu0 0
      %2346 = vmatprep.subr.bf16.mxu0 0
      %2347 = vmatpush1.bf16.msra.mxu0 0
      %2348 = vmatprep.subr.bf16.mxu0 0
      %2349 = vmatpush1.bf16.msra.mxu0 %v2332
      %2350 = vmatprep.subr.bf16.mxu0 0
      %2351 = vmatpush2.bf16.msra.mxu0 0
      %2352 = vmatprep.subr.bf16.mxu0 0
      %2353 = vmatpush2.bf16.msra.mxu0 0
      %2354 = vmatprep.subr.bf16.mxu0 0
      %2355 = vmatpush2.bf16.msra.mxu0 0
      %2356 = vmatprep.subr.bf16.mxu0 0
      %2357 = vmatpush2.bf16.msra.mxu0 0
      %2358 = vmatprep.subr.bf16.mxu0 0
      %2359 = vmatpush2.bf16.msra.mxu0 0
      %2360 = vmatprep.subr.bf16.mxu0 0
      %2361 = vmatpush2.bf16.msra.mxu0 0
      %2362 = vmatprep.subr.bf16.mxu0 0
      %2363 = vmatpush2.bf16.msra.mxu0 0
      %2364 = vmatprep.subr.bf16.mxu0 0
      %2365 = vmatpush2.bf16.msra.mxu0 0
      %2366 = vmatprep.mubr.bf16.mxu0 0
      %2367 = vmatmul.mubr.bf16.gmra.mxu0 %v697
      %v2368 = vpop.f32.mrf.mxu0
      %v2369 = vadd.f32 0.0, %v2368
      %v2370 = vpop.f32.mrf.mxu0
      %v2371 = vpop.f32.mrf.mxu0
      %v2372 = vadd.f32 0.0, %v2371
      %v2373 = vpop.f32.mrf.mxu0
      %2374 = vmatprep.mubr.bf16.mxu0 0
      %2375 = vmatmul.mubr.bf16.gmra.mxu0 %v700
      %v2376 = vpop.f32.mrf.mxu0
      %v2377 = vadd.f32 0.0, %v2376
      %v2378 = vpop.f32.mrf.mxu0
      %v2379 = vpop.f32.mrf.mxu0
      %v2380 = vadd.f32 0.0, %v2379
      %v2381 = vpop.f32.mrf.mxu0
      %2382 = vmatprep.mubr.bf16.mxu0 0
      %2383 = vmatmul.mubr.bf16.gmra.mxu0 %v703
      %v2384 = vpop.f32.mrf.mxu0
      %v2385 = vadd.f32 0.0, %v2384
      %v2386 = vpop.f32.mrf.mxu0
      %v2387 = vpop.f32.mrf.mxu0
      %v2388 = vadd.f32 0.0, %v2387
      %v2389 = vpop.f32.mrf.mxu0
      %2390 = vmatprep.mubr.bf16.mxu0 0
      %2391 = vmatmul.mubr.bf16.gmra.mxu0 %v706
      %v2392 = vpop.f32.mrf.mxu0
      %v2393 = vadd.f32 0.0, %v2392
      %v2394 = vpop.f32.mrf.mxu0
      %v2395 = vpop.f32.mrf.mxu0
      %v2396 = vadd.f32 0.0, %v2395
      %v2397 = vpop.f32.mrf.mxu0
      %2398 = vmatprep.mubr.bf16.mxu0 0
      %2399 = vmatmul.mubr.bf16.gmra.mxu0 %v709
      %v2400 = vpop.f32.mrf.mxu0
      %v2401 = vadd.f32 0.0, %v2400
      %v2402 = vpop.f32.mrf.mxu0
      %v2403 = vpop.f32.mrf.mxu0
      %v2404 = vadd.f32 0.0, %v2403
      %v2405 = vpop.f32.mrf.mxu0
      %2406 = vmatprep.mubr.bf16.mxu0 0
      %2407 = vmatmul.mubr.bf16.gmra.mxu0 %v712
      %v2408 = vpop.f32.mrf.mxu0
      %v2409 = vadd.f32 0.0, %v2408
      %v2410 = vpop.f32.mrf.mxu0
      %v2411 = vpop.f32.mrf.mxu0
      %v2412 = vadd.f32 0.0, %v2411
      %v2413 = vpop.f32.mrf.mxu0
      %2414 = vmatprep.mubr.bf16.mxu0 0
      %2415 = vmatmul.mubr.bf16.gmra.mxu0 %v715
      %v2416 = vpop.f32.mrf.mxu0
      %v2417 = vadd.f32 0.0, %v2416
      %v2418 = vpop.f32.mrf.mxu0
      %v2419 = vpop.f32.mrf.mxu0
      %v2420 = vadd.f32 0.0, %v2419
      %v2421 = vpop.f32.mrf.mxu0
      %2422 = vmatprep.mubr.bf16.mxu0 0
      %2423 = vmatmul.mubr.bf16.gmra.mxu0 %v718
      %v2424 = vpop.f32.mrf.mxu0
      %v2425 = vadd.f32 0.0, %v2424
      %v2426 = vpop.f32.mrf.mxu0
      %v2427 = vpop.f32.mrf.mxu0
      %v2428 = vadd.f32 0.0, %v2427
      %v2429 = vpop.f32.mrf.mxu0
      %2430 = vmatprep.mubr.bf16.mxu0 0
      %2431 = vmatmul.mubr.bf16.gmra.mxu0 %v721
      %v2432 = vpop.f32.mrf.mxu0
      %v2433 = vadd.f32 0.0, %v2432
      %v2434 = vpop.f32.mrf.mxu0
      %v2435 = vpop.f32.mrf.mxu0
      %v2436 = vadd.f32 0.0, %v2435
      %v2437 = vpop.f32.mrf.mxu0
      %2438 = vmatprep.mubr.bf16.mxu0 0
      %2439 = vmatmul.mubr.bf16.gmra.mxu0 %v724
      %v2440 = vpop.f32.mrf.mxu0
      %v2441 = vadd.f32 0.0, %v2440
      %v2442 = vpop.f32.mrf.mxu0
      %v2443 = vpop.f32.mrf.mxu0
      %v2444 = vadd.f32 0.0, %v2443
      %v2445 = vpop.f32.mrf.mxu0
      %2446 = vmatprep.mubr.bf16.mxu0 0
      %2447 = vmatmul.mubr.bf16.gmra.mxu0 %v727
      %v2448 = vpop.f32.mrf.mxu0
      %v2449 = vadd.f32 0.0, %v2448
      %v2450 = vpop.f32.mrf.mxu0
      %v2451 = vpop.f32.mrf.mxu0
      %v2452 = vadd.f32 0.0, %v2451
      %v2453 = vpop.f32.mrf.mxu0
      %2454 = vmatprep.mubr.bf16.mxu0 0
      %2455 = vmatmul.mubr.bf16.gmra.mxu0 %v730
      %v2456 = vpop.f32.mrf.mxu0
      %v2457 = vadd.f32 0.0, %v2456
      %v2458 = vpop.f32.mrf.mxu0
      %v2459 = vpop.f32.mrf.mxu0
      %v2460 = vadd.f32 0.0, %v2459
      %v2461 = vpop.f32.mrf.mxu0
      %2462 = vmatprep.mubr.bf16.mxu0 0
      %2463 = vmatmul.mubr.bf16.gmra.mxu0 %v733
      %v2464 = vpop.f32.mrf.mxu0
      %v2465 = vadd.f32 0.0, %v2464
      %v2466 = vpop.f32.mrf.mxu0
      %v2467 = vpop.f32.mrf.mxu0
      %v2468 = vadd.f32 0.0, %v2467
      %v2469 = vpop.f32.mrf.mxu0
      %2470 = vmatprep.mubr.bf16.mxu0 0
      %2471 = vmatmul.mubr.bf16.gmra.mxu0 %v736
      %v2472 = vpop.f32.mrf.mxu0
      %v2473 = vadd.f32 0.0, %v2472
      %v2474 = vpop.f32.mrf.mxu0
      %v2475 = vpop.f32.mrf.mxu0
      %v2476 = vadd.f32 0.0, %v2475
      %v2477 = vpop.f32.mrf.mxu0
      %2478 = vmatprep.mubr.bf16.mxu0 0
      %2479 = vmatmul.mubr.bf16.gmra.mxu0 %v1706
      %v2480 = vpop.f32.mrf.mxu0
      %v2481 = vadd.f32 0.0, %v2480
      %v2482 = vpop.f32.mrf.mxu0
      %v2483 = vpop.f32.mrf.mxu0
      %v2484 = vadd.f32 0.0, %v2483
      %v2485 = vpop.f32.mrf.mxu0
      %2486 = vmatprep.mubr.bf16.mxu0 0
      %2487 = vmatmul.mubr.bf16.gmra.mxu0 %v2329
      %v2488 = vpop.f32.mrf.mxu0
      %v2489 = vadd.f32 0.0, %v2488
      %v2490 = vpop.f32.mrf.mxu0
      %v2491 = vpop.f32.mrf.mxu0
      %v2492 = vadd.f32 0.0, %v2491
      %v2493 = vpop.f32.mrf.mxu0
      %2494 = vdwg.mxu0
      %v2495 = vadd.f32 %v2283, %v2369
      %v2496 = vadd.f32 %v2284, %v2372
      %v2497 = vadd.f32 %v2285, %v2377
      %v2498 = vadd.f32 %v2286, %v2380
      %v2499 = vadd.f32 %v2287, %v2385
      %v2500 = vadd.f32 %v2288, %v2388
      %v2501 = vadd.f32 %v2289, %v2393
      %v2502 = vadd.f32 %v2290, %v2396
      %v2503 = vadd.f32 %v2291, %v2401
      %v2504 = vadd.f32 %v2292, %v2404
      %v2505 = vadd.f32 %v2293, %v2409
      %v2506 = vadd.f32 %v2294, %v2412
      %v2507 = vadd.f32 %v2295, %v2417
      %v2508 = vadd.f32 %v2296, %v2420
      %v2509 = vadd.f32 %v2297, %v2425
      %v2510 = vadd.f32 %v2298, %v2428
      %v2511 = vadd.f32 %v2299, %v2433
      %v2512 = vadd.f32 %v2300, %v2436
      %v2513 = vadd.f32 %v2301, %v2441
      %v2514 = vadd.f32 %v2302, %v2444
      %v2515 = vadd.f32 %v2303, %v2449
      %v2516 = vadd.f32 %v2304, %v2452
      %v2517 = vadd.f32 %v2305, %v2457
      %v2518 = vadd.f32 %v2306, %v2460
      %v2519 = vadd.f32 %v2307, %v2465
      %v2520 = vadd.f32 %v2308, %v2468
      %v2521 = vadd.f32 %v2309, %v2473
      %v2522 = vadd.f32 %v2310, %v2476
      %v2523 = vadd.f32 %v2311, %v2481
      %v2524 = vadd.f32 %v2312, %v2484
      %v2525 = vadd.f32 %v2313, %v2489
      %v2526 = vadd.f32 %v2314, %v2492
      %v2527 = vrot.slane %v490, 2
      %v2528 = vrot.slane %v491, 2
      %v2529 = vsel %vm1115, %v2527, %v2528
      %v2530 = vrot.slane %v492, 2
      %v2531 = vsel %vm1115, %v2528, %v2530
      %v2534 = vpack.c.bf16 %v2531, %v2529
      %s2535 = scalar_lea.vmem %s2, 32
      %v2536 = vld [vmem:[%s2535] sm:$0xf]
      %v2538 = vsel %vm689, %v2534, 0
      %v2541 = vsel %vm738, %v2536, 0
      %2543 = vmatprep.subr.bf16.mxu0 0
      %2544 = vmatpush1.bf16.msra.mxu0 0
      %2545 = vmatprep.subr.bf16.mxu0 0
      %2546 = vmatpush1.bf16.msra.mxu0 0
      %2547 = vmatprep.subr.bf16.mxu0 0
      %2548 = vmatpush1.bf16.msra.mxu0 0
      %2549 = vmatprep.subr.bf16.mxu0 0
      %2550 = vmatpush1.bf16.msra.mxu0 0
      %2551 = vmatprep.subr.bf16.mxu0 0
      %2552 = vmatpush1.bf16.msra.mxu0 0
      %2553 = vmatprep.subr.bf16.mxu0 0
      %2554 = vmatpush1.bf16.msra.mxu0 0
      %2555 = vmatprep.subr.bf16.mxu0 0
      %2556 = vmatpush1.bf16.msra.mxu0 0
      %2557 = vmatprep.subr.bf16.mxu0 0
      %2558 = vmatpush1.bf16.msra.mxu0 %v2541
      %2559 = vmatprep.subr.bf16.mxu0 0
      %2560 = vmatpush2.bf16.msra.mxu0 0
      %2561 = vmatprep.subr.bf16.mxu0 0
      %2562 = vmatpush2.bf16.msra.mxu0 0
      %2563 = vmatprep.subr.bf16.mxu0 0
      %2564 = vmatpush2.bf16.msra.mxu0 0
      %2565 = vmatprep.subr.bf16.mxu0 0
      %2566 = vmatpush2.bf16.msra.mxu0 0
      %2567 = vmatprep.subr.bf16.mxu0 0
      %2568 = vmatpush2.bf16.msra.mxu0 0
      %2569 = vmatprep.subr.bf16.mxu0 0
      %2570 = vmatpush2.bf16.msra.mxu0 0
      %2571 = vmatprep.subr.bf16.mxu0 0
      %2572 = vmatpush2.bf16.msra.mxu0 0
      %2573 = vmatprep.subr.bf16.mxu0 0
      %2574 = vmatpush2.bf16.msra.mxu0 0
      %2575 = vmatprep.mubr.bf16.mxu0 0
      %2576 = vmatmul.mubr.bf16.gmra.mxu0 %v1253
      %v2577 = vpop.f32.mrf.mxu0
      %v2578 = vadd.f32 0.0, %v2577
      %v2579 = vpop.f32.mrf.mxu0
      %v2580 = vpop.f32.mrf.mxu0
      %v2581 = vadd.f32 0.0, %v2580
      %v2582 = vpop.f32.mrf.mxu0
      %2583 = vmatprep.mubr.bf16.mxu0 0
      %2584 = vmatmul.mubr.bf16.gmra.mxu0 %v1256
      %v2585 = vpop.f32.mrf.mxu0
      %v2586 = vadd.f32 0.0, %v2585
      %v2587 = vpop.f32.mrf.mxu0
      %v2588 = vpop.f32.mrf.mxu0
      %v2589 = vadd.f32 0.0, %v2588
      %v2590 = vpop.f32.mrf.mxu0
      %2591 = vmatprep.mubr.bf16.mxu0 0
      %2592 = vmatmul.mubr.bf16.gmra.mxu0 %v1259
      %v2593 = vpop.f32.mrf.mxu0
      %v2594 = vadd.f32 0.0, %v2593
      %v2595 = vpop.f32.mrf.mxu0
      %v2596 = vpop.f32.mrf.mxu0
      %v2597 = vadd.f32 0.0, %v2596
      %v2598 = vpop.f32.mrf.mxu0
      %2599 = vmatprep.mubr.bf16.mxu0 0
      %2600 = vmatmul.mubr.bf16.gmra.mxu0 %v1262
      %v2601 = vpop.f32.mrf.mxu0
      %v2602 = vadd.f32 0.0, %v2601
      %v2603 = vpop.f32.mrf.mxu0
      %v2604 = vpop.f32.mrf.mxu0
      %v2605 = vadd.f32 0.0, %v2604
      %v2606 = vpop.f32.mrf.mxu0
      %2607 = vmatprep.mubr.bf16.mxu0 0
      %2608 = vmatmul.mubr.bf16.gmra.mxu0 %v1265
      %v2609 = vpop.f32.mrf.mxu0
      %v2610 = vadd.f32 0.0, %v2609
      %v2611 = vpop.f32.mrf.mxu0
      %v2612 = vpop.f32.mrf.mxu0
      %v2613 = vadd.f32 0.0, %v2612
      %v2614 = vpop.f32.mrf.mxu0
      %2615 = vmatprep.mubr.bf16.mxu0 0
      %2616 = vmatmul.mubr.bf16.gmra.mxu0 %v1268
      %v2617 = vpop.f32.mrf.mxu0
      %v2618 = vadd.f32 0.0, %v2617
      %v2619 = vpop.f32.mrf.mxu0
      %v2620 = vpop.f32.mrf.mxu0
      %v2621 = vadd.f32 0.0, %v2620
      %v2622 = vpop.f32.mrf.mxu0
      %2623 = vmatprep.mubr.bf16.mxu0 0
      %2624 = vmatmul.mubr.bf16.gmra.mxu0 %v1271
      %v2625 = vpop.f32.mrf.mxu0
      %v2626 = vadd.f32 0.0, %v2625
      %v2627 = vpop.f32.mrf.mxu0
      %v2628 = vpop.f32.mrf.mxu0
      %v2629 = vadd.f32 0.0, %v2628
      %v2630 = vpop.f32.mrf.mxu0
      %2631 = vmatprep.mubr.bf16.mxu0 0
      %2632 = vmatmul.mubr.bf16.gmra.mxu0 %v1274
      %v2633 = vpop.f32.mrf.mxu0
      %v2634 = vadd.f32 0.0, %v2633
      %v2635 = vpop.f32.mrf.mxu0
      %v2636 = vpop.f32.mrf.mxu0
      %v2637 = vadd.f32 0.0, %v2636
      %v2638 = vpop.f32.mrf.mxu0
      %2639 = vmatprep.mubr.bf16.mxu0 0
      %2640 = vmatmul.mubr.bf16.gmra.mxu0 %v1277
      %v2641 = vpop.f32.mrf.mxu0
      %v2642 = vadd.f32 0.0, %v2641
      %v2643 = vpop.f32.mrf.mxu0
      %v2644 = vpop.f32.mrf.mxu0
      %v2645 = vadd.f32 0.0, %v2644
      %v2646 = vpop.f32.mrf.mxu0
      %2647 = vmatprep.mubr.bf16.mxu0 0
      %2648 = vmatmul.mubr.bf16.gmra.mxu0 %v1280
      %v2649 = vpop.f32.mrf.mxu0
      %v2650 = vadd.f32 0.0, %v2649
      %v2651 = vpop.f32.mrf.mxu0
      %v2652 = vpop.f32.mrf.mxu0
      %v2653 = vadd.f32 0.0, %v2652
      %v2654 = vpop.f32.mrf.mxu0
      %2655 = vmatprep.mubr.bf16.mxu0 0
      %2656 = vmatmul.mubr.bf16.gmra.mxu0 %v1283
      %v2657 = vpop.f32.mrf.mxu0
      %v2658 = vadd.f32 0.0, %v2657
      %v2659 = vpop.f32.mrf.mxu0
      %v2660 = vpop.f32.mrf.mxu0
      %v2661 = vadd.f32 0.0, %v2660
      %v2662 = vpop.f32.mrf.mxu0
      %2663 = vmatprep.mubr.bf16.mxu0 0
      %2664 = vmatmul.mubr.bf16.gmra.mxu0 %v1286
      %v2665 = vpop.f32.mrf.mxu0
      %v2666 = vadd.f32 0.0, %v2665
      %v2667 = vpop.f32.mrf.mxu0
      %v2668 = vpop.f32.mrf.mxu0
      %v2669 = vadd.f32 0.0, %v2668
      %v2670 = vpop.f32.mrf.mxu0
      %2671 = vmatprep.mubr.bf16.mxu0 0
      %2672 = vmatmul.mubr.bf16.gmra.mxu0 %v1289
      %v2673 = vpop.f32.mrf.mxu0
      %v2674 = vadd.f32 0.0, %v2673
      %v2675 = vpop.f32.mrf.mxu0
      %v2676 = vpop.f32.mrf.mxu0
      %v2677 = vadd.f32 0.0, %v2676
      %v2678 = vpop.f32.mrf.mxu0
      %2679 = vmatprep.mubr.bf16.mxu0 0
      %2680 = vmatmul.mubr.bf16.gmra.mxu0 %v1292
      %v2681 = vpop.f32.mrf.mxu0
      %v2682 = vadd.f32 0.0, %v2681
      %v2683 = vpop.f32.mrf.mxu0
      %v2684 = vpop.f32.mrf.mxu0
      %v2685 = vadd.f32 0.0, %v2684
      %v2686 = vpop.f32.mrf.mxu0
      %2687 = vmatprep.mubr.bf16.mxu0 0
      %2688 = vmatmul.mubr.bf16.gmra.mxu0 %v1915
      %v2689 = vpop.f32.mrf.mxu0
      %v2690 = vadd.f32 0.0, %v2689
      %v2691 = vpop.f32.mrf.mxu0
      %v2692 = vpop.f32.mrf.mxu0
      %v2693 = vadd.f32 0.0, %v2692
      %v2694 = vpop.f32.mrf.mxu0
      %2695 = vmatprep.mubr.bf16.mxu0 0
      %2696 = vmatmul.mubr.bf16.gmra.mxu0 %v2538
      %v2697 = vpop.f32.mrf.mxu0
      %v2698 = vadd.f32 0.0, %v2697
      %v2699 = vpop.f32.mrf.mxu0
      %v2700 = vpop.f32.mrf.mxu0
      %v2701 = vadd.f32 0.0, %v2700
      %v2702 = vpop.f32.mrf.mxu0
      %2703 = vdwg.mxu0
      %v2704 = vadd.f32 %v2495, %v2578
      %v2705 = vadd.f32 %v2496, %v2581
      %v2706 = vadd.f32 %v2497, %v2586
      %v2707 = vadd.f32 %v2498, %v2589
      %v2708 = vadd.f32 %v2499, %v2594
      %v2709 = vadd.f32 %v2500, %v2597
      %v2710 = vadd.f32 %v2501, %v2602
      %v2711 = vadd.f32 %v2502, %v2605
      %v2712 = vadd.f32 %v2503, %v2610
      %v2713 = vadd.f32 %v2504, %v2613
      %v2714 = vadd.f32 %v2505, %v2618
      %v2715 = vadd.f32 %v2506, %v2621
      %v2716 = vadd.f32 %v2507, %v2626
      %v2717 = vadd.f32 %v2508, %v2629
      %v2718 = vadd.f32 %v2509, %v2634
      %v2719 = vadd.f32 %v2510, %v2637
      %v2720 = vadd.f32 %v2511, %v2642
      %v2721 = vadd.f32 %v2512, %v2645
      %v2722 = vadd.f32 %v2513, %v2650
      %v2723 = vadd.f32 %v2514, %v2653
      %v2724 = vadd.f32 %v2515, %v2658
      %v2725 = vadd.f32 %v2516, %v2661
      %v2726 = vadd.f32 %v2517, %v2666
      %v2727 = vadd.f32 %v2518, %v2669
      %v2728 = vadd.f32 %v2519, %v2674
      %v2729 = vadd.f32 %v2520, %v2677
      %v2730 = vadd.f32 %v2521, %v2682
      %v2731 = vadd.f32 %v2522, %v2685
      %v2732 = vadd.f32 %v2523, %v2690
      %v2733 = vadd.f32 %v2524, %v2693
      %v2734 = vadd.f32 %v2525, %v2698
      %v2735 = vadd.f32 %v2526, %v2701
      %2736 = vst [vmem:[%s368] sm:$0xff] %v2704
      %2737 = vst [vmem:[%s368 + $0x8] sm:$0xff] %v2705
      %2738 = vst [vmem:[%s368 + $0x10] sm:$0xff] %v2706
      %2739 = vst [vmem:[%s368 + $0x18] sm:$0xff] %v2707
      %2740 = vst [vmem:[%s368 + $0x20] sm:$0xff] %v2708
      %2741 = vst [vmem:[%s368 + $0x28] sm:$0xff] %v2709
      %2742 = vst [vmem:[%s368 + $0x30] sm:$0xff] %v2710
      %2743 = vst [vmem:[%s368 + $0x38] sm:$0xff] %v2711
      %2744 = vst [vmem:[%s368 + $0x40] sm:$0xff] %v2712
      %2745 = vst [vmem:[%s368 + $0x48] sm:$0xff] %v2713
      %2746 = vst [vmem:[%s368 + $0x50] sm:$0xff] %v2714
      %2747 = vst [vmem:[%s368 + $0x58] sm:$0xff] %v2715
      %2748 = vst [vmem:[%s368 + $0x60] sm:$0xff] %v2716
      %2749 = vst [vmem:[%s368 + $0x68] sm:$0xff] %v2717
      %2750 = vst [vmem:[%s368 + $0x70] sm:$0xff] %v2718
      %2751 = vst [vmem:[%s368 + $0x78] sm:$0xff] %v2719
      %2752 = vst [vmem:[%s368 + $0x80] sm:$0xff] %v2720
      %2753 = vst [vmem:[%s368 + $0x88] sm:$0xff] %v2721
      %2754 = vst [vmem:[%s368 + $0x90] sm:$0xff] %v2722
      %2755 = vst [vmem:[%s368 + $0x98] sm:$0xff] %v2723
      %2756 = vst [vmem:[%s368 + $0xa0] sm:$0xff] %v2724
      %2757 = vst [vmem:[%s368 + $0xa8] sm:$0xff] %v2725
      %2758 = vst [vmem:[%s368 + $0xb0] sm:$0xff] %v2726
      %2759 = vst [vmem:[%s368 + $0xb8] sm:$0xff] %v2727
      %2760 = vst [vmem:[%s368 + $0xc0] sm:$0xff] %v2728
      %2761 = vst [vmem:[%s368 + $0xc8] sm:$0xff] %v2729
      %2762 = vst [vmem:[%s368 + $0xd0] sm:$0xff] %v2730
      %2763 = vst [vmem:[%s368 + $0xd8] sm:$0xff] %v2731
      %2764 = vst [vmem:[%s368 + $0xe0] sm:$0xff] %v2732
      %2765 = vst [vmem:[%s368 + $0xe8] sm:$0xff] %v2733
      %2766 = vst [vmem:[%s368 + $0xf0] sm:$0xff] %v2734
      %2767 = vst [vmem:[%s368 + $0xf8] sm:$0xff] %v2735
      %s2768 = smul.u32 %s22, 16
      %v2769 = vstv %s2768
      %v2770 = vadd.s32 %v2769, 1
      %v2771 = vadd.s32 %v2769, 2
      %v2772 = vadd.s32 %v2769, 3
      %v2773 = vadd.s32 %v2769, 4
      %v2774 = vadd.s32 %v2769, 5
      %v2775 = vadd.s32 %v2769, 6
      %v2776 = vadd.s32 %v2769, 7
      %v2777 = vadd.s32 %v2769, 8
      %v2778 = vadd.s32 %v2769, 9
      %v2779 = vadd.s32 %v2769, 10
      %v2780 = vadd.s32 %v2769, 11
      %v2781 = vadd.s32 %v2769, 12
      %v2782 = vadd.s32 %v2769, 13
      %v2783 = vadd.s32 %v2769, 14
      %v2784 = vadd.s32 %v2769, 15
      %vm2785 = vcmp.lt.s32.totalorder %v2769, 16
      %vm2786 = vcmp.lt.s32.totalorder %v2770, 16
      %vm2787 = vcmp.lt.s32.totalorder %v2771, 16
      %vm2788 = vcmp.lt.s32.totalorder %v2772, 16
      %vm2789 = vcmp.lt.s32.totalorder %v2773, 16
      %vm2790 = vcmp.lt.s32.totalorder %v2774, 16
      %vm2791 = vcmp.lt.s32.totalorder %v2775, 16
      %vm2792 = vcmp.lt.s32.totalorder %v2776, 16
      %vm2793 = vcmp.lt.s32.totalorder %v2777, 16
      %vm2794 = vcmp.lt.s32.totalorder %v2778, 16
      %vm2795 = vcmp.lt.s32.totalorder %v2779, 16
      %vm2796 = vcmp.lt.s32.totalorder %v2780, 16
      %vm2797 = vcmp.lt.s32.totalorder %v2781, 16
      %vm2798 = vcmp.lt.s32.totalorder %v2782, 16
      %vm2799 = vcmp.lt.s32.totalorder %v2783, 16
      %vm2800 = vcmp.lt.s32.totalorder %v2784, 16
      %v2801 = vsel %vm2785, 1, 0
      %v2802 = vsel %vm2786, 1, 0
      %v2803 = vsel %vm2787, 1, 0
      %v2804 = vsel %vm2788, 1, 0
      %v2805 = vsel %vm2789, 1, 0
      %v2806 = vsel %vm2790, 1, 0
      %v2807 = vsel %vm2791, 1, 0
      %v2808 = vsel %vm2792, 1, 0
      %v2809 = vsel %vm2793, 1, 0
      %v2810 = vsel %vm2794, 1, 0
      %v2811 = vsel %vm2795, 1, 0
      %v2812 = vsel %vm2796, 1, 0
      %v2813 = vsel %vm2797, 1, 0
      %v2814 = vsel %vm2798, 1, 0
      %v2815 = vsel %vm2799, 1, 0
      %v2816 = vsel %vm2800, 1, 0
      %v2817 = vcvt.s32.f32 %v2801
      %v2818 = vcvt.s32.f32 %v2802
      %v2819 = vcvt.s32.f32 %v2803
      %v2820 = vcvt.s32.f32 %v2804
      %v2821 = vcvt.s32.f32 %v2805
      %v2822 = vcvt.s32.f32 %v2806
      %v2823 = vcvt.s32.f32 %v2807
      %v2824 = vcvt.s32.f32 %v2808
      %v2825 = vcvt.s32.f32 %v2809
      %v2826 = vcvt.s32.f32 %v2810
      %v2827 = vcvt.s32.f32 %v2811
      %v2828 = vcvt.s32.f32 %v2812
      %v2829 = vcvt.s32.f32 %v2813
      %v2830 = vcvt.s32.f32 %v2814
      %v2831 = vcvt.s32.f32 %v2815
      %v2832 = vcvt.s32.f32 %v2816
      %v2833 = vmul.f32 %v2704, %v2817
      %v2834 = vmul.f32 %v2705, %v2817
      %v2835 = vmul.f32 %v2706, %v2818
      %v2836 = vmul.f32 %v2707, %v2818
      %v2837 = vmul.f32 %v2708, %v2819
      %v2838 = vmul.f32 %v2709, %v2819
      %v2839 = vmul.f32 %v2710, %v2820
      %v2840 = vmul.f32 %v2711, %v2820
      %v2841 = vmul.f32 %v2712, %v2821
      %v2842 = vmul.f32 %v2713, %v2821
      %v2843 = vmul.f32 %v2714, %v2822
      %v2844 = vmul.f32 %v2715, %v2822
      %v2845 = vmul.f32 %v2716, %v2823
      %v2846 = vmul.f32 %v2717, %v2823
      %v2847 = vmul.f32 %v2718, %v2824
      %v2848 = vmul.f32 %v2719, %v2824
      %v2849 = vmul.f32 %v2720, %v2825
      %v2850 = vmul.f32 %v2721, %v2825
      %v2851 = vmul.f32 %v2722, %v2826
      %v2852 = vmul.f32 %v2723, %v2826
      %v2853 = vmul.f32 %v2724, %v2827
      %v2854 = vmul.f32 %v2725, %v2827
      %v2855 = vmul.f32 %v2726, %v2828
      %v2856 = vmul.f32 %v2727, %v2828
      %v2857 = vmul.f32 %v2728, %v2829
      %v2858 = vmul.f32 %v2729, %v2829
      %v2859 = vmul.f32 %v2730, %v2830
      %v2860 = vmul.f32 %v2731, %v2830
      %v2861 = vmul.f32 %v2732, %v2831
      %v2862 = vmul.f32 %v2733, %v2831
      %v2863 = vmul.f32 %v2734, %v2832
      %v2864 = vmul.f32 %v2735, %v2832
      %v2865 = vadd.f32 %v2833, %v2834
      %v2866 = vadd.f32 %v2865, %v2835
      %v2867 = vadd.f32 %v2866, %v2836
      %v2868 = vadd.f32 %v2867, %v2837
      %v2869 = vadd.f32 %v2868, %v2838
      %v2870 = vadd.f32 %v2869, %v2839
      %v2871 = vadd.f32 %v2870, %v2840
      %v2872 = vadd.f32 %v2871, %v2841
      %v2873 = vadd.f32 %v2872, %v2842
      %v2874 = vadd.f32 %v2873, %v2843
      %v2875 = vadd.f32 %v2874, %v2844
      %v2876 = vadd.f32 %v2875, %v2845
      %v2877 = vadd.f32 %v2876, %v2846
      %v2878 = vadd.f32 %v2877, %v2847
      %v2879 = vadd.f32 %v2878, %v2848
      %v2880 = vadd.f32 %v2879, %v2849
      %v2881 = vadd.f32 %v2880, %v2850
      %v2882 = vadd.f32 %v2881, %v2851
      %v2883 = vadd.f32 %v2882, %v2852
      %v2884 = vadd.f32 %v2883, %v2853
      %v2885 = vadd.f32 %v2884, %v2854
      %v2886 = vadd.f32 %v2885, %v2855
      %v2887 = vadd.f32 %v2886, %v2856
      %v2888 = vadd.f32 %v2887, %v2857
      %v2889 = vadd.f32 %v2888, %v2858
      %v2890 = vadd.f32 %v2889, %v2859
      %v2891 = vadd.f32 %v2890, %v2860
      %v2892 = vadd.f32 %v2891, %v2861
      %v2893 = vadd.f32 %v2892, %v2862
      %v2894 = vadd.f32 %v2893, %v2863
      %v2895 = vadd.f32 %v2894, %v2864
      %v2896 = vrot.slane %v2895, 4
      %v2897 = vadd.f32 %v2895, %v2896
      %v2898 = vrot.slane %v2897, 2
      %v2899 = vadd.f32 %v2897, %v2898
      %v2900 = vrot.slane %v2899, 1
      %v2901 = vadd.f32 %v2899, %v2900
      %v2902 = vmul.f32 %v2833, %v2833
      %v2903 = vmul.f32 %v2834, %v2834
      %v2904 = vmul.f32 %v2835, %v2835
      %v2905 = vmul.f32 %v2836, %v2836
      %v2906 = vmul.f32 %v2837, %v2837
      %v2907 = vmul.f32 %v2838, %v2838
      %v2908 = vmul.f32 %v2839, %v2839
      %v2909 = vmul.f32 %v2840, %v2840
      %v2910 = vmul.f32 %v2841, %v2841
      %v2911 = vmul.f32 %v2842, %v2842
      %v2912 = vmul.f32 %v2843, %v2843
      %v2913 = vmul.f32 %v2844, %v2844
      %v2914 = vmul.f32 %v2845, %v2845
      %v2915 = vmul.f32 %v2846, %v2846
      %v2916 = vmul.f32 %v2847, %v2847
      %v2917 = vmul.f32 %v2848, %v2848
      %v2918 = vmul.f32 %v2849, %v2849
      %v2919 = vmul.f32 %v2850, %v2850
      %v2920 = vmul.f32 %v2851, %v2851
      %v2921 = vmul.f32 %v2852, %v2852
      %v2922 = vmul.f32 %v2853, %v2853
      %v2923 = vmul.f32 %v2854, %v2854
      %v2924 = vmul.f32 %v2855, %v2855
      %v2925 = vmul.f32 %v2856, %v2856
      %v2926 = vmul.f32 %v2857, %v2857
      %v2927 = vmul.f32 %v2858, %v2858
      %v2928 = vmul.f32 %v2859, %v2859
      %v2929 = vmul.f32 %v2860, %v2860
      %v2930 = vmul.f32 %v2861, %v2861
      %v2931 = vmul.f32 %v2862, %v2862
      %v2932 = vmul.f32 %v2863, %v2863
      %v2933 = vmul.f32 %v2864, %v2864
      %v2934 = vadd.f32 %v2902, %v2903
      %v2935 = vadd.f32 %v2934, %v2904
      %v2936 = vadd.f32 %v2935, %v2905
      %v2937 = vadd.f32 %v2936, %v2906
      %v2938 = vadd.f32 %v2937, %v2907
      %v2939 = vadd.f32 %v2938, %v2908
      %v2940 = vadd.f32 %v2939, %v2909
      %v2941 = vadd.f32 %v2940, %v2910
      %v2942 = vadd.f32 %v2941, %v2911
      %v2943 = vadd.f32 %v2942, %v2912
      %v2944 = vadd.f32 %v2943, %v2913
      %v2945 = vadd.f32 %v2944, %v2914
      %v2946 = vadd.f32 %v2945, %v2915
      %v2947 = vadd.f32 %v2946, %v2916
      %v2948 = vadd.f32 %v2947, %v2917
      %v2949 = vadd.f32 %v2948, %v2918
      %v2950 = vadd.f32 %v2949, %v2919
      %v2951 = vadd.f32 %v2950, %v2920
      %v2952 = vadd.f32 %v2951, %v2921
      %v2953 = vadd.f32 %v2952, %v2922
      %v2954 = vadd.f32 %v2953, %v2923
      %v2955 = vadd.f32 %v2954, %v2924
      %v2956 = vadd.f32 %v2955, %v2925
      %v2957 = vadd.f32 %v2956, %v2926
      %v2958 = vadd.f32 %v2957, %v2927
      %v2959 = vadd.f32 %v2958, %v2928
      %v2960 = vadd.f32 %v2959, %v2929
      %v2961 = vadd.f32 %v2960, %v2930
      %v2962 = vadd.f32 %v2961, %v2931
      %v2963 = vadd.f32 %v2962, %v2932
      %v2964 = vadd.f32 %v2963, %v2933
      %v2965 = vrot.slane %v2964, 4
      %v2966 = vadd.f32 %v2964, %v2965
      %v2967 = vrot.slane %v2966, 2
      %v2968 = vadd.f32 %v2966, %v2967
      %v2969 = vrot.slane %v2968, 1
      %v2970 = vadd.f32 %v2968, %v2969
      %2971 = vst [vmem:[%s376] sm:$0xff] %v2901
      %2972 = vst [vmem:[%s383] sm:$0xff] %v2970
      %s2973 = smul.u32 16, %s22
      %p2974 = scmp.lt.s32.totalorder %s21, 1
      %s2975 = scalar_select %p2974, %s21, 1
      %p2976 = scmp.lt.s32.totalorder %s2973, 15
      %s2977 = scalar_select %p2976, %s2973, 15
      %s2978 = smul.addr %s2977, 2
      %s2979 = smul.addr %s2975, 32
      %s2980 = sadd.s32 %s2978, %s2979
      %s2981 = smul.addr %s2980, 8
      %s2982 = scalar_lea.vmem %s3, %s2981
      %p2983 = scmp.lt.s32.totalorder %s21, 1
      %s2984 = scalar_select %p2983, %s21, 1
      %p2985 = scmp.lt.s32.totalorder %s22, 0
      %s2986 = scalar_select %p2985, %s22, 0
      %s2987 = sadd.s32 %s2986, %s2984
      %s2988 = smul.addr %s2987, 8
      %s2989 = scalar_lea.vmem %s4, %s2988
      %p2990 = scmp.lt.s32.totalorder %s21, 1
      %s2991 = scalar_select %p2990, %s21, 1
      %p2992 = scmp.lt.s32.totalorder %s22, 0
      %s2993 = scalar_select %p2992, %s22, 0
      %s2994 = sadd.s32 %s2993, %s2991
      %s2995 = smul.addr %s2994, 8
      %s2996 = scalar_lea.vmem %s5, %s2995
      // Predicated region
      $region33: #{double_conv.6} parent=31 // pred_check
        %p2997 = pneg %p130
      $region34: #{double_conv.6} parent=31 // pred_check_branch
        %2999 = sbr.rel (%p2997) target = $region36
      $region35: #{double_conv.6} parent=31 // pred_region
        %s3000 = smul.u32 16, %s22
      $region36: #{double_conv.6} parent=31 // pred_fallthru
        _
      // Predicated region
      $region37: #{double_conv.6} parent=31 // pred_check
        %p3001 = pneg %p158
      $region38: #{double_conv.6} parent=31 // pred_check_branch
        %3003 = sbr.rel (%p3001) target = $region40
      $region39: #{double_conv.6} parent=31 // pred_region
        _
      $region40: #{double_conv.6} parent=31 // pred_fallthru
        _
      // Predicated region
      $region41: #{double_conv.6} parent=31 // pred_check
        %p3004 = pneg %p186
      $region42: #{double_conv.6} parent=31 // pred_check_branch
        %3006 = sbr.rel (%p3004) target = $region44
      $region43: #{double_conv.6} parent=31 // pred_region
        _
      $region44: #{double_conv.6} parent=31 // pred_fallthru
        _
    $region32: #{double_conv.6} parent=5 // pred_fallthru
      _
    %p3007 = scmp.le.s32.totalorder 2, %s12
    // Predicated region
    $region45: #{double_conv.6} parent=5 // pred_check
      %p3008 = pneg %p3007
    $region46: #{double_conv.6} parent=5 // pred_check_branch
      %3010 = sbr.rel (%p3008) target = $region48
    $region47: #{double_conv.6} parent=5 // pred_region
      %s3011 = ssub.s32 %s12, 2
      // Predicated region
      $region49: #{double_conv.6} parent=47 // pred_check
        %p3012 = pneg %p136
      $region50: #{double_conv.6} parent=47 // pred_check_branch
        %3014 = sbr.rel (%p3012) target = $region52
      $region51: #{double_conv.6} parent=47 // pred_region
        %s3015 = smul.u32 16, %s24
        %p3016 = scmp.lt.s32.totalorder %s23, 1
        %s3017 = scalar_select %p3016, %s23, 1
        %p3018 = scmp.lt.s32.totalorder %s3015, 15
        %s3019 = scalar_select %p3018, %s3015, 15
        %s3020 = smul.addr %s3019, 2
        %s3021 = smul.addr %s3017, 32
        %s3022 = sadd.s32 %s3020, %s3021
        %s3023 = smul.addr %s3022, 8
        %s3024 = scalar_lea.vmem %s3, %s3023
      $region52: #{double_conv.6} parent=47 // pred_fallthru
        _
      // Predicated region
      $region53: #{double_conv.6} parent=47 // pred_check
        %p3025 = pneg %p164
      $region54: #{double_conv.6} parent=47 // pred_check_branch
        %3027 = sbr.rel (%p3025) target = $region56
      $region55: #{double_conv.6} parent=47 // pred_region
        %p3028 = scmp.lt.s32.totalorder %s23, 1
        %s3029 = scalar_select %p3028, %s23, 1
        %p3030 = scmp.lt.s32.totalorder %s24, 0
        %s3031 = scalar_select %p3030, %s24, 0
        %s3032 = sadd.s32 %s3031, %s3029
        %s3033 = smul.addr %s3032, 8
        %s3034 = scalar_lea.vmem %s4, %s3033
      $region56: #{double_conv.6} parent=47 // pred_fallthru
        _
      // Predicated region
      $region57: #{double_conv.6} parent=47 // pred_check
        %p3035 = pneg %p192
      $region58: #{double_conv.6} parent=47 // pred_check_branch
        %3037 = sbr.rel (%p3035) target = $region60
      $region59: #{double_conv.6} parent=47 // pred_region
        %p3038 = scmp.lt.s32.totalorder %s23, 1
        %s3039 = scalar_select %p3038, %s23, 1
        %p3040 = scmp.lt.s32.totalorder %s24, 0
        %s3041 = scalar_select %p3040, %s24, 0
        %s3042 = sadd.s32 %s3041, %s3039
        %s3043 = smul.addr %s3042, 8
        %s3044 = scalar_lea.vmem %s5, %s3043
      $region60: #{double_conv.6} parent=47 // pred_fallthru
        _
    $region48: #{double_conv.6} parent=5 // pred_fallthru
      _
  $region6: #{double_conv.6} parent=0 // loop_footer
    %s16 = sadd.s32 1, %s12
  $region7: #{double_conv.6} parent=0 // loop_footer_branch
    %11 = sbr.rel target = $region3
  $region8: #{double_conv.6} parent=0 // loop_exit
    _

</llo_original>
